<compile_context>
chip_gen: v5e
topology: v5e:2x2
jax: 0.10.0
libtpu: 0.0.40
codegen_flags: <defaults>
</compile_context>

<pallas_src>
import math

import jax
import jax.numpy as jnp
from jax.experimental import pallas as pl
from jax.experimental.pallas import tpu as pltpu


# ----------------------------- fused Pallas kernel -----------------------------

def _lenet_kernel(p1_ref, wm1_ref, b1_ref, wm2_ref, b2_ref,
                  wf1_ref, bf1_ref, wf2_ref, bf2_ref, wf3_ref, bf3_ref,
                  out_ref, pooled1_ref, p2_ref, feat_ref):
    # p1_ref : (1, 784, 75) im2col patches for one sample, rows pre-ordered as
    #          (dh, dw, hp, wp) with dh,dw in {0,1} (pooling parity) and
    #          hp,wp in [0,14); columns ordered (c, kh, kw) to match
    #          w1.reshape(6, 75).
    # ---- conv1 + bias + relu : one MXU matmul ----
    y1 = jnp.dot(p1_ref[0], wm1_ref[...], preferred_element_type=jnp.float32)
    y1 = jnp.maximum(y1 + b1_ref[...], 0.0)                    # (784, 6)

    # ---- maxpool 2x2 : parity row ordering -> contiguous-block maxima ----
    m = jnp.maximum(y1[0:392], y1[392:784])                    # max over dh (392, 6)
    m = jnp.maximum(m[0:196], m[196:392])                      # max over dw (196, 6)

    # stash pooled conv1 output as (14, 14, 6) so conv2 windows are plain slices
    for i in range(14):
        pooled1_ref[i] = m[i * 14:(i + 1) * 14, :]

    # ---- conv2 im2col into VMEM scratch (10, 10, 150); columns (kh, kw, c) ----
    for kh in range(5):
        for kw in range(5):
            t = kh * 5 + kw
            p2_ref[:, :, t * 6:(t + 1) * 6] = (
                pooled1_ref[kh:kh + 10, kw:kw + 10, :])

    # ---- conv2 + bias + relu : 10 row matmuls, results stay in registers ----
    wm2 = wm2_ref[...]                                         # (150, 16)
    b2 = b2_ref[...]                                           # (1, 16)
    y2_rows = []
    for ho in range(10):
        r = jnp.dot(p2_ref[ho], wm2, preferred_element_type=jnp.float32)
        y2_rows.append(jnp.maximum(r + b2, 0.0))               # (10, 16)

    # ---- maxpool 2x2 fused with the flatten into feat_ref (1, 400) ----
    # feat column order is (hp, wp, c); fc1's weight rows were pre-permuted to
    # match PyTorch's (c, h, w) flatten, so no runtime transpose is needed.
    for hp in range(5):
        for wp in range(5):
            r0 = y2_rows[2 * hp]
            r1 = y2_rows[2 * hp + 1]
            m0 = jnp.maximum(r0[2 * wp:2 * wp + 1, :], r0[2 * wp + 1:2 * wp + 2, :])
            m1 = jnp.maximum(r1[2 * wp:2 * wp + 1, :], r1[2 * wp + 1:2 * wp + 2, :])
            col = (hp * 5 + wp) * 16
            feat_ref[:, col:col + 16] = jnp.maximum(m0, m1)    # (1, 16)

    # ---- fc1 -> relu -> fc2 -> relu -> fc3 ----
    h = jnp.dot(feat_ref[...], wf1_ref[...], preferred_element_type=jnp.float32)
    h = jnp.maximum(h + bf1_ref[...], 0.0)                     # (1, 120)
    h = jnp.dot(h, wf2_ref[...], preferred_element_type=jnp.float32)
    h = jnp.maximum(h + bf2_ref[...], 0.0)                     # (1, 84)
    out_ref[0] = (jnp.dot(h, wf3_ref[...], preferred_element_type=jnp.float32)
                  + bf3_ref[...])                              # (1, num_class)


# ----------------------------- wrappers -----------------------------

def prepare_params(params):
    """One-time parameter preparation (hoisted out of the forward pass)."""
    (w1, b1, w2, b2, fw1, fb1, fw2, fb2, fw3, fb3) = params
    # conv1: (75, 6), column order (c, kh, kw) == PyTorch OIHW flatten
    wm1 = w1.reshape(6, 75).T
    # conv2: (150, 16), row order (kh, kw, c) matching in-kernel p2 assembly
    wm2 = jnp.transpose(w2, (2, 3, 1, 0)).reshape(150, 16)
    # fc1: permute the 400 input columns from PyTorch (c, h, w) order to the
    # in-kernel (hp, wp, c) flatten order.
    wf1 = fw1.reshape(120, 16, 5, 5).transpose(2, 3, 1, 0).reshape(400, 120)
    wf2 = fw2.T
    wf3 = fw3.T
    return (wm1, b1.reshape(1, 6), wm2, b2.reshape(1, 16),
            wf1, fb1.reshape(1, -1), wf2, fb2.reshape(1, -1),
            wf3, fb3.reshape(1, -1))


def _build_patches(x_nchw):
    """im2col for conv1 with rows pre-ordered (dh, dw, hp, wp)."""
    x = jnp.transpose(x_nchw, (0, 2, 3, 1)).astype(jnp.float32)   # (B, 32, 32, 3)
    B = x.shape[0]
    cols = [x[:, kh:kh + 28, kw:kw + 28, :]
            for kh in range(5) for kw in range(5)]
    p = jnp.stack(cols, axis=-1)                                  # (B, 28, 28, 3, 25)
    p = p.reshape(B, 28, 28, 75)                                  # k = c*25 + kh*5 + kw
    # reorder spatial rows by pooling parity: h = 2*hp + dh, w = 2*wp + dw
    p = p.reshape(B, 14, 2, 14, 2, 75).transpose(0, 2, 4, 1, 3, 5)
    return p.reshape(B, 784, 75)            # row = dh*392 + dw*196 + hp*14 + wp


def lenet_forward(x_nchw, prep):
    """Pallas LeNet forward. x_nchw: [B, 3, 32, 32] float32."""
    (wm1, b1r, wm2, b2r, wf1, bf1r, wf2, bf2r, wf3, bf3r) = prep
    num_class = wf3.shape[1]
    p1 = _build_patches(x_nchw)
    B = p1.shape[0]

    out = pl.pallas_call(
        _lenet_kernel,
        out_shape=jax.ShapeDtypeStruct((B, 1, num_class), jnp.float32),
        grid=(B,),
        in_specs=[
            pl.BlockSpec((1, 784, 75), lambda b: (b, 0, 0)),      # patches
            pl.BlockSpec((75, 6), lambda b: (0, 0)),              # conv1 w
            pl.BlockSpec((1, 6), lambda b: (0, 0)),               # conv1 b
            pl.BlockSpec((150, 16), lambda b: (0, 0)),            # conv2 w
            pl.BlockSpec((1, 16), lambda b: (0, 0)),              # conv2 b
            pl.BlockSpec((400, 120), lambda b: (0, 0)),           # fc1 w
            pl.BlockSpec((1, 120), lambda b: (0, 0)),             # fc1 b
            pl.BlockSpec((120, 84), lambda b: (0, 0)),            # fc2 w
            pl.BlockSpec((1, 84), lambda b: (0, 0)),              # fc2 b
            pl.BlockSpec((84, num_class), lambda b: (0, 0)),      # fc3 w
            pl.BlockSpec((1, num_class), lambda b: (0, 0)),       # fc3 b
        ],
        out_specs=pl.BlockSpec((1, 1, num_class), lambda b: (b, 0, 0)),
        scratch_shapes=[
            pltpu.VMEM((14, 14, 6), jnp.float32),      # pooled conv1 output
            pltpu.VMEM((10, 10, 150), jnp.float32),    # conv2 im2col patches
            pltpu.VMEM((1, 400), jnp.float32),         # flattened features
        ],
        compiler_params=pltpu.CompilerParams(
            dimension_semantics=("parallel",)),
    )(p1, wm1, b1r, wm2, b2r, wf1, bf1r, wf2, bf2r, wf3, bf3r)
    return out[:, 0, :]


# ----------------------------- reference (pure JAX) -----------------------------

def lenet_reference(x, params):
    (w1, b1, w2, b2, fw1, fb1, fw2, fb2, fw3, fb3) = params
    dn = ('NCHW', 'OIHW', 'NCHW')

    def pool(y):
        return jax.lax.reduce_window(y, -jnp.inf, jax.lax.max,
                                     (1, 1, 2, 2), (1, 1, 2, 2), 'VALID')

    y = jax.lax.conv_general_dilated(x, w1, (1, 1), 'VALID',
                                     dimension_numbers=dn)
    y = pool(jnp.maximum(y + b1[None, :, None, None], 0.0))
    y = jax.lax.conv_general_dilated(y, w2, (1, 1), 'VALID',
                                     dimension_numbers=dn)
    y = pool(jnp.maximum(y + b2[None, :, None, None], 0.0))
    y = y.reshape(y.shape[0], -1)
    y = jnp.maximum(y @ fw1.T + fb1, 0.0)
    y = jnp.maximum(y @ fw2.T + fb2, 0.0)
    return y @ fw3.T + fb3


# ----------------------------- params -----------------------------

def init_params(key, num_class):
    ks = jax.random.split(key, 5)
    # conv: kaiming normal, bias zero
    w1 = jax.random.normal(ks[0], (6, 3, 5, 5), jnp.float32) * math.sqrt(2.0 / 75)
    b1 = jnp.zeros((6,), jnp.float32)
    w2 = jax.random.normal(ks[1], (16, 6, 5, 5), jnp.float32) * math.sqrt(2.0 / 150)
    b2 = jnp.zeros((16,), jnp.float32)
    # linear: xavier normal, bias zero (PyTorch layout: (out, in))
    fw1 = jax.random.normal(ks[2], (120, 400), jnp.float32) * math.sqrt(2.0 / (400 + 120))
    fb1 = jnp.zeros((120,), jnp.float32)
    fw2 = jax.random.normal(ks[3], (84, 120), jnp.float32) * math.sqrt(2.0 / (120 + 84))
    fb2 = jnp.zeros((84,), jnp.float32)
    fw3 = jax.random.normal(ks[4], (num_class, 84), jnp.float32) * math.sqrt(2.0 / (84 + num_class))
    fb3 = jnp.zeros((num_class,), jnp.float32)
    return (w1, b1, w2, b2, fw1, fb1, fw2, fb2, fw3, fb3)


# ----------------------------- main -----------------------------

if __name__ == "__main__":
    num_class = 10
    key = jax.random.PRNGKey(0)
    pkey, xkey = jax.random.split(key)
    params = init_params(pkey, num_class)
    prep = prepare_params(params)            # one-time weight layout prep
    # LeNet's 16*5*5 flatten implies a 32x32 spatial input (CIFAR-style).
    x = jax.random.normal(xkey, (2, 3, 32, 32), jnp.float32)

    fwd = jax.jit(lenet_forward)
    out = jax.block_until_ready(fwd(x, prep))
    assert out.shape == (2, num_class), out.shape

    ref = jax.block_until_ready(lenet_reference(x, params))
    assert jnp.allclose(out, ref, atol=2e-2, rtol=2e-2), (
        "mismatch vs reference: max abs diff "
        f"{float(jnp.max(jnp.abs(out - ref)))}")

    print("KERNEL_OK")
</pallas_src>

<mosaic_0001>
module attributes {stable_mosaic.version = 11 : i64} {
  func.func @_lenet_kernel(%arg0: i32, %arg1: memref<1x784x75xf32, #tpu.memory_space<vmem>>, %arg2: memref<75x6xf32, #tpu.memory_space<vmem>>, %arg3: memref<1x6xf32, #tpu.memory_space<vmem>>, %arg4: memref<150x16xf32, #tpu.memory_space<vmem>>, %arg5: memref<1x16xf32, #tpu.memory_space<vmem>>, %arg6: memref<400x120xf32, #tpu.memory_space<vmem>>, %arg7: memref<1x120xf32, #tpu.memory_space<vmem>>, %arg8: memref<120x84xf32, #tpu.memory_space<vmem>>, %arg9: memref<1x84xf32, #tpu.memory_space<vmem>>, %arg10: memref<84x10xf32, #tpu.memory_space<vmem>>, %arg11: memref<1x10xf32, #tpu.memory_space<vmem>>, %arg12: memref<1x1x10xf32, #tpu.memory_space<vmem>>, %arg13: memref<14x14x6xf32, #tpu.memory_space<vmem>>, %arg14: memref<10x10x150xf32, #tpu.memory_space<vmem>>, %arg15: memref<1x400xf32, #tpu.memory_space<vmem>>) attributes {dimension_semantics = [#tpu.dimension_semantics<parallel>], iteration_bounds = array<i64: 2>, scalar_prefetch = 0 : i64, scratch_operands = 3 : i64, tpu.core_type = #tpu.core_type<tc>, window_params = [{transform_indices = @transform_0, window_bounds = array<i64: 1, 784, 75>}, {pipeline_mode = #tpu.pipeline_mode<synchronous>, transform_indices = @transform_1, window_bounds = array<i64: 75, 6>}, {pipeline_mode = #tpu.pipeline_mode<synchronous>, transform_indices = @transform_2, window_bounds = array<i64: 1, 6>}, {pipeline_mode = #tpu.pipeline_mode<synchronous>, transform_indices = @transform_3, window_bounds = array<i64: 150, 16>}, {pipeline_mode = #tpu.pipeline_mode<synchronous>, transform_indices = @transform_4, window_bounds = array<i64: 1, 16>}, {pipeline_mode = #tpu.pipeline_mode<synchronous>, transform_indices = @transform_5, window_bounds = array<i64: 400, 120>}, {pipeline_mode = #tpu.pipeline_mode<synchronous>, transform_indices = @transform_6, window_bounds = array<i64: 1, 120>}, {pipeline_mode = #tpu.pipeline_mode<synchronous>, transform_indices = @transform_7, window_bounds = array<i64: 120, 84>}, {pipeline_mode = #tpu.pipeline_mode<synchronous>, transform_indices = @transform_8, window_bounds = array<i64: 1, 84>}, {pipeline_mode = #tpu.pipeline_mode<synchronous>, transform_indices = @transform_9, window_bounds = array<i64: 84, 10>}, {pipeline_mode = #tpu.pipeline_mode<synchronous>, transform_indices = @transform_10, window_bounds = array<i64: 1, 10>}, {transform_indices = @transform_11, window_bounds = array<i64: 1, 1, 10>}]} {
    %c0 = arith.constant 0 : index
    %c0_0 = arith.constant 0 : index
    %c0_1 = arith.constant 0 : index
    %0 = vector.load %arg1[%c0, %c0_0, %c0_1] : memref<1x784x75xf32, #tpu.memory_space<vmem>>, vector<1x784x75xf32>
    %1 = vector.shape_cast %0 : vector<1x784x75xf32> to vector<784x75xf32>
    %c0_2 = arith.constant 0 : index
    %c0_3 = arith.constant 0 : index
    %2 = vector.load %arg2[%c0_2, %c0_3] : memref<75x6xf32, #tpu.memory_space<vmem>>, vector<75x6xf32>
    %cst = arith.constant dense<0.000000e+00> : vector<784x6xf32>
    %3 = tpu.matmul %1, %2, %cst {dimension_numbers = #tpu.dot_dimension_numbers<[1], [0], [0], [1], [0, 0, 1, 1], [], []>} : vector<784x75xf32>, vector<75x6xf32>, vector<784x6xf32> -> vector<784x6xf32>
    %c0_4 = arith.constant 0 : index
    %c0_5 = arith.constant 0 : index
    %4 = vector.load %arg3[%c0_4, %c0_5] : memref<1x6xf32, #tpu.memory_space<vmem>>, vector<1x6xf32>
    %5 = vector.broadcast %4 : vector<1x6xf32> to vector<784x6xf32>
    %6 = arith.addf %3, %5 : vector<784x6xf32>
    %cst_6 = arith.constant 0.000000e+00 : f32
    %7 = vector.broadcast %cst_6 : f32 to vector<784x6xf32>
    %8 = arith.maximumf %6, %7 : vector<784x6xf32>
    %9 = vector.extract_strided_slice %8 {offsets = [0, 0], sizes = [392, 6], strides = [1, 1]} : vector<784x6xf32> to vector<392x6xf32>
    %10 = vector.extract_strided_slice %8 {offsets = [392, 0], sizes = [392, 6], strides = [1, 1]} : vector<784x6xf32> to vector<392x6xf32>
    %11 = arith.maximumf %9, %10 : vector<392x6xf32>
    %12 = vector.extract_strided_slice %11 {offsets = [0, 0], sizes = [196, 6], strides = [1, 1]} : vector<392x6xf32> to vector<196x6xf32>
    %13 = vector.extract_strided_slice %11 {offsets = [196, 0], sizes = [196, 6], strides = [1, 1]} : vector<392x6xf32> to vector<196x6xf32>
    %14 = arith.maximumf %12, %13 : vector<196x6xf32>
    %15 = vector.extract_strided_slice %14 {offsets = [0, 0], sizes = [14, 6], strides = [1, 1]} : vector<196x6xf32> to vector<14x6xf32>
    %c0_7 = arith.constant 0 : index
    %c0_8 = arith.constant 0 : index
    %c0_9 = arith.constant 0 : index
    %16 = vector.load %arg13[%c0_7, %c0_8, %c0_9] : memref<14x14x6xf32, #tpu.memory_space<vmem>>, vector<1x14x6xf32>
    %17 = vector.shape_cast %16 : vector<1x14x6xf32> to vector<14x6xf32>
    %18 = vector.shape_cast %15 : vector<14x6xf32> to vector<1x14x6xf32>
    tpu.vector_store %arg13[%c0_7, %c0_8, %c0_9], %18 {strides = array<i32>} : memref<14x14x6xf32, #tpu.memory_space<vmem>>, vector<1x14x6xf32>,
    %19 = vector.extract_strided_slice %14 {offsets = [14, 0], sizes = [14, 6], strides = [1, 1]} : vector<196x6xf32> to vector<14x6xf32>
    %c1 = arith.constant 1 : index
    %c0_10 = arith.constant 0 : index
    %c0_11 = arith.constant 0 : index
    %20 = vector.load %arg13[%c1, %c0_10, %c0_11] : memref<14x14x6xf32, #tpu.memory_space<vmem>>, vector<1x14x6xf32>
    %21 = vector.shape_cast %20 : vector<1x14x6xf32> to vector<14x6xf32>
    %22 = vector.shape_cast %19 : vector<14x6xf32> to vector<1x14x6xf32>
    tpu.vector_store %arg13[%c1, %c0_10, %c0_11], %22 {strides = array<i32>} : memref<14x14x6xf32, #tpu.memory_space<vmem>>, vector<1x14x6xf32>,
    %23 = vector.extract_strided_slice %14 {offsets = [28, 0], sizes = [14, 6], strides = [1, 1]} : vector<196x6xf32> to vector<14x6xf32>
    %c2 = arith.constant 2 : index
    %c0_12 = arith.constant 0 : index
    %c0_13 = arith.constant 0 : index
    %24 = vector.load %arg13[%c2, %c0_12, %c0_13] : memref<14x14x6xf32, #tpu.memory_space<vmem>>, vector<1x14x6xf32>
    %25 = vector.shape_cast %24 : vector<1x14x6xf32> to vector<14x6xf32>
    %26 = vector.shape_cast %23 : vector<14x6xf32> to vector<1x14x6xf32>
    tpu.vector_store %arg13[%c2, %c0_12, %c0_13], %26 {strides = array<i32>} : memref<14x14x6xf32, #tpu.memory_space<vmem>>, vector<1x14x6xf32>,
    %27 = vector.extract_strided_slice %14 {offsets = [42, 0], sizes = [14, 6], strides = [1, 1]} : vector<196x6xf32> to vector<14x6xf32>
    %c3 = arith.constant 3 : index
    %c0_14 = arith.constant 0 : index
    %c0_15 = arith.constant 0 : index
    %28 = vector.load %arg13[%c3, %c0_14, %c0_15] : memref<14x14x6xf32, #tpu.memory_space<vmem>>, vector<1x14x6xf32>
    %29 = vector.shape_cast %28 : vector<1x14x6xf32> to vector<14x6xf32>
    %30 = vector.shape_cast %27 : vector<14x6xf32> to vector<1x14x6xf32>
    tpu.vector_store %arg13[%c3, %c0_14, %c0_15], %30 {strides = array<i32>} : memref<14x14x6xf32, #tpu.memory_space<vmem>>, vector<1x14x6xf32>,
    %31 = vector.extract_strided_slice %14 {offsets = [56, 0], sizes = [14, 6], strides = [1, 1]} : vector<196x6xf32> to vector<14x6xf32>
    %c4 = arith.constant 4 : index
    %c0_16 = arith.constant 0 : index
    %c0_17 = arith.constant 0 : index
    %32 = vector.load %arg13[%c4, %c0_16, %c0_17] : memref<14x14x6xf32, #tpu.memory_space<vmem>>, vector<1x14x6xf32>
    %33 = vector.shape_cast %32 : vector<1x14x6xf32> to vector<14x6xf32>
    %34 = vector.shape_cast %31 : vector<14x6xf32> to vector<1x14x6xf32>
    tpu.vector_store %arg13[%c4, %c0_16, %c0_17], %34 {strides = array<i32>} : memref<14x14x6xf32, #tpu.memory_space<vmem>>, vector<1x14x6xf32>,
    %35 = vector.extract_strided_slice %14 {offsets = [70, 0], sizes = [14, 6], strides = [1, 1]} : vector<196x6xf32> to vector<14x6xf32>
    %c5 = arith.constant 5 : index
    %c0_18 = arith.constant 0 : index
    %c0_19 = arith.constant 0 : index
    %36 = vector.load %arg13[%c5, %c0_18, %c0_19] : memref<14x14x6xf32, #tpu.memory_space<vmem>>, vector<1x14x6xf32>
    %37 = vector.shape_cast %36 : vector<1x14x6xf32> to vector<14x6xf32>
    %38 = vector.shape_cast %35 : vector<14x6xf32> to vector<1x14x6xf32>
    tpu.vector_store %arg13[%c5, %c0_18, %c0_19], %38 {strides = array<i32>} : memref<14x14x6xf32, #tpu.memory_space<vmem>>, vector<1x14x6xf32>,
    %39 = vector.extract_strided_slice %14 {offsets = [84, 0], sizes = [14, 6], strides = [1, 1]} : vector<196x6xf32> to vector<14x6xf32>
    %c6 = arith.constant 6 : index
    %c0_20 = arith.constant 0 : index
    %c0_21 = arith.constant 0 : index
    %40 = vector.load %arg13[%c6, %c0_20, %c0_21] : memref<14x14x6xf32, #tpu.memory_space<vmem>>, vector<1x14x6xf32>
    %41 = vector.shape_cast %40 : vector<1x14x6xf32> to vector<14x6xf32>
    %42 = vector.shape_cast %39 : vector<14x6xf32> to vector<1x14x6xf32>
    tpu.vector_store %arg13[%c6, %c0_20, %c0_21], %42 {strides = array<i32>} : memref<14x14x6xf32, #tpu.memory_space<vmem>>, vector<1x14x6xf32>,
    %43 = vector.extract_strided_slice %14 {offsets = [98, 0], sizes = [14, 6], strides = [1, 1]} : vector<196x6xf32> to vector<14x6xf32>
    %c7 = arith.constant 7 : index
    %c0_22 = arith.constant 0 : index
    %c0_23 = arith.constant 0 : index
    %44 = vector.load %arg13[%c7, %c0_22, %c0_23] : memref<14x14x6xf32, #tpu.memory_space<vmem>>, vector<1x14x6xf32>
    %45 = vector.shape_cast %44 : vector<1x14x6xf32> to vector<14x6xf32>
    %46 = vector.shape_cast %43 : vector<14x6xf32> to vector<1x14x6xf32>
    tpu.vector_store %arg13[%c7, %c0_22, %c0_23], %46 {strides = array<i32>} : memref<14x14x6xf32, #tpu.memory_space<vmem>>, vector<1x14x6xf32>,
    %47 = vector.extract_strided_slice %14 {offsets = [112, 0], sizes = [14, 6], strides = [1, 1]} : vector<196x6xf32> to vector<14x6xf32>
    %c8 = arith.constant 8 : index
    %c0_24 = arith.constant 0 : index
    %c0_25 = arith.constant 0 : index
    %48 = vector.load %arg13[%c8, %c0_24, %c0_25] : memref<14x14x6xf32, #tpu.memory_space<vmem>>, vector<1x14x6xf32>
    %49 = vector.shape_cast %48 : vector<1x14x6xf32> to vector<14x6xf32>
    %50 = vector.shape_cast %47 : vector<14x6xf32> to vector<1x14x6xf32>
    tpu.vector_store %arg13[%c8, %c0_24, %c0_25], %50 {strides = array<i32>} : memref<14x14x6xf32, #tpu.memory_space<vmem>>, vector<1x14x6xf32>,
    %51 = vector.extract_strided_slice %14 {offsets = [126, 0], sizes = [14, 6], strides = [1, 1]} : vector<196x6xf32> to vector<14x6xf32>
    %c9 = arith.constant 9 : index
    %c0_26 = arith.constant 0 : index
    %c0_27 = arith.constant 0 : index
    %52 = vector.load %arg13[%c9, %c0_26, %c0_27] : memref<14x14x6xf32, #tpu.memory_space<vmem>>, vector<1x14x6xf32>
    %53 = vector.shape_cast %52 : vector<1x14x6xf32> to vector<14x6xf32>
    %54 = vector.shape_cast %51 : vector<14x6xf32> to vector<1x14x6xf32>
    tpu.vector_store %arg13[%c9, %c0_26, %c0_27], %54 {strides = array<i32>} : memref<14x14x6xf32, #tpu.memory_space<vmem>>, vector<1x14x6xf32>,
    %55 = vector.extract_strided_slice %14 {offsets = [140, 0], sizes = [14, 6], strides = [1, 1]} : vector<196x6xf32> to vector<14x6xf32>
    %c10 = arith.constant 10 : index
    %c0_28 = arith.constant 0 : index
    %c0_29 = arith.constant 0 : index
    %56 = vector.load %arg13[%c10, %c0_28, %c0_29] : memref<14x14x6xf32, #tpu.memory_space<vmem>>, vector<1x14x6xf32>
    %57 = vector.shape_cast %56 : vector<1x14x6xf32> to vector<14x6xf32>
    %58 = vector.shape_cast %55 : vector<14x6xf32> to vector<1x14x6xf32>
    tpu.vector_store %arg13[%c10, %c0_28, %c0_29], %58 {strides = array<i32>} : memref<14x14x6xf32, #tpu.memory_space<vmem>>, vector<1x14x6xf32>,
    %59 = vector.extract_strided_slice %14 {offsets = [154, 0], sizes = [14, 6], strides = [1, 1]} : vector<196x6xf32> to vector<14x6xf32>
    %c11 = arith.constant 11 : index
    %c0_30 = arith.constant 0 : index
    %c0_31 = arith.constant 0 : index
    %60 = vector.load %arg13[%c11, %c0_30, %c0_31] : memref<14x14x6xf32, #tpu.memory_space<vmem>>, vector<1x14x6xf32>
    %61 = vector.shape_cast %60 : vector<1x14x6xf32> to vector<14x6xf32>
    %62 = vector.shape_cast %59 : vector<14x6xf32> to vector<1x14x6xf32>
    tpu.vector_store %arg13[%c11, %c0_30, %c0_31], %62 {strides = array<i32>} : memref<14x14x6xf32, #tpu.memory_space<vmem>>, vector<1x14x6xf32>,
    %63 = vector.extract_strided_slice %14 {offsets = [168, 0], sizes = [14, 6], strides = [1, 1]} : vector<196x6xf32> to vector<14x6xf32>
    %c12 = arith.constant 12 : index
    %c0_32 = arith.constant 0 : index
    %c0_33 = arith.constant 0 : index
    %64 = vector.load %arg13[%c12, %c0_32, %c0_33] : memref<14x14x6xf32, #tpu.memory_space<vmem>>, vector<1x14x6xf32>
    %65 = vector.shape_cast %64 : vector<1x14x6xf32> to vector<14x6xf32>
    %66 = vector.shape_cast %63 : vector<14x6xf32> to vector<1x14x6xf32>
    tpu.vector_store %arg13[%c12, %c0_32, %c0_33], %66 {strides = array<i32>} : memref<14x14x6xf32, #tpu.memory_space<vmem>>, vector<1x14x6xf32>,
    %67 = vector.extract_strided_slice %14 {offsets = [182, 0], sizes = [14, 6], strides = [1, 1]} : vector<196x6xf32> to vector<14x6xf32>
    %c13 = arith.constant 13 : index
    %c0_34 = arith.constant 0 : index
    %c0_35 = arith.constant 0 : index
    %68 = vector.load %arg13[%c13, %c0_34, %c0_35] : memref<14x14x6xf32, #tpu.memory_space<vmem>>, vector<1x14x6xf32>
    %69 = vector.shape_cast %68 : vector<1x14x6xf32> to vector<14x6xf32>
    %70 = vector.shape_cast %67 : vector<14x6xf32> to vector<1x14x6xf32>
    tpu.vector_store %arg13[%c13, %c0_34, %c0_35], %70 {strides = array<i32>} : memref<14x14x6xf32, #tpu.memory_space<vmem>>, vector<1x14x6xf32>,
    %c0_36 = arith.constant 0 : index
    %c0_37 = arith.constant 0 : index
    %c0_38 = arith.constant 0 : index
    %71 = vector.load %arg13[%c0_36, %c0_37, %c0_38] : memref<14x14x6xf32, #tpu.memory_space<vmem>>, vector<10x10x6xf32>
    %c0_39 = arith.constant 0 : index
    %c0_40 = arith.constant 0 : index
    %c0_41 = arith.constant 0 : index
    %72 = vector.load %arg14[%c0_39, %c0_40, %c0_41] : memref<10x10x150xf32, #tpu.memory_space<vmem>>, vector<10x10x6xf32>
    tpu.vector_store %arg14[%c0_39, %c0_40, %c0_41], %71 {strides = array<i32>} : memref<10x10x150xf32, #tpu.memory_space<vmem>>, vector<10x10x6xf32>,
    %c0_42 = arith.constant 0 : index
    %c1_43 = arith.constant 1 : index
    %c0_44 = arith.constant 0 : index
    %73 = vector.load %arg13[%c0_42, %c1_43, %c0_44] : memref<14x14x6xf32, #tpu.memory_space<vmem>>, vector<10x10x6xf32>
    %c0_45 = arith.constant 0 : index
    %c0_46 = arith.constant 0 : index
    %c6_47 = arith.constant 6 : index
    %74 = vector.load %arg14[%c0_45, %c0_46, %c6_47] : memref<10x10x150xf32, #tpu.memory_space<vmem>>, vector<10x10x6xf32>
    tpu.vector_store %arg14[%c0_45, %c0_46, %c6_47], %73 {strides = array<i32>} : memref<10x10x150xf32, #tpu.memory_space<vmem>>, vector<10x10x6xf32>,
    %c0_48 = arith.constant 0 : index
    %c2_49 = arith.constant 2 : index
    %c0_50 = arith.constant 0 : index
    %75 = vector.load %arg13[%c0_48, %c2_49, %c0_50] : memref<14x14x6xf32, #tpu.memory_space<vmem>>, vector<10x10x6xf32>
    %c0_51 = arith.constant 0 : index
    %c0_52 = arith.constant 0 : index
    %c12_53 = arith.constant 12 : index
    %76 = vector.load %arg14[%c0_51, %c0_52, %c12_53] : memref<10x10x150xf32, #tpu.memory_space<vmem>>, vector<10x10x6xf32>
    tpu.vector_store %arg14[%c0_51, %c0_52, %c12_53], %75 {strides = array<i32>} : memref<10x10x150xf32, #tpu.memory_space<vmem>>, vector<10x10x6xf32>,
    %c0_54 = arith.constant 0 : index
    %c3_55 = arith.constant 3 : index
    %c0_56 = arith.constant 0 : index
    %77 = vector.load %arg13[%c0_54, %c3_55, %c0_56] : memref<14x14x6xf32, #tpu.memory_space<vmem>>, vector<10x10x6xf32>
    %c0_57 = arith.constant 0 : index
    %c0_58 = arith.constant 0 : index
    %c18 = arith.constant 18 : index
    %78 = vector.load %arg14[%c0_57, %c0_58, %c18] : memref<10x10x150xf32, #tpu.memory_space<vmem>>, vector<10x10x6xf32>
    tpu.vector_store %arg14[%c0_57, %c0_58, %c18], %77 {strides = array<i32>} : memref<10x10x150xf32, #tpu.memory_space<vmem>>, vector<10x10x6xf32>,
    %c0_59 = arith.constant 0 : index
    %c4_60 = arith.constant 4 : index
    %c0_61 = arith.constant 0 : index
    %79 = vector.load %arg13[%c0_59, %c4_60, %c0_61] : memref<14x14x6xf32, #tpu.memory_space<vmem>>, vector<10x10x6xf32>
    %c0_62 = arith.constant 0 : index
    %c0_63 = arith.constant 0 : index
    %c24 = arith.constant 24 : index
    %80 = vector.load %arg14[%c0_62, %c0_63, %c24] : memref<10x10x150xf32, #tpu.memory_space<vmem>>, vector<10x10x6xf32>
    tpu.vector_store %arg14[%c0_62, %c0_63, %c24], %79 {strides = array<i32>} : memref<10x10x150xf32, #tpu.memory_space<vmem>>, vector<10x10x6xf32>,
    %c1_64 = arith.constant 1 : index
    %c0_65 = arith.constant 0 : index
    %c0_66 = arith.constant 0 : index
    %81 = vector.load %arg13[%c1_64, %c0_65, %c0_66] : memref<14x14x6xf32, #tpu.memory_space<vmem>>, vector<10x10x6xf32>
    %c0_67 = arith.constant 0 : index
    %c0_68 = arith.constant 0 : index
    %c30 = arith.constant 30 : index
    %82 = vector.load %arg14[%c0_67, %c0_68, %c30] : memref<10x10x150xf32, #tpu.memory_space<vmem>>, vector<10x10x6xf32>
    tpu.vector_store %arg14[%c0_67, %c0_68, %c30], %81 {strides = array<i32>} : memref<10x10x150xf32, #tpu.memory_space<vmem>>, vector<10x10x6xf32>,
    %c1_69 = arith.constant 1 : index
    %c1_70 = arith.constant 1 : index
    %c0_71 = arith.constant 0 : index
    %83 = vector.load %arg13[%c1_69, %c1_70, %c0_71] : memref<14x14x6xf32, #tpu.memory_space<vmem>>, vector<10x10x6xf32>
    %c0_72 = arith.constant 0 : index
    %c0_73 = arith.constant 0 : index
    %c36 = arith.constant 36 : index
    %84 = vector.load %arg14[%c0_72, %c0_73, %c36] : memref<10x10x150xf32, #tpu.memory_space<vmem>>, vector<10x10x6xf32>
    tpu.vector_store %arg14[%c0_72, %c0_73, %c36], %83 {strides = array<i32>} : memref<10x10x150xf32, #tpu.memory_space<vmem>>, vector<10x10x6xf32>,
    %c1_74 = arith.constant 1 : index
    %c2_75 = arith.constant 2 : index
    %c0_76 = arith.constant 0 : index
    %85 = vector.load %arg13[%c1_74, %c2_75, %c0_76] : memref<14x14x6xf32, #tpu.memory_space<vmem>>, vector<10x10x6xf32>
    %c0_77 = arith.constant 0 : index
    %c0_78 = arith.constant 0 : index
    %c42 = arith.constant 42 : index
    %86 = vector.load %arg14[%c0_77, %c0_78, %c42] : memref<10x10x150xf32, #tpu.memory_space<vmem>>, vector<10x10x6xf32>
    tpu.vector_store %arg14[%c0_77, %c0_78, %c42], %85 {strides = array<i32>} : memref<10x10x150xf32, #tpu.memory_space<vmem>>, vector<10x10x6xf32>,
    %c1_79 = arith.constant 1 : index
    %c3_80 = arith.constant 3 : index
    %c0_81 = arith.constant 0 : index
    %87 = vector.load %arg13[%c1_79, %c3_80, %c0_81] : memref<14x14x6xf32, #tpu.memory_space<vmem>>, vector<10x10x6xf32>
    %c0_82 = arith.constant 0 : index
    %c0_83 = arith.constant 0 : index
    %c48 = arith.constant 48 : index
    %88 = vector.load %arg14[%c0_82, %c0_83, %c48] : memref<10x10x150xf32, #tpu.memory_space<vmem>>, vector<10x10x6xf32>
    tpu.vector_store %arg14[%c0_82, %c0_83, %c48], %87 {strides = array<i32>} : memref<10x10x150xf32, #tpu.memory_space<vmem>>, vector<10x10x6xf32>,
    %c1_84 = arith.constant 1 : index
    %c4_85 = arith.constant 4 : index
    %c0_86 = arith.constant 0 : index
    %89 = vector.load %arg13[%c1_84, %c4_85, %c0_86] : memref<14x14x6xf32, #tpu.memory_space<vmem>>, vector<10x10x6xf32>
    %c0_87 = arith.constant 0 : index
    %c0_88 = arith.constant 0 : index
    %c54 = arith.constant 54 : index
    %90 = vector.load %arg14[%c0_87, %c0_88, %c54] : memref<10x10x150xf32, #tpu.memory_space<vmem>>, vector<10x10x6xf32>
    tpu.vector_store %arg14[%c0_87, %c0_88, %c54], %89 {strides = array<i32>} : memref<10x10x150xf32, #tpu.memory_space<vmem>>, vector<10x10x6xf32>,
    %c2_89 = arith.constant 2 : index
    %c0_90 = arith.constant 0 : index
    %c0_91 = arith.constant 0 : index
    %91 = vector.load %arg13[%c2_89, %c0_90, %c0_91] : memref<14x14x6xf32, #tpu.memory_space<vmem>>, vector<10x10x6xf32>
    %c0_92 = arith.constant 0 : index
    %c0_93 = arith.constant 0 : index
    %c60 = arith.constant 60 : index
    %92 = vector.load %arg14[%c0_92, %c0_93, %c60] : memref<10x10x150xf32, #tpu.memory_space<vmem>>, vector<10x10x6xf32>
    tpu.vector_store %arg14[%c0_92, %c0_93, %c60], %91 {strides = array<i32>} : memref<10x10x150xf32, #tpu.memory_space<vmem>>, vector<10x10x6xf32>,
    %c2_94 = arith.constant 2 : index
    %c1_95 = arith.constant 1 : index
    %c0_96 = arith.constant 0 : index
    %93 = vector.load %arg13[%c2_94, %c1_95, %c0_96] : memref<14x14x6xf32, #tpu.memory_space<vmem>>, vector<10x10x6xf32>
    %c0_97 = arith.constant 0 : index
    %c0_98 = arith.constant 0 : index
    %c66 = arith.constant 66 : index
    %94 = vector.load %arg14[%c0_97, %c0_98, %c66] : memref<10x10x150xf32, #tpu.memory_space<vmem>>, vector<10x10x6xf32>
    tpu.vector_store %arg14[%c0_97, %c0_98, %c66], %93 {strides = array<i32>} : memref<10x10x150xf32, #tpu.memory_space<vmem>>, vector<10x10x6xf32>,
    %c2_99 = arith.constant 2 : index
    %c2_100 = arith.constant 2 : index
    %c0_101 = arith.constant 0 : index
    %95 = vector.load %arg13[%c2_99, %c2_100, %c0_101] : memref<14x14x6xf32, #tpu.memory_space<vmem>>, vector<10x10x6xf32>
    %c0_102 = arith.constant 0 : index
    %c0_103 = arith.constant 0 : index
    %c72 = arith.constant 72 : index
    %96 = vector.load %arg14[%c0_102, %c0_103, %c72] : memref<10x10x150xf32, #tpu.memory_space<vmem>>, vector<10x10x6xf32>
    tpu.vector_store %arg14[%c0_102, %c0_103, %c72], %95 {strides = array<i32>} : memref<10x10x150xf32, #tpu.memory_space<vmem>>, vector<10x10x6xf32>,
    %c2_104 = arith.constant 2 : index
    %c3_105 = arith.constant 3 : index
    %c0_106 = arith.constant 0 : index
    %97 = vector.load %arg13[%c2_104, %c3_105, %c0_106] : memref<14x14x6xf32, #tpu.memory_space<vmem>>, vector<10x10x6xf32>
    %c0_107 = arith.constant 0 : index
    %c0_108 = arith.constant 0 : index
    %c78 = arith.constant 78 : index
    %98 = vector.load %arg14[%c0_107, %c0_108, %c78] : memref<10x10x150xf32, #tpu.memory_space<vmem>>, vector<10x10x6xf32>
    tpu.vector_store %arg14[%c0_107, %c0_108, %c78], %97 {strides = array<i32>} : memref<10x10x150xf32, #tpu.memory_space<vmem>>, vector<10x10x6xf32>,
    %c2_109 = arith.constant 2 : index
    %c4_110 = arith.constant 4 : index
    %c0_111 = arith.constant 0 : index
    %99 = vector.load %arg13[%c2_109, %c4_110, %c0_111] : memref<14x14x6xf32, #tpu.memory_space<vmem>>, vector<10x10x6xf32>
    %c0_112 = arith.constant 0 : index
    %c0_113 = arith.constant 0 : index
    %c84 = arith.constant 84 : index
    %100 = vector.load %arg14[%c0_112, %c0_113, %c84] : memref<10x10x150xf32, #tpu.memory_space<vmem>>, vector<10x10x6xf32>
    tpu.vector_store %arg14[%c0_112, %c0_113, %c84], %99 {strides = array<i32>} : memref<10x10x150xf32, #tpu.memory_space<vmem>>, vector<10x10x6xf32>,
    %c3_114 = arith.constant 3 : index
    %c0_115 = arith.constant 0 : index
    %c0_116 = arith.constant 0 : index
    %101 = vector.load %arg13[%c3_114, %c0_115, %c0_116] : memref<14x14x6xf32, #tpu.memory_space<vmem>>, vector<10x10x6xf32>
    %c0_117 = arith.constant 0 : index
    %c0_118 = arith.constant 0 : index
    %c90 = arith.constant 90 : index
    %102 = vector.load %arg14[%c0_117, %c0_118, %c90] : memref<10x10x150xf32, #tpu.memory_space<vmem>>, vector<10x10x6xf32>
    tpu.vector_store %arg14[%c0_117, %c0_118, %c90], %101 {strides = array<i32>} : memref<10x10x150xf32, #tpu.memory_space<vmem>>, vector<10x10x6xf32>,
    %c3_119 = arith.constant 3 : index
    %c1_120 = arith.constant 1 : index
    %c0_121 = arith.constant 0 : index
    %103 = vector.load %arg13[%c3_119, %c1_120, %c0_121] : memref<14x14x6xf32, #tpu.memory_space<vmem>>, vector<10x10x6xf32>
    %c0_122 = arith.constant 0 : index
    %c0_123 = arith.constant 0 : index
    %c96 = arith.constant 96 : index
    %104 = vector.load %arg14[%c0_122, %c0_123, %c96] : memref<10x10x150xf32, #tpu.memory_space<vmem>>, vector<10x10x6xf32>
    tpu.vector_store %arg14[%c0_122, %c0_123, %c96], %103 {strides = array<i32>} : memref<10x10x150xf32, #tpu.memory_space<vmem>>, vector<10x10x6xf32>,
    %c3_124 = arith.constant 3 : index
    %c2_125 = arith.constant 2 : index
    %c0_126 = arith.constant 0 : index
    %105 = vector.load %arg13[%c3_124, %c2_125, %c0_126] : memref<14x14x6xf32, #tpu.memory_space<vmem>>, vector<10x10x6xf32>
    %c0_127 = arith.constant 0 : index
    %c0_128 = arith.constant 0 : index
    %c102 = arith.constant 102 : index
    %106 = vector.load %arg14[%c0_127, %c0_128, %c102] : memref<10x10x150xf32, #tpu.memory_space<vmem>>, vector<10x10x6xf32>
    tpu.vector_store %arg14[%c0_127, %c0_128, %c102], %105 {strides = array<i32>} : memref<10x10x150xf32, #tpu.memory_space<vmem>>, vector<10x10x6xf32>,
    %c3_129 = arith.constant 3 : index
    %c3_130 = arith.constant 3 : index
    %c0_131 = arith.constant 0 : index
    %107 = vector.load %arg13[%c3_129, %c3_130, %c0_131] : memref<14x14x6xf32, #tpu.memory_space<vmem>>, vector<10x10x6xf32>
    %c0_132 = arith.constant 0 : index
    %c0_133 = arith.constant 0 : index
    %c108 = arith.constant 108 : index
    %108 = vector.load %arg14[%c0_132, %c0_133, %c108] : memref<10x10x150xf32, #tpu.memory_space<vmem>>, vector<10x10x6xf32>
    tpu.vector_store %arg14[%c0_132, %c0_133, %c108], %107 {strides = array<i32>} : memref<10x10x150xf32, #tpu.memory_space<vmem>>, vector<10x10x6xf32>,
    %c3_134 = arith.constant 3 : index
    %c4_135 = arith.constant 4 : index
    %c0_136 = arith.constant 0 : index
    %109 = vector.load %arg13[%c3_134, %c4_135, %c0_136] : memref<14x14x6xf32, #tpu.memory_space<vmem>>, vector<10x10x6xf32>
    %c0_137 = arith.constant 0 : index
    %c0_138 = arith.constant 0 : index
    %c114 = arith.constant 114 : index
    %110 = vector.load %arg14[%c0_137, %c0_138, %c114] : memref<10x10x150xf32, #tpu.memory_space<vmem>>, vector<10x10x6xf32>
    tpu.vector_store %arg14[%c0_137, %c0_138, %c114], %109 {strides = array<i32>} : memref<10x10x150xf32, #tpu.memory_space<vmem>>, vector<10x10x6xf32>,
    %c4_139 = arith.constant 4 : index
    %c0_140 = arith.constant 0 : index
    %c0_141 = arith.constant 0 : index
    %111 = vector.load %arg13[%c4_139, %c0_140, %c0_141] : memref<14x14x6xf32, #tpu.memory_space<vmem>>, vector<10x10x6xf32>
    %c0_142 = arith.constant 0 : index
    %c0_143 = arith.constant 0 : index
    %c120 = arith.constant 120 : index
    %112 = vector.load %arg14[%c0_142, %c0_143, %c120] : memref<10x10x150xf32, #tpu.memory_space<vmem>>, vector<10x10x6xf32>
    tpu.vector_store %arg14[%c0_142, %c0_143, %c120], %111 {strides = array<i32>} : memref<10x10x150xf32, #tpu.memory_space<vmem>>, vector<10x10x6xf32>,
    %c4_144 = arith.constant 4 : index
    %c1_145 = arith.constant 1 : index
    %c0_146 = arith.constant 0 : index
    %113 = vector.load %arg13[%c4_144, %c1_145, %c0_146] : memref<14x14x6xf32, #tpu.memory_space<vmem>>, vector<10x10x6xf32>
    %c0_147 = arith.constant 0 : index
    %c0_148 = arith.constant 0 : index
    %c126 = arith.constant 126 : index
    %114 = vector.load %arg14[%c0_147, %c0_148, %c126] : memref<10x10x150xf32, #tpu.memory_space<vmem>>, vector<10x10x6xf32>
    tpu.vector_store %arg14[%c0_147, %c0_148, %c126], %113 {strides = array<i32>} : memref<10x10x150xf32, #tpu.memory_space<vmem>>, vector<10x10x6xf32>,
    %c4_149 = arith.constant 4 : index
    %c2_150 = arith.constant 2 : index
    %c0_151 = arith.constant 0 : index
    %115 = vector.load %arg13[%c4_149, %c2_150, %c0_151] : memref<14x14x6xf32, #tpu.memory_space<vmem>>, vector<10x10x6xf32>
    %c0_152 = arith.constant 0 : index
    %c0_153 = arith.constant 0 : index
    %c132 = arith.constant 132 : index
    %116 = vector.load %arg14[%c0_152, %c0_153, %c132] : memref<10x10x150xf32, #tpu.memory_space<vmem>>, vector<10x10x6xf32>
    tpu.vector_store %arg14[%c0_152, %c0_153, %c132], %115 {strides = array<i32>} : memref<10x10x150xf32, #tpu.memory_space<vmem>>, vector<10x10x6xf32>,
    %c4_154 = arith.constant 4 : index
    %c3_155 = arith.constant 3 : index
    %c0_156 = arith.constant 0 : index
    %117 = vector.load %arg13[%c4_154, %c3_155, %c0_156] : memref<14x14x6xf32, #tpu.memory_space<vmem>>, vector<10x10x6xf32>
    %c0_157 = arith.constant 0 : index
    %c0_158 = arith.constant 0 : index
    %c138 = arith.constant 138 : index
    %118 = vector.load %arg14[%c0_157, %c0_158, %c138] : memref<10x10x150xf32, #tpu.memory_space<vmem>>, vector<10x10x6xf32>
    tpu.vector_store %arg14[%c0_157, %c0_158, %c138], %117 {strides = array<i32>} : memref<10x10x150xf32, #tpu.memory_space<vmem>>, vector<10x10x6xf32>,
    %c4_159 = arith.constant 4 : index
    %c4_160 = arith.constant 4 : index
    %c0_161 = arith.constant 0 : index
    %119 = vector.load %arg13[%c4_159, %c4_160, %c0_161] : memref<14x14x6xf32, #tpu.memory_space<vmem>>, vector<10x10x6xf32>
    %c0_162 = arith.constant 0 : index
    %c0_163 = arith.constant 0 : index
    %c144 = arith.constant 144 : index
    %120 = vector.load %arg14[%c0_162, %c0_163, %c144] : memref<10x10x150xf32, #tpu.memory_space<vmem>>, vector<10x10x6xf32>
    tpu.vector_store %arg14[%c0_162, %c0_163, %c144], %119 {strides = array<i32>} : memref<10x10x150xf32, #tpu.memory_space<vmem>>, vector<10x10x6xf32>,
    %c0_164 = arith.constant 0 : index
    %c0_165 = arith.constant 0 : index
    %121 = vector.load %arg4[%c0_164, %c0_165] : memref<150x16xf32, #tpu.memory_space<vmem>>, vector<150x16xf32>
    %c0_166 = arith.constant 0 : index
    %c0_167 = arith.constant 0 : index
    %122 = vector.load %arg5[%c0_166, %c0_167] : memref<1x16xf32, #tpu.memory_space<vmem>>, vector<1x16xf32>
    %c0_168 = arith.constant 0 : index
    %c0_169 = arith.constant 0 : index
    %c0_170 = arith.constant 0 : index
    %123 = vector.load %arg14[%c0_168, %c0_169, %c0_170] : memref<10x10x150xf32, #tpu.memory_space<vmem>>, vector<1x10x150xf32>
    %124 = vector.shape_cast %123 : vector<1x10x150xf32> to vector<10x150xf32>
    %cst_171 = arith.constant dense<0.000000e+00> : vector<10x16xf32>
    %125 = tpu.matmul %124, %121, %cst_171 {dimension_numbers = #tpu.dot_dimension_numbers<[1], [0], [0], [1], [0, 0, 1, 1], [], []>} : vector<10x150xf32>, vector<150x16xf32>, vector<10x16xf32> -> vector<10x16xf32>
    %126 = vector.broadcast %122 : vector<1x16xf32> to vector<10x16xf32>
    %127 = arith.addf %125, %126 : vector<10x16xf32>
    %cst_172 = arith.constant 0.000000e+00 : f32
    %128 = vector.broadcast %cst_172 : f32 to vector<10x16xf32>
    %129 = arith.maximumf %127, %128 : vector<10x16xf32>
    %c1_173 = arith.constant 1 : index
    %c0_174 = arith.constant 0 : index
    %c0_175 = arith.constant 0 : index
    %130 = vector.load %arg14[%c1_173, %c0_174, %c0_175] : memref<10x10x150xf32, #tpu.memory_space<vmem>>, vector<1x10x150xf32>
    %131 = vector.shape_cast %130 : vector<1x10x150xf32> to vector<10x150xf32>
    %cst_176 = arith.constant dense<0.000000e+00> : vector<10x16xf32>
    %132 = tpu.matmul %131, %121, %cst_176 {dimension_numbers = #tpu.dot_dimension_numbers<[1], [0], [0], [1], [0, 0, 1, 1], [], []>} : vector<10x150xf32>, vector<150x16xf32>, vector<10x16xf32> -> vector<10x16xf32>
    %133 = vector.broadcast %122 : vector<1x16xf32> to vector<10x16xf32>
    %134 = arith.addf %132, %133 : vector<10x16xf32>
    %cst_177 = arith.constant 0.000000e+00 : f32
    %135 = vector.broadcast %cst_177 : f32 to vector<10x16xf32>
    %136 = arith.maximumf %134, %135 : vector<10x16xf32>
    %c2_178 = arith.constant 2 : index
    %c0_179 = arith.constant 0 : index
    %c0_180 = arith.constant 0 : index
    %137 = vector.load %arg14[%c2_178, %c0_179, %c0_180] : memref<10x10x150xf32, #tpu.memory_space<vmem>>, vector<1x10x150xf32>
    %138 = vector.shape_cast %137 : vector<1x10x150xf32> to vector<10x150xf32>
    %cst_181 = arith.constant dense<0.000000e+00> : vector<10x16xf32>
    %139 = tpu.matmul %138, %121, %cst_181 {dimension_numbers = #tpu.dot_dimension_numbers<[1], [0], [0], [1], [0, 0, 1, 1], [], []>} : vector<10x150xf32>, vector<150x16xf32>, vector<10x16xf32> -> vector<10x16xf32>
    %140 = vector.broadcast %122 : vector<1x16xf32> to vector<10x16xf32>
    %141 = arith.addf %139, %140 : vector<10x16xf32>
    %cst_182 = arith.constant 0.000000e+00 : f32
    %142 = vector.broadcast %cst_182 : f32 to vector<10x16xf32>
    %143 = arith.maximumf %141, %142 : vector<10x16xf32>
    %c3_183 = arith.constant 3 : index
    %c0_184 = arith.constant 0 : index
    %c0_185 = arith.constant 0 : index
    %144 = vector.load %arg14[%c3_183, %c0_184, %c0_185] : memref<10x10x150xf32, #tpu.memory_space<vmem>>, vector<1x10x150xf32>
    %145 = vector.shape_cast %144 : vector<1x10x150xf32> to vector<10x150xf32>
    %cst_186 = arith.constant dense<0.000000e+00> : vector<10x16xf32>
    %146 = tpu.matmul %145, %121, %cst_186 {dimension_numbers = #tpu.dot_dimension_numbers<[1], [0], [0], [1], [0, 0, 1, 1], [], []>} : vector<10x150xf32>, vector<150x16xf32>, vector<10x16xf32> -> vector<10x16xf32>
    %147 = vector.broadcast %122 : vector<1x16xf32> to vector<10x16xf32>
    %148 = arith.addf %146, %147 : vector<10x16xf32>
    %cst_187 = arith.constant 0.000000e+00 : f32
    %149 = vector.broadcast %cst_187 : f32 to vector<10x16xf32>
    %150 = arith.maximumf %148, %149 : vector<10x16xf32>
    %c4_188 = arith.constant 4 : index
    %c0_189 = arith.constant 0 : index
    %c0_190 = arith.constant 0 : index
    %151 = vector.load %arg14[%c4_188, %c0_189, %c0_190] : memref<10x10x150xf32, #tpu.memory_space<vmem>>, vector<1x10x150xf32>
    %152 = vector.shape_cast %151 : vector<1x10x150xf32> to vector<10x150xf32>
    %cst_191 = arith.constant dense<0.000000e+00> : vector<10x16xf32>
    %153 = tpu.matmul %152, %121, %cst_191 {dimension_numbers = #tpu.dot_dimension_numbers<[1], [0], [0], [1], [0, 0, 1, 1], [], []>} : vector<10x150xf32>, vector<150x16xf32>, vector<10x16xf32> -> vector<10x16xf32>
    %154 = vector.broadcast %122 : vector<1x16xf32> to vector<10x16xf32>
    %155 = arith.addf %153, %154 : vector<10x16xf32>
    %cst_192 = arith.constant 0.000000e+00 : f32
    %156 = vector.broadcast %cst_192 : f32 to vector<10x16xf32>
    %157 = arith.maximumf %155, %156 : vector<10x16xf32>
    %c5_193 = arith.constant 5 : index
    %c0_194 = arith.constant 0 : index
    %c0_195 = arith.constant 0 : index
    %158 = vector.load %arg14[%c5_193, %c0_194, %c0_195] : memref<10x10x150xf32, #tpu.memory_space<vmem>>, vector<1x10x150xf32>
    %159 = vector.shape_cast %158 : vector<1x10x150xf32> to vector<10x150xf32>
    %cst_196 = arith.constant dense<0.000000e+00> : vector<10x16xf32>
    %160 = tpu.matmul %159, %121, %cst_196 {dimension_numbers = #tpu.dot_dimension_numbers<[1], [0], [0], [1], [0, 0, 1, 1], [], []>} : vector<10x150xf32>, vector<150x16xf32>, vector<10x16xf32> -> vector<10x16xf32>
    %161 = vector.broadcast %122 : vector<1x16xf32> to vector<10x16xf32>
    %162 = arith.addf %160, %161 : vector<10x16xf32>
    %cst_197 = arith.constant 0.000000e+00 : f32
    %163 = vector.broadcast %cst_197 : f32 to vector<10x16xf32>
    %164 = arith.maximumf %162, %163 : vector<10x16xf32>
    %c6_198 = arith.constant 6 : index
    %c0_199 = arith.constant 0 : index
    %c0_200 = arith.constant 0 : index
    %165 = vector.load %arg14[%c6_198, %c0_199, %c0_200] : memref<10x10x150xf32, #tpu.memory_space<vmem>>, vector<1x10x150xf32>
    %166 = vector.shape_cast %165 : vector<1x10x150xf32> to vector<10x150xf32>
    %cst_201 = arith.constant dense<0.000000e+00> : vector<10x16xf32>
    %167 = tpu.matmul %166, %121, %cst_201 {dimension_numbers = #tpu.dot_dimension_numbers<[1], [0], [0], [1], [0, 0, 1, 1], [], []>} : vector<10x150xf32>, vector<150x16xf32>, vector<10x16xf32> -> vector<10x16xf32>
    %168 = vector.broadcast %122 : vector<1x16xf32> to vector<10x16xf32>
    %169 = arith.addf %167, %168 : vector<10x16xf32>
    %cst_202 = arith.constant 0.000000e+00 : f32
    %170 = vector.broadcast %cst_202 : f32 to vector<10x16xf32>
    %171 = arith.maximumf %169, %170 : vector<10x16xf32>
    %c7_203 = arith.constant 7 : index
    %c0_204 = arith.constant 0 : index
    %c0_205 = arith.constant 0 : index
    %172 = vector.load %arg14[%c7_203, %c0_204, %c0_205] : memref<10x10x150xf32, #tpu.memory_space<vmem>>, vector<1x10x150xf32>
    %173 = vector.shape_cast %172 : vector<1x10x150xf32> to vector<10x150xf32>
    %cst_206 = arith.constant dense<0.000000e+00> : vector<10x16xf32>
    %174 = tpu.matmul %173, %121, %cst_206 {dimension_numbers = #tpu.dot_dimension_numbers<[1], [0], [0], [1], [0, 0, 1, 1], [], []>} : vector<10x150xf32>, vector<150x16xf32>, vector<10x16xf32> -> vector<10x16xf32>
    %175 = vector.broadcast %122 : vector<1x16xf32> to vector<10x16xf32>
    %176 = arith.addf %174, %175 : vector<10x16xf32>
    %cst_207 = arith.constant 0.000000e+00 : f32
    %177 = vector.broadcast %cst_207 : f32 to vector<10x16xf32>
    %178 = arith.maximumf %176, %177 : vector<10x16xf32>
    %c8_208 = arith.constant 8 : index
    %c0_209 = arith.constant 0 : index
    %c0_210 = arith.constant 0 : index
    %179 = vector.load %arg14[%c8_208, %c0_209, %c0_210] : memref<10x10x150xf32, #tpu.memory_space<vmem>>, vector<1x10x150xf32>
    %180 = vector.shape_cast %179 : vector<1x10x150xf32> to vector<10x150xf32>
    %cst_211 = arith.constant dense<0.000000e+00> : vector<10x16xf32>
    %181 = tpu.matmul %180, %121, %cst_211 {dimension_numbers = #tpu.dot_dimension_numbers<[1], [0], [0], [1], [0, 0, 1, 1], [], []>} : vector<10x150xf32>, vector<150x16xf32>, vector<10x16xf32> -> vector<10x16xf32>
    %182 = vector.broadcast %122 : vector<1x16xf32> to vector<10x16xf32>
    %183 = arith.addf %181, %182 : vector<10x16xf32>
    %cst_212 = arith.constant 0.000000e+00 : f32
    %184 = vector.broadcast %cst_212 : f32 to vector<10x16xf32>
    %185 = arith.maximumf %183, %184 : vector<10x16xf32>
    %c9_213 = arith.constant 9 : index
    %c0_214 = arith.constant 0 : index
    %c0_215 = arith.constant 0 : index
    %186 = vector.load %arg14[%c9_213, %c0_214, %c0_215] : memref<10x10x150xf32, #tpu.memory_space<vmem>>, vector<1x10x150xf32>
    %187 = vector.shape_cast %186 : vector<1x10x150xf32> to vector<10x150xf32>
    %cst_216 = arith.constant dense<0.000000e+00> : vector<10x16xf32>
    %188 = tpu.matmul %187, %121, %cst_216 {dimension_numbers = #tpu.dot_dimension_numbers<[1], [0], [0], [1], [0, 0, 1, 1], [], []>} : vector<10x150xf32>, vector<150x16xf32>, vector<10x16xf32> -> vector<10x16xf32>
    %189 = vector.broadcast %122 : vector<1x16xf32> to vector<10x16xf32>
    %190 = arith.addf %188, %189 : vector<10x16xf32>
    %cst_217 = arith.constant 0.000000e+00 : f32
    %191 = vector.broadcast %cst_217 : f32 to vector<10x16xf32>
    %192 = arith.maximumf %190, %191 : vector<10x16xf32>
    %193 = vector.extract_strided_slice %129 {offsets = [0, 0], sizes = [1, 16], strides = [1, 1]} : vector<10x16xf32> to vector<1x16xf32>
    %194 = vector.extract_strided_slice %129 {offsets = [1, 0], sizes = [1, 16], strides = [1, 1]} : vector<10x16xf32> to vector<1x16xf32>
    %195 = arith.maximumf %193, %194 : vector<1x16xf32>
    %196 = vector.extract_strided_slice %136 {offsets = [0, 0], sizes = [1, 16], strides = [1, 1]} : vector<10x16xf32> to vector<1x16xf32>
    %197 = vector.extract_strided_slice %136 {offsets = [1, 0], sizes = [1, 16], strides = [1, 1]} : vector<10x16xf32> to vector<1x16xf32>
    %198 = arith.maximumf %196, %197 : vector<1x16xf32>
    %199 = arith.maximumf %195, %198 : vector<1x16xf32>
    %c0_218 = arith.constant 0 : index
    %c0_219 = arith.constant 0 : index
    %200 = vector.load %arg15[%c0_218, %c0_219] : memref<1x400xf32, #tpu.memory_space<vmem>>, vector<1x16xf32>
    tpu.vector_store %arg15[%c0_218, %c0_219], %199 {strides = array<i32>} : memref<1x400xf32, #tpu.memory_space<vmem>>, vector<1x16xf32>,
    %201 = vector.extract_strided_slice %129 {offsets = [2, 0], sizes = [1, 16], strides = [1, 1]} : vector<10x16xf32> to vector<1x16xf32>
    %202 = vector.extract_strided_slice %129 {offsets = [3, 0], sizes = [1, 16], strides = [1, 1]} : vector<10x16xf32> to vector<1x16xf32>
    %203 = arith.maximumf %201, %202 : vector<1x16xf32>
    %204 = vector.extract_strided_slice %136 {offsets = [2, 0], sizes = [1, 16], strides = [1, 1]} : vector<10x16xf32> to vector<1x16xf32>
    %205 = vector.extract_strided_slice %136 {offsets = [3, 0], sizes = [1, 16], strides = [1, 1]} : vector<10x16xf32> to vector<1x16xf32>
    %206 = arith.maximumf %204, %205 : vector<1x16xf32>
    %207 = arith.maximumf %203, %206 : vector<1x16xf32>
    %c0_220 = arith.constant 0 : index
    %c16 = arith.constant 16 : index
    %208 = vector.load %arg15[%c0_220, %c16] : memref<1x400xf32, #tpu.memory_space<vmem>>, vector<1x16xf32>
    tpu.vector_store %arg15[%c0_220, %c16], %207 {strides = array<i32>} : memref<1x400xf32, #tpu.memory_space<vmem>>, vector<1x16xf32>,
    %209 = vector.extract_strided_slice %129 {offsets = [4, 0], sizes = [1, 16], strides = [1, 1]} : vector<10x16xf32> to vector<1x16xf32>
    %210 = vector.extract_strided_slice %129 {offsets = [5, 0], sizes = [1, 16], strides = [1, 1]} : vector<10x16xf32> to vector<1x16xf32>
    %211 = arith.maximumf %209, %210 : vector<1x16xf32>
    %212 = vector.extract_strided_slice %136 {offsets = [4, 0], sizes = [1, 16], strides = [1, 1]} : vector<10x16xf32> to vector<1x16xf32>
    %213 = vector.extract_strided_slice %136 {offsets = [5, 0], sizes = [1, 16], strides = [1, 1]} : vector<10x16xf32> to vector<1x16xf32>
    %214 = arith.maximumf %212, %213 : vector<1x16xf32>
    %215 = arith.maximumf %211, %214 : vector<1x16xf32>
    %c0_221 = arith.constant 0 : index
    %c32 = arith.constant 32 : index
    %216 = vector.load %arg15[%c0_221, %c32] : memref<1x400xf32, #tpu.memory_space<vmem>>, vector<1x16xf32>
    tpu.vector_store %arg15[%c0_221, %c32], %215 {strides = array<i32>} : memref<1x400xf32, #tpu.memory_space<vmem>>, vector<1x16xf32>,
    %217 = vector.extract_strided_slice %129 {offsets = [6, 0], sizes = [1, 16], strides = [1, 1]} : vector<10x16xf32> to vector<1x16xf32>
    %218 = vector.extract_strided_slice %129 {offsets = [7, 0], sizes = [1, 16], strides = [1, 1]} : vector<10x16xf32> to vector<1x16xf32>
    %219 = arith.maximumf %217, %218 : vector<1x16xf32>
    %220 = vector.extract_strided_slice %136 {offsets = [6, 0], sizes = [1, 16], strides = [1, 1]} : vector<10x16xf32> to vector<1x16xf32>
    %221 = vector.extract_strided_slice %136 {offsets = [7, 0], sizes = [1, 16], strides = [1, 1]} : vector<10x16xf32> to vector<1x16xf32>
    %222 = arith.maximumf %220, %221 : vector<1x16xf32>
    %223 = arith.maximumf %219, %222 : vector<1x16xf32>
    %c0_222 = arith.constant 0 : index
    %c48_223 = arith.constant 48 : index
    %224 = vector.load %arg15[%c0_222, %c48_223] : memref<1x400xf32, #tpu.memory_space<vmem>>, vector<1x16xf32>
    tpu.vector_store %arg15[%c0_222, %c48_223], %223 {strides = array<i32>} : memref<1x400xf32, #tpu.memory_space<vmem>>, vector<1x16xf32>,
    %225 = vector.extract_strided_slice %129 {offsets = [8, 0], sizes = [1, 16], strides = [1, 1]} : vector<10x16xf32> to vector<1x16xf32>
    %226 = vector.extract_strided_slice %129 {offsets = [9, 0], sizes = [1, 16], strides = [1, 1]} : vector<10x16xf32> to vector<1x16xf32>
    %227 = arith.maximumf %225, %226 : vector<1x16xf32>
    %228 = vector.extract_strided_slice %136 {offsets = [8, 0], sizes = [1, 16], strides = [1, 1]} : vector<10x16xf32> to vector<1x16xf32>
    %229 = vector.extract_strided_slice %136 {offsets = [9, 0], sizes = [1, 16], strides = [1, 1]} : vector<10x16xf32> to vector<1x16xf32>
    %230 = arith.maximumf %228, %229 : vector<1x16xf32>
    %231 = arith.maximumf %227, %230 : vector<1x16xf32>
    %c0_224 = arith.constant 0 : index
    %c64 = arith.constant 64 : index
    %232 = vector.load %arg15[%c0_224, %c64] : memref<1x400xf32, #tpu.memory_space<vmem>>, vector<1x16xf32>
    tpu.vector_store %arg15[%c0_224, %c64], %231 {strides = array<i32>} : memref<1x400xf32, #tpu.memory_space<vmem>>, vector<1x16xf32>,
    %233 = vector.extract_strided_slice %143 {offsets = [0, 0], sizes = [1, 16], strides = [1, 1]} : vector<10x16xf32> to vector<1x16xf32>
    %234 = vector.extract_strided_slice %143 {offsets = [1, 0], sizes = [1, 16], strides = [1, 1]} : vector<10x16xf32> to vector<1x16xf32>
    %235 = arith.maximumf %233, %234 : vector<1x16xf32>
    %236 = vector.extract_strided_slice %150 {offsets = [0, 0], sizes = [1, 16], strides = [1, 1]} : vector<10x16xf32> to vector<1x16xf32>
    %237 = vector.extract_strided_slice %150 {offsets = [1, 0], sizes = [1, 16], strides = [1, 1]} : vector<10x16xf32> to vector<1x16xf32>
    %238 = arith.maximumf %236, %237 : vector<1x16xf32>
    %239 = arith.maximumf %235, %238 : vector<1x16xf32>
    %c0_225 = arith.constant 0 : index
    %c80 = arith.constant 80 : index
    %240 = vector.load %arg15[%c0_225, %c80] : memref<1x400xf32, #tpu.memory_space<vmem>>, vector<1x16xf32>
    tpu.vector_store %arg15[%c0_225, %c80], %239 {strides = array<i32>} : memref<1x400xf32, #tpu.memory_space<vmem>>, vector<1x16xf32>,
    %241 = vector.extract_strided_slice %143 {offsets = [2, 0], sizes = [1, 16], strides = [1, 1]} : vector<10x16xf32> to vector<1x16xf32>
    %242 = vector.extract_strided_slice %143 {offsets = [3, 0], sizes = [1, 16], strides = [1, 1]} : vector<10x16xf32> to vector<1x16xf32>
    %243 = arith.maximumf %241, %242 : vector<1x16xf32>
    %244 = vector.extract_strided_slice %150 {offsets = [2, 0], sizes = [1, 16], strides = [1, 1]} : vector<10x16xf32> to vector<1x16xf32>
    %245 = vector.extract_strided_slice %150 {offsets = [3, 0], sizes = [1, 16], strides = [1, 1]} : vector<10x16xf32> to vector<1x16xf32>
    %246 = arith.maximumf %244, %245 : vector<1x16xf32>
    %247 = arith.maximumf %243, %246 : vector<1x16xf32>
    %c0_226 = arith.constant 0 : index
    %c96_227 = arith.constant 96 : index
    %248 = vector.load %arg15[%c0_226, %c96_227] : memref<1x400xf32, #tpu.memory_space<vmem>>, vector<1x16xf32>
    tpu.vector_store %arg15[%c0_226, %c96_227], %247 {strides = array<i32>} : memref<1x400xf32, #tpu.memory_space<vmem>>, vector<1x16xf32>,
    %249 = vector.extract_strided_slice %143 {offsets = [4, 0], sizes = [1, 16], strides = [1, 1]} : vector<10x16xf32> to vector<1x16xf32>
    %250 = vector.extract_strided_slice %143 {offsets = [5, 0], sizes = [1, 16], strides = [1, 1]} : vector<10x16xf32> to vector<1x16xf32>
    %251 = arith.maximumf %249, %250 : vector<1x16xf32>
    %252 = vector.extract_strided_slice %150 {offsets = [4, 0], sizes = [1, 16], strides = [1, 1]} : vector<10x16xf32> to vector<1x16xf32>
    %253 = vector.extract_strided_slice %150 {offsets = [5, 0], sizes = [1, 16], strides = [1, 1]} : vector<10x16xf32> to vector<1x16xf32>
    %254 = arith.maximumf %252, %253 : vector<1x16xf32>
    %255 = arith.maximumf %251, %254 : vector<1x16xf32>
    %c0_228 = arith.constant 0 : index
    %c112 = arith.constant 112 : index
    %256 = vector.load %arg15[%c0_228, %c112] : memref<1x400xf32, #tpu.memory_space<vmem>>, vector<1x16xf32>
    tpu.vector_store %arg15[%c0_228, %c112], %255 {strides = array<i32>} : memref<1x400xf32, #tpu.memory_space<vmem>>, vector<1x16xf32>,
    %257 = vector.extract_strided_slice %143 {offsets = [6, 0], sizes = [1, 16], strides = [1, 1]} : vector<10x16xf32> to vector<1x16xf32>
    %258 = vector.extract_strided_slice %143 {offsets = [7, 0], sizes = [1, 16], strides = [1, 1]} : vector<10x16xf32> to vector<1x16xf32>
    %259 = arith.maximumf %257, %258 : vector<1x16xf32>
    %260 = vector.extract_strided_slice %150 {offsets = [6, 0], sizes = [1, 16], strides = [1, 1]} : vector<10x16xf32> to vector<1x16xf32>
    %261 = vector.extract_strided_slice %150 {offsets = [7, 0], sizes = [1, 16], strides = [1, 1]} : vector<10x16xf32> to vector<1x16xf32>
    %262 = arith.maximumf %260, %261 : vector<1x16xf32>
    %263 = arith.maximumf %259, %262 : vector<1x16xf32>
    %c0_229 = arith.constant 0 : index
    %c128 = arith.constant 128 : index
    %264 = vector.load %arg15[%c0_229, %c128] : memref<1x400xf32, #tpu.memory_space<vmem>>, vector<1x16xf32>
    tpu.vector_store %arg15[%c0_229, %c128], %263 {strides = array<i32>} : memref<1x400xf32, #tpu.memory_space<vmem>>, vector<1x16xf32>,
    %265 = vector.extract_strided_slice %143 {offsets = [8, 0], sizes = [1, 16], strides = [1, 1]} : vector<10x16xf32> to vector<1x16xf32>
    %266 = vector.extract_strided_slice %143 {offsets = [9, 0], sizes = [1, 16], strides = [1, 1]} : vector<10x16xf32> to vector<1x16xf32>
    %267 = arith.maximumf %265, %266 : vector<1x16xf32>
    %268 = vector.extract_strided_slice %150 {offsets = [8, 0], sizes = [1, 16], strides = [1, 1]} : vector<10x16xf32> to vector<1x16xf32>
    %269 = vector.extract_strided_slice %150 {offsets = [9, 0], sizes = [1, 16], strides = [1, 1]} : vector<10x16xf32> to vector<1x16xf32>
    %270 = arith.maximumf %268, %269 : vector<1x16xf32>
    %271 = arith.maximumf %267, %270 : vector<1x16xf32>
    %c0_230 = arith.constant 0 : index
    %c144_231 = arith.constant 144 : index
    %272 = vector.load %arg15[%c0_230, %c144_231] : memref<1x400xf32, #tpu.memory_space<vmem>>, vector<1x16xf32>
    tpu.vector_store %arg15[%c0_230, %c144_231], %271 {strides = array<i32>} : memref<1x400xf32, #tpu.memory_space<vmem>>, vector<1x16xf32>,
    %273 = vector.extract_strided_slice %157 {offsets = [0, 0], sizes = [1, 16], strides = [1, 1]} : vector<10x16xf32> to vector<1x16xf32>
    %274 = vector.extract_strided_slice %157 {offsets = [1, 0], sizes = [1, 16], strides = [1, 1]} : vector<10x16xf32> to vector<1x16xf32>
    %275 = arith.maximumf %273, %274 : vector<1x16xf32>
    %276 = vector.extract_strided_slice %164 {offsets = [0, 0], sizes = [1, 16], strides = [1, 1]} : vector<10x16xf32> to vector<1x16xf32>
    %277 = vector.extract_strided_slice %164 {offsets = [1, 0], sizes = [1, 16], strides = [1, 1]} : vector<10x16xf32> to vector<1x16xf32>
    %278 = arith.maximumf %276, %277 : vector<1x16xf32>
    %279 = arith.maximumf %275, %278 : vector<1x16xf32>
    %c0_232 = arith.constant 0 : index
    %c160 = arith.constant 160 : index
    %280 = vector.load %arg15[%c0_232, %c160] : memref<1x400xf32, #tpu.memory_space<vmem>>, vector<1x16xf32>
    tpu.vector_store %arg15[%c0_232, %c160], %279 {strides = array<i32>} : memref<1x400xf32, #tpu.memory_space<vmem>>, vector<1x16xf32>,
    %281 = vector.extract_strided_slice %157 {offsets = [2, 0], sizes = [1, 16], strides = [1, 1]} : vector<10x16xf32> to vector<1x16xf32>
    %282 = vector.extract_strided_slice %157 {offsets = [3, 0], sizes = [1, 16], strides = [1, 1]} : vector<10x16xf32> to vector<1x16xf32>
    %283 = arith.maximumf %281, %282 : vector<1x16xf32>
    %284 = vector.extract_strided_slice %164 {offsets = [2, 0], sizes = [1, 16], strides = [1, 1]} : vector<10x16xf32> to vector<1x16xf32>
    %285 = vector.extract_strided_slice %164 {offsets = [3, 0], sizes = [1, 16], strides = [1, 1]} : vector<10x16xf32> to vector<1x16xf32>
    %286 = arith.maximumf %284, %285 : vector<1x16xf32>
    %287 = arith.maximumf %283, %286 : vector<1x16xf32>
    %c0_233 = arith.constant 0 : index
    %c176 = arith.constant 176 : index
    %288 = vector.load %arg15[%c0_233, %c176] : memref<1x400xf32, #tpu.memory_space<vmem>>, vector<1x16xf32>
    tpu.vector_store %arg15[%c0_233, %c176], %287 {strides = array<i32>} : memref<1x400xf32, #tpu.memory_space<vmem>>, vector<1x16xf32>,
    %289 = vector.extract_strided_slice %157 {offsets = [4, 0], sizes = [1, 16], strides = [1, 1]} : vector<10x16xf32> to vector<1x16xf32>
    %290 = vector.extract_strided_slice %157 {offsets = [5, 0], sizes = [1, 16], strides = [1, 1]} : vector<10x16xf32> to vector<1x16xf32>
    %291 = arith.maximumf %289, %290 : vector<1x16xf32>
    %292 = vector.extract_strided_slice %164 {offsets = [4, 0], sizes = [1, 16], strides = [1, 1]} : vector<10x16xf32> to vector<1x16xf32>
    %293 = vector.extract_strided_slice %164 {offsets = [5, 0], sizes = [1, 16], strides = [1, 1]} : vector<10x16xf32> to vector<1x16xf32>
    %294 = arith.maximumf %292, %293 : vector<1x16xf32>
    %295 = arith.maximumf %291, %294 : vector<1x16xf32>
    %c0_234 = arith.constant 0 : index
    %c192 = arith.constant 192 : index
    %296 = vector.load %arg15[%c0_234, %c192] : memref<1x400xf32, #tpu.memory_space<vmem>>, vector<1x16xf32>
    tpu.vector_store %arg15[%c0_234, %c192], %295 {strides = array<i32>} : memref<1x400xf32, #tpu.memory_space<vmem>>, vector<1x16xf32>,
    %297 = vector.extract_strided_slice %157 {offsets = [6, 0], sizes = [1, 16], strides = [1, 1]} : vector<10x16xf32> to vector<1x16xf32>
    %298 = vector.extract_strided_slice %157 {offsets = [7, 0], sizes = [1, 16], strides = [1, 1]} : vector<10x16xf32> to vector<1x16xf32>
    %299 = arith.maximumf %297, %298 : vector<1x16xf32>
    %300 = vector.extract_strided_slice %164 {offsets = [6, 0], sizes = [1, 16], strides = [1, 1]} : vector<10x16xf32> to vector<1x16xf32>
    %301 = vector.extract_strided_slice %164 {offsets = [7, 0], sizes = [1, 16], strides = [1, 1]} : vector<10x16xf32> to vector<1x16xf32>
    %302 = arith.maximumf %300, %301 : vector<1x16xf32>
    %303 = arith.maximumf %299, %302 : vector<1x16xf32>
    %c0_235 = arith.constant 0 : index
    %c208 = arith.constant 208 : index
    %304 = vector.load %arg15[%c0_235, %c208] : memref<1x400xf32, #tpu.memory_space<vmem>>, vector<1x16xf32>
    tpu.vector_store %arg15[%c0_235, %c208], %303 {strides = array<i32>} : memref<1x400xf32, #tpu.memory_space<vmem>>, vector<1x16xf32>,
    %305 = vector.extract_strided_slice %157 {offsets = [8, 0], sizes = [1, 16], strides = [1, 1]} : vector<10x16xf32> to vector<1x16xf32>
    %306 = vector.extract_strided_slice %157 {offsets = [9, 0], sizes = [1, 16], strides = [1, 1]} : vector<10x16xf32> to vector<1x16xf32>
    %307 = arith.maximumf %305, %306 : vector<1x16xf32>
    %308 = vector.extract_strided_slice %164 {offsets = [8, 0], sizes = [1, 16], strides = [1, 1]} : vector<10x16xf32> to vector<1x16xf32>
    %309 = vector.extract_strided_slice %164 {offsets = [9, 0], sizes = [1, 16], strides = [1, 1]} : vector<10x16xf32> to vector<1x16xf32>
    %310 = arith.maximumf %308, %309 : vector<1x16xf32>
    %311 = arith.maximumf %307, %310 : vector<1x16xf32>
    %c0_236 = arith.constant 0 : index
    %c224 = arith.constant 224 : index
    %312 = vector.load %arg15[%c0_236, %c224] : memref<1x400xf32, #tpu.memory_space<vmem>>, vector<1x16xf32>
    tpu.vector_store %arg15[%c0_236, %c224], %311 {strides = array<i32>} : memref<1x400xf32, #tpu.memory_space<vmem>>, vector<1x16xf32>,
    %313 = vector.extract_strided_slice %171 {offsets = [0, 0], sizes = [1, 16], strides = [1, 1]} : vector<10x16xf32> to vector<1x16xf32>
    %314 = vector.extract_strided_slice %171 {offsets = [1, 0], sizes = [1, 16], strides = [1, 1]} : vector<10x16xf32> to vector<1x16xf32>
    %315 = arith.maximumf %313, %314 : vector<1x16xf32>
    %316 = vector.extract_strided_slice %178 {offsets = [0, 0], sizes = [1, 16], strides = [1, 1]} : vector<10x16xf32> to vector<1x16xf32>
    %317 = vector.extract_strided_slice %178 {offsets = [1, 0], sizes = [1, 16], strides = [1, 1]} : vector<10x16xf32> to vector<1x16xf32>
    %318 = arith.maximumf %316, %317 : vector<1x16xf32>
    %319 = arith.maximumf %315, %318 : vector<1x16xf32>
    %c0_237 = arith.constant 0 : index
    %c240 = arith.constant 240 : index
    %320 = vector.load %arg15[%c0_237, %c240] : memref<1x400xf32, #tpu.memory_space<vmem>>, vector<1x16xf32>
    tpu.vector_store %arg15[%c0_237, %c240], %319 {strides = array<i32>} : memref<1x400xf32, #tpu.memory_space<vmem>>, vector<1x16xf32>,
    %321 = vector.extract_strided_slice %171 {offsets = [2, 0], sizes = [1, 16], strides = [1, 1]} : vector<10x16xf32> to vector<1x16xf32>
    %322 = vector.extract_strided_slice %171 {offsets = [3, 0], sizes = [1, 16], strides = [1, 1]} : vector<10x16xf32> to vector<1x16xf32>
    %323 = arith.maximumf %321, %322 : vector<1x16xf32>
    %324 = vector.extract_strided_slice %178 {offsets = [2, 0], sizes = [1, 16], strides = [1, 1]} : vector<10x16xf32> to vector<1x16xf32>
    %325 = vector.extract_strided_slice %178 {offsets = [3, 0], sizes = [1, 16], strides = [1, 1]} : vector<10x16xf32> to vector<1x16xf32>
    %326 = arith.maximumf %324, %325 : vector<1x16xf32>
    %327 = arith.maximumf %323, %326 : vector<1x16xf32>
    %c0_238 = arith.constant 0 : index
    %c256 = arith.constant 256 : index
    %328 = vector.load %arg15[%c0_238, %c256] : memref<1x400xf32, #tpu.memory_space<vmem>>, vector<1x16xf32>
    tpu.vector_store %arg15[%c0_238, %c256], %327 {strides = array<i32>} : memref<1x400xf32, #tpu.memory_space<vmem>>, vector<1x16xf32>,
    %329 = vector.extract_strided_slice %171 {offsets = [4, 0], sizes = [1, 16], strides = [1, 1]} : vector<10x16xf32> to vector<1x16xf32>
    %330 = vector.extract_strided_slice %171 {offsets = [5, 0], sizes = [1, 16], strides = [1, 1]} : vector<10x16xf32> to vector<1x16xf32>
    %331 = arith.maximumf %329, %330 : vector<1x16xf32>
    %332 = vector.extract_strided_slice %178 {offsets = [4, 0], sizes = [1, 16], strides = [1, 1]} : vector<10x16xf32> to vector<1x16xf32>
    %333 = vector.extract_strided_slice %178 {offsets = [5, 0], sizes = [1, 16], strides = [1, 1]} : vector<10x16xf32> to vector<1x16xf32>
    %334 = arith.maximumf %332, %333 : vector<1x16xf32>
    %335 = arith.maximumf %331, %334 : vector<1x16xf32>
    %c0_239 = arith.constant 0 : index
    %c272 = arith.constant 272 : index
    %336 = vector.load %arg15[%c0_239, %c272] : memref<1x400xf32, #tpu.memory_space<vmem>>, vector<1x16xf32>
    tpu.vector_store %arg15[%c0_239, %c272], %335 {strides = array<i32>} : memref<1x400xf32, #tpu.memory_space<vmem>>, vector<1x16xf32>,
    %337 = vector.extract_strided_slice %171 {offsets = [6, 0], sizes = [1, 16], strides = [1, 1]} : vector<10x16xf32> to vector<1x16xf32>
    %338 = vector.extract_strided_slice %171 {offsets = [7, 0], sizes = [1, 16], strides = [1, 1]} : vector<10x16xf32> to vector<1x16xf32>
    %339 = arith.maximumf %337, %338 : vector<1x16xf32>
    %340 = vector.extract_strided_slice %178 {offsets = [6, 0], sizes = [1, 16], strides = [1, 1]} : vector<10x16xf32> to vector<1x16xf32>
    %341 = vector.extract_strided_slice %178 {offsets = [7, 0], sizes = [1, 16], strides = [1, 1]} : vector<10x16xf32> to vector<1x16xf32>
    %342 = arith.maximumf %340, %341 : vector<1x16xf32>
    %343 = arith.maximumf %339, %342 : vector<1x16xf32>
    %c0_240 = arith.constant 0 : index
    %c288 = arith.constant 288 : index
    %344 = vector.load %arg15[%c0_240, %c288] : memref<1x400xf32, #tpu.memory_space<vmem>>, vector<1x16xf32>
    tpu.vector_store %arg15[%c0_240, %c288], %343 {strides = array<i32>} : memref<1x400xf32, #tpu.memory_space<vmem>>, vector<1x16xf32>,
    %345 = vector.extract_strided_slice %171 {offsets = [8, 0], sizes = [1, 16], strides = [1, 1]} : vector<10x16xf32> to vector<1x16xf32>
    %346 = vector.extract_strided_slice %171 {offsets = [9, 0], sizes = [1, 16], strides = [1, 1]} : vector<10x16xf32> to vector<1x16xf32>
    %347 = arith.maximumf %345, %346 : vector<1x16xf32>
    %348 = vector.extract_strided_slice %178 {offsets = [8, 0], sizes = [1, 16], strides = [1, 1]} : vector<10x16xf32> to vector<1x16xf32>
    %349 = vector.extract_strided_slice %178 {offsets = [9, 0], sizes = [1, 16], strides = [1, 1]} : vector<10x16xf32> to vector<1x16xf32>
    %350 = arith.maximumf %348, %349 : vector<1x16xf32>
    %351 = arith.maximumf %347, %350 : vector<1x16xf32>
    %c0_241 = arith.constant 0 : index
    %c304 = arith.constant 304 : index
    %352 = vector.load %arg15[%c0_241, %c304] : memref<1x400xf32, #tpu.memory_space<vmem>>, vector<1x16xf32>
    tpu.vector_store %arg15[%c0_241, %c304], %351 {strides = array<i32>} : memref<1x400xf32, #tpu.memory_space<vmem>>, vector<1x16xf32>,
    %353 = vector.extract_strided_slice %185 {offsets = [0, 0], sizes = [1, 16], strides = [1, 1]} : vector<10x16xf32> to vector<1x16xf32>
    %354 = vector.extract_strided_slice %185 {offsets = [1, 0], sizes = [1, 16], strides = [1, 1]} : vector<10x16xf32> to vector<1x16xf32>
    %355 = arith.maximumf %353, %354 : vector<1x16xf32>
    %356 = vector.extract_strided_slice %192 {offsets = [0, 0], sizes = [1, 16], strides = [1, 1]} : vector<10x16xf32> to vector<1x16xf32>
    %357 = vector.extract_strided_slice %192 {offsets = [1, 0], sizes = [1, 16], strides = [1, 1]} : vector<10x16xf32> to vector<1x16xf32>
    %358 = arith.maximumf %356, %357 : vector<1x16xf32>
    %359 = arith.maximumf %355, %358 : vector<1x16xf32>
    %c0_242 = arith.constant 0 : index
    %c320 = arith.constant 320 : index
    %360 = vector.load %arg15[%c0_242, %c320] : memref<1x400xf32, #tpu.memory_space<vmem>>, vector<1x16xf32>
    tpu.vector_store %arg15[%c0_242, %c320], %359 {strides = array<i32>} : memref<1x400xf32, #tpu.memory_space<vmem>>, vector<1x16xf32>,
    %361 = vector.extract_strided_slice %185 {offsets = [2, 0], sizes = [1, 16], strides = [1, 1]} : vector<10x16xf32> to vector<1x16xf32>
    %362 = vector.extract_strided_slice %185 {offsets = [3, 0], sizes = [1, 16], strides = [1, 1]} : vector<10x16xf32> to vector<1x16xf32>
    %363 = arith.maximumf %361, %362 : vector<1x16xf32>
    %364 = vector.extract_strided_slice %192 {offsets = [2, 0], sizes = [1, 16], strides = [1, 1]} : vector<10x16xf32> to vector<1x16xf32>
    %365 = vector.extract_strided_slice %192 {offsets = [3, 0], sizes = [1, 16], strides = [1, 1]} : vector<10x16xf32> to vector<1x16xf32>
    %366 = arith.maximumf %364, %365 : vector<1x16xf32>
    %367 = arith.maximumf %363, %366 : vector<1x16xf32>
    %c0_243 = arith.constant 0 : index
    %c336 = arith.constant 336 : index
    %368 = vector.load %arg15[%c0_243, %c336] : memref<1x400xf32, #tpu.memory_space<vmem>>, vector<1x16xf32>
    tpu.vector_store %arg15[%c0_243, %c336], %367 {strides = array<i32>} : memref<1x400xf32, #tpu.memory_space<vmem>>, vector<1x16xf32>,
    %369 = vector.extract_strided_slice %185 {offsets = [4, 0], sizes = [1, 16], strides = [1, 1]} : vector<10x16xf32> to vector<1x16xf32>
    %370 = vector.extract_strided_slice %185 {offsets = [5, 0], sizes = [1, 16], strides = [1, 1]} : vector<10x16xf32> to vector<1x16xf32>
    %371 = arith.maximumf %369, %370 : vector<1x16xf32>
    %372 = vector.extract_strided_slice %192 {offsets = [4, 0], sizes = [1, 16], strides = [1, 1]} : vector<10x16xf32> to vector<1x16xf32>
    %373 = vector.extract_strided_slice %192 {offsets = [5, 0], sizes = [1, 16], strides = [1, 1]} : vector<10x16xf32> to vector<1x16xf32>
    %374 = arith.maximumf %372, %373 : vector<1x16xf32>
    %375 = arith.maximumf %371, %374 : vector<1x16xf32>
    %c0_244 = arith.constant 0 : index
    %c352 = arith.constant 352 : index
    %376 = vector.load %arg15[%c0_244, %c352] : memref<1x400xf32, #tpu.memory_space<vmem>>, vector<1x16xf32>
    tpu.vector_store %arg15[%c0_244, %c352], %375 {strides = array<i32>} : memref<1x400xf32, #tpu.memory_space<vmem>>, vector<1x16xf32>,
    %377 = vector.extract_strided_slice %185 {offsets = [6, 0], sizes = [1, 16], strides = [1, 1]} : vector<10x16xf32> to vector<1x16xf32>
    %378 = vector.extract_strided_slice %185 {offsets = [7, 0], sizes = [1, 16], strides = [1, 1]} : vector<10x16xf32> to vector<1x16xf32>
    %379 = arith.maximumf %377, %378 : vector<1x16xf32>
    %380 = vector.extract_strided_slice %192 {offsets = [6, 0], sizes = [1, 16], strides = [1, 1]} : vector<10x16xf32> to vector<1x16xf32>
    %381 = vector.extract_strided_slice %192 {offsets = [7, 0], sizes = [1, 16], strides = [1, 1]} : vector<10x16xf32> to vector<1x16xf32>
    %382 = arith.maximumf %380, %381 : vector<1x16xf32>
    %383 = arith.maximumf %379, %382 : vector<1x16xf32>
    %c0_245 = arith.constant 0 : index
    %c368 = arith.constant 368 : index
    %384 = vector.load %arg15[%c0_245, %c368] : memref<1x400xf32, #tpu.memory_space<vmem>>, vector<1x16xf32>
    tpu.vector_store %arg15[%c0_245, %c368], %383 {strides = array<i32>} : memref<1x400xf32, #tpu.memory_space<vmem>>, vector<1x16xf32>,
    %385 = vector.extract_strided_slice %185 {offsets = [8, 0], sizes = [1, 16], strides = [1, 1]} : vector<10x16xf32> to vector<1x16xf32>
    %386 = vector.extract_strided_slice %185 {offsets = [9, 0], sizes = [1, 16], strides = [1, 1]} : vector<10x16xf32> to vector<1x16xf32>
    %387 = arith.maximumf %385, %386 : vector<1x16xf32>
    %388 = vector.extract_strided_slice %192 {offsets = [8, 0], sizes = [1, 16], strides = [1, 1]} : vector<10x16xf32> to vector<1x16xf32>
    %389 = vector.extract_strided_slice %192 {offsets = [9, 0], sizes = [1, 16], strides = [1, 1]} : vector<10x16xf32> to vector<1x16xf32>
    %390 = arith.maximumf %388, %389 : vector<1x16xf32>
    %391 = arith.maximumf %387, %390 : vector<1x16xf32>
    %c0_246 = arith.constant 0 : index
    %c384 = arith.constant 384 : index
    %392 = vector.load %arg15[%c0_246, %c384] : memref<1x400xf32, #tpu.memory_space<vmem>>, vector<1x16xf32>
    tpu.vector_store %arg15[%c0_246, %c384], %391 {strides = array<i32>} : memref<1x400xf32, #tpu.memory_space<vmem>>, vector<1x16xf32>,
    %c0_247 = arith.constant 0 : index
    %c0_248 = arith.constant 0 : index
    %393 = vector.load %arg15[%c0_247, %c0_248] : memref<1x400xf32, #tpu.memory_space<vmem>>, vector<1x400xf32>
    %c0_249 = arith.constant 0 : index
    %c0_250 = arith.constant 0 : index
    %394 = vector.load %arg6[%c0_249, %c0_250] : memref<400x120xf32, #tpu.memory_space<vmem>>, vector<400x120xf32>
    %cst_251 = arith.constant dense<0.000000e+00> : vector<1x120xf32>
    %395 = tpu.matmul %393, %394, %cst_251 {dimension_numbers = #tpu.dot_dimension_numbers<[1], [0], [0], [1], [0, 0, 1, 1], [], []>} : vector<1x400xf32>, vector<400x120xf32>, vector<1x120xf32> -> vector<1x120xf32>
    %c0_252 = arith.constant 0 : index
    %c0_253 = arith.constant 0 : index
    %396 = vector.load %arg7[%c0_252, %c0_253] : memref<1x120xf32, #tpu.memory_space<vmem>>, vector<1x120xf32>
    %397 = arith.addf %395, %396 : vector<1x120xf32>
    %cst_254 = arith.constant 0.000000e+00 : f32
    %398 = vector.broadcast %cst_254 : f32 to vector<1x120xf32>
    %399 = arith.maximumf %397, %398 : vector<1x120xf32>
    %c0_255 = arith.constant 0 : index
    %c0_256 = arith.constant 0 : index
    %400 = vector.load %arg8[%c0_255, %c0_256] : memref<120x84xf32, #tpu.memory_space<vmem>>, vector<120x84xf32>
    %cst_257 = arith.constant dense<0.000000e+00> : vector<1x84xf32>
    %401 = tpu.matmul %399, %400, %cst_257 {dimension_numbers = #tpu.dot_dimension_numbers<[1], [0], [0], [1], [0, 0, 1, 1], [], []>} : vector<1x120xf32>, vector<120x84xf32>, vector<1x84xf32> -> vector<1x84xf32>
    %c0_258 = arith.constant 0 : index
    %c0_259 = arith.constant 0 : index
    %402 = vector.load %arg9[%c0_258, %c0_259] : memref<1x84xf32, #tpu.memory_space<vmem>>, vector<1x84xf32>
    %403 = arith.addf %401, %402 : vector<1x84xf32>
    %cst_260 = arith.constant 0.000000e+00 : f32
    %404 = vector.broadcast %cst_260 : f32 to vector<1x84xf32>
    %405 = arith.maximumf %403, %404 : vector<1x84xf32>
    %c0_261 = arith.constant 0 : index
    %c0_262 = arith.constant 0 : index
    %406 = vector.load %arg10[%c0_261, %c0_262] : memref<84x10xf32, #tpu.memory_space<vmem>>, vector<84x10xf32>
    %cst_263 = arith.constant dense<0.000000e+00> : vector<1x10xf32>
    %407 = tpu.matmul %405, %406, %cst_263 {dimension_numbers = #tpu.dot_dimension_numbers<[1], [0], [0], [1], [0, 0, 1, 1], [], []>} : vector<1x84xf32>, vector<84x10xf32>, vector<1x10xf32> -> vector<1x10xf32>
    %c0_264 = arith.constant 0 : index
    %c0_265 = arith.constant 0 : index
    %408 = vector.load %arg11[%c0_264, %c0_265] : memref<1x10xf32, #tpu.memory_space<vmem>>, vector<1x10xf32>
    %409 = arith.addf %407, %408 : vector<1x10xf32>
    %c0_266 = arith.constant 0 : index
    %c0_267 = arith.constant 0 : index
    %c0_268 = arith.constant 0 : index
    %410 = vector.load %arg12[%c0_266, %c0_267, %c0_268] : memref<1x1x10xf32, #tpu.memory_space<vmem>>, vector<1x1x10xf32>
    %411 = vector.shape_cast %410 : vector<1x1x10xf32> to vector<1x10xf32>
    %412 = vector.shape_cast %409 : vector<1x10xf32> to vector<1x1x10xf32>
    tpu.vector_store %arg12[%c0_266, %c0_267, %c0_268], %412 {strides = array<i32>} : memref<1x1x10xf32, #tpu.memory_space<vmem>>, vector<1x1x10xf32>,
    return
  }
  func.func @transform_0(%arg0: i32) -> (i32, i32, i32) {
    %c0_i32 = arith.constant 0 : i32
    %c0_i32_0 = arith.constant 0 : i32
    %c0_i32_1 = arith.constant 0 : i32
    return %arg0, %c0_i32, %c0_i32_0 : i32, i32, i32
  }
  func.func @transform_1(%arg0: i32) -> (i32, i32) {
    %c0_i32 = arith.constant 0 : i32
    %c0_i32_0 = arith.constant 0 : i32
    %c0_i32_1 = arith.constant 0 : i32
    return %c0_i32, %c0_i32_0 : i32, i32
  }
  func.func @transform_2(%arg0: i32) -> (i32, i32) {
    %c0_i32 = arith.constant 0 : i32
    %c0_i32_0 = arith.constant 0 : i32
    %c0_i32_1 = arith.constant 0 : i32
    return %c0_i32, %c0_i32_0 : i32, i32
  }
  func.func @transform_3(%arg0: i32) -> (i32, i32) {
    %c0_i32 = arith.constant 0 : i32
    %c0_i32_0 = arith.constant 0 : i32
    %c0_i32_1 = arith.constant 0 : i32
    return %c0_i32, %c0_i32_0 : i32, i32
  }
  func.func @transform_4(%arg0: i32) -> (i32, i32) {
    %c0_i32 = arith.constant 0 : i32
    %c0_i32_0 = arith.constant 0 : i32
    %c0_i32_1 = arith.constant 0 : i32
    return %c0_i32, %c0_i32_0 : i32, i32
  }
  func.func @transform_5(%arg0: i32) -> (i32, i32) {
    %c0_i32 = arith.constant 0 : i32
    %c0_i32_0 = arith.constant 0 : i32
    %c0_i32_1 = arith.constant 0 : i32
    return %c0_i32, %c0_i32_0 : i32, i32
  }
  func.func @transform_6(%arg0: i32) -> (i32, i32) {
    %c0_i32 = arith.constant 0 : i32
    %c0_i32_0 = arith.constant 0 : i32
    %c0_i32_1 = arith.constant 0 : i32
    return %c0_i32, %c0_i32_0 : i32, i32
  }
  func.func @transform_7(%arg0: i32) -> (i32, i32) {
    %c0_i32 = arith.constant 0 : i32
    %c0_i32_0 = arith.constant 0 : i32
    %c0_i32_1 = arith.constant 0 : i32
    return %c0_i32, %c0_i32_0 : i32, i32
  }
  func.func @transform_8(%arg0: i32) -> (i32, i32) {
    %c0_i32 = arith.constant 0 : i32
    %c0_i32_0 = arith.constant 0 : i32
    %c0_i32_1 = arith.constant 0 : i32
    return %c0_i32, %c0_i32_0 : i32, i32
  }
  func.func @transform_9(%arg0: i32) -> (i32, i32) {
    %c0_i32 = arith.constant 0 : i32
    %c0_i32_0 = arith.constant 0 : i32
    %c0_i32_1 = arith.constant 0 : i32
    return %c0_i32, %c0_i32_0 : i32, i32
  }
  func.func @transform_10(%arg0: i32) -> (i32, i32) {
    %c0_i32 = arith.constant 0 : i32
    %c0_i32_0 = arith.constant 0 : i32
    %c0_i32_1 = arith.constant 0 : i32
    return %c0_i32, %c0_i32_0 : i32, i32
  }
  func.func @transform_11(%arg0: i32) -> (i32, i32, i32) {
    %c0_i32 = arith.constant 0 : i32
    %c0_i32_0 = arith.constant 0 : i32
    %c0_i32_1 = arith.constant 0 : i32
    return %arg0, %c0_i32, %c0_i32_0 : i32, i32, i32
  }
}

</mosaic_0001>

<llo_original>
// kernel: lenet_forward.1
$region0: #{lenet_forward.1}
  #allocation0 [shape = 'u32[]', space=smem, size = 0x4, offset = 0x4, fixed_abs, tag = 'smem constant byte address 0x4 - core index']
  #allocation1 [shape = 'u32[72,128]{1,0:T(1,128)}', space=vmem, size = 0x9000, scoped, tag = 'internal scratch']
  #allocation2 [shape = 'f32[14,14,6]{2,1,0:T(8,128)}', space=vmem, size = 0x1c000, scoped, tag = 'scratch operand']
  #allocation3 [shape = 'f32[10,10,150]{2,1,0:T(8,128)}', space=vmem, size = 0x28000, scoped, tag = 'scratch operand']
  #allocation4 [shape = 'f32[1,400]{1,0:T(1,128)}', space=vmem, size = 0x800, scoped, tag = 'scratch operand']
  %s0 = inlined_call_operand.vmem [shape: f32[2,784,75], index: 0, kind: input, shape index: {}]
  %s1 = inlined_call_operand.vmem [shape: f32[75,6], index: 1, kind: input, shape index: {}]
  %s2 = inlined_call_operand.vmem [shape: f32[1,6], index: 2, kind: input, shape index: {}]
  %s3 = inlined_call_operand.vmem [shape: f32[150,16], index: 3, kind: input, shape index: {}]
  %s4 = inlined_call_operand.vmem [shape: f32[1,16], index: 4, kind: input, shape index: {}]
  %s5 = inlined_call_operand.vmem [shape: f32[400,120], index: 5, kind: input, shape index: {}]
  %s6 = inlined_call_operand.vmem [shape: f32[1,120], index: 6, kind: input, shape index: {}]
  %s7 = inlined_call_operand.vmem [shape: f32[120,84], index: 7, kind: input, shape index: {}]
  %s8 = inlined_call_operand.vmem [shape: f32[1,84], index: 8, kind: input, shape index: {}]
  %s9 = inlined_call_operand.vmem [shape: f32[84,10], index: 9, kind: input, shape index: {}]
  %s10 = inlined_call_operand.vmem [shape: f32[1,10], index: 10, kind: input, shape index: {}]
  %s11 = inlined_call_operand.hbm [shape: f32[2,1,10], index: 11, kind: output, shape index: {}]
  %s12 = sld [smem:[#allocation0]]
  $region77: #{lenet_forward.1} parent=0
    _
  %s14 = ssub.s32 1, %s12
  %s15 = scalar_select 0, %s14, %s12
  $region1: #{lenet_forward.1} parent=0
    #allocation5 [shape = 'u8[1024]{0}', space=vmem, size = 0x400, scoped, tag = 'output window, operand 0']
    #allocation6 [shape = 's32[2]{0}', space=sflag, size = 0x8, scoped, tag = 'scoped memory for lenet_forward.1']
    %16 = vsyncpa [#allocation6], 0
    %s17 = scalar_lea.sflag [#allocation6], 1
    %18 = vsyncpa %s17, 0
    loop: start=0, step=1, limit=4
    $region2: #{lenet_forward.1} parent=1 // loop_pre_header
      _
    $region3: #{lenet_forward.1} parent=1 // loop_header
      %s20 = sphi 0, %s24
      %p21 = scmp.ge.s32.totalorder %s20, 4
      %s30 = sphi 0, %s32
      %s33 = sphi 0, %s30
      %s34 = sphi 0, %s33
      %s50 = sphi 0, %s34
      %s54 = sphi 0, %s54
      %s56 = sphi 0, %s54
      %s57 = sphi 0, %s56
      %s71 = sphi 0, %s57
      %s75 = sphi 0, %s75
      %s77 = sphi 0, %s75
      %s78 = sphi 0, %s77
      %s92 = sphi 0, %s78
      %s96 = sphi 0, %s96
      %s98 = sphi 0, %s96
      %s99 = sphi 0, %s98
      %s113 = sphi 0, %s99
      %s117 = sphi 0, %s117
      %s119 = sphi 0, %s117
      %s120 = sphi 0, %s119
      %s134 = sphi 0, %s120
      %s138 = sphi 0, %s138
      %s140 = sphi 0, %s138
      %s141 = sphi 0, %s140
      %s155 = sphi 0, %s141
      %s159 = sphi 0, %s159
      %s161 = sphi 0, %s159
      %s162 = sphi 0, %s161
      %s176 = sphi 0, %s162
      %s180 = sphi 0, %s180
      %s182 = sphi 0, %s180
      %s183 = sphi 0, %s182
      %s197 = sphi 0, %s183
      %s201 = sphi 0, %s201
      %s203 = sphi 0, %s201
      %s204 = sphi 0, %s203
      %s218 = sphi 0, %s204
      %s222 = sphi 0, %s222
      %s224 = sphi 0, %s222
      %s225 = sphi 0, %s224
      %s239 = sphi 0, %s225
      %s243 = sphi 0, %s243
      %s245 = sphi 0, %s243
      %s246 = sphi 0, %s245
      %s260 = sphi 0, %s246
      %s266 = sphi 0, %s268
      %s269 = sphi 0, %s266
      %s270 = sphi 0, %s269
      %s286 = sphi 0, %s270
    $region4: #{lenet_forward.1} parent=1 // loop_header_branch
      %23 = sbr.rel (%p21) target = $region8
    $region5: #{lenet_forward.1} parent=1 // loop_body
      %s25 = ssub.s32 %s20, 1
      %s26 = ssub.s32 %s20, 2
      %s27 = sadd.s32 %s20, 1
      %s28 = ssub.s32 %s20, %s27
      %p29 = scmp.eq.s32.totalorder %s28, 0
      %s31 = sadd.s32 %s30, 1
      %s32 = scalar_select %p29, %s30, %s31
      %p35 = pneg %p29
      %p36 = scmp.eq.s32.totalorder %s20, 1
      %p37 = por %p35, %p36
      %p38 = scmp.ne.s32.totalorder %s30, %s33
      %p39 = scmp.eq.s32.totalorder %s20, 0
      %p40 = por %p38, %p39
      %p41 = scmp.ne.s32.totalorder %s30, %s33
      %p42 = scmp.eq.s32.totalorder %s25, 1
      %p43 = por %p41, %p42
      %p44 = scmp.ne.s32.totalorder %s33, %s34
      %p45 = scmp.eq.s32.totalorder %s25, 0
      %p46 = por %p44, %p45
      %p47 = scmp.ne.s32.totalorder %s33, %s34
      %p48 = scmp.eq.s32.totalorder %s26, 1
      %p49 = por %p47, %p48
      %p51 = scmp.ne.s32.totalorder %s34, %s50
      %p52 = scmp.eq.s32.totalorder %s26, 0
      %p53 = por %p51, %p52
      %s55 = sadd.s32 %s54, 1
      %p58 = scmp.eq.s32.totalorder %s20, 1
      %p59 = scmp.ne.s32.totalorder %s54, %s56
      %p60 = scmp.eq.s32.totalorder %s20, 0
      %p61 = por %p59, %p60
      %p62 = scmp.ne.s32.totalorder %s54, %s56
      %p63 = scmp.eq.s32.totalorder %s25, 1
      %p64 = por %p62, %p63
      %p65 = scmp.ne.s32.totalorder %s56, %s57
      %p66 = scmp.eq.s32.totalorder %s25, 0
      %p67 = por %p65, %p66
      %p68 = scmp.ne.s32.totalorder %s56, %s57
      %p69 = scmp.eq.s32.totalorder %s26, 1
      %p70 = por %p68, %p69
      %p72 = scmp.ne.s32.totalorder %s57, %s71
      %p73 = scmp.eq.s32.totalorder %s26, 0
      %p74 = por %p72, %p73
      %s76 = sadd.s32 %s75, 1
      %p79 = scmp.eq.s32.totalorder %s20, 1
      %p80 = scmp.ne.s32.totalorder %s75, %s77
      %p81 = scmp.eq.s32.totalorder %s20, 0
      %p82 = por %p80, %p81
      %p83 = scmp.ne.s32.totalorder %s75, %s77
      %p84 = scmp.eq.s32.totalorder %s25, 1
      %p85 = por %p83, %p84
      %p86 = scmp.ne.s32.totalorder %s77, %s78
      %p87 = scmp.eq.s32.totalorder %s25, 0
      %p88 = por %p86, %p87
      %p89 = scmp.ne.s32.totalorder %s77, %s78
      %p90 = scmp.eq.s32.totalorder %s26, 1
      %p91 = por %p89, %p90
      %p93 = scmp.ne.s32.totalorder %s78, %s92
      %p94 = scmp.eq.s32.totalorder %s26, 0
      %p95 = por %p93, %p94
      %s97 = sadd.s32 %s96, 1
      %p100 = scmp.eq.s32.totalorder %s20, 1
      %p101 = scmp.ne.s32.totalorder %s96, %s98
      %p102 = scmp.eq.s32.totalorder %s20, 0
      %p103 = por %p101, %p102
      %p104 = scmp.ne.s32.totalorder %s96, %s98
      %p105 = scmp.eq.s32.totalorder %s25, 1
      %p106 = por %p104, %p105
      %p107 = scmp.ne.s32.totalorder %s98, %s99
      %p108 = scmp.eq.s32.totalorder %s25, 0
      %p109 = por %p107, %p108
      %p110 = scmp.ne.s32.totalorder %s98, %s99
      %p111 = scmp.eq.s32.totalorder %s26, 1
      %p112 = por %p110, %p111
      %p114 = scmp.ne.s32.totalorder %s99, %s113
      %p115 = scmp.eq.s32.totalorder %s26, 0
      %p116 = por %p114, %p115
      %s118 = sadd.s32 %s117, 1
      %p121 = scmp.eq.s32.totalorder %s20, 1
      %p122 = scmp.ne.s32.totalorder %s117, %s119
      %p123 = scmp.eq.s32.totalorder %s20, 0
      %p124 = por %p122, %p123
      %p125 = scmp.ne.s32.totalorder %s117, %s119
      %p126 = scmp.eq.s32.totalorder %s25, 1
      %p127 = por %p125, %p126
      %p128 = scmp.ne.s32.totalorder %s119, %s120
      %p129 = scmp.eq.s32.totalorder %s25, 0
      %p130 = por %p128, %p129
      %p131 = scmp.ne.s32.totalorder %s119, %s120
      %p132 = scmp.eq.s32.totalorder %s26, 1
      %p133 = por %p131, %p132
      %p135 = scmp.ne.s32.totalorder %s120, %s134
      %p136 = scmp.eq.s32.totalorder %s26, 0
      %p137 = por %p135, %p136
      %s139 = sadd.s32 %s138, 1
      %p142 = scmp.eq.s32.totalorder %s20, 1
      %p143 = scmp.ne.s32.totalorder %s138, %s140
      %p144 = scmp.eq.s32.totalorder %s20, 0
      %p145 = por %p143, %p144
      %p146 = scmp.ne.s32.totalorder %s138, %s140
      %p147 = scmp.eq.s32.totalorder %s25, 1
      %p148 = por %p146, %p147
      %p149 = scmp.ne.s32.totalorder %s140, %s141
      %p150 = scmp.eq.s32.totalorder %s25, 0
      %p151 = por %p149, %p150
      %p152 = scmp.ne.s32.totalorder %s140, %s141
      %p153 = scmp.eq.s32.totalorder %s26, 1
      %p154 = por %p152, %p153
      %p156 = scmp.ne.s32.totalorder %s141, %s155
      %p157 = scmp.eq.s32.totalorder %s26, 0
      %p158 = por %p156, %p157
      %s160 = sadd.s32 %s159, 1
      %p163 = scmp.eq.s32.totalorder %s20, 1
      %p164 = scmp.ne.s32.totalorder %s159, %s161
      %p165 = scmp.eq.s32.totalorder %s20, 0
      %p166 = por %p164, %p165
      %p167 = scmp.ne.s32.totalorder %s159, %s161
      %p168 = scmp.eq.s32.totalorder %s25, 1
      %p169 = por %p167, %p168
      %p170 = scmp.ne.s32.totalorder %s161, %s162
      %p171 = scmp.eq.s32.totalorder %s25, 0
      %p172 = por %p170, %p171
      %p173 = scmp.ne.s32.totalorder %s161, %s162
      %p174 = scmp.eq.s32.totalorder %s26, 1
      %p175 = por %p173, %p174
      %p177 = scmp.ne.s32.totalorder %s162, %s176
      %p178 = scmp.eq.s32.totalorder %s26, 0
      %p179 = por %p177, %p178
      %s181 = sadd.s32 %s180, 1
      %p184 = scmp.eq.s32.totalorder %s20, 1
      %p185 = scmp.ne.s32.totalorder %s180, %s182
      %p186 = scmp.eq.s32.totalorder %s20, 0
      %p187 = por %p185, %p186
      %p188 = scmp.ne.s32.totalorder %s180, %s182
      %p189 = scmp.eq.s32.totalorder %s25, 1
      %p190 = por %p188, %p189
      %p191 = scmp.ne.s32.totalorder %s182, %s183
      %p192 = scmp.eq.s32.totalorder %s25, 0
      %p193 = por %p191, %p192
      %p194 = scmp.ne.s32.totalorder %s182, %s183
      %p195 = scmp.eq.s32.totalorder %s26, 1
      %p196 = por %p194, %p195
      %p198 = scmp.ne.s32.totalorder %s183, %s197
      %p199 = scmp.eq.s32.totalorder %s26, 0
      %p200 = por %p198, %p199
      %s202 = sadd.s32 %s201, 1
      %p205 = scmp.eq.s32.totalorder %s20, 1
      %p206 = scmp.ne.s32.totalorder %s201, %s203
      %p207 = scmp.eq.s32.totalorder %s20, 0
      %p208 = por %p206, %p207
      %p209 = scmp.ne.s32.totalorder %s201, %s203
      %p210 = scmp.eq.s32.totalorder %s25, 1
      %p211 = por %p209, %p210
      %p212 = scmp.ne.s32.totalorder %s203, %s204
      %p213 = scmp.eq.s32.totalorder %s25, 0
      %p214 = por %p212, %p213
      %p215 = scmp.ne.s32.totalorder %s203, %s204
      %p216 = scmp.eq.s32.totalorder %s26, 1
      %p217 = por %p215, %p216
      %p219 = scmp.ne.s32.totalorder %s204, %s218
      %p220 = scmp.eq.s32.totalorder %s26, 0
      %p221 = por %p219, %p220
      %s223 = sadd.s32 %s222, 1
      %p226 = scmp.eq.s32.totalorder %s20, 1
      %p227 = scmp.ne.s32.totalorder %s222, %s224
      %p228 = scmp.eq.s32.totalorder %s20, 0
      %p229 = por %p227, %p228
      %p230 = scmp.ne.s32.totalorder %s222, %s224
      %p231 = scmp.eq.s32.totalorder %s25, 1
      %p232 = por %p230, %p231
      %p233 = scmp.ne.s32.totalorder %s224, %s225
      %p234 = scmp.eq.s32.totalorder %s25, 0
      %p235 = por %p233, %p234
      %p236 = scmp.ne.s32.totalorder %s224, %s225
      %p237 = scmp.eq.s32.totalorder %s26, 1
      %p238 = por %p236, %p237
      %p240 = scmp.ne.s32.totalorder %s225, %s239
      %p241 = scmp.eq.s32.totalorder %s26, 0
      %p242 = por %p240, %p241
      %s244 = sadd.s32 %s243, 1
      %p247 = scmp.eq.s32.totalorder %s20, 1
      %p248 = scmp.ne.s32.totalorder %s243, %s245
      %p249 = scmp.eq.s32.totalorder %s20, 0
      %p250 = por %p248, %p249
      %p251 = scmp.ne.s32.totalorder %s243, %s245
      %p252 = scmp.eq.s32.totalorder %s25, 1
      %p253 = por %p251, %p252
      %p254 = scmp.ne.s32.totalorder %s245, %s246
      %p255 = scmp.eq.s32.totalorder %s25, 0
      %p256 = por %p254, %p255
      %p257 = scmp.ne.s32.totalorder %s245, %s246
      %p258 = scmp.eq.s32.totalorder %s26, 1
      %p259 = por %p257, %p258
      %p261 = scmp.ne.s32.totalorder %s246, %s260
      %p262 = scmp.eq.s32.totalorder %s26, 0
      %p263 = por %p261, %p262
      %s264 = ssub.s32 %s20, %s27
      %p265 = scmp.eq.s32.totalorder %s264, 0
      %s267 = sadd.s32 %s266, 1
      %s268 = scalar_select %p265, %s266, %s267
      %p271 = pneg %p265
      %p272 = scmp.eq.s32.totalorder %s20, 1
      %p273 = por %p271, %p272
      %p274 = scmp.ne.s32.totalorder %s266, %s269
      %p275 = scmp.eq.s32.totalorder %s20, 0
      %p276 = por %p274, %p275
      %p277 = scmp.ne.s32.totalorder %s266, %s269
      %p278 = scmp.eq.s32.totalorder %s25, 1
      %p279 = por %p277, %p278
      %p280 = scmp.ne.s32.totalorder %s269, %s270
      %p281 = scmp.eq.s32.totalorder %s25, 0
      %p282 = por %p280, %p281
      %p283 = scmp.ne.s32.totalorder %s269, %s270
      %p284 = scmp.eq.s32.totalorder %s26, 1
      %p285 = por %p283, %p284
      %p287 = scmp.ne.s32.totalorder %s270, %s286
      %p288 = scmp.eq.s32.totalorder %s26, 0
      %p289 = por %p287, %p288
      %p290 = scmp.le.s32.totalorder 1, %s20
      %p291 = scmp.lt.s32.totalorder %s20, 3
      %p292 = pnand %p290, %p291
      %p293 = pneg %p292
      // Predicated region
      $region9: #{lenet_forward.1} parent=5 // pred_check
        _
      $region10: #{lenet_forward.1} parent=5 // pred_check_branch
        %295 = sbr.rel (%p292) target = $region12
      $region11: #{lenet_forward.1} parent=5 // pred_region
        %s296 = ssub.s32 %s20, 1
        // Predicated region
        $region13: #{lenet_forward.1} parent=11 // pred_check
          %p297 = pneg %p67
        $region14: #{lenet_forward.1} parent=11 // pred_check_branch
          %299 = sbr.rel (%p297) target = $region16
        $region15: #{lenet_forward.1} parent=11 // pred_region
          _
        $region16: #{lenet_forward.1} parent=11 // pred_fallthru
          _
        // Predicated region
        $region17: #{lenet_forward.1} parent=11 // pred_check
          %p300 = pneg %p88
        $region18: #{lenet_forward.1} parent=11 // pred_check_branch
          %302 = sbr.rel (%p300) target = $region20
        $region19: #{lenet_forward.1} parent=11 // pred_region
          _
        $region20: #{lenet_forward.1} parent=11 // pred_fallthru
          _
        // Predicated region
        $region21: #{lenet_forward.1} parent=11 // pred_check
          %p303 = pneg %p109
        $region22: #{lenet_forward.1} parent=11 // pred_check_branch
          %305 = sbr.rel (%p303) target = $region24
        $region23: #{lenet_forward.1} parent=11 // pred_region
          _
        $region24: #{lenet_forward.1} parent=11 // pred_fallthru
          _
        // Predicated region
        $region25: #{lenet_forward.1} parent=11 // pred_check
          %p306 = pneg %p130
        $region26: #{lenet_forward.1} parent=11 // pred_check_branch
          %308 = sbr.rel (%p306) target = $region28
        $region27: #{lenet_forward.1} parent=11 // pred_region
          _
        $region28: #{lenet_forward.1} parent=11 // pred_fallthru
          _
        // Predicated region
        $region29: #{lenet_forward.1} parent=11 // pred_check
          %p309 = pneg %p151
        $region30: #{lenet_forward.1} parent=11 // pred_check_branch
          %311 = sbr.rel (%p309) target = $region32
        $region31: #{lenet_forward.1} parent=11 // pred_region
          _
        $region32: #{lenet_forward.1} parent=11 // pred_fallthru
          _
        // Predicated region
        $region33: #{lenet_forward.1} parent=11 // pred_check
          %p312 = pneg %p172
        $region34: #{lenet_forward.1} parent=11 // pred_check_branch
          %314 = sbr.rel (%p312) target = $region36
        $region35: #{lenet_forward.1} parent=11 // pred_region
          _
        $region36: #{lenet_forward.1} parent=11 // pred_fallthru
          _
        // Predicated region
        $region37: #{lenet_forward.1} parent=11 // pred_check
          %p315 = pneg %p193
        $region38: #{lenet_forward.1} parent=11 // pred_check_branch
          %317 = sbr.rel (%p315) target = $region40
        $region39: #{lenet_forward.1} parent=11 // pred_region
          _
        $region40: #{lenet_forward.1} parent=11 // pred_fallthru
          _
        // Predicated region
        $region41: #{lenet_forward.1} parent=11 // pred_check
          %p318 = pneg %p214
        $region42: #{lenet_forward.1} parent=11 // pred_check_branch
          %320 = sbr.rel (%p318) target = $region44
        $region43: #{lenet_forward.1} parent=11 // pred_region
          _
        $region44: #{lenet_forward.1} parent=11 // pred_fallthru
          _
        // Predicated region
        $region45: #{lenet_forward.1} parent=11 // pred_check
          %p321 = pneg %p235
        $region46: #{lenet_forward.1} parent=11 // pred_check_branch
          %323 = sbr.rel (%p321) target = $region48
        $region47: #{lenet_forward.1} parent=11 // pred_region
          _
        $region48: #{lenet_forward.1} parent=11 // pred_fallthru
          _
        // Predicated region
        $region49: #{lenet_forward.1} parent=11 // pred_check
          %p324 = pneg %p256
        $region50: #{lenet_forward.1} parent=11 // pred_check_branch
          %326 = sbr.rel (%p324) target = $region52
        $region51: #{lenet_forward.1} parent=11 // pred_region
          _
        $region52: #{lenet_forward.1} parent=11 // pred_fallthru
          _
      $region12: #{lenet_forward.1} parent=5 // pred_fallthru
        _
      %p327 = scmp.lt.s32.totalorder %s20, 2
      // Predicated region
      $region53: #{lenet_forward.1} parent=5 // pred_check
        %p328 = pneg %p327
      $region54: #{lenet_forward.1} parent=5 // pred_check_branch
        %330 = sbr.rel (%p328) target = $region56
      $region55: #{lenet_forward.1} parent=5 // pred_region
        // Predicated region
        $region57: #{lenet_forward.1} parent=55 // pred_check
          %p331 = pneg %p40
        $region58: #{lenet_forward.1} parent=55 // pred_check_branch
          %333 = sbr.rel (%p331) target = $region60
        $region59: #{lenet_forward.1} parent=55 // pred_region
          %p334 = scmp.lt.s32.totalorder %s20, 1
          %s335 = scalar_select %p334, %s20, 1
          %s336 = smul.addr %s335, 98
          %s337 = smul.addr %s336, 8
          %s338 = scalar_lea.vmem %s0, %s337
        $region60: #{lenet_forward.1} parent=55 // pred_fallthru
          _
      $region56: #{lenet_forward.1} parent=5 // pred_fallthru
        _
      %p339 = scmp.le.s32.totalorder 1, %s20
      %p340 = scmp.lt.s32.totalorder %s20, 3
      %p341 = pnand %p339, %p340
      %p342 = pneg %p341
      // Predicated region
      $region61: #{lenet_forward.1} parent=5 // pred_check
        _
      $region62: #{lenet_forward.1} parent=5 // pred_check_branch
        %344 = sbr.rel (%p341) target = $region64
      $region63: #{lenet_forward.1} parent=5 // pred_region
        %s345 = ssub.s32 %s20, 1
        %p346 = scmp.lt.s32.totalorder %s25, 1
        %s347 = scalar_select %p346, %s25, 1
        %s348 = smul.addr %s347, 98
        %s349 = smul.addr %s348, 8
        %s350 = scalar_lea.vmem %s0, %s349
        %p351 = pneg %p46
        %p352 = pneg %p43
        %p353 = pneg %p67
        %p354 = pneg %p64
        %p355 = pneg %p88
        %p356 = pneg %p85
        %p357 = pneg %p109
        %p358 = pneg %p106
        %p359 = pneg %p130
        %p360 = pneg %p127
        %p361 = pneg %p151
        %p362 = pneg %p148
        %p363 = pneg %p172
        %p364 = pneg %p169
        %p365 = pneg %p193
        %p366 = pneg %p190
        %p367 = pneg %p214
        %p368 = pneg %p211
        %p369 = pneg %p235
        %p370 = pneg %p232
        %p371 = pneg %p256
        %p372 = pneg %p253
        %p373 = pneg %p282
        %p374 = pneg %p279
        %s375 = sand.u32 %s269, 1
        %s376 = scalar_lea.sflag [#allocation6], %s375
        %s377 = sand.u32 %s269, 1
        %s378 = scalar_lea.vmem [#allocation5], %s377
        %p379 = scmp.lt.s32.totalorder %s25, 1
        %s380 = scalar_select %p379, %s25, 1
        %s381 = smul.addr %s380, 98
        %s382 = smul.addr %s381, 8
        %s383 = scalar_lea.vmem %s0, %s382
        %v384 = vld [vmem:[%s383] sm:$0xff]
        %v385 = vld [vmem:[%s383 + $0x8] sm:$0xff]
        %v386 = vld [vmem:[%s383 + $0x10] sm:$0xff]
        %v387 = vld [vmem:[%s383 + $0x18] sm:$0xff]
        %v388 = vld [vmem:[%s383 + $0x20] sm:$0xff]
        %v389 = vld [vmem:[%s383 + $0x28] sm:$0xff]
        %v390 = vld [vmem:[%s383 + $0x30] sm:$0xff]
        %v391 = vld [vmem:[%s383 + $0x38] sm:$0xff]
        %v392 = vld [vmem:[%s383 + $0x40] sm:$0xff]
        %v393 = vld [vmem:[%s383 + $0x48] sm:$0xff]
        %v394 = vld [vmem:[%s383 + $0x50] sm:$0xff]
        %v395 = vld [vmem:[%s383 + $0x58] sm:$0xff]
        %v396 = vld [vmem:[%s383 + $0x60] sm:$0xff]
        %v397 = vld [vmem:[%s383 + $0x68] sm:$0xff]
        %v398 = vld [vmem:[%s383 + $0x70] sm:$0xff]
        %v399 = vld [vmem:[%s383 + $0x78] sm:$0xff]
        %v400 = vld [vmem:[%s383 + $0x80] sm:$0xff]
        %v401 = vld [vmem:[%s383 + $0x88] sm:$0xff]
        %v402 = vld [vmem:[%s383 + $0x90] sm:$0xff]
        %v403 = vld [vmem:[%s383 + $0x98] sm:$0xff]
        %v404 = vld [vmem:[%s383 + $0xa0] sm:$0xff]
        %v405 = vld [vmem:[%s383 + $0xa8] sm:$0xff]
        %v406 = vld [vmem:[%s383 + $0xb0] sm:$0xff]
        %v407 = vld [vmem:[%s383 + $0xb8] sm:$0xff]
        %v408 = vld [vmem:[%s383 + $0xc0] sm:$0xff]
        %v409 = vld [vmem:[%s383 + $0xc8] sm:$0xff]
        %v410 = vld [vmem:[%s383 + $0xd0] sm:$0xff]
        %v411 = vld [vmem:[%s383 + $0xd8] sm:$0xff]
        %v412 = vld [vmem:[%s383 + $0xe0] sm:$0xff]
        %v413 = vld [vmem:[%s383 + $0xe8] sm:$0xff]
        %v414 = vld [vmem:[%s383 + $0xf0] sm:$0xff]
        %v415 = vld [vmem:[%s383 + $0xf8] sm:$0xff]
        %v416 = vld [vmem:[%s383 + $0x100] sm:$0xff]
        %v417 = vld [vmem:[%s383 + $0x108] sm:$0xff]
        %v418 = vld [vmem:[%s383 + $0x110] sm:$0xff]
        %v419 = vld [vmem:[%s383 + $0x118] sm:$0xff]
        %v420 = vld [vmem:[%s383 + $0x120] sm:$0xff]
        %v421 = vld [vmem:[%s383 + $0x128] sm:$0xff]
        %v422 = vld [vmem:[%s383 + $0x130] sm:$0xff]
        %v423 = vld [vmem:[%s383 + $0x138] sm:$0xff]
        %v424 = vld [vmem:[%s383 + $0x140] sm:$0xff]
        %v425 = vld [vmem:[%s383 + $0x148] sm:$0xff]
        %v426 = vld [vmem:[%s383 + $0x150] sm:$0xff]
        %v427 = vld [vmem:[%s383 + $0x158] sm:$0xff]
        %v428 = vld [vmem:[%s383 + $0x160] sm:$0xff]
        %v429 = vld [vmem:[%s383 + $0x168] sm:$0xff]
        %v430 = vld [vmem:[%s383 + $0x170] sm:$0xff]
        %v431 = vld [vmem:[%s383 + $0x178] sm:$0xff]
        %v432 = vld [vmem:[%s383 + $0x180] sm:$0xff]
        %v433 = vld [vmem:[%s383 + $0x188] sm:$0xff]
        %v434 = vld [vmem:[%s383 + $0x190] sm:$0xff]
        %v435 = vld [vmem:[%s383 + $0x198] sm:$0xff]
        %v436 = vld [vmem:[%s383 + $0x1a0] sm:$0xff]
        %v437 = vld [vmem:[%s383 + $0x1a8] sm:$0xff]
        %v438 = vld [vmem:[%s383 + $0x1b0] sm:$0xff]
        %v439 = vld [vmem:[%s383 + $0x1b8] sm:$0xff]
        %v440 = vld [vmem:[%s383 + $0x1c0] sm:$0xff]
        %v441 = vld [vmem:[%s383 + $0x1c8] sm:$0xff]
        %v442 = vld [vmem:[%s383 + $0x1d0] sm:$0xff]
        %v443 = vld [vmem:[%s383 + $0x1d8] sm:$0xff]
        %v444 = vld [vmem:[%s383 + $0x1e0] sm:$0xff]
        %v445 = vld [vmem:[%s383 + $0x1e8] sm:$0xff]
        %v446 = vld [vmem:[%s383 + $0x1f0] sm:$0xff]
        %v447 = vld [vmem:[%s383 + $0x1f8] sm:$0xff]
        %v448 = vld [vmem:[%s383 + $0x200] sm:$0xff]
        %v449 = vld [vmem:[%s383 + $0x208] sm:$0xff]
        %v450 = vld [vmem:[%s383 + $0x210] sm:$0xff]
        %v451 = vld [vmem:[%s383 + $0x218] sm:$0xff]
        %v452 = vld [vmem:[%s383 + $0x220] sm:$0xff]
        %v453 = vld [vmem:[%s383 + $0x228] sm:$0xff]
        %v454 = vld [vmem:[%s383 + $0x230] sm:$0xff]
        %v455 = vld [vmem:[%s383 + $0x238] sm:$0xff]
        %v456 = vld [vmem:[%s383 + $0x240] sm:$0xff]
        %v457 = vld [vmem:[%s383 + $0x248] sm:$0xff]
        %v458 = vld [vmem:[%s383 + $0x250] sm:$0xff]
        %v459 = vld [vmem:[%s383 + $0x258] sm:$0xff]
        %v460 = vld [vmem:[%s383 + $0x260] sm:$0xff]
        %v461 = vld [vmem:[%s383 + $0x268] sm:$0xff]
        %v462 = vld [vmem:[%s383 + $0x270] sm:$0xff]
        %v463 = vld [vmem:[%s383 + $0x278] sm:$0xff]
        %v464 = vld [vmem:[%s383 + $0x280] sm:$0xff]
        %v465 = vld [vmem:[%s383 + $0x288] sm:$0xff]
        %v466 = vld [vmem:[%s383 + $0x290] sm:$0xff]
        %v467 = vld [vmem:[%s383 + $0x298] sm:$0xff]
        %v468 = vld [vmem:[%s383 + $0x2a0] sm:$0xff]
        %v469 = vld [vmem:[%s383 + $0x2a8] sm:$0xff]
        %v470 = vld [vmem:[%s383 + $0x2b0] sm:$0xff]
        %v471 = vld [vmem:[%s383 + $0x2b8] sm:$0xff]
        %v472 = vld [vmem:[%s383 + $0x2c0] sm:$0xff]
        %v473 = vld [vmem:[%s383 + $0x2c8] sm:$0xff]
        %v474 = vld [vmem:[%s383 + $0x2d0] sm:$0xff]
        %v475 = vld [vmem:[%s383 + $0x2d8] sm:$0xff]
        %v476 = vld [vmem:[%s383 + $0x2e0] sm:$0xff]
        %v477 = vld [vmem:[%s383 + $0x2e8] sm:$0xff]
        %v478 = vld [vmem:[%s383 + $0x2f0] sm:$0xff]
        %v479 = vld [vmem:[%s383 + $0x2f8] sm:$0xff]
        %v480 = vld [vmem:[%s383 + $0x300] sm:$0xff]
        %v481 = vld [vmem:[%s383 + $0x308] sm:$0xff]
        %v482 = vld [vmem:[%s1] sm:$0xff]
        %v483 = vld [vmem:[%s1 + $0x8] sm:$0xff]
        %v484 = vld [vmem:[%s1 + $0x10] sm:$0xff]
        %v485 = vld [vmem:[%s1 + $0x18] sm:$0xff]
        %v486 = vld [vmem:[%s1 + $0x20] sm:$0xff]
        %v487 = vld [vmem:[%s1 + $0x28] sm:$0xff]
        %v488 = vld [vmem:[%s1 + $0x30] sm:$0xff]
        %v489 = vld [vmem:[%s1 + $0x38] sm:$0xff]
        %v490 = vld [vmem:[%s1 + $0x40] sm:$0xff]
        %v491 = vld [vmem:[%s1 + $0x48] sm:$0x7]
        %v492 = vld [vmem:[%s2] sm:$0x1]
        %v494 = vperm.slane %v492, 0
        %vm496 = vcmask 613376
        %v498 = vsel %vm496, %v384, 0
        %v501 = vsel %vm496, %v385, 0
        %v504 = vsel %vm496, %v386, 0
        %v507 = vsel %vm496, %v387, 0
        %v510 = vsel %vm496, %v388, 0
        %v513 = vsel %vm496, %v389, 0
        %v516 = vsel %vm496, %v390, 0
        %v519 = vsel %vm496, %v391, 0
        %v522 = vsel %vm496, %v392, 0
        %v525 = vsel %vm496, %v393, 0
        %v528 = vsel %vm496, %v394, 0
        %v531 = vsel %vm496, %v395, 0
        %v534 = vsel %vm496, %v396, 0
        %v537 = vsel %vm496, %v397, 0
        %v540 = vsel %vm496, %v398, 0
        %v543 = vsel %vm496, %v399, 0
        %v546 = vsel %vm496, %v400, 0
        %v549 = vsel %vm496, %v401, 0
        %v552 = vsel %vm496, %v402, 0
        %v555 = vsel %vm496, %v403, 0
        %v558 = vsel %vm496, %v404, 0
        %v561 = vsel %vm496, %v405, 0
        %v564 = vsel %vm496, %v406, 0
        %v567 = vsel %vm496, %v407, 0
        %v570 = vsel %vm496, %v408, 0
        %v573 = vsel %vm496, %v409, 0
        %v576 = vsel %vm496, %v410, 0
        %v579 = vsel %vm496, %v411, 0
        %v582 = vsel %vm496, %v412, 0
        %v585 = vsel %vm496, %v413, 0
        %v588 = vsel %vm496, %v414, 0
        %v591 = vsel %vm496, %v415, 0
        %v594 = vsel %vm496, %v416, 0
        %v597 = vsel %vm496, %v417, 0
        %v600 = vsel %vm496, %v418, 0
        %v603 = vsel %vm496, %v419, 0
        %v606 = vsel %vm496, %v420, 0
        %v609 = vsel %vm496, %v421, 0
        %v612 = vsel %vm496, %v422, 0
        %v615 = vsel %vm496, %v423, 0
        %v618 = vsel %vm496, %v424, 0
        %v621 = vsel %vm496, %v425, 0
        %v624 = vsel %vm496, %v426, 0
        %v627 = vsel %vm496, %v427, 0
        %v630 = vsel %vm496, %v428, 0
        %v633 = vsel %vm496, %v429, 0
        %v636 = vsel %vm496, %v430, 0
        %v639 = vsel %vm496, %v431, 0
        %v642 = vsel %vm496, %v432, 0
        %v645 = vsel %vm496, %v433, 0
        %v648 = vsel %vm496, %v434, 0
        %v651 = vsel %vm496, %v435, 0
        %v654 = vsel %vm496, %v436, 0
        %v657 = vsel %vm496, %v437, 0
        %v660 = vsel %vm496, %v438, 0
        %v663 = vsel %vm496, %v439, 0
        %v666 = vsel %vm496, %v440, 0
        %v669 = vsel %vm496, %v441, 0
        %v672 = vsel %vm496, %v442, 0
        %v675 = vsel %vm496, %v443, 0
        %v678 = vsel %vm496, %v444, 0
        %v681 = vsel %vm496, %v445, 0
        %v684 = vsel %vm496, %v446, 0
        %v687 = vsel %vm496, %v447, 0
        %v690 = vsel %vm496, %v448, 0
        %v693 = vsel %vm496, %v449, 0
        %v696 = vsel %vm496, %v450, 0
        %v699 = vsel %vm496, %v451, 0
        %v702 = vsel %vm496, %v452, 0
        %v705 = vsel %vm496, %v453, 0
        %v708 = vsel %vm496, %v454, 0
        %v711 = vsel %vm496, %v455, 0
        %v714 = vsel %vm496, %v456, 0
        %v717 = vsel %vm496, %v457, 0
        %v720 = vsel %vm496, %v458, 0
        %v723 = vsel %vm496, %v459, 0
        %v726 = vsel %vm496, %v460, 0
        %v729 = vsel %vm496, %v461, 0
        %v732 = vsel %vm496, %v462, 0
        %v735 = vsel %vm496, %v463, 0
        %v738 = vsel %vm496, %v464, 0
        %v741 = vsel %vm496, %v465, 0
        %v744 = vsel %vm496, %v466, 0
        %v747 = vsel %vm496, %v467, 0
        %v750 = vsel %vm496, %v468, 0
        %v753 = vsel %vm496, %v469, 0
        %v756 = vsel %vm496, %v470, 0
        %v759 = vsel %vm496, %v471, 0
        %v762 = vsel %vm496, %v472, 0
        %v765 = vsel %vm496, %v473, 0
        %v768 = vsel %vm496, %v474, 0
        %v771 = vsel %vm496, %v475, 0
        %v774 = vsel %vm496, %v476, 0
        %v777 = vsel %vm496, %v477, 0
        %v780 = vsel %vm496, %v478, 0
        %v783 = vsel %vm496, %v479, 0
        %v786 = vsel %vm496, %v480, 0
        %v789 = vsel %vm496, %v481, 0
        %vm791 = vcmask 1042432
        %v793 = vsel %vm791, %v491, 0
        %795 = vmatpush.msra.mxu0 0.0
        %796 = vmatpush.msra.mxu0 0.0
        %797 = vmatpush.msra.mxu0 0.0
        %798 = vmatpush.msra.mxu0 0.0
        %799 = vmatpush.msra.mxu0 0.0
        %800 = vmatpush.msra.mxu0 0.0
        %801 = vmatpush.msra.mxu0 %v793
        %802 = vmatpush.msra.mxu0 %v490
        %803 = vmatpush.msra.mxu0 %v489
        %804 = vmatpush.msra.mxu0 %v488
        %805 = vmatpush.msra.mxu0 %v487
        %806 = vmatpush.msra.mxu0 %v486
        %807 = vmatpush.msra.mxu0 %v485
        %808 = vmatpush.msra.mxu0 %v484
        %809 = vmatpush.msra.mxu0 %v483
        %810 = vmatpush.msra.mxu0 %v482
        %811 = vmatmul.f32.gmra.mxu0 %v498
        %v812 = vpop.f32.mrf.mxu0
        %v813 = vadd.f32 %v494, %v812
        %814 = vmatmul.f32.gmra.mxu0 %v501
        %v815 = vpop.f32.mrf.mxu0
        %v816 = vadd.f32 %v494, %v815
        %817 = vmatmul.f32.gmra.mxu0 %v504
        %v818 = vpop.f32.mrf.mxu0
        %v819 = vadd.f32 %v494, %v818
        %820 = vmatmul.f32.gmra.mxu0 %v507
        %v821 = vpop.f32.mrf.mxu0
        %v822 = vadd.f32 %v494, %v821
        %823 = vmatmul.f32.gmra.mxu0 %v510
        %v824 = vpop.f32.mrf.mxu0
        %v825 = vadd.f32 %v494, %v824
        %826 = vmatmul.f32.gmra.mxu0 %v513
        %v827 = vpop.f32.mrf.mxu0
        %v828 = vadd.f32 %v494, %v827
        %829 = vmatmul.f32.gmra.mxu0 %v516
        %v830 = vpop.f32.mrf.mxu0
        %v831 = vadd.f32 %v494, %v830
        %832 = vmatmul.f32.gmra.mxu0 %v519
        %v833 = vpop.f32.mrf.mxu0
        %v834 = vadd.f32 %v494, %v833
        %835 = vmatmul.f32.gmra.mxu0 %v522
        %v836 = vpop.f32.mrf.mxu0
        %v837 = vadd.f32 %v494, %v836
        %838 = vmatmul.f32.gmra.mxu0 %v525
        %v839 = vpop.f32.mrf.mxu0
        %v840 = vadd.f32 %v494, %v839
        %841 = vmatmul.f32.gmra.mxu0 %v528
        %v842 = vpop.f32.mrf.mxu0
        %v843 = vadd.f32 %v494, %v842
        %844 = vmatmul.f32.gmra.mxu0 %v531
        %v845 = vpop.f32.mrf.mxu0
        %v846 = vadd.f32 %v494, %v845
        %847 = vmatmul.f32.gmra.mxu0 %v534
        %v848 = vpop.f32.mrf.mxu0
        %v849 = vadd.f32 %v494, %v848
        %850 = vmatmul.f32.gmra.mxu0 %v537
        %v851 = vpop.f32.mrf.mxu0
        %v852 = vadd.f32 %v494, %v851
        %853 = vmatmul.f32.gmra.mxu0 %v540
        %v854 = vpop.f32.mrf.mxu0
        %v855 = vadd.f32 %v494, %v854
        %856 = vmatmul.f32.gmra.mxu0 %v543
        %v857 = vpop.f32.mrf.mxu0
        %v858 = vadd.f32 %v494, %v857
        %859 = vmatmul.f32.gmra.mxu0 %v546
        %v860 = vpop.f32.mrf.mxu0
        %v861 = vadd.f32 %v494, %v860
        %862 = vmatmul.f32.gmra.mxu0 %v549
        %v863 = vpop.f32.mrf.mxu0
        %v864 = vadd.f32 %v494, %v863
        %865 = vmatmul.f32.gmra.mxu0 %v552
        %v866 = vpop.f32.mrf.mxu0
        %v867 = vadd.f32 %v494, %v866
        %868 = vmatmul.f32.gmra.mxu0 %v555
        %v869 = vpop.f32.mrf.mxu0
        %v870 = vadd.f32 %v494, %v869
        %871 = vmatmul.f32.gmra.mxu0 %v558
        %v872 = vpop.f32.mrf.mxu0
        %v873 = vadd.f32 %v494, %v872
        %874 = vmatmul.f32.gmra.mxu0 %v561
        %v875 = vpop.f32.mrf.mxu0
        %v876 = vadd.f32 %v494, %v875
        %877 = vmatmul.f32.gmra.mxu0 %v564
        %v878 = vpop.f32.mrf.mxu0
        %v879 = vadd.f32 %v494, %v878
        %880 = vmatmul.f32.gmra.mxu0 %v567
        %v881 = vpop.f32.mrf.mxu0
        %v882 = vadd.f32 %v494, %v881
        %883 = vmatmul.f32.gmra.mxu0 %v570
        %v884 = vpop.f32.mrf.mxu0
        %v885 = vadd.f32 %v494, %v884
        %886 = vmatmul.f32.gmra.mxu0 %v573
        %v887 = vpop.f32.mrf.mxu0
        %v888 = vadd.f32 %v494, %v887
        %889 = vmatmul.f32.gmra.mxu0 %v576
        %v890 = vpop.f32.mrf.mxu0
        %v891 = vadd.f32 %v494, %v890
        %892 = vmatmul.f32.gmra.mxu0 %v579
        %v893 = vpop.f32.mrf.mxu0
        %v894 = vadd.f32 %v494, %v893
        %895 = vmatmul.f32.gmra.mxu0 %v582
        %v896 = vpop.f32.mrf.mxu0
        %v897 = vadd.f32 %v494, %v896
        %898 = vmatmul.f32.gmra.mxu0 %v585
        %v899 = vpop.f32.mrf.mxu0
        %v900 = vadd.f32 %v494, %v899
        %901 = vmatmul.f32.gmra.mxu0 %v588
        %v902 = vpop.f32.mrf.mxu0
        %v903 = vadd.f32 %v494, %v902
        %904 = vmatmul.f32.gmra.mxu0 %v591
        %v905 = vpop.f32.mrf.mxu0
        %v906 = vadd.f32 %v494, %v905
        %907 = vmatmul.f32.gmra.mxu0 %v594
        %v908 = vpop.f32.mrf.mxu0
        %v909 = vadd.f32 %v494, %v908
        %910 = vmatmul.f32.gmra.mxu0 %v597
        %v911 = vpop.f32.mrf.mxu0
        %v912 = vadd.f32 %v494, %v911
        %913 = vmatmul.f32.gmra.mxu0 %v600
        %v914 = vpop.f32.mrf.mxu0
        %v915 = vadd.f32 %v494, %v914
        %916 = vmatmul.f32.gmra.mxu0 %v603
        %v917 = vpop.f32.mrf.mxu0
        %v918 = vadd.f32 %v494, %v917
        %919 = vmatmul.f32.gmra.mxu0 %v606
        %v920 = vpop.f32.mrf.mxu0
        %v921 = vadd.f32 %v494, %v920
        %922 = vmatmul.f32.gmra.mxu0 %v609
        %v923 = vpop.f32.mrf.mxu0
        %v924 = vadd.f32 %v494, %v923
        %925 = vmatmul.f32.gmra.mxu0 %v612
        %v926 = vpop.f32.mrf.mxu0
        %v927 = vadd.f32 %v494, %v926
        %928 = vmatmul.f32.gmra.mxu0 %v615
        %v929 = vpop.f32.mrf.mxu0
        %v930 = vadd.f32 %v494, %v929
        %931 = vmatmul.f32.gmra.mxu0 %v618
        %v932 = vpop.f32.mrf.mxu0
        %v933 = vadd.f32 %v494, %v932
        %934 = vmatmul.f32.gmra.mxu0 %v621
        %v935 = vpop.f32.mrf.mxu0
        %v936 = vadd.f32 %v494, %v935
        %937 = vmatmul.f32.gmra.mxu0 %v624
        %v938 = vpop.f32.mrf.mxu0
        %v939 = vadd.f32 %v494, %v938
        %940 = vmatmul.f32.gmra.mxu0 %v627
        %v941 = vpop.f32.mrf.mxu0
        %v942 = vadd.f32 %v494, %v941
        %943 = vmatmul.f32.gmra.mxu0 %v630
        %v944 = vpop.f32.mrf.mxu0
        %v945 = vadd.f32 %v494, %v944
        %946 = vmatmul.f32.gmra.mxu0 %v633
        %v947 = vpop.f32.mrf.mxu0
        %v948 = vadd.f32 %v494, %v947
        %949 = vmatmul.f32.gmra.mxu0 %v636
        %v950 = vpop.f32.mrf.mxu0
        %v951 = vadd.f32 %v494, %v950
        %952 = vmatmul.f32.gmra.mxu0 %v639
        %v953 = vpop.f32.mrf.mxu0
        %v954 = vadd.f32 %v494, %v953
        %955 = vmatmul.f32.gmra.mxu0 %v642
        %v956 = vpop.f32.mrf.mxu0
        %v957 = vadd.f32 %v494, %v956
        %958 = vmatmul.f32.gmra.mxu0 %v645
        %v959 = vpop.f32.mrf.mxu0
        %v960 = vadd.f32 %v494, %v959
        %961 = vmatmul.f32.gmra.mxu0 %v648
        %v962 = vpop.f32.mrf.mxu0
        %v963 = vadd.f32 %v494, %v962
        %964 = vmatmul.f32.gmra.mxu0 %v651
        %v965 = vpop.f32.mrf.mxu0
        %v966 = vadd.f32 %v494, %v965
        %967 = vmatmul.f32.gmra.mxu0 %v654
        %v968 = vpop.f32.mrf.mxu0
        %v969 = vadd.f32 %v494, %v968
        %970 = vmatmul.f32.gmra.mxu0 %v657
        %v971 = vpop.f32.mrf.mxu0
        %v972 = vadd.f32 %v494, %v971
        %973 = vmatmul.f32.gmra.mxu0 %v660
        %v974 = vpop.f32.mrf.mxu0
        %v975 = vadd.f32 %v494, %v974
        %976 = vmatmul.f32.gmra.mxu0 %v663
        %v977 = vpop.f32.mrf.mxu0
        %v978 = vadd.f32 %v494, %v977
        %979 = vmatmul.f32.gmra.mxu0 %v666
        %v980 = vpop.f32.mrf.mxu0
        %v981 = vadd.f32 %v494, %v980
        %982 = vmatmul.f32.gmra.mxu0 %v669
        %v983 = vpop.f32.mrf.mxu0
        %v984 = vadd.f32 %v494, %v983
        %985 = vmatmul.f32.gmra.mxu0 %v672
        %v986 = vpop.f32.mrf.mxu0
        %v987 = vadd.f32 %v494, %v986
        %988 = vmatmul.f32.gmra.mxu0 %v675
        %v989 = vpop.f32.mrf.mxu0
        %v990 = vadd.f32 %v494, %v989
        %991 = vmatmul.f32.gmra.mxu0 %v678
        %v992 = vpop.f32.mrf.mxu0
        %v993 = vadd.f32 %v494, %v992
        %994 = vmatmul.f32.gmra.mxu0 %v681
        %v995 = vpop.f32.mrf.mxu0
        %v996 = vadd.f32 %v494, %v995
        %997 = vmatmul.f32.gmra.mxu0 %v684
        %v998 = vpop.f32.mrf.mxu0
        %v999 = vadd.f32 %v494, %v998
        %1000 = vmatmul.f32.gmra.mxu0 %v687
        %v1001 = vpop.f32.mrf.mxu0
        %v1002 = vadd.f32 %v494, %v1001
        %1003 = vmatmul.f32.gmra.mxu0 %v690
        %v1004 = vpop.f32.mrf.mxu0
        %v1005 = vadd.f32 %v494, %v1004
        %1006 = vmatmul.f32.gmra.mxu0 %v693
        %v1007 = vpop.f32.mrf.mxu0
        %v1008 = vadd.f32 %v494, %v1007
        %1009 = vmatmul.f32.gmra.mxu0 %v696
        %v1010 = vpop.f32.mrf.mxu0
        %v1011 = vadd.f32 %v494, %v1010
        %1012 = vmatmul.f32.gmra.mxu0 %v699
        %v1013 = vpop.f32.mrf.mxu0
        %v1014 = vadd.f32 %v494, %v1013
        %1015 = vmatmul.f32.gmra.mxu0 %v702
        %v1016 = vpop.f32.mrf.mxu0
        %v1017 = vadd.f32 %v494, %v1016
        %1018 = vmatmul.f32.gmra.mxu0 %v705
        %v1019 = vpop.f32.mrf.mxu0
        %v1020 = vadd.f32 %v494, %v1019
        %1021 = vmatmul.f32.gmra.mxu0 %v708
        %v1022 = vpop.f32.mrf.mxu0
        %v1023 = vadd.f32 %v494, %v1022
        %1024 = vmatmul.f32.gmra.mxu0 %v711
        %v1025 = vpop.f32.mrf.mxu0
        %v1026 = vadd.f32 %v494, %v1025
        %1027 = vmatmul.f32.gmra.mxu0 %v714
        %v1028 = vpop.f32.mrf.mxu0
        %v1029 = vadd.f32 %v494, %v1028
        %1030 = vmatmul.f32.gmra.mxu0 %v717
        %v1031 = vpop.f32.mrf.mxu0
        %v1032 = vadd.f32 %v494, %v1031
        %1033 = vmatmul.f32.gmra.mxu0 %v720
        %v1034 = vpop.f32.mrf.mxu0
        %v1035 = vadd.f32 %v494, %v1034
        %1036 = vmatmul.f32.gmra.mxu0 %v723
        %v1037 = vpop.f32.mrf.mxu0
        %v1038 = vadd.f32 %v494, %v1037
        %1039 = vmatmul.f32.gmra.mxu0 %v726
        %v1040 = vpop.f32.mrf.mxu0
        %v1041 = vadd.f32 %v494, %v1040
        %1042 = vmatmul.f32.gmra.mxu0 %v729
        %v1043 = vpop.f32.mrf.mxu0
        %v1044 = vadd.f32 %v494, %v1043
        %1045 = vmatmul.f32.gmra.mxu0 %v732
        %v1046 = vpop.f32.mrf.mxu0
        %v1047 = vadd.f32 %v494, %v1046
        %1048 = vmatmul.f32.gmra.mxu0 %v735
        %v1049 = vpop.f32.mrf.mxu0
        %v1050 = vadd.f32 %v494, %v1049
        %1051 = vmatmul.f32.gmra.mxu0 %v738
        %v1052 = vpop.f32.mrf.mxu0
        %v1053 = vadd.f32 %v494, %v1052
        %1054 = vmatmul.f32.gmra.mxu0 %v741
        %v1055 = vpop.f32.mrf.mxu0
        %v1056 = vadd.f32 %v494, %v1055
        %1057 = vmatmul.f32.gmra.mxu0 %v744
        %v1058 = vpop.f32.mrf.mxu0
        %v1059 = vadd.f32 %v494, %v1058
        %1060 = vmatmul.f32.gmra.mxu0 %v747
        %v1061 = vpop.f32.mrf.mxu0
        %v1062 = vadd.f32 %v494, %v1061
        %1063 = vmatmul.f32.gmra.mxu0 %v750
        %v1064 = vpop.f32.mrf.mxu0
        %v1065 = vadd.f32 %v494, %v1064
        %1066 = vmatmul.f32.gmra.mxu0 %v753
        %v1067 = vpop.f32.mrf.mxu0
        %v1068 = vadd.f32 %v494, %v1067
        %1069 = vmatmul.f32.gmra.mxu0 %v756
        %v1070 = vpop.f32.mrf.mxu0
        %v1071 = vadd.f32 %v494, %v1070
        %1072 = vmatmul.f32.gmra.mxu0 %v759
        %v1073 = vpop.f32.mrf.mxu0
        %v1074 = vadd.f32 %v494, %v1073
        %1075 = vmatmul.f32.gmra.mxu0 %v762
        %v1076 = vpop.f32.mrf.mxu0
        %v1077 = vadd.f32 %v494, %v1076
        %1078 = vmatmul.f32.gmra.mxu0 %v765
        %v1079 = vpop.f32.mrf.mxu0
        %v1080 = vadd.f32 %v494, %v1079
        %1081 = vmatmul.f32.gmra.mxu0 %v768
        %v1082 = vpop.f32.mrf.mxu0
        %v1083 = vadd.f32 %v494, %v1082
        %1084 = vmatmul.f32.gmra.mxu0 %v771
        %v1085 = vpop.f32.mrf.mxu0
        %v1086 = vadd.f32 %v494, %v1085
        %1087 = vmatmul.f32.gmra.mxu0 %v774
        %v1088 = vpop.f32.mrf.mxu0
        %v1089 = vadd.f32 %v494, %v1088
        %1090 = vmatmul.f32.gmra.mxu0 %v777
        %v1091 = vpop.f32.mrf.mxu0
        %v1092 = vadd.f32 %v494, %v1091
        %1093 = vmatmul.f32.gmra.mxu0 %v780
        %v1094 = vpop.f32.mrf.mxu0
        %v1095 = vadd.f32 %v494, %v1094
        %1096 = vmatmul.f32.gmra.mxu0 %v783
        %v1097 = vpop.f32.mrf.mxu0
        %v1098 = vadd.f32 %v494, %v1097
        %1099 = vmatmul.f32.gmra.mxu0 %v786
        %v1100 = vpop.f32.mrf.mxu0
        %v1101 = vadd.f32 %v494, %v1100
        %1102 = vmatmul.f32.gmra.mxu0 %v789
        %v1103 = vpop.f32.mrf.mxu0
        %v1104 = vadd.f32 %v494, %v1103
        %1105 = vdwg.mxu0
        %v1106 = vmax.f32 %v813, 0.0
        %v1107 = vmax.f32 %v816, 0.0
        %v1108 = vmax.f32 %v819, 0.0
        %v1109 = vmax.f32 %v822, 0.0
        %v1110 = vmax.f32 %v825, 0.0
        %v1111 = vmax.f32 %v828, 0.0
        %v1112 = vmax.f32 %v831, 0.0
        %v1113 = vmax.f32 %v834, 0.0
        %v1114 = vmax.f32 %v837, 0.0
        %v1115 = vmax.f32 %v840, 0.0
        %v1116 = vmax.f32 %v843, 0.0
        %v1117 = vmax.f32 %v846, 0.0
        %v1118 = vmax.f32 %v849, 0.0
        %v1119 = vmax.f32 %v852, 0.0
        %v1120 = vmax.f32 %v855, 0.0
        %v1121 = vmax.f32 %v858, 0.0
        %v1122 = vmax.f32 %v861, 0.0
        %v1123 = vmax.f32 %v864, 0.0
        %v1124 = vmax.f32 %v867, 0.0
        %v1125 = vmax.f32 %v870, 0.0
        %v1126 = vmax.f32 %v873, 0.0
        %v1127 = vmax.f32 %v876, 0.0
        %v1128 = vmax.f32 %v879, 0.0
        %v1129 = vmax.f32 %v882, 0.0
        %v1130 = vmax.f32 %v885, 0.0
        %v1131 = vmax.f32 %v888, 0.0
        %v1132 = vmax.f32 %v891, 0.0
        %v1133 = vmax.f32 %v894, 0.0
        %v1134 = vmax.f32 %v897, 0.0
        %v1135 = vmax.f32 %v900, 0.0
        %v1136 = vmax.f32 %v903, 0.0
        %v1137 = vmax.f32 %v906, 0.0
        %v1138 = vmax.f32 %v909, 0.0
        %v1139 = vmax.f32 %v912, 0.0
        %v1140 = vmax.f32 %v915, 0.0
        %v1141 = vmax.f32 %v918, 0.0
        %v1142 = vmax.f32 %v921, 0.0
        %v1143 = vmax.f32 %v924, 0.0
        %v1144 = vmax.f32 %v927, 0.0
        %v1145 = vmax.f32 %v930, 0.0
        %v1146 = vmax.f32 %v933, 0.0
        %v1147 = vmax.f32 %v936, 0.0
        %v1148 = vmax.f32 %v939, 0.0
        %v1149 = vmax.f32 %v942, 0.0
        %v1150 = vmax.f32 %v945, 0.0
        %v1151 = vmax.f32 %v948, 0.0
        %v1152 = vmax.f32 %v951, 0.0
        %v1153 = vmax.f32 %v954, 0.0
        %v1154 = vmax.f32 %v957, 0.0
        %v1155 = vmax.f32 %v960, 0.0
        %v1156 = vmax.f32 %v963, 0.0
        %v1157 = vmax.f32 %v966, 0.0
        %v1158 = vmax.f32 %v969, 0.0
        %v1159 = vmax.f32 %v972, 0.0
        %v1160 = vmax.f32 %v975, 0.0
        %v1161 = vmax.f32 %v978, 0.0
        %v1162 = vmax.f32 %v981, 0.0
        %v1163 = vmax.f32 %v984, 0.0
        %v1164 = vmax.f32 %v987, 0.0
        %v1165 = vmax.f32 %v990, 0.0
        %v1166 = vmax.f32 %v993, 0.0
        %v1167 = vmax.f32 %v996, 0.0
        %v1168 = vmax.f32 %v999, 0.0
        %v1169 = vmax.f32 %v1002, 0.0
        %v1170 = vmax.f32 %v1005, 0.0
        %v1171 = vmax.f32 %v1008, 0.0
        %v1172 = vmax.f32 %v1011, 0.0
        %v1173 = vmax.f32 %v1014, 0.0
        %v1174 = vmax.f32 %v1017, 0.0
        %v1175 = vmax.f32 %v1020, 0.0
        %v1176 = vmax.f32 %v1023, 0.0
        %v1177 = vmax.f32 %v1026, 0.0
        %v1178 = vmax.f32 %v1029, 0.0
        %v1179 = vmax.f32 %v1032, 0.0
        %v1180 = vmax.f32 %v1035, 0.0
        %v1181 = vmax.f32 %v1038, 0.0
        %v1182 = vmax.f32 %v1041, 0.0
        %v1183 = vmax.f32 %v1044, 0.0
        %v1184 = vmax.f32 %v1047, 0.0
        %v1185 = vmax.f32 %v1050, 0.0
        %v1186 = vmax.f32 %v1053, 0.0
        %v1187 = vmax.f32 %v1056, 0.0
        %v1188 = vmax.f32 %v1059, 0.0
        %v1189 = vmax.f32 %v1062, 0.0
        %v1190 = vmax.f32 %v1065, 0.0
        %v1191 = vmax.f32 %v1068, 0.0
        %v1192 = vmax.f32 %v1071, 0.0
        %v1193 = vmax.f32 %v1074, 0.0
        %v1194 = vmax.f32 %v1077, 0.0
        %v1195 = vmax.f32 %v1080, 0.0
        %v1196 = vmax.f32 %v1083, 0.0
        %v1197 = vmax.f32 %v1086, 0.0
        %v1198 = vmax.f32 %v1089, 0.0
        %v1199 = vmax.f32 %v1092, 0.0
        %v1200 = vmax.f32 %v1095, 0.0
        %v1201 = vmax.f32 %v1098, 0.0
        %v1202 = vmax.f32 %v1101, 0.0
        %v1203 = vmax.f32 %v1104, 0.0
        %v1204 = vmax.f32 %v1106, %v1155
        %v1205 = vmax.f32 %v1107, %v1156
        %v1206 = vmax.f32 %v1108, %v1157
        %v1207 = vmax.f32 %v1109, %v1158
        %v1208 = vmax.f32 %v1110, %v1159
        %v1209 = vmax.f32 %v1111, %v1160
        %v1210 = vmax.f32 %v1112, %v1161
        %v1211 = vmax.f32 %v1113, %v1162
        %v1212 = vmax.f32 %v1114, %v1163
        %v1213 = vmax.f32 %v1115, %v1164
        %v1214 = vmax.f32 %v1116, %v1165
        %v1215 = vmax.f32 %v1117, %v1166
        %v1216 = vmax.f32 %v1118, %v1167
        %v1217 = vmax.f32 %v1119, %v1168
        %v1218 = vmax.f32 %v1120, %v1169
        %v1219 = vmax.f32 %v1121, %v1170
        %v1220 = vmax.f32 %v1122, %v1171
        %v1221 = vmax.f32 %v1123, %v1172
        %v1222 = vmax.f32 %v1124, %v1173
        %v1223 = vmax.f32 %v1125, %v1174
        %v1224 = vmax.f32 %v1126, %v1175
        %v1225 = vmax.f32 %v1127, %v1176
        %v1226 = vmax.f32 %v1128, %v1177
        %v1227 = vmax.f32 %v1129, %v1178
        %v1228 = vmax.f32 %v1130, %v1179
        %v1229 = vmax.f32 %v1131, %v1180
        %v1230 = vmax.f32 %v1132, %v1181
        %v1231 = vmax.f32 %v1133, %v1182
        %v1232 = vmax.f32 %v1134, %v1183
        %v1233 = vmax.f32 %v1135, %v1184
        %v1234 = vmax.f32 %v1136, %v1185
        %v1235 = vmax.f32 %v1137, %v1186
        %v1236 = vmax.f32 %v1138, %v1187
        %v1237 = vmax.f32 %v1139, %v1188
        %v1238 = vmax.f32 %v1140, %v1189
        %v1239 = vmax.f32 %v1141, %v1190
        %v1240 = vmax.f32 %v1142, %v1191
        %v1241 = vmax.f32 %v1143, %v1192
        %v1242 = vmax.f32 %v1144, %v1193
        %v1243 = vmax.f32 %v1145, %v1194
        %v1244 = vmax.f32 %v1146, %v1195
        %v1245 = vmax.f32 %v1147, %v1196
        %v1246 = vmax.f32 %v1148, %v1197
        %v1247 = vmax.f32 %v1149, %v1198
        %v1248 = vmax.f32 %v1150, %v1199
        %v1249 = vmax.f32 %v1151, %v1200
        %v1250 = vmax.f32 %v1152, %v1201
        %v1251 = vmax.f32 %v1153, %v1202
        %v1252 = vmax.f32 %v1154, %v1203
        %vm1278 = vcmask 1043456
        %v1279 = vrot.slane %v1228, 4
        %v1280 = vrot.slane %v1229, 4
        %v1281 = vsel %vm1278, %v1279, %v1280
        %v1282 = vrot.slane %v1230, 4
        %v1283 = vsel %vm1278, %v1280, %v1282
        %v1284 = vrot.slane %v1231, 4
        %v1285 = vsel %vm1278, %v1282, %v1284
        %v1286 = vrot.slane %v1232, 4
        %v1287 = vsel %vm1278, %v1284, %v1286
        %v1288 = vrot.slane %v1233, 4
        %v1289 = vsel %vm1278, %v1286, %v1288
        %v1290 = vrot.slane %v1234, 4
        %v1291 = vsel %vm1278, %v1288, %v1290
        %v1292 = vrot.slane %v1235, 4
        %v1293 = vsel %vm1278, %v1290, %v1292
        %v1294 = vrot.slane %v1236, 4
        %v1295 = vsel %vm1278, %v1292, %v1294
        %v1296 = vrot.slane %v1237, 4
        %v1297 = vsel %vm1278, %v1294, %v1296
        %v1298 = vrot.slane %v1238, 4
        %v1299 = vsel %vm1278, %v1296, %v1298
        %v1300 = vrot.slane %v1239, 4
        %v1301 = vsel %vm1278, %v1298, %v1300
        %v1302 = vrot.slane %v1240, 4
        %v1303 = vsel %vm1278, %v1300, %v1302
        %v1304 = vrot.slane %v1241, 4
        %v1305 = vsel %vm1278, %v1302, %v1304
        %v1306 = vrot.slane %v1242, 4
        %v1307 = vsel %vm1278, %v1304, %v1306
        %v1308 = vrot.slane %v1243, 4
        %v1309 = vsel %vm1278, %v1306, %v1308
        %v1310 = vrot.slane %v1244, 4
        %v1311 = vsel %vm1278, %v1308, %v1310
        %v1312 = vrot.slane %v1245, 4
        %v1313 = vsel %vm1278, %v1310, %v1312
        %v1314 = vrot.slane %v1246, 4
        %v1315 = vsel %vm1278, %v1312, %v1314
        %v1316 = vrot.slane %v1247, 4
        %v1317 = vsel %vm1278, %v1314, %v1316
        %v1318 = vrot.slane %v1248, 4
        %v1319 = vsel %vm1278, %v1316, %v1318
        %v1320 = vrot.slane %v1249, 4
        %v1321 = vsel %vm1278, %v1318, %v1320
        %v1322 = vrot.slane %v1250, 4
        %v1323 = vsel %vm1278, %v1320, %v1322
        %v1324 = vrot.slane %v1251, 4
        %v1325 = vsel %vm1278, %v1322, %v1324
        %v1326 = vrot.slane %v1252, 4
        %v1327 = vsel %vm1278, %v1324, %v1326
        %v1353 = vmax.f32 %v1204, %v1281
        %v1354 = vmax.f32 %v1205, %v1283
        %v1355 = vmax.f32 %v1206, %v1285
        %v1356 = vmax.f32 %v1207, %v1287
        %v1357 = vmax.f32 %v1208, %v1289
        %v1358 = vmax.f32 %v1209, %v1291
        %v1359 = vmax.f32 %v1210, %v1293
        %v1360 = vmax.f32 %v1211, %v1295
        %v1361 = vmax.f32 %v1212, %v1297
        %v1362 = vmax.f32 %v1213, %v1299
        %v1363 = vmax.f32 %v1214, %v1301
        %v1364 = vmax.f32 %v1215, %v1303
        %v1365 = vmax.f32 %v1216, %v1305
        %v1366 = vmax.f32 %v1217, %v1307
        %v1367 = vmax.f32 %v1218, %v1309
        %v1368 = vmax.f32 %v1219, %v1311
        %v1369 = vmax.f32 %v1220, %v1313
        %v1370 = vmax.f32 %v1221, %v1315
        %v1371 = vmax.f32 %v1222, %v1317
        %v1372 = vmax.f32 %v1223, %v1319
        %v1373 = vmax.f32 %v1224, %v1321
        %v1374 = vmax.f32 %v1225, %v1323
        %v1375 = vmax.f32 %v1226, %v1325
        %v1376 = vmax.f32 %v1227, %v1327
        %v1377 = vmax.f32 %v1228, %v1326
        %vm1378 = vcmask 48128
        %1379 = vst.msk [vmem:[#allocation2] sm:$0xff] %vm1378, %v1353
        %vm1380 = vcmask 46080
        %1381 = vst.msk [vmem:[#allocation2 + $0x8] sm:$0x3f] %vm1380, %v1354
        %s1382 = scalar_lea.vmem [#allocation2], 16
        %vm1383 = vcmask 48134
        %1384 = vst.msk [vmem:[%s1382 - $0x6] sm:$0xc0] %vm1383, %v1354
        %1385 = vst.msk [vmem:[%s1382 + $0x2] sm:$0xff] %vm1378, %v1355
        %vm1386 = vcmask 44032
        %1387 = vst.msk [vmem:[%s1382 + $0xa] sm:$0xf] %vm1386, %v1356
        %s1388 = scalar_lea.vmem [#allocation2], 32
        %vm1389 = vcmask 48132
        %1390 = vst.msk [vmem:[%s1388 - $0x4] sm:$0xf0] %vm1389, %v1356
        %1391 = vst.msk [vmem:[%s1388 + $0x4] sm:$0xff] %vm1378, %v1357
        %vm1392 = vcmask 41984
        %1393 = vst.msk [vmem:[%s1388 + $0xc] sm:$0x3] %vm1392, %v1358
        %s1394 = scalar_lea.vmem [#allocation2], 48
        %vm1395 = vcmask 48130
        %1396 = vst.msk [vmem:[%s1394 - $0x2] sm:$0xfc] %vm1395, %v1358
        %1397 = vst.msk [vmem:[%s1394 + $0x6] sm:$0xff] %vm1378, %v1359
        %s1398 = scalar_lea.vmem [#allocation2], 64
        %1399 = vst.msk [vmem:[%s1398] sm:$0xff] %vm1378, %v1360
        %1400 = vst.msk [vmem:[%s1398 + $0x8] sm:$0x3f] %vm1380, %v1361
        %s1401 = scalar_lea.vmem [#allocation2], 80
        %1402 = vst.msk [vmem:[%s1401 - $0x6] sm:$0xc0] %vm1383, %v1361
        %1403 = vst.msk [vmem:[%s1401 + $0x2] sm:$0xff] %vm1378, %v1362
        %1404 = vst.msk [vmem:[%s1401 + $0xa] sm:$0xf] %vm1386, %v1363
        %s1405 = scalar_lea.vmem [#allocation2], 96
        %1406 = vst.msk [vmem:[%s1405 - $0x4] sm:$0xf0] %vm1389, %v1363
        %1407 = vst.msk [vmem:[%s1405 + $0x4] sm:$0xff] %vm1378, %v1364
        %1408 = vst.msk [vmem:[%s1405 + $0xc] sm:$0x3] %vm1392, %v1365
        %s1409 = scalar_lea.vmem [#allocation2], 112
        %1410 = vst.msk [vmem:[%s1409 - $0x2] sm:$0xfc] %vm1395, %v1365
        %1411 = vst.msk [vmem:[%s1409 + $0x6] sm:$0xff] %vm1378, %v1366
        %s1412 = scalar_lea.vmem [#allocation2], 128
        %1413 = vst.msk [vmem:[%s1412] sm:$0xff] %vm1378, %v1367
        %1414 = vst.msk [vmem:[%s1412 + $0x8] sm:$0x3f] %vm1380, %v1368
        %s1415 = scalar_lea.vmem [#allocation2], 144
        %1416 = vst.msk [vmem:[%s1415 - $0x6] sm:$0xc0] %vm1383, %v1368
        %1417 = vst.msk [vmem:[%s1415 + $0x2] sm:$0xff] %vm1378, %v1369
        %1418 = vst.msk [vmem:[%s1415 + $0xa] sm:$0xf] %vm1386, %v1370
        %s1419 = scalar_lea.vmem [#allocation2], 160
        %1420 = vst.msk [vmem:[%s1419 - $0x4] sm:$0xf0] %vm1389, %v1370
        %1421 = vst.msk [vmem:[%s1419 + $0x4] sm:$0xff] %vm1378, %v1371
        %1422 = vst.msk [vmem:[%s1419 + $0xc] sm:$0x3] %vm1392, %v1372
        %s1423 = scalar_lea.vmem [#allocation2], 176
        %1424 = vst.msk [vmem:[%s1423 - $0x2] sm:$0xfc] %vm1395, %v1372
        %1425 = vst.msk [vmem:[%s1423 + $0x6] sm:$0xff] %vm1378, %v1373
        %s1426 = scalar_lea.vmem [#allocation2], 192
        %1427 = vst.msk [vmem:[%s1426] sm:$0xff] %vm1378, %v1374
        %1428 = vst.msk [vmem:[%s1426 + $0x8] sm:$0x3f] %vm1380, %v1375
        %s1429 = scalar_lea.vmem [#allocation2], 208
        %1430 = vst.msk [vmem:[%s1429 - $0x6] sm:$0xc0] %vm1383, %v1375
        %1431 = vst.msk [vmem:[%s1429 + $0x2] sm:$0xff] %vm1378, %v1376
        %1432 = vst.msk [vmem:[%s1429 + $0xa] sm:$0xf] %vm1386, %v1377
        %v1433 = vld [vmem:[#allocation2] sm:$0xff]
        %v1434 = vld [vmem:[#allocation2 + $0x8] sm:$0x3]
        %v1435 = vld [vmem:[#allocation2 + $0x10] sm:$0xff]
        %v1436 = vld [vmem:[#allocation2 + $0x18] sm:$0x3]
        %v1437 = vld [vmem:[#allocation2 + $0x20] sm:$0xff]
        %v1438 = vld [vmem:[#allocation2 + $0x28] sm:$0x3]
        %v1439 = vld [vmem:[#allocation2 + $0x30] sm:$0xff]
        %v1440 = vld [vmem:[#allocation2 + $0x38] sm:$0x3]
        %v1441 = vld [vmem:[#allocation2 + $0x40] sm:$0xff]
        %v1442 = vld [vmem:[#allocation2 + $0x48] sm:$0x3]
        %v1443 = vld [vmem:[#allocation2 + $0x50] sm:$0xff]
        %v1444 = vld [vmem:[#allocation2 + $0x58] sm:$0x3]
        %v1445 = vld [vmem:[#allocation2 + $0x60] sm:$0xff]
        %v1446 = vld [vmem:[#allocation2 + $0x68] sm:$0x3]
        %v1447 = vld [vmem:[#allocation2 + $0x70] sm:$0xff]
        %v1448 = vld [vmem:[#allocation2 + $0x78] sm:$0x3]
        %v1449 = vld [vmem:[#allocation2 + $0x80] sm:$0xff]
        %v1450 = vld [vmem:[#allocation2 + $0x88] sm:$0x3]
        %v1451 = vld [vmem:[#allocation2 + $0x90] sm:$0xff]
        %v1452 = vld [vmem:[#allocation2 + $0x98] sm:$0x3]
        %1453 = vst.msk [vmem:[#allocation3] sm:$0xff] %vm1378, %v1433
        %1454 = vst.msk [vmem:[#allocation3 + $0x10] sm:$0x3] %vm1392, %v1434
        %1455 = vst.msk [vmem:[#allocation3 + $0x20] sm:$0xff] %vm1378, %v1435
        %1456 = vst.msk [vmem:[#allocation3 + $0x30] sm:$0x3] %vm1392, %v1436
        %1457 = vst.msk [vmem:[#allocation3 + $0x40] sm:$0xff] %vm1378, %v1437
        %1458 = vst.msk [vmem:[#allocation3 + $0x50] sm:$0x3] %vm1392, %v1438
        %1459 = vst.msk [vmem:[#allocation3 + $0x60] sm:$0xff] %vm1378, %v1439
        %1460 = vst.msk [vmem:[#allocation3 + $0x70] sm:$0x3] %vm1392, %v1440
        %1461 = vst.msk [vmem:[#allocation3 + $0x80] sm:$0xff] %vm1378, %v1441
        %1462 = vst.msk [vmem:[#allocation3 + $0x90] sm:$0x3] %vm1392, %v1442
        %1463 = vst.msk [vmem:[#allocation3 + $0xa0] sm:$0xff] %vm1378, %v1443
        %1464 = vst.msk [vmem:[#allocation3 + $0xb0] sm:$0x3] %vm1392, %v1444
        %1465 = vst.msk [vmem:[#allocation3 + $0xc0] sm:$0xff] %vm1378, %v1445
        %1466 = vst.msk [vmem:[#allocation3 + $0xd0] sm:$0x3] %vm1392, %v1446
        %1467 = vst.msk [vmem:[#allocation3 + $0xe0] sm:$0xff] %vm1378, %v1447
        %1468 = vst.msk [vmem:[#allocation3 + $0xf0] sm:$0x3] %vm1392, %v1448
        %1469 = vst.msk [vmem:[#allocation3 + $0x100] sm:$0xff] %vm1378, %v1449
        %1470 = vst.msk [vmem:[#allocation3 + $0x110] sm:$0x3] %vm1392, %v1450
        %1471 = vst.msk [vmem:[#allocation3 + $0x120] sm:$0xff] %vm1378, %v1451
        %1472 = vst.msk [vmem:[#allocation3 + $0x130] sm:$0x3] %vm1392, %v1452
        %v1473 = vld [vmem:[#allocation2 + $0x1] sm:$0xff]
        %v1474 = vld [vmem:[#allocation2 + $0x9] sm:$0x3]
        %v1475 = vld [vmem:[#allocation2 + $0x11] sm:$0xff]
        %v1476 = vld [vmem:[#allocation2 + $0x19] sm:$0x3]
        %v1477 = vld [vmem:[#allocation2 + $0x21] sm:$0xff]
        %v1478 = vld [vmem:[#allocation2 + $0x29] sm:$0x3]
        %v1479 = vld [vmem:[#allocation2 + $0x31] sm:$0xff]
        %v1480 = vld [vmem:[#allocation2 + $0x39] sm:$0x3]
        %v1481 = vld [vmem:[#allocation2 + $0x41] sm:$0xff]
        %v1482 = vld [vmem:[#allocation2 + $0x49] sm:$0x3]
        %v1483 = vld [vmem:[#allocation2 + $0x51] sm:$0xff]
        %v1484 = vld [vmem:[#allocation2 + $0x59] sm:$0x3]
        %v1485 = vld [vmem:[#allocation2 + $0x61] sm:$0xff]
        %v1486 = vld [vmem:[#allocation2 + $0x69] sm:$0x3]
        %v1487 = vld [vmem:[#allocation2 + $0x71] sm:$0xff]
        %v1488 = vld [vmem:[#allocation2 + $0x79] sm:$0x3]
        %v1489 = vld [vmem:[#allocation2 + $0x81] sm:$0xff]
        %v1490 = vld [vmem:[#allocation2 + $0x89] sm:$0x3]
        %v1491 = vld [vmem:[#allocation2 + $0x91] sm:$0xff]
        %v1492 = vld [vmem:[#allocation2 + $0x99] sm:$0x3]
        %1513 = vrot.lane.b32.xlu0 %v1473, 6
        %v1514 = vpop.permute.xlu0 %1513
        %1515 = vrot.lane.b32.xlu0 %v1474, 6
        %v1516 = vpop.permute.xlu0 %1515
        %1517 = vrot.lane.b32.xlu0 %v1475, 6
        %v1518 = vpop.permute.xlu0 %1517
        %1519 = vrot.lane.b32.xlu0 %v1476, 6
        %v1520 = vpop.permute.xlu0 %1519
        %1521 = vrot.lane.b32.xlu0 %v1477, 6
        %v1522 = vpop.permute.xlu0 %1521
        %1523 = vrot.lane.b32.xlu0 %v1478, 6
        %v1524 = vpop.permute.xlu0 %1523
        %1525 = vrot.lane.b32.xlu0 %v1479, 6
        %v1526 = vpop.permute.xlu0 %1525
        %1527 = vrot.lane.b32.xlu0 %v1480, 6
        %v1528 = vpop.permute.xlu0 %1527
        %1529 = vrot.lane.b32.xlu0 %v1481, 6
        %v1530 = vpop.permute.xlu0 %1529
        %1531 = vrot.lane.b32.xlu0 %v1482, 6
        %v1532 = vpop.permute.xlu0 %1531
        %1533 = vrot.lane.b32.xlu0 %v1483, 6
        %v1534 = vpop.permute.xlu0 %1533
        %1535 = vrot.lane.b32.xlu0 %v1484, 6
        %v1536 = vpop.permute.xlu0 %1535
        %1537 = vrot.lane.b32.xlu0 %v1485, 6
        %v1538 = vpop.permute.xlu0 %1537
        %1539 = vrot.lane.b32.xlu0 %v1486, 6
        %v1540 = vpop.permute.xlu0 %1539
        %1541 = vrot.lane.b32.xlu0 %v1487, 6
        %v1542 = vpop.permute.xlu0 %1541
        %1543 = vrot.lane.b32.xlu0 %v1488, 6
        %v1544 = vpop.permute.xlu0 %1543
        %1545 = vrot.lane.b32.xlu0 %v1489, 6
        %v1546 = vpop.permute.xlu0 %1545
        %1547 = vrot.lane.b32.xlu0 %v1490, 6
        %v1548 = vpop.permute.xlu0 %1547
        %1549 = vrot.lane.b32.xlu0 %v1491, 6
        %v1550 = vpop.permute.xlu0 %1549
        %1551 = vrot.lane.b32.xlu0 %v1492, 6
        %v1552 = vpop.permute.xlu0 %1551
        %vm1573 = vcmask 97328
        %1574 = vst.msk [vmem:[#allocation3] sm:$0xff] %vm1573, %v1514
        %vm1575 = vcmask 91184
        %1576 = vst.msk [vmem:[#allocation3 + $0x10] sm:$0x3] %vm1575, %v1516
        %1577 = vst.msk [vmem:[#allocation3 + $0x20] sm:$0xff] %vm1573, %v1518
        %1578 = vst.msk [vmem:[#allocation3 + $0x30] sm:$0x3] %vm1575, %v1520
        %1579 = vst.msk [vmem:[#allocation3 + $0x40] sm:$0xff] %vm1573, %v1522
        %1580 = vst.msk [vmem:[#allocation3 + $0x50] sm:$0x3] %vm1575, %v1524
        %1581 = vst.msk [vmem:[#allocation3 + $0x60] sm:$0xff] %vm1573, %v1526
        %1582 = vst.msk [vmem:[#allocation3 + $0x70] sm:$0x3] %vm1575, %v1528
        %1583 = vst.msk [vmem:[#allocation3 + $0x80] sm:$0xff] %vm1573, %v1530
        %1584 = vst.msk [vmem:[#allocation3 + $0x90] sm:$0x3] %vm1575, %v1532
        %1585 = vst.msk [vmem:[#allocation3 + $0xa0] sm:$0xff] %vm1573, %v1534
        %1586 = vst.msk [vmem:[#allocation3 + $0xb0] sm:$0x3] %vm1575, %v1536
        %1587 = vst.msk [vmem:[#allocation3 + $0xc0] sm:$0xff] %vm1573, %v1538
        %1588 = vst.msk [vmem:[#allocation3 + $0xd0] sm:$0x3] %vm1575, %v1540
        %1589 = vst.msk [vmem:[#allocation3 + $0xe0] sm:$0xff] %vm1573, %v1542
        %1590 = vst.msk [vmem:[#allocation3 + $0xf0] sm:$0x3] %vm1575, %v1544
        %1591 = vst.msk [vmem:[#allocation3 + $0x100] sm:$0xff] %vm1573, %v1546
        %1592 = vst.msk [vmem:[#allocation3 + $0x110] sm:$0x3] %vm1575, %v1548
        %1593 = vst.msk [vmem:[#allocation3 + $0x120] sm:$0xff] %vm1573, %v1550
        %1594 = vst.msk [vmem:[#allocation3 + $0x130] sm:$0x3] %vm1575, %v1552
        %v1595 = vld [vmem:[#allocation2 + $0x2] sm:$0xff]
        %v1596 = vld [vmem:[#allocation2 + $0xa] sm:$0x3]
        %v1597 = vld [vmem:[#allocation2 + $0x12] sm:$0xff]
        %v1598 = vld [vmem:[#allocation2 + $0x1a] sm:$0x3]
        %v1599 = vld [vmem:[#allocation2 + $0x22] sm:$0xff]
        %v1600 = vld [vmem:[#allocation2 + $0x2a] sm:$0x3]
        %v1601 = vld [vmem:[#allocation2 + $0x32] sm:$0xff]
        %v1602 = vld [vmem:[#allocation2 + $0x3a] sm:$0x3]
        %v1603 = vld [vmem:[#allocation2 + $0x42] sm:$0xff]
        %v1604 = vld [vmem:[#allocation2 + $0x4a] sm:$0x3]
        %v1605 = vld [vmem:[#allocation2 + $0x52] sm:$0xff]
        %v1606 = vld [vmem:[#allocation2 + $0x5a] sm:$0x3]
        %v1607 = vld [vmem:[#allocation2 + $0x62] sm:$0xff]
        %v1608 = vld [vmem:[#allocation2 + $0x6a] sm:$0x3]
        %v1609 = vld [vmem:[#allocation2 + $0x72] sm:$0xff]
        %v1610 = vld [vmem:[#allocation2 + $0x7a] sm:$0x3]
        %v1611 = vld [vmem:[#allocation2 + $0x82] sm:$0xff]
        %v1612 = vld [vmem:[#allocation2 + $0x8a] sm:$0x3]
        %v1613 = vld [vmem:[#allocation2 + $0x92] sm:$0xff]
        %v1614 = vld [vmem:[#allocation2 + $0x9a] sm:$0x3]
        %1635 = vrot.lane.b32.xlu0 %v1595, 12
        %v1636 = vpop.permute.xlu0 %1635
        %1637 = vrot.lane.b32.xlu0 %v1596, 12
        %v1638 = vpop.permute.xlu0 %1637
        %1639 = vrot.lane.b32.xlu0 %v1597, 12
        %v1640 = vpop.permute.xlu0 %1639
        %1641 = vrot.lane.b32.xlu0 %v1598, 12
        %v1642 = vpop.permute.xlu0 %1641
        %1643 = vrot.lane.b32.xlu0 %v1599, 12
        %v1644 = vpop.permute.xlu0 %1643
        %1645 = vrot.lane.b32.xlu0 %v1600, 12
        %v1646 = vpop.permute.xlu0 %1645
        %1647 = vrot.lane.b32.xlu0 %v1601, 12
        %v1648 = vpop.permute.xlu0 %1647
        %1649 = vrot.lane.b32.xlu0 %v1602, 12
        %v1650 = vpop.permute.xlu0 %1649
        %1651 = vrot.lane.b32.xlu0 %v1603, 12
        %v1652 = vpop.permute.xlu0 %1651
        %1653 = vrot.lane.b32.xlu0 %v1604, 12
        %v1654 = vpop.permute.xlu0 %1653
        %1655 = vrot.lane.b32.xlu0 %v1605, 12
        %v1656 = vpop.permute.xlu0 %1655
        %1657 = vrot.lane.b32.xlu0 %v1606, 12
        %v1658 = vpop.permute.xlu0 %1657
        %1659 = vrot.lane.b32.xlu0 %v1607, 12
        %v1660 = vpop.permute.xlu0 %1659
        %1661 = vrot.lane.b32.xlu0 %v1608, 12
        %v1662 = vpop.permute.xlu0 %1661
        %1663 = vrot.lane.b32.xlu0 %v1609, 12
        %v1664 = vpop.permute.xlu0 %1663
        %1665 = vrot.lane.b32.xlu0 %v1610, 12
        %v1666 = vpop.permute.xlu0 %1665
        %1667 = vrot.lane.b32.xlu0 %v1611, 12
        %v1668 = vpop.permute.xlu0 %1667
        %1669 = vrot.lane.b32.xlu0 %v1612, 12
        %v1670 = vpop.permute.xlu0 %1669
        %1671 = vrot.lane.b32.xlu0 %v1613, 12
        %v1672 = vpop.permute.xlu0 %1671
        %1673 = vrot.lane.b32.xlu0 %v1614, 12
        %v1674 = vpop.permute.xlu0 %1673
        %vm1695 = vcmask 146528
        %1696 = vst.msk [vmem:[#allocation3] sm:$0xff] %vm1695, %v1636
        %vm1697 = vcmask 140384
        %1698 = vst.msk [vmem:[#allocation3 + $0x10] sm:$0x3] %vm1697, %v1638
        %1699 = vst.msk [vmem:[#allocation3 + $0x20] sm:$0xff] %vm1695, %v1640
        %1700 = vst.msk [vmem:[#allocation3 + $0x30] sm:$0x3] %vm1697, %v1642
        %1701 = vst.msk [vmem:[#allocation3 + $0x40] sm:$0xff] %vm1695, %v1644
        %1702 = vst.msk [vmem:[#allocation3 + $0x50] sm:$0x3] %vm1697, %v1646
        %1703 = vst.msk [vmem:[#allocation3 + $0x60] sm:$0xff] %vm1695, %v1648
        %1704 = vst.msk [vmem:[#allocation3 + $0x70] sm:$0x3] %vm1697, %v1650
        %1705 = vst.msk [vmem:[#allocation3 + $0x80] sm:$0xff] %vm1695, %v1652
        %1706 = vst.msk [vmem:[#allocation3 + $0x90] sm:$0x3] %vm1697, %v1654
        %1707 = vst.msk [vmem:[#allocation3 + $0xa0] sm:$0xff] %vm1695, %v1656
        %1708 = vst.msk [vmem:[#allocation3 + $0xb0] sm:$0x3] %vm1697, %v1658
        %1709 = vst.msk [vmem:[#allocation3 + $0xc0] sm:$0xff] %vm1695, %v1660
        %1710 = vst.msk [vmem:[#allocation3 + $0xd0] sm:$0x3] %vm1697, %v1662
        %1711 = vst.msk [vmem:[#allocation3 + $0xe0] sm:$0xff] %vm1695, %v1664
        %1712 = vst.msk [vmem:[#allocation3 + $0xf0] sm:$0x3] %vm1697, %v1666
        %1713 = vst.msk [vmem:[#allocation3 + $0x100] sm:$0xff] %vm1695, %v1668
        %1714 = vst.msk [vmem:[#allocation3 + $0x110] sm:$0x3] %vm1697, %v1670
        %1715 = vst.msk [vmem:[#allocation3 + $0x120] sm:$0xff] %vm1695, %v1672
        %1716 = vst.msk [vmem:[#allocation3 + $0x130] sm:$0x3] %vm1697, %v1674
        %v1717 = vld [vmem:[#allocation2 + $0x3] sm:$0xff]
        %v1718 = vld [vmem:[#allocation2 + $0xb] sm:$0x3]
        %v1719 = vld [vmem:[#allocation2 + $0x13] sm:$0xff]
        %v1720 = vld [vmem:[#allocation2 + $0x1b] sm:$0x3]
        %v1721 = vld [vmem:[#allocation2 + $0x23] sm:$0xff]
        %v1722 = vld [vmem:[#allocation2 + $0x2b] sm:$0x3]
        %v1723 = vld [vmem:[#allocation2 + $0x33] sm:$0xff]
        %v1724 = vld [vmem:[#allocation2 + $0x3b] sm:$0x3]
        %v1725 = vld [vmem:[#allocation2 + $0x43] sm:$0xff]
        %v1726 = vld [vmem:[#allocation2 + $0x4b] sm:$0x3]
        %v1727 = vld [vmem:[#allocation2 + $0x53] sm:$0xff]
        %v1728 = vld [vmem:[#allocation2 + $0x5b] sm:$0x3]
        %v1729 = vld [vmem:[#allocation2 + $0x63] sm:$0xff]
        %v1730 = vld [vmem:[#allocation2 + $0x6b] sm:$0x3]
        %v1731 = vld [vmem:[#allocation2 + $0x73] sm:$0xff]
        %v1732 = vld [vmem:[#allocation2 + $0x7b] sm:$0x3]
        %v1733 = vld [vmem:[#allocation2 + $0x83] sm:$0xff]
        %v1734 = vld [vmem:[#allocation2 + $0x8b] sm:$0x3]
        %v1735 = vld [vmem:[#allocation2 + $0x93] sm:$0xff]
        %v1736 = vld [vmem:[#allocation2 + $0x9b] sm:$0x3]
        %1757 = vrot.lane.b32.xlu0 %v1717, 18
        %v1758 = vpop.permute.xlu0 %1757
        %1759 = vrot.lane.b32.xlu0 %v1718, 18
        %v1760 = vpop.permute.xlu0 %1759
        %1761 = vrot.lane.b32.xlu0 %v1719, 18
        %v1762 = vpop.permute.xlu0 %1761
        %1763 = vrot.lane.b32.xlu0 %v1720, 18
        %v1764 = vpop.permute.xlu0 %1763
        %1765 = vrot.lane.b32.xlu0 %v1721, 18
        %v1766 = vpop.permute.xlu0 %1765
        %1767 = vrot.lane.b32.xlu0 %v1722, 18
        %v1768 = vpop.permute.xlu0 %1767
        %1769 = vrot.lane.b32.xlu0 %v1723, 18
        %v1770 = vpop.permute.xlu0 %1769
        %1771 = vrot.lane.b32.xlu0 %v1724, 18
        %v1772 = vpop.permute.xlu0 %1771
        %1773 = vrot.lane.b32.xlu0 %v1725, 18
        %v1774 = vpop.permute.xlu0 %1773
        %1775 = vrot.lane.b32.xlu0 %v1726, 18
        %v1776 = vpop.permute.xlu0 %1775
        %1777 = vrot.lane.b32.xlu0 %v1727, 18
        %v1778 = vpop.permute.xlu0 %1777
        %1779 = vrot.lane.b32.xlu0 %v1728, 18
        %v1780 = vpop.permute.xlu0 %1779
        %1781 = vrot.lane.b32.xlu0 %v1729, 18
        %v1782 = vpop.permute.xlu0 %1781
        %1783 = vrot.lane.b32.xlu0 %v1730, 18
        %v1784 = vpop.permute.xlu0 %1783
        %1785 = vrot.lane.b32.xlu0 %v1731, 18
        %v1786 = vpop.permute.xlu0 %1785
        %1787 = vrot.lane.b32.xlu0 %v1732, 18
        %v1788 = vpop.permute.xlu0 %1787
        %1789 = vrot.lane.b32.xlu0 %v1733, 18
        %v1790 = vpop.permute.xlu0 %1789
        %1791 = vrot.lane.b32.xlu0 %v1734, 18
        %v1792 = vpop.permute.xlu0 %1791
        %1793 = vrot.lane.b32.xlu0 %v1735, 18
        %v1794 = vpop.permute.xlu0 %1793
        %1795 = vrot.lane.b32.xlu0 %v1736, 18
        %v1796 = vpop.permute.xlu0 %1795
        %vm1817 = vcmask 195728
        %1818 = vst.msk [vmem:[#allocation3] sm:$0xff] %vm1817, %v1758
        %vm1819 = vcmask 189584
        %1820 = vst.msk [vmem:[#allocation3 + $0x10] sm:$0x3] %vm1819, %v1760
        %1821 = vst.msk [vmem:[#allocation3 + $0x20] sm:$0xff] %vm1817, %v1762
        %1822 = vst.msk [vmem:[#allocation3 + $0x30] sm:$0x3] %vm1819, %v1764
        %1823 = vst.msk [vmem:[#allocation3 + $0x40] sm:$0xff] %vm1817, %v1766
        %1824 = vst.msk [vmem:[#allocation3 + $0x50] sm:$0x3] %vm1819, %v1768
        %1825 = vst.msk [vmem:[#allocation3 + $0x60] sm:$0xff] %vm1817, %v1770
        %1826 = vst.msk [vmem:[#allocation3 + $0x70] sm:$0x3] %vm1819, %v1772
        %1827 = vst.msk [vmem:[#allocation3 + $0x80] sm:$0xff] %vm1817, %v1774
        %1828 = vst.msk [vmem:[#allocation3 + $0x90] sm:$0x3] %vm1819, %v1776
        %1829 = vst.msk [vmem:[#allocation3 + $0xa0] sm:$0xff] %vm1817, %v1778
        %1830 = vst.msk [vmem:[#allocation3 + $0xb0] sm:$0x3] %vm1819, %v1780
        %1831 = vst.msk [vmem:[#allocation3 + $0xc0] sm:$0xff] %vm1817, %v1782
        %1832 = vst.msk [vmem:[#allocation3 + $0xd0] sm:$0x3] %vm1819, %v1784
        %1833 = vst.msk [vmem:[#allocation3 + $0xe0] sm:$0xff] %vm1817, %v1786
        %1834 = vst.msk [vmem:[#allocation3 + $0xf0] sm:$0x3] %vm1819, %v1788
        %1835 = vst.msk [vmem:[#allocation3 + $0x100] sm:$0xff] %vm1817, %v1790
        %1836 = vst.msk [vmem:[#allocation3 + $0x110] sm:$0x3] %vm1819, %v1792
        %1837 = vst.msk [vmem:[#allocation3 + $0x120] sm:$0xff] %vm1817, %v1794
        %1838 = vst.msk [vmem:[#allocation3 + $0x130] sm:$0x3] %vm1819, %v1796
        %v1839 = vld [vmem:[#allocation2 + $0x4] sm:$0xff]
        %v1840 = vld [vmem:[#allocation2 + $0xc] sm:$0x3]
        %v1841 = vld [vmem:[#allocation2 + $0x14] sm:$0xff]
        %v1842 = vld [vmem:[#allocation2 + $0x1c] sm:$0x3]
        %v1843 = vld [vmem:[#allocation2 + $0x24] sm:$0xff]
        %v1844 = vld [vmem:[#allocation2 + $0x2c] sm:$0x3]
        %v1845 = vld [vmem:[#allocation2 + $0x34] sm:$0xff]
        %v1846 = vld [vmem:[#allocation2 + $0x3c] sm:$0x3]
        %v1847 = vld [vmem:[#allocation2 + $0x44] sm:$0xff]
        %v1848 = vld [vmem:[#allocation2 + $0x4c] sm:$0x3]
        %v1849 = vld [vmem:[#allocation2 + $0x54] sm:$0xff]
        %v1850 = vld [vmem:[#allocation2 + $0x5c] sm:$0x3]
        %v1851 = vld [vmem:[#allocation2 + $0x64] sm:$0xff]
        %v1852 = vld [vmem:[#allocation2 + $0x6c] sm:$0x3]
        %v1853 = vld [vmem:[#allocation2 + $0x74] sm:$0xff]
        %v1854 = vld [vmem:[#allocation2 + $0x7c] sm:$0x3]
        %v1855 = vld [vmem:[#allocation2 + $0x84] sm:$0xff]
        %v1856 = vld [vmem:[#allocation2 + $0x8c] sm:$0x3]
        %v1857 = vld [vmem:[#allocation2 + $0x94] sm:$0xff]
        %v1858 = vld [vmem:[#allocation2 + $0x9c] sm:$0x3]
        %1879 = vrot.lane.b32.xlu0 %v1839, 24
        %v1880 = vpop.permute.xlu0 %1879
        %1881 = vrot.lane.b32.xlu0 %v1840, 24
        %v1882 = vpop.permute.xlu0 %1881
        %1883 = vrot.lane.b32.xlu0 %v1841, 24
        %v1884 = vpop.permute.xlu0 %1883
        %1885 = vrot.lane.b32.xlu0 %v1842, 24
        %v1886 = vpop.permute.xlu0 %1885
        %1887 = vrot.lane.b32.xlu0 %v1843, 24
        %v1888 = vpop.permute.xlu0 %1887
        %1889 = vrot.lane.b32.xlu0 %v1844, 24
        %v1890 = vpop.permute.xlu0 %1889
        %1891 = vrot.lane.b32.xlu0 %v1845, 24
        %v1892 = vpop.permute.xlu0 %1891
        %1893 = vrot.lane.b32.xlu0 %v1846, 24
        %v1894 = vpop.permute.xlu0 %1893
        %1895 = vrot.lane.b32.xlu0 %v1847, 24
        %v1896 = vpop.permute.xlu0 %1895
        %1897 = vrot.lane.b32.xlu0 %v1848, 24
        %v1898 = vpop.permute.xlu0 %1897
        %1899 = vrot.lane.b32.xlu0 %v1849, 24
        %v1900 = vpop.permute.xlu0 %1899
        %1901 = vrot.lane.b32.xlu0 %v1850, 24
        %v1902 = vpop.permute.xlu0 %1901
        %1903 = vrot.lane.b32.xlu0 %v1851, 24
        %v1904 = vpop.permute.xlu0 %1903
        %1905 = vrot.lane.b32.xlu0 %v1852, 24
        %v1906 = vpop.permute.xlu0 %1905
        %1907 = vrot.lane.b32.xlu0 %v1853, 24
        %v1908 = vpop.permute.xlu0 %1907
        %1909 = vrot.lane.b32.xlu0 %v1854, 24
        %v1910 = vpop.permute.xlu0 %1909
        %1911 = vrot.lane.b32.xlu0 %v1855, 24
        %v1912 = vpop.permute.xlu0 %1911
        %1913 = vrot.lane.b32.xlu0 %v1856, 24
        %v1914 = vpop.permute.xlu0 %1913
        %1915 = vrot.lane.b32.xlu0 %v1857, 24
        %v1916 = vpop.permute.xlu0 %1915
        %1917 = vrot.lane.b32.xlu0 %v1858, 24
        %v1918 = vpop.permute.xlu0 %1917
        %vm1939 = vcmask 244928
        %1940 = vst.msk [vmem:[#allocation3] sm:$0xff] %vm1939, %v1880
        %vm1941 = vcmask 238784
        %1942 = vst.msk [vmem:[#allocation3 + $0x10] sm:$0x3] %vm1941, %v1882
        %1943 = vst.msk [vmem:[#allocation3 + $0x20] sm:$0xff] %vm1939, %v1884
        %1944 = vst.msk [vmem:[#allocation3 + $0x30] sm:$0x3] %vm1941, %v1886
        %1945 = vst.msk [vmem:[#allocation3 + $0x40] sm:$0xff] %vm1939, %v1888
        %1946 = vst.msk [vmem:[#allocation3 + $0x50] sm:$0x3] %vm1941, %v1890
        %1947 = vst.msk [vmem:[#allocation3 + $0x60] sm:$0xff] %vm1939, %v1892
        %1948 = vst.msk [vmem:[#allocation3 + $0x70] sm:$0x3] %vm1941, %v1894
        %1949 = vst.msk [vmem:[#allocation3 + $0x80] sm:$0xff] %vm1939, %v1896
        %1950 = vst.msk [vmem:[#allocation3 + $0x90] sm:$0x3] %vm1941, %v1898
        %1951 = vst.msk [vmem:[#allocation3 + $0xa0] sm:$0xff] %vm1939, %v1900
        %1952 = vst.msk [vmem:[#allocation3 + $0xb0] sm:$0x3] %vm1941, %v1902
        %1953 = vst.msk [vmem:[#allocation3 + $0xc0] sm:$0xff] %vm1939, %v1904
        %1954 = vst.msk [vmem:[#allocation3 + $0xd0] sm:$0x3] %vm1941, %v1906
        %1955 = vst.msk [vmem:[#allocation3 + $0xe0] sm:$0xff] %vm1939, %v1908
        %1956 = vst.msk [vmem:[#allocation3 + $0xf0] sm:$0x3] %vm1941, %v1910
        %1957 = vst.msk [vmem:[#allocation3 + $0x100] sm:$0xff] %vm1939, %v1912
        %1958 = vst.msk [vmem:[#allocation3 + $0x110] sm:$0x3] %vm1941, %v1914
        %1959 = vst.msk [vmem:[#allocation3 + $0x120] sm:$0xff] %vm1939, %v1916
        %1960 = vst.msk [vmem:[#allocation3 + $0x130] sm:$0x3] %vm1941, %v1918
        %v1961 = vld [vmem:[%s1382] sm:$0xff]
        %v1962 = vld [vmem:[%s1382 + $0x8] sm:$0x3]
        %v1963 = vld [vmem:[%s1382 + $0x10] sm:$0xff]
        %v1964 = vld [vmem:[%s1382 + $0x18] sm:$0x3]
        %v1965 = vld [vmem:[%s1382 + $0x20] sm:$0xff]
        %v1966 = vld [vmem:[%s1382 + $0x28] sm:$0x3]
        %v1967 = vld [vmem:[%s1382 + $0x30] sm:$0xff]
        %v1968 = vld [vmem:[%s1382 + $0x38] sm:$0x3]
        %v1969 = vld [vmem:[%s1382 + $0x40] sm:$0xff]
        %v1970 = vld [vmem:[%s1382 + $0x48] sm:$0x3]
        %v1971 = vld [vmem:[%s1382 + $0x50] sm:$0xff]
        %v1972 = vld [vmem:[%s1382 + $0x58] sm:$0x3]
        %v1973 = vld [vmem:[%s1382 + $0x60] sm:$0xff]
        %v1974 = vld [vmem:[%s1382 + $0x68] sm:$0x3]
        %v1975 = vld [vmem:[%s1382 + $0x70] sm:$0xff]
        %v1976 = vld [vmem:[%s1382 + $0x78] sm:$0x3]
        %v1977 = vld [vmem:[%s1382 + $0x80] sm:$0xff]
        %v1978 = vld [vmem:[%s1382 + $0x88] sm:$0x3]
        %v1979 = vld [vmem:[%s1382 + $0x90] sm:$0xff]
        %v1980 = vld [vmem:[%s1382 + $0x98] sm:$0x3]
        %2001 = vrot.lane.b32.xlu0 %v1961, 30
        %v2002 = vpop.permute.xlu0 %2001
        %2003 = vrot.lane.b32.xlu0 %v1962, 30
        %v2004 = vpop.permute.xlu0 %2003
        %2005 = vrot.lane.b32.xlu0 %v1963, 30
        %v2006 = vpop.permute.xlu0 %2005
        %2007 = vrot.lane.b32.xlu0 %v1964, 30
        %v2008 = vpop.permute.xlu0 %2007
        %2009 = vrot.lane.b32.xlu0 %v1965, 30
        %v2010 = vpop.permute.xlu0 %2009
        %2011 = vrot.lane.b32.xlu0 %v1966, 30
        %v2012 = vpop.permute.xlu0 %2011
        %2013 = vrot.lane.b32.xlu0 %v1967, 30
        %v2014 = vpop.permute.xlu0 %2013
        %2015 = vrot.lane.b32.xlu0 %v1968, 30
        %v2016 = vpop.permute.xlu0 %2015
        %2017 = vrot.lane.b32.xlu0 %v1969, 30
        %v2018 = vpop.permute.xlu0 %2017
        %2019 = vrot.lane.b32.xlu0 %v1970, 30
        %v2020 = vpop.permute.xlu0 %2019
        %2021 = vrot.lane.b32.xlu0 %v1971, 30
        %v2022 = vpop.permute.xlu0 %2021
        %2023 = vrot.lane.b32.xlu0 %v1972, 30
        %v2024 = vpop.permute.xlu0 %2023
        %2025 = vrot.lane.b32.xlu0 %v1973, 30
        %v2026 = vpop.permute.xlu0 %2025
        %2027 = vrot.lane.b32.xlu0 %v1974, 30
        %v2028 = vpop.permute.xlu0 %2027
        %2029 = vrot.lane.b32.xlu0 %v1975, 30
        %v2030 = vpop.permute.xlu0 %2029
        %2031 = vrot.lane.b32.xlu0 %v1976, 30
        %v2032 = vpop.permute.xlu0 %2031
        %2033 = vrot.lane.b32.xlu0 %v1977, 30
        %v2034 = vpop.permute.xlu0 %2033
        %2035 = vrot.lane.b32.xlu0 %v1978, 30
        %v2036 = vpop.permute.xlu0 %2035
        %2037 = vrot.lane.b32.xlu0 %v1979, 30
        %v2038 = vpop.permute.xlu0 %2037
        %2039 = vrot.lane.b32.xlu0 %v1980, 30
        %v2040 = vpop.permute.xlu0 %2039
        %vm2061 = vcmask 294128
        %2062 = vst.msk [vmem:[#allocation3] sm:$0xff] %vm2061, %v2002
        %vm2063 = vcmask 287984
        %2064 = vst.msk [vmem:[#allocation3 + $0x10] sm:$0x3] %vm2063, %v2004
        %2065 = vst.msk [vmem:[#allocation3 + $0x20] sm:$0xff] %vm2061, %v2006
        %2066 = vst.msk [vmem:[#allocation3 + $0x30] sm:$0x3] %vm2063, %v2008
        %2067 = vst.msk [vmem:[#allocation3 + $0x40] sm:$0xff] %vm2061, %v2010
        %2068 = vst.msk [vmem:[#allocation3 + $0x50] sm:$0x3] %vm2063, %v2012
        %2069 = vst.msk [vmem:[#allocation3 + $0x60] sm:$0xff] %vm2061, %v2014
        %2070 = vst.msk [vmem:[#allocation3 + $0x70] sm:$0x3] %vm2063, %v2016
        %2071 = vst.msk [vmem:[#allocation3 + $0x80] sm:$0xff] %vm2061, %v2018
        %2072 = vst.msk [vmem:[#allocation3 + $0x90] sm:$0x3] %vm2063, %v2020
        %2073 = vst.msk [vmem:[#allocation3 + $0xa0] sm:$0xff] %vm2061, %v2022
        %2074 = vst.msk [vmem:[#allocation3 + $0xb0] sm:$0x3] %vm2063, %v2024
        %2075 = vst.msk [vmem:[#allocation3 + $0xc0] sm:$0xff] %vm2061, %v2026
        %2076 = vst.msk [vmem:[#allocation3 + $0xd0] sm:$0x3] %vm2063, %v2028
        %2077 = vst.msk [vmem:[#allocation3 + $0xe0] sm:$0xff] %vm2061, %v2030
        %2078 = vst.msk [vmem:[#allocation3 + $0xf0] sm:$0x3] %vm2063, %v2032
        %2079 = vst.msk [vmem:[#allocation3 + $0x100] sm:$0xff] %vm2061, %v2034
        %2080 = vst.msk [vmem:[#allocation3 + $0x110] sm:$0x3] %vm2063, %v2036
        %2081 = vst.msk [vmem:[#allocation3 + $0x120] sm:$0xff] %vm2061, %v2038
        %2082 = vst.msk [vmem:[#allocation3 + $0x130] sm:$0x3] %vm2063, %v2040
        %v2083 = vld [vmem:[%s1382 + $0x1] sm:$0xff]
        %v2084 = vld [vmem:[%s1382 + $0x9] sm:$0x3]
        %v2085 = vld [vmem:[%s1382 + $0x11] sm:$0xff]
        %v2086 = vld [vmem:[%s1382 + $0x19] sm:$0x3]
        %v2087 = vld [vmem:[%s1382 + $0x21] sm:$0xff]
        %v2088 = vld [vmem:[%s1382 + $0x29] sm:$0x3]
        %v2089 = vld [vmem:[%s1382 + $0x31] sm:$0xff]
        %v2090 = vld [vmem:[%s1382 + $0x39] sm:$0x3]
        %v2091 = vld [vmem:[%s1382 + $0x41] sm:$0xff]
        %v2092 = vld [vmem:[%s1382 + $0x49] sm:$0x3]
        %v2093 = vld [vmem:[%s1382 + $0x51] sm:$0xff]
        %v2094 = vld [vmem:[%s1382 + $0x59] sm:$0x3]
        %v2095 = vld [vmem:[%s1382 + $0x61] sm:$0xff]
        %v2096 = vld [vmem:[%s1382 + $0x69] sm:$0x3]
        %v2097 = vld [vmem:[%s1382 + $0x71] sm:$0xff]
        %v2098 = vld [vmem:[%s1382 + $0x79] sm:$0x3]
        %v2099 = vld [vmem:[%s1382 + $0x81] sm:$0xff]
        %v2100 = vld [vmem:[%s1382 + $0x89] sm:$0x3]
        %v2101 = vld [vmem:[%s1382 + $0x91] sm:$0xff]
        %v2102 = vld [vmem:[%s1382 + $0x99] sm:$0x3]
        %2123 = vrot.lane.b32.xlu0 %v2083, 36
        %v2124 = vpop.permute.xlu0 %2123
        %2125 = vrot.lane.b32.xlu0 %v2084, 36
        %v2126 = vpop.permute.xlu0 %2125
        %2127 = vrot.lane.b32.xlu0 %v2085, 36
        %v2128 = vpop.permute.xlu0 %2127
        %2129 = vrot.lane.b32.xlu0 %v2086, 36
        %v2130 = vpop.permute.xlu0 %2129
        %2131 = vrot.lane.b32.xlu0 %v2087, 36
        %v2132 = vpop.permute.xlu0 %2131
        %2133 = vrot.lane.b32.xlu0 %v2088, 36
        %v2134 = vpop.permute.xlu0 %2133
        %2135 = vrot.lane.b32.xlu0 %v2089, 36
        %v2136 = vpop.permute.xlu0 %2135
        %2137 = vrot.lane.b32.xlu0 %v2090, 36
        %v2138 = vpop.permute.xlu0 %2137
        %2139 = vrot.lane.b32.xlu0 %v2091, 36
        %v2140 = vpop.permute.xlu0 %2139
        %2141 = vrot.lane.b32.xlu0 %v2092, 36
        %v2142 = vpop.permute.xlu0 %2141
        %2143 = vrot.lane.b32.xlu0 %v2093, 36
        %v2144 = vpop.permute.xlu0 %2143
        %2145 = vrot.lane.b32.xlu0 %v2094, 36
        %v2146 = vpop.permute.xlu0 %2145
        %2147 = vrot.lane.b32.xlu0 %v2095, 36
        %v2148 = vpop.permute.xlu0 %2147
        %2149 = vrot.lane.b32.xlu0 %v2096, 36
        %v2150 = vpop.permute.xlu0 %2149
        %2151 = vrot.lane.b32.xlu0 %v2097, 36
        %v2152 = vpop.permute.xlu0 %2151
        %2153 = vrot.lane.b32.xlu0 %v2098, 36
        %v2154 = vpop.permute.xlu0 %2153
        %2155 = vrot.lane.b32.xlu0 %v2099, 36
        %v2156 = vpop.permute.xlu0 %2155
        %2157 = vrot.lane.b32.xlu0 %v2100, 36
        %v2158 = vpop.permute.xlu0 %2157
        %2159 = vrot.lane.b32.xlu0 %v2101, 36
        %v2160 = vpop.permute.xlu0 %2159
        %2161 = vrot.lane.b32.xlu0 %v2102, 36
        %v2162 = vpop.permute.xlu0 %2161
        %vm2183 = vcmask 343328
        %2184 = vst.msk [vmem:[#allocation3] sm:$0xff] %vm2183, %v2124
        %vm2185 = vcmask 337184
        %2186 = vst.msk [vmem:[#allocation3 + $0x10] sm:$0x3] %vm2185, %v2126
        %2187 = vst.msk [vmem:[#allocation3 + $0x20] sm:$0xff] %vm2183, %v2128
        %2188 = vst.msk [vmem:[#allocation3 + $0x30] sm:$0x3] %vm2185, %v2130
        %2189 = vst.msk [vmem:[#allocation3 + $0x40] sm:$0xff] %vm2183, %v2132
        %2190 = vst.msk [vmem:[#allocation3 + $0x50] sm:$0x3] %vm2185, %v2134
        %2191 = vst.msk [vmem:[#allocation3 + $0x60] sm:$0xff] %vm2183, %v2136
        %2192 = vst.msk [vmem:[#allocation3 + $0x70] sm:$0x3] %vm2185, %v2138
        %2193 = vst.msk [vmem:[#allocation3 + $0x80] sm:$0xff] %vm2183, %v2140
        %2194 = vst.msk [vmem:[#allocation3 + $0x90] sm:$0x3] %vm2185, %v2142
        %2195 = vst.msk [vmem:[#allocation3 + $0xa0] sm:$0xff] %vm2183, %v2144
        %2196 = vst.msk [vmem:[#allocation3 + $0xb0] sm:$0x3] %vm2185, %v2146
        %2197 = vst.msk [vmem:[#allocation3 + $0xc0] sm:$0xff] %vm2183, %v2148
        %2198 = vst.msk [vmem:[#allocation3 + $0xd0] sm:$0x3] %vm2185, %v2150
        %2199 = vst.msk [vmem:[#allocation3 + $0xe0] sm:$0xff] %vm2183, %v2152
        %2200 = vst.msk [vmem:[#allocation3 + $0xf0] sm:$0x3] %vm2185, %v2154
        %2201 = vst.msk [vmem:[#allocation3 + $0x100] sm:$0xff] %vm2183, %v2156
        %2202 = vst.msk [vmem:[#allocation3 + $0x110] sm:$0x3] %vm2185, %v2158
        %2203 = vst.msk [vmem:[#allocation3 + $0x120] sm:$0xff] %vm2183, %v2160
        %2204 = vst.msk [vmem:[#allocation3 + $0x130] sm:$0x3] %vm2185, %v2162
        %v2205 = vld [vmem:[%s1382 + $0x2] sm:$0xff]
        %v2206 = vld [vmem:[%s1382 + $0xa] sm:$0x3]
        %v2207 = vld [vmem:[%s1382 + $0x12] sm:$0xff]
        %v2208 = vld [vmem:[%s1382 + $0x1a] sm:$0x3]
        %v2209 = vld [vmem:[%s1382 + $0x22] sm:$0xff]
        %v2210 = vld [vmem:[%s1382 + $0x2a] sm:$0x3]
        %v2211 = vld [vmem:[%s1382 + $0x32] sm:$0xff]
        %v2212 = vld [vmem:[%s1382 + $0x3a] sm:$0x3]
        %v2213 = vld [vmem:[%s1382 + $0x42] sm:$0xff]
        %v2214 = vld [vmem:[%s1382 + $0x4a] sm:$0x3]
        %v2215 = vld [vmem:[%s1382 + $0x52] sm:$0xff]
        %v2216 = vld [vmem:[%s1382 + $0x5a] sm:$0x3]
        %v2217 = vld [vmem:[%s1382 + $0x62] sm:$0xff]
        %v2218 = vld [vmem:[%s1382 + $0x6a] sm:$0x3]
        %v2219 = vld [vmem:[%s1382 + $0x72] sm:$0xff]
        %v2220 = vld [vmem:[%s1382 + $0x7a] sm:$0x3]
        %v2221 = vld [vmem:[%s1382 + $0x82] sm:$0xff]
        %v2222 = vld [vmem:[%s1382 + $0x8a] sm:$0x3]
        %v2223 = vld [vmem:[%s1382 + $0x92] sm:$0xff]
        %v2224 = vld [vmem:[%s1382 + $0x9a] sm:$0x3]
        %2245 = vrot.lane.b32.xlu0 %v2205, 42
        %v2246 = vpop.permute.xlu0 %2245
        %2247 = vrot.lane.b32.xlu0 %v2206, 42
        %v2248 = vpop.permute.xlu0 %2247
        %2249 = vrot.lane.b32.xlu0 %v2207, 42
        %v2250 = vpop.permute.xlu0 %2249
        %2251 = vrot.lane.b32.xlu0 %v2208, 42
        %v2252 = vpop.permute.xlu0 %2251
        %2253 = vrot.lane.b32.xlu0 %v2209, 42
        %v2254 = vpop.permute.xlu0 %2253
        %2255 = vrot.lane.b32.xlu0 %v2210, 42
        %v2256 = vpop.permute.xlu0 %2255
        %2257 = vrot.lane.b32.xlu0 %v2211, 42
        %v2258 = vpop.permute.xlu0 %2257
        %2259 = vrot.lane.b32.xlu0 %v2212, 42
        %v2260 = vpop.permute.xlu0 %2259
        %2261 = vrot.lane.b32.xlu0 %v2213, 42
        %v2262 = vpop.permute.xlu0 %2261
        %2263 = vrot.lane.b32.xlu0 %v2214, 42
        %v2264 = vpop.permute.xlu0 %2263
        %2265 = vrot.lane.b32.xlu0 %v2215, 42
        %v2266 = vpop.permute.xlu0 %2265
        %2267 = vrot.lane.b32.xlu0 %v2216, 42
        %v2268 = vpop.permute.xlu0 %2267
        %2269 = vrot.lane.b32.xlu0 %v2217, 42
        %v2270 = vpop.permute.xlu0 %2269
        %2271 = vrot.lane.b32.xlu0 %v2218, 42
        %v2272 = vpop.permute.xlu0 %2271
        %2273 = vrot.lane.b32.xlu0 %v2219, 42
        %v2274 = vpop.permute.xlu0 %2273
        %2275 = vrot.lane.b32.xlu0 %v2220, 42
        %v2276 = vpop.permute.xlu0 %2275
        %2277 = vrot.lane.b32.xlu0 %v2221, 42
        %v2278 = vpop.permute.xlu0 %2277
        %2279 = vrot.lane.b32.xlu0 %v2222, 42
        %v2280 = vpop.permute.xlu0 %2279
        %2281 = vrot.lane.b32.xlu0 %v2223, 42
        %v2282 = vpop.permute.xlu0 %2281
        %2283 = vrot.lane.b32.xlu0 %v2224, 42
        %v2284 = vpop.permute.xlu0 %2283
        %vm2305 = vcmask 392528
        %2306 = vst.msk [vmem:[#allocation3] sm:$0xff] %vm2305, %v2246
        %vm2307 = vcmask 386384
        %2308 = vst.msk [vmem:[#allocation3 + $0x10] sm:$0x3] %vm2307, %v2248
        %2309 = vst.msk [vmem:[#allocation3 + $0x20] sm:$0xff] %vm2305, %v2250
        %2310 = vst.msk [vmem:[#allocation3 + $0x30] sm:$0x3] %vm2307, %v2252
        %2311 = vst.msk [vmem:[#allocation3 + $0x40] sm:$0xff] %vm2305, %v2254
        %2312 = vst.msk [vmem:[#allocation3 + $0x50] sm:$0x3] %vm2307, %v2256
        %2313 = vst.msk [vmem:[#allocation3 + $0x60] sm:$0xff] %vm2305, %v2258
        %2314 = vst.msk [vmem:[#allocation3 + $0x70] sm:$0x3] %vm2307, %v2260
        %2315 = vst.msk [vmem:[#allocation3 + $0x80] sm:$0xff] %vm2305, %v2262
        %2316 = vst.msk [vmem:[#allocation3 + $0x90] sm:$0x3] %vm2307, %v2264
        %2317 = vst.msk [vmem:[#allocation3 + $0xa0] sm:$0xff] %vm2305, %v2266
        %2318 = vst.msk [vmem:[#allocation3 + $0xb0] sm:$0x3] %vm2307, %v2268
        %2319 = vst.msk [vmem:[#allocation3 + $0xc0] sm:$0xff] %vm2305, %v2270
        %2320 = vst.msk [vmem:[#allocation3 + $0xd0] sm:$0x3] %vm2307, %v2272
        %2321 = vst.msk [vmem:[#allocation3 + $0xe0] sm:$0xff] %vm2305, %v2274
        %2322 = vst.msk [vmem:[#allocation3 + $0xf0] sm:$0x3] %vm2307, %v2276
        %2323 = vst.msk [vmem:[#allocation3 + $0x100] sm:$0xff] %vm2305, %v2278
        %2324 = vst.msk [vmem:[#allocation3 + $0x110] sm:$0x3] %vm2307, %v2280
        %2325 = vst.msk [vmem:[#allocation3 + $0x120] sm:$0xff] %vm2305, %v2282
        %2326 = vst.msk [vmem:[#allocation3 + $0x130] sm:$0x3] %vm2307, %v2284
        %v2327 = vld [vmem:[%s1382 + $0x3] sm:$0xff]
        %v2328 = vld [vmem:[%s1382 + $0xb] sm:$0x3]
        %v2329 = vld [vmem:[%s1382 + $0x13] sm:$0xff]
        %v2330 = vld [vmem:[%s1382 + $0x1b] sm:$0x3]
        %v2331 = vld [vmem:[%s1382 + $0x23] sm:$0xff]
        %v2332 = vld [vmem:[%s1382 + $0x2b] sm:$0x3]
        %v2333 = vld [vmem:[%s1382 + $0x33] sm:$0xff]
        %v2334 = vld [vmem:[%s1382 + $0x3b] sm:$0x3]
        %v2335 = vld [vmem:[%s1382 + $0x43] sm:$0xff]
        %v2336 = vld [vmem:[%s1382 + $0x4b] sm:$0x3]
        %v2337 = vld [vmem:[%s1382 + $0x53] sm:$0xff]
        %v2338 = vld [vmem:[%s1382 + $0x5b] sm:$0x3]
        %v2339 = vld [vmem:[%s1382 + $0x63] sm:$0xff]
        %v2340 = vld [vmem:[%s1382 + $0x6b] sm:$0x3]
        %v2341 = vld [vmem:[%s1382 + $0x73] sm:$0xff]
        %v2342 = vld [vmem:[%s1382 + $0x7b] sm:$0x3]
        %v2343 = vld [vmem:[%s1382 + $0x83] sm:$0xff]
        %v2344 = vld [vmem:[%s1382 + $0x8b] sm:$0x3]
        %v2345 = vld [vmem:[%s1382 + $0x93] sm:$0xff]
        %v2346 = vld [vmem:[%s1382 + $0x9b] sm:$0x3]
        %2367 = vrot.lane.b32.xlu0 %v2327, 48
        %v2368 = vpop.permute.xlu0 %2367
        %2369 = vrot.lane.b32.xlu0 %v2328, 48
        %v2370 = vpop.permute.xlu0 %2369
        %2371 = vrot.lane.b32.xlu0 %v2329, 48
        %v2372 = vpop.permute.xlu0 %2371
        %2373 = vrot.lane.b32.xlu0 %v2330, 48
        %v2374 = vpop.permute.xlu0 %2373
        %2375 = vrot.lane.b32.xlu0 %v2331, 48
        %v2376 = vpop.permute.xlu0 %2375
        %2377 = vrot.lane.b32.xlu0 %v2332, 48
        %v2378 = vpop.permute.xlu0 %2377
        %2379 = vrot.lane.b32.xlu0 %v2333, 48
        %v2380 = vpop.permute.xlu0 %2379
        %2381 = vrot.lane.b32.xlu0 %v2334, 48
        %v2382 = vpop.permute.xlu0 %2381
        %2383 = vrot.lane.b32.xlu0 %v2335, 48
        %v2384 = vpop.permute.xlu0 %2383
        %2385 = vrot.lane.b32.xlu0 %v2336, 48
        %v2386 = vpop.permute.xlu0 %2385
        %2387 = vrot.lane.b32.xlu0 %v2337, 48
        %v2388 = vpop.permute.xlu0 %2387
        %2389 = vrot.lane.b32.xlu0 %v2338, 48
        %v2390 = vpop.permute.xlu0 %2389
        %2391 = vrot.lane.b32.xlu0 %v2339, 48
        %v2392 = vpop.permute.xlu0 %2391
        %2393 = vrot.lane.b32.xlu0 %v2340, 48
        %v2394 = vpop.permute.xlu0 %2393
        %2395 = vrot.lane.b32.xlu0 %v2341, 48
        %v2396 = vpop.permute.xlu0 %2395
        %2397 = vrot.lane.b32.xlu0 %v2342, 48
        %v2398 = vpop.permute.xlu0 %2397
        %2399 = vrot.lane.b32.xlu0 %v2343, 48
        %v2400 = vpop.permute.xlu0 %2399
        %2401 = vrot.lane.b32.xlu0 %v2344, 48
        %v2402 = vpop.permute.xlu0 %2401
        %2403 = vrot.lane.b32.xlu0 %v2345, 48
        %v2404 = vpop.permute.xlu0 %2403
        %2405 = vrot.lane.b32.xlu0 %v2346, 48
        %v2406 = vpop.permute.xlu0 %2405
        %vm2427 = vcmask 441728
        %2428 = vst.msk [vmem:[#allocation3] sm:$0xff] %vm2427, %v2368
        %vm2429 = vcmask 435584
        %2430 = vst.msk [vmem:[#allocation3 + $0x10] sm:$0x3] %vm2429, %v2370
        %2431 = vst.msk [vmem:[#allocation3 + $0x20] sm:$0xff] %vm2427, %v2372
        %2432 = vst.msk [vmem:[#allocation3 + $0x30] sm:$0x3] %vm2429, %v2374
        %2433 = vst.msk [vmem:[#allocation3 + $0x40] sm:$0xff] %vm2427, %v2376
        %2434 = vst.msk [vmem:[#allocation3 + $0x50] sm:$0x3] %vm2429, %v2378
        %2435 = vst.msk [vmem:[#allocation3 + $0x60] sm:$0xff] %vm2427, %v2380
        %2436 = vst.msk [vmem:[#allocation3 + $0x70] sm:$0x3] %vm2429, %v2382
        %2437 = vst.msk [vmem:[#allocation3 + $0x80] sm:$0xff] %vm2427, %v2384
        %2438 = vst.msk [vmem:[#allocation3 + $0x90] sm:$0x3] %vm2429, %v2386
        %2439 = vst.msk [vmem:[#allocation3 + $0xa0] sm:$0xff] %vm2427, %v2388
        %2440 = vst.msk [vmem:[#allocation3 + $0xb0] sm:$0x3] %vm2429, %v2390
        %2441 = vst.msk [vmem:[#allocation3 + $0xc0] sm:$0xff] %vm2427, %v2392
        %2442 = vst.msk [vmem:[#allocation3 + $0xd0] sm:$0x3] %vm2429, %v2394
        %2443 = vst.msk [vmem:[#allocation3 + $0xe0] sm:$0xff] %vm2427, %v2396
        %2444 = vst.msk [vmem:[#allocation3 + $0xf0] sm:$0x3] %vm2429, %v2398
        %2445 = vst.msk [vmem:[#allocation3 + $0x100] sm:$0xff] %vm2427, %v2400
        %2446 = vst.msk [vmem:[#allocation3 + $0x110] sm:$0x3] %vm2429, %v2402
        %2447 = vst.msk [vmem:[#allocation3 + $0x120] sm:$0xff] %vm2427, %v2404
        %2448 = vst.msk [vmem:[#allocation3 + $0x130] sm:$0x3] %vm2429, %v2406
        %v2449 = vld [vmem:[%s1382 + $0x4] sm:$0xff]
        %v2450 = vld [vmem:[%s1382 + $0xc] sm:$0x3]
        %v2451 = vld [vmem:[%s1382 + $0x14] sm:$0xff]
        %v2452 = vld [vmem:[%s1382 + $0x1c] sm:$0x3]
        %v2453 = vld [vmem:[%s1382 + $0x24] sm:$0xff]
        %v2454 = vld [vmem:[%s1382 + $0x2c] sm:$0x3]
        %v2455 = vld [vmem:[%s1382 + $0x34] sm:$0xff]
        %v2456 = vld [vmem:[%s1382 + $0x3c] sm:$0x3]
        %v2457 = vld [vmem:[%s1382 + $0x44] sm:$0xff]
        %v2458 = vld [vmem:[%s1382 + $0x4c] sm:$0x3]
        %v2459 = vld [vmem:[%s1382 + $0x54] sm:$0xff]
        %v2460 = vld [vmem:[%s1382 + $0x5c] sm:$0x3]
        %v2461 = vld [vmem:[%s1382 + $0x64] sm:$0xff]
        %v2462 = vld [vmem:[%s1382 + $0x6c] sm:$0x3]
        %v2463 = vld [vmem:[%s1382 + $0x74] sm:$0xff]
        %v2464 = vld [vmem:[%s1382 + $0x7c] sm:$0x3]
        %v2465 = vld [vmem:[%s1382 + $0x84] sm:$0xff]
        %v2466 = vld [vmem:[%s1382 + $0x8c] sm:$0x3]
        %v2467 = vld [vmem:[%s1382 + $0x94] sm:$0xff]
        %v2468 = vld [vmem:[%s1382 + $0x9c] sm:$0x3]
        %2489 = vrot.lane.b32.xlu0 %v2449, 54
        %v2490 = vpop.permute.xlu0 %2489
        %2491 = vrot.lane.b32.xlu0 %v2450, 54
        %v2492 = vpop.permute.xlu0 %2491
        %2493 = vrot.lane.b32.xlu0 %v2451, 54
        %v2494 = vpop.permute.xlu0 %2493
        %2495 = vrot.lane.b32.xlu0 %v2452, 54
        %v2496 = vpop.permute.xlu0 %2495
        %2497 = vrot.lane.b32.xlu0 %v2453, 54
        %v2498 = vpop.permute.xlu0 %2497
        %2499 = vrot.lane.b32.xlu0 %v2454, 54
        %v2500 = vpop.permute.xlu0 %2499
        %2501 = vrot.lane.b32.xlu0 %v2455, 54
        %v2502 = vpop.permute.xlu0 %2501
        %2503 = vrot.lane.b32.xlu0 %v2456, 54
        %v2504 = vpop.permute.xlu0 %2503
        %2505 = vrot.lane.b32.xlu0 %v2457, 54
        %v2506 = vpop.permute.xlu0 %2505
        %2507 = vrot.lane.b32.xlu0 %v2458, 54
        %v2508 = vpop.permute.xlu0 %2507
        %2509 = vrot.lane.b32.xlu0 %v2459, 54
        %v2510 = vpop.permute.xlu0 %2509
        %2511 = vrot.lane.b32.xlu0 %v2460, 54
        %v2512 = vpop.permute.xlu0 %2511
        %2513 = vrot.lane.b32.xlu0 %v2461, 54
        %v2514 = vpop.permute.xlu0 %2513
        %2515 = vrot.lane.b32.xlu0 %v2462, 54
        %v2516 = vpop.permute.xlu0 %2515
        %2517 = vrot.lane.b32.xlu0 %v2463, 54
        %v2518 = vpop.permute.xlu0 %2517
        %2519 = vrot.lane.b32.xlu0 %v2464, 54
        %v2520 = vpop.permute.xlu0 %2519
        %2521 = vrot.lane.b32.xlu0 %v2465, 54
        %v2522 = vpop.permute.xlu0 %2521
        %2523 = vrot.lane.b32.xlu0 %v2466, 54
        %v2524 = vpop.permute.xlu0 %2523
        %2525 = vrot.lane.b32.xlu0 %v2467, 54
        %v2526 = vpop.permute.xlu0 %2525
        %2527 = vrot.lane.b32.xlu0 %v2468, 54
        %v2528 = vpop.permute.xlu0 %2527
        %vm2549 = vcmask 490928
        %2550 = vst.msk [vmem:[#allocation3] sm:$0xff] %vm2549, %v2490
        %vm2551 = vcmask 484784
        %2552 = vst.msk [vmem:[#allocation3 + $0x10] sm:$0x3] %vm2551, %v2492
        %2553 = vst.msk [vmem:[#allocation3 + $0x20] sm:$0xff] %vm2549, %v2494
        %2554 = vst.msk [vmem:[#allocation3 + $0x30] sm:$0x3] %vm2551, %v2496
        %2555 = vst.msk [vmem:[#allocation3 + $0x40] sm:$0xff] %vm2549, %v2498
        %2556 = vst.msk [vmem:[#allocation3 + $0x50] sm:$0x3] %vm2551, %v2500
        %2557 = vst.msk [vmem:[#allocation3 + $0x60] sm:$0xff] %vm2549, %v2502
        %2558 = vst.msk [vmem:[#allocation3 + $0x70] sm:$0x3] %vm2551, %v2504
        %2559 = vst.msk [vmem:[#allocation3 + $0x80] sm:$0xff] %vm2549, %v2506
        %2560 = vst.msk [vmem:[#allocation3 + $0x90] sm:$0x3] %vm2551, %v2508
        %2561 = vst.msk [vmem:[#allocation3 + $0xa0] sm:$0xff] %vm2549, %v2510
        %2562 = vst.msk [vmem:[#allocation3 + $0xb0] sm:$0x3] %vm2551, %v2512
        %2563 = vst.msk [vmem:[#allocation3 + $0xc0] sm:$0xff] %vm2549, %v2514
        %2564 = vst.msk [vmem:[#allocation3 + $0xd0] sm:$0x3] %vm2551, %v2516
        %2565 = vst.msk [vmem:[#allocation3 + $0xe0] sm:$0xff] %vm2549, %v2518
        %2566 = vst.msk [vmem:[#allocation3 + $0xf0] sm:$0x3] %vm2551, %v2520
        %2567 = vst.msk [vmem:[#allocation3 + $0x100] sm:$0xff] %vm2549, %v2522
        %2568 = vst.msk [vmem:[#allocation3 + $0x110] sm:$0x3] %vm2551, %v2524
        %2569 = vst.msk [vmem:[#allocation3 + $0x120] sm:$0xff] %vm2549, %v2526
        %2570 = vst.msk [vmem:[#allocation3 + $0x130] sm:$0x3] %vm2551, %v2528
        %v2571 = vld [vmem:[%s1388] sm:$0xff]
        %v2572 = vld [vmem:[%s1388 + $0x8] sm:$0x3]
        %v2573 = vld [vmem:[%s1388 + $0x10] sm:$0xff]
        %v2574 = vld [vmem:[%s1388 + $0x18] sm:$0x3]
        %v2575 = vld [vmem:[%s1388 + $0x20] sm:$0xff]
        %v2576 = vld [vmem:[%s1388 + $0x28] sm:$0x3]
        %v2577 = vld [vmem:[%s1388 + $0x30] sm:$0xff]
        %v2578 = vld [vmem:[%s1388 + $0x38] sm:$0x3]
        %v2579 = vld [vmem:[%s1388 + $0x40] sm:$0xff]
        %v2580 = vld [vmem:[%s1388 + $0x48] sm:$0x3]
        %v2581 = vld [vmem:[%s1388 + $0x50] sm:$0xff]
        %v2582 = vld [vmem:[%s1388 + $0x58] sm:$0x3]
        %v2583 = vld [vmem:[%s1388 + $0x60] sm:$0xff]
        %v2584 = vld [vmem:[%s1388 + $0x68] sm:$0x3]
        %v2585 = vld [vmem:[%s1388 + $0x70] sm:$0xff]
        %v2586 = vld [vmem:[%s1388 + $0x78] sm:$0x3]
        %v2587 = vld [vmem:[%s1388 + $0x80] sm:$0xff]
        %v2588 = vld [vmem:[%s1388 + $0x88] sm:$0x3]
        %v2589 = vld [vmem:[%s1388 + $0x90] sm:$0xff]
        %v2590 = vld [vmem:[%s1388 + $0x98] sm:$0x3]
        %2611 = vrot.lane.b32.xlu0 %v2571, 60
        %v2612 = vpop.permute.xlu0 %2611
        %2613 = vrot.lane.b32.xlu0 %v2572, 60
        %v2614 = vpop.permute.xlu0 %2613
        %2615 = vrot.lane.b32.xlu0 %v2573, 60
        %v2616 = vpop.permute.xlu0 %2615
        %2617 = vrot.lane.b32.xlu0 %v2574, 60
        %v2618 = vpop.permute.xlu0 %2617
        %2619 = vrot.lane.b32.xlu0 %v2575, 60
        %v2620 = vpop.permute.xlu0 %2619
        %2621 = vrot.lane.b32.xlu0 %v2576, 60
        %v2622 = vpop.permute.xlu0 %2621
        %2623 = vrot.lane.b32.xlu0 %v2577, 60
        %v2624 = vpop.permute.xlu0 %2623
        %2625 = vrot.lane.b32.xlu0 %v2578, 60
        %v2626 = vpop.permute.xlu0 %2625
        %2627 = vrot.lane.b32.xlu0 %v2579, 60
        %v2628 = vpop.permute.xlu0 %2627
        %2629 = vrot.lane.b32.xlu0 %v2580, 60
        %v2630 = vpop.permute.xlu0 %2629
        %2631 = vrot.lane.b32.xlu0 %v2581, 60
        %v2632 = vpop.permute.xlu0 %2631
        %2633 = vrot.lane.b32.xlu0 %v2582, 60
        %v2634 = vpop.permute.xlu0 %2633
        %2635 = vrot.lane.b32.xlu0 %v2583, 60
        %v2636 = vpop.permute.xlu0 %2635
        %2637 = vrot.lane.b32.xlu0 %v2584, 60
        %v2638 = vpop.permute.xlu0 %2637
        %2639 = vrot.lane.b32.xlu0 %v2585, 60
        %v2640 = vpop.permute.xlu0 %2639
        %2641 = vrot.lane.b32.xlu0 %v2586, 60
        %v2642 = vpop.permute.xlu0 %2641
        %2643 = vrot.lane.b32.xlu0 %v2587, 60
        %v2644 = vpop.permute.xlu0 %2643
        %2645 = vrot.lane.b32.xlu0 %v2588, 60
        %v2646 = vpop.permute.xlu0 %2645
        %2647 = vrot.lane.b32.xlu0 %v2589, 60
        %v2648 = vpop.permute.xlu0 %2647
        %2649 = vrot.lane.b32.xlu0 %v2590, 60
        %v2650 = vpop.permute.xlu0 %2649
        %vm2671 = vcmask 540128
        %2672 = vst.msk [vmem:[#allocation3] sm:$0xff] %vm2671, %v2612
        %vm2673 = vcmask 533984
        %2674 = vst.msk [vmem:[#allocation3 + $0x10] sm:$0x3] %vm2673, %v2614
        %2675 = vst.msk [vmem:[#allocation3 + $0x20] sm:$0xff] %vm2671, %v2616
        %2676 = vst.msk [vmem:[#allocation3 + $0x30] sm:$0x3] %vm2673, %v2618
        %2677 = vst.msk [vmem:[#allocation3 + $0x40] sm:$0xff] %vm2671, %v2620
        %2678 = vst.msk [vmem:[#allocation3 + $0x50] sm:$0x3] %vm2673, %v2622
        %2679 = vst.msk [vmem:[#allocation3 + $0x60] sm:$0xff] %vm2671, %v2624
        %2680 = vst.msk [vmem:[#allocation3 + $0x70] sm:$0x3] %vm2673, %v2626
        %2681 = vst.msk [vmem:[#allocation3 + $0x80] sm:$0xff] %vm2671, %v2628
        %2682 = vst.msk [vmem:[#allocation3 + $0x90] sm:$0x3] %vm2673, %v2630
        %2683 = vst.msk [vmem:[#allocation3 + $0xa0] sm:$0xff] %vm2671, %v2632
        %2684 = vst.msk [vmem:[#allocation3 + $0xb0] sm:$0x3] %vm2673, %v2634
        %2685 = vst.msk [vmem:[#allocation3 + $0xc0] sm:$0xff] %vm2671, %v2636
        %2686 = vst.msk [vmem:[#allocation3 + $0xd0] sm:$0x3] %vm2673, %v2638
        %2687 = vst.msk [vmem:[#allocation3 + $0xe0] sm:$0xff] %vm2671, %v2640
        %2688 = vst.msk [vmem:[#allocation3 + $0xf0] sm:$0x3] %vm2673, %v2642
        %2689 = vst.msk [vmem:[#allocation3 + $0x100] sm:$0xff] %vm2671, %v2644
        %2690 = vst.msk [vmem:[#allocation3 + $0x110] sm:$0x3] %vm2673, %v2646
        %2691 = vst.msk [vmem:[#allocation3 + $0x120] sm:$0xff] %vm2671, %v2648
        %2692 = vst.msk [vmem:[#allocation3 + $0x130] sm:$0x3] %vm2673, %v2650
        %v2693 = vld [vmem:[%s1388 + $0x1] sm:$0xff]
        %v2694 = vld [vmem:[%s1388 + $0x9] sm:$0x3]
        %v2695 = vld [vmem:[%s1388 + $0x11] sm:$0xff]
        %v2696 = vld [vmem:[%s1388 + $0x19] sm:$0x3]
        %v2697 = vld [vmem:[%s1388 + $0x21] sm:$0xff]
        %v2698 = vld [vmem:[%s1388 + $0x29] sm:$0x3]
        %v2699 = vld [vmem:[%s1388 + $0x31] sm:$0xff]
        %v2700 = vld [vmem:[%s1388 + $0x39] sm:$0x3]
        %v2701 = vld [vmem:[%s1388 + $0x41] sm:$0xff]
        %v2702 = vld [vmem:[%s1388 + $0x49] sm:$0x3]
        %v2703 = vld [vmem:[%s1388 + $0x51] sm:$0xff]
        %v2704 = vld [vmem:[%s1388 + $0x59] sm:$0x3]
        %v2705 = vld [vmem:[%s1388 + $0x61] sm:$0xff]
        %v2706 = vld [vmem:[%s1388 + $0x69] sm:$0x3]
        %v2707 = vld [vmem:[%s1388 + $0x71] sm:$0xff]
        %v2708 = vld [vmem:[%s1388 + $0x79] sm:$0x3]
        %v2709 = vld [vmem:[%s1388 + $0x81] sm:$0xff]
        %v2710 = vld [vmem:[%s1388 + $0x89] sm:$0x3]
        %v2711 = vld [vmem:[%s1388 + $0x91] sm:$0xff]
        %v2712 = vld [vmem:[%s1388 + $0x99] sm:$0x3]
        %2733 = vrot.lane.b32.xlu0 %v2693, 66
        %v2734 = vpop.permute.xlu0 %2733
        %2735 = vrot.lane.b32.xlu0 %v2694, 66
        %v2736 = vpop.permute.xlu0 %2735
        %2737 = vrot.lane.b32.xlu0 %v2695, 66
        %v2738 = vpop.permute.xlu0 %2737
        %2739 = vrot.lane.b32.xlu0 %v2696, 66
        %v2740 = vpop.permute.xlu0 %2739
        %2741 = vrot.lane.b32.xlu0 %v2697, 66
        %v2742 = vpop.permute.xlu0 %2741
        %2743 = vrot.lane.b32.xlu0 %v2698, 66
        %v2744 = vpop.permute.xlu0 %2743
        %2745 = vrot.lane.b32.xlu0 %v2699, 66
        %v2746 = vpop.permute.xlu0 %2745
        %2747 = vrot.lane.b32.xlu0 %v2700, 66
        %v2748 = vpop.permute.xlu0 %2747
        %2749 = vrot.lane.b32.xlu0 %v2701, 66
        %v2750 = vpop.permute.xlu0 %2749
        %2751 = vrot.lane.b32.xlu0 %v2702, 66
        %v2752 = vpop.permute.xlu0 %2751
        %2753 = vrot.lane.b32.xlu0 %v2703, 66
        %v2754 = vpop.permute.xlu0 %2753
        %2755 = vrot.lane.b32.xlu0 %v2704, 66
        %v2756 = vpop.permute.xlu0 %2755
        %2757 = vrot.lane.b32.xlu0 %v2705, 66
        %v2758 = vpop.permute.xlu0 %2757
        %2759 = vrot.lane.b32.xlu0 %v2706, 66
        %v2760 = vpop.permute.xlu0 %2759
        %2761 = vrot.lane.b32.xlu0 %v2707, 66
        %v2762 = vpop.permute.xlu0 %2761
        %2763 = vrot.lane.b32.xlu0 %v2708, 66
        %v2764 = vpop.permute.xlu0 %2763
        %2765 = vrot.lane.b32.xlu0 %v2709, 66
        %v2766 = vpop.permute.xlu0 %2765
        %2767 = vrot.lane.b32.xlu0 %v2710, 66
        %v2768 = vpop.permute.xlu0 %2767
        %2769 = vrot.lane.b32.xlu0 %v2711, 66
        %v2770 = vpop.permute.xlu0 %2769
        %2771 = vrot.lane.b32.xlu0 %v2712, 66
        %v2772 = vpop.permute.xlu0 %2771
        %vm2793 = vcmask 589328
        %2794 = vst.msk [vmem:[#allocation3] sm:$0xff] %vm2793, %v2734
        %vm2795 = vcmask 583184
        %2796 = vst.msk [vmem:[#allocation3 + $0x10] sm:$0x3] %vm2795, %v2736
        %2797 = vst.msk [vmem:[#allocation3 + $0x20] sm:$0xff] %vm2793, %v2738
        %2798 = vst.msk [vmem:[#allocation3 + $0x30] sm:$0x3] %vm2795, %v2740
        %2799 = vst.msk [vmem:[#allocation3 + $0x40] sm:$0xff] %vm2793, %v2742
        %2800 = vst.msk [vmem:[#allocation3 + $0x50] sm:$0x3] %vm2795, %v2744
        %2801 = vst.msk [vmem:[#allocation3 + $0x60] sm:$0xff] %vm2793, %v2746
        %2802 = vst.msk [vmem:[#allocation3 + $0x70] sm:$0x3] %vm2795, %v2748
        %2803 = vst.msk [vmem:[#allocation3 + $0x80] sm:$0xff] %vm2793, %v2750
        %2804 = vst.msk [vmem:[#allocation3 + $0x90] sm:$0x3] %vm2795, %v2752
        %2805 = vst.msk [vmem:[#allocation3 + $0xa0] sm:$0xff] %vm2793, %v2754
        %2806 = vst.msk [vmem:[#allocation3 + $0xb0] sm:$0x3] %vm2795, %v2756
        %2807 = vst.msk [vmem:[#allocation3 + $0xc0] sm:$0xff] %vm2793, %v2758
        %2808 = vst.msk [vmem:[#allocation3 + $0xd0] sm:$0x3] %vm2795, %v2760
        %2809 = vst.msk [vmem:[#allocation3 + $0xe0] sm:$0xff] %vm2793, %v2762
        %2810 = vst.msk [vmem:[#allocation3 + $0xf0] sm:$0x3] %vm2795, %v2764
        %2811 = vst.msk [vmem:[#allocation3 + $0x100] sm:$0xff] %vm2793, %v2766
        %2812 = vst.msk [vmem:[#allocation3 + $0x110] sm:$0x3] %vm2795, %v2768
        %2813 = vst.msk [vmem:[#allocation3 + $0x120] sm:$0xff] %vm2793, %v2770
        %2814 = vst.msk [vmem:[#allocation3 + $0x130] sm:$0x3] %vm2795, %v2772
        %v2815 = vld [vmem:[%s1388 + $0x2] sm:$0xff]
        %v2816 = vld [vmem:[%s1388 + $0xa] sm:$0x3]
        %v2817 = vld [vmem:[%s1388 + $0x12] sm:$0xff]
        %v2818 = vld [vmem:[%s1388 + $0x1a] sm:$0x3]
        %v2819 = vld [vmem:[%s1388 + $0x22] sm:$0xff]
        %v2820 = vld [vmem:[%s1388 + $0x2a] sm:$0x3]
        %v2821 = vld [vmem:[%s1388 + $0x32] sm:$0xff]
        %v2822 = vld [vmem:[%s1388 + $0x3a] sm:$0x3]
        %v2823 = vld [vmem:[%s1388 + $0x42] sm:$0xff]
        %v2824 = vld [vmem:[%s1388 + $0x4a] sm:$0x3]
        %v2825 = vld [vmem:[%s1388 + $0x52] sm:$0xff]
        %v2826 = vld [vmem:[%s1388 + $0x5a] sm:$0x3]
        %v2827 = vld [vmem:[%s1388 + $0x62] sm:$0xff]
        %v2828 = vld [vmem:[%s1388 + $0x6a] sm:$0x3]
        %v2829 = vld [vmem:[%s1388 + $0x72] sm:$0xff]
        %v2830 = vld [vmem:[%s1388 + $0x7a] sm:$0x3]
        %v2831 = vld [vmem:[%s1388 + $0x82] sm:$0xff]
        %v2832 = vld [vmem:[%s1388 + $0x8a] sm:$0x3]
        %v2833 = vld [vmem:[%s1388 + $0x92] sm:$0xff]
        %v2834 = vld [vmem:[%s1388 + $0x9a] sm:$0x3]
        %2855 = vrot.lane.b32.xlu0 %v2815, 72
        %v2856 = vpop.permute.xlu0 %2855
        %2857 = vrot.lane.b32.xlu0 %v2816, 72
        %v2858 = vpop.permute.xlu0 %2857
        %2859 = vrot.lane.b32.xlu0 %v2817, 72
        %v2860 = vpop.permute.xlu0 %2859
        %2861 = vrot.lane.b32.xlu0 %v2818, 72
        %v2862 = vpop.permute.xlu0 %2861
        %2863 = vrot.lane.b32.xlu0 %v2819, 72
        %v2864 = vpop.permute.xlu0 %2863
        %2865 = vrot.lane.b32.xlu0 %v2820, 72
        %v2866 = vpop.permute.xlu0 %2865
        %2867 = vrot.lane.b32.xlu0 %v2821, 72
        %v2868 = vpop.permute.xlu0 %2867
        %2869 = vrot.lane.b32.xlu0 %v2822, 72
        %v2870 = vpop.permute.xlu0 %2869
        %2871 = vrot.lane.b32.xlu0 %v2823, 72
        %v2872 = vpop.permute.xlu0 %2871
        %2873 = vrot.lane.b32.xlu0 %v2824, 72
        %v2874 = vpop.permute.xlu0 %2873
        %2875 = vrot.lane.b32.xlu0 %v2825, 72
        %v2876 = vpop.permute.xlu0 %2875
        %2877 = vrot.lane.b32.xlu0 %v2826, 72
        %v2878 = vpop.permute.xlu0 %2877
        %2879 = vrot.lane.b32.xlu0 %v2827, 72
        %v2880 = vpop.permute.xlu0 %2879
        %2881 = vrot.lane.b32.xlu0 %v2828, 72
        %v2882 = vpop.permute.xlu0 %2881
        %2883 = vrot.lane.b32.xlu0 %v2829, 72
        %v2884 = vpop.permute.xlu0 %2883
        %2885 = vrot.lane.b32.xlu0 %v2830, 72
        %v2886 = vpop.permute.xlu0 %2885
        %2887 = vrot.lane.b32.xlu0 %v2831, 72
        %v2888 = vpop.permute.xlu0 %2887
        %2889 = vrot.lane.b32.xlu0 %v2832, 72
        %v2890 = vpop.permute.xlu0 %2889
        %2891 = vrot.lane.b32.xlu0 %v2833, 72
        %v2892 = vpop.permute.xlu0 %2891
        %2893 = vrot.lane.b32.xlu0 %v2834, 72
        %v2894 = vpop.permute.xlu0 %2893
        %vm2915 = vcmask 638528
        %2916 = vst.msk [vmem:[#allocation3] sm:$0xff] %vm2915, %v2856
        %vm2917 = vcmask 632384
        %2918 = vst.msk [vmem:[#allocation3 + $0x10] sm:$0x3] %vm2917, %v2858
        %2919 = vst.msk [vmem:[#allocation3 + $0x20] sm:$0xff] %vm2915, %v2860
        %2920 = vst.msk [vmem:[#allocation3 + $0x30] sm:$0x3] %vm2917, %v2862
        %2921 = vst.msk [vmem:[#allocation3 + $0x40] sm:$0xff] %vm2915, %v2864
        %2922 = vst.msk [vmem:[#allocation3 + $0x50] sm:$0x3] %vm2917, %v2866
        %2923 = vst.msk [vmem:[#allocation3 + $0x60] sm:$0xff] %vm2915, %v2868
        %2924 = vst.msk [vmem:[#allocation3 + $0x70] sm:$0x3] %vm2917, %v2870
        %2925 = vst.msk [vmem:[#allocation3 + $0x80] sm:$0xff] %vm2915, %v2872
        %2926 = vst.msk [vmem:[#allocation3 + $0x90] sm:$0x3] %vm2917, %v2874
        %2927 = vst.msk [vmem:[#allocation3 + $0xa0] sm:$0xff] %vm2915, %v2876
        %2928 = vst.msk [vmem:[#allocation3 + $0xb0] sm:$0x3] %vm2917, %v2878
        %2929 = vst.msk [vmem:[#allocation3 + $0xc0] sm:$0xff] %vm2915, %v2880
        %2930 = vst.msk [vmem:[#allocation3 + $0xd0] sm:$0x3] %vm2917, %v2882
        %2931 = vst.msk [vmem:[#allocation3 + $0xe0] sm:$0xff] %vm2915, %v2884
        %2932 = vst.msk [vmem:[#allocation3 + $0xf0] sm:$0x3] %vm2917, %v2886
        %2933 = vst.msk [vmem:[#allocation3 + $0x100] sm:$0xff] %vm2915, %v2888
        %2934 = vst.msk [vmem:[#allocation3 + $0x110] sm:$0x3] %vm2917, %v2890
        %2935 = vst.msk [vmem:[#allocation3 + $0x120] sm:$0xff] %vm2915, %v2892
        %2936 = vst.msk [vmem:[#allocation3 + $0x130] sm:$0x3] %vm2917, %v2894
        %v2937 = vld [vmem:[%s1388 + $0x3] sm:$0xff]
        %v2938 = vld [vmem:[%s1388 + $0xb] sm:$0x3]
        %v2939 = vld [vmem:[%s1388 + $0x13] sm:$0xff]
        %v2940 = vld [vmem:[%s1388 + $0x1b] sm:$0x3]
        %v2941 = vld [vmem:[%s1388 + $0x23] sm:$0xff]
        %v2942 = vld [vmem:[%s1388 + $0x2b] sm:$0x3]
        %v2943 = vld [vmem:[%s1388 + $0x33] sm:$0xff]
        %v2944 = vld [vmem:[%s1388 + $0x3b] sm:$0x3]
        %v2945 = vld [vmem:[%s1388 + $0x43] sm:$0xff]
        %v2946 = vld [vmem:[%s1388 + $0x4b] sm:$0x3]
        %v2947 = vld [vmem:[%s1388 + $0x53] sm:$0xff]
        %v2948 = vld [vmem:[%s1388 + $0x5b] sm:$0x3]
        %v2949 = vld [vmem:[%s1388 + $0x63] sm:$0xff]
        %v2950 = vld [vmem:[%s1388 + $0x6b] sm:$0x3]
        %v2951 = vld [vmem:[%s1388 + $0x73] sm:$0xff]
        %v2952 = vld [vmem:[%s1388 + $0x7b] sm:$0x3]
        %v2953 = vld [vmem:[%s1388 + $0x83] sm:$0xff]
        %v2954 = vld [vmem:[%s1388 + $0x8b] sm:$0x3]
        %v2955 = vld [vmem:[%s1388 + $0x93] sm:$0xff]
        %v2956 = vld [vmem:[%s1388 + $0x9b] sm:$0x3]
        %2977 = vrot.lane.b32.xlu0 %v2937, 78
        %v2978 = vpop.permute.xlu0 %2977
        %2979 = vrot.lane.b32.xlu0 %v2938, 78
        %v2980 = vpop.permute.xlu0 %2979
        %2981 = vrot.lane.b32.xlu0 %v2939, 78
        %v2982 = vpop.permute.xlu0 %2981
        %2983 = vrot.lane.b32.xlu0 %v2940, 78
        %v2984 = vpop.permute.xlu0 %2983
        %2985 = vrot.lane.b32.xlu0 %v2941, 78
        %v2986 = vpop.permute.xlu0 %2985
        %2987 = vrot.lane.b32.xlu0 %v2942, 78
        %v2988 = vpop.permute.xlu0 %2987
        %2989 = vrot.lane.b32.xlu0 %v2943, 78
        %v2990 = vpop.permute.xlu0 %2989
        %2991 = vrot.lane.b32.xlu0 %v2944, 78
        %v2992 = vpop.permute.xlu0 %2991
        %2993 = vrot.lane.b32.xlu0 %v2945, 78
        %v2994 = vpop.permute.xlu0 %2993
        %2995 = vrot.lane.b32.xlu0 %v2946, 78
        %v2996 = vpop.permute.xlu0 %2995
        %2997 = vrot.lane.b32.xlu0 %v2947, 78
        %v2998 = vpop.permute.xlu0 %2997
        %2999 = vrot.lane.b32.xlu0 %v2948, 78
        %v3000 = vpop.permute.xlu0 %2999
        %3001 = vrot.lane.b32.xlu0 %v2949, 78
        %v3002 = vpop.permute.xlu0 %3001
        %3003 = vrot.lane.b32.xlu0 %v2950, 78
        %v3004 = vpop.permute.xlu0 %3003
        %3005 = vrot.lane.b32.xlu0 %v2951, 78
        %v3006 = vpop.permute.xlu0 %3005
        %3007 = vrot.lane.b32.xlu0 %v2952, 78
        %v3008 = vpop.permute.xlu0 %3007
        %3009 = vrot.lane.b32.xlu0 %v2953, 78
        %v3010 = vpop.permute.xlu0 %3009
        %3011 = vrot.lane.b32.xlu0 %v2954, 78
        %v3012 = vpop.permute.xlu0 %3011
        %3013 = vrot.lane.b32.xlu0 %v2955, 78
        %v3014 = vpop.permute.xlu0 %3013
        %3015 = vrot.lane.b32.xlu0 %v2956, 78
        %v3016 = vpop.permute.xlu0 %3015
        %vm3037 = vcmask 687728
        %3038 = vst.msk [vmem:[#allocation3] sm:$0xff] %vm3037, %v2978
        %vm3039 = vcmask 681584
        %3040 = vst.msk [vmem:[#allocation3 + $0x10] sm:$0x3] %vm3039, %v2980
        %3041 = vst.msk [vmem:[#allocation3 + $0x20] sm:$0xff] %vm3037, %v2982
        %3042 = vst.msk [vmem:[#allocation3 + $0x30] sm:$0x3] %vm3039, %v2984
        %3043 = vst.msk [vmem:[#allocation3 + $0x40] sm:$0xff] %vm3037, %v2986
        %3044 = vst.msk [vmem:[#allocation3 + $0x50] sm:$0x3] %vm3039, %v2988
        %3045 = vst.msk [vmem:[#allocation3 + $0x60] sm:$0xff] %vm3037, %v2990
        %3046 = vst.msk [vmem:[#allocation3 + $0x70] sm:$0x3] %vm3039, %v2992
        %3047 = vst.msk [vmem:[#allocation3 + $0x80] sm:$0xff] %vm3037, %v2994
        %3048 = vst.msk [vmem:[#allocation3 + $0x90] sm:$0x3] %vm3039, %v2996
        %3049 = vst.msk [vmem:[#allocation3 + $0xa0] sm:$0xff] %vm3037, %v2998
        %3050 = vst.msk [vmem:[#allocation3 + $0xb0] sm:$0x3] %vm3039, %v3000
        %3051 = vst.msk [vmem:[#allocation3 + $0xc0] sm:$0xff] %vm3037, %v3002
        %3052 = vst.msk [vmem:[#allocation3 + $0xd0] sm:$0x3] %vm3039, %v3004
        %3053 = vst.msk [vmem:[#allocation3 + $0xe0] sm:$0xff] %vm3037, %v3006
        %3054 = vst.msk [vmem:[#allocation3 + $0xf0] sm:$0x3] %vm3039, %v3008
        %3055 = vst.msk [vmem:[#allocation3 + $0x100] sm:$0xff] %vm3037, %v3010
        %3056 = vst.msk [vmem:[#allocation3 + $0x110] sm:$0x3] %vm3039, %v3012
        %3057 = vst.msk [vmem:[#allocation3 + $0x120] sm:$0xff] %vm3037, %v3014
        %3058 = vst.msk [vmem:[#allocation3 + $0x130] sm:$0x3] %vm3039, %v3016
        %v3059 = vld [vmem:[%s1388 + $0x4] sm:$0xff]
        %v3060 = vld [vmem:[%s1388 + $0xc] sm:$0x3]
        %v3061 = vld [vmem:[%s1388 + $0x14] sm:$0xff]
        %v3062 = vld [vmem:[%s1388 + $0x1c] sm:$0x3]
        %v3063 = vld [vmem:[%s1388 + $0x24] sm:$0xff]
        %v3064 = vld [vmem:[%s1388 + $0x2c] sm:$0x3]
        %v3065 = vld [vmem:[%s1388 + $0x34] sm:$0xff]
        %v3066 = vld [vmem:[%s1388 + $0x3c] sm:$0x3]
        %v3067 = vld [vmem:[%s1388 + $0x44] sm:$0xff]
        %v3068 = vld [vmem:[%s1388 + $0x4c] sm:$0x3]
        %v3069 = vld [vmem:[%s1388 + $0x54] sm:$0xff]
        %v3070 = vld [vmem:[%s1388 + $0x5c] sm:$0x3]
        %v3071 = vld [vmem:[%s1388 + $0x64] sm:$0xff]
        %v3072 = vld [vmem:[%s1388 + $0x6c] sm:$0x3]
        %v3073 = vld [vmem:[%s1388 + $0x74] sm:$0xff]
        %v3074 = vld [vmem:[%s1388 + $0x7c] sm:$0x3]
        %v3075 = vld [vmem:[%s1388 + $0x84] sm:$0xff]
        %v3076 = vld [vmem:[%s1388 + $0x8c] sm:$0x3]
        %v3077 = vld [vmem:[%s1388 + $0x94] sm:$0xff]
        %v3078 = vld [vmem:[%s1388 + $0x9c] sm:$0x3]
        %3099 = vrot.lane.b32.xlu0 %v3059, 84
        %v3100 = vpop.permute.xlu0 %3099
        %3101 = vrot.lane.b32.xlu0 %v3060, 84
        %v3102 = vpop.permute.xlu0 %3101
        %3103 = vrot.lane.b32.xlu0 %v3061, 84
        %v3104 = vpop.permute.xlu0 %3103
        %3105 = vrot.lane.b32.xlu0 %v3062, 84
        %v3106 = vpop.permute.xlu0 %3105
        %3107 = vrot.lane.b32.xlu0 %v3063, 84
        %v3108 = vpop.permute.xlu0 %3107
        %3109 = vrot.lane.b32.xlu0 %v3064, 84
        %v3110 = vpop.permute.xlu0 %3109
        %3111 = vrot.lane.b32.xlu0 %v3065, 84
        %v3112 = vpop.permute.xlu0 %3111
        %3113 = vrot.lane.b32.xlu0 %v3066, 84
        %v3114 = vpop.permute.xlu0 %3113
        %3115 = vrot.lane.b32.xlu0 %v3067, 84
        %v3116 = vpop.permute.xlu0 %3115
        %3117 = vrot.lane.b32.xlu0 %v3068, 84
        %v3118 = vpop.permute.xlu0 %3117
        %3119 = vrot.lane.b32.xlu0 %v3069, 84
        %v3120 = vpop.permute.xlu0 %3119
        %3121 = vrot.lane.b32.xlu0 %v3070, 84
        %v3122 = vpop.permute.xlu0 %3121
        %3123 = vrot.lane.b32.xlu0 %v3071, 84
        %v3124 = vpop.permute.xlu0 %3123
        %3125 = vrot.lane.b32.xlu0 %v3072, 84
        %v3126 = vpop.permute.xlu0 %3125
        %3127 = vrot.lane.b32.xlu0 %v3073, 84
        %v3128 = vpop.permute.xlu0 %3127
        %3129 = vrot.lane.b32.xlu0 %v3074, 84
        %v3130 = vpop.permute.xlu0 %3129
        %3131 = vrot.lane.b32.xlu0 %v3075, 84
        %v3132 = vpop.permute.xlu0 %3131
        %3133 = vrot.lane.b32.xlu0 %v3076, 84
        %v3134 = vpop.permute.xlu0 %3133
        %3135 = vrot.lane.b32.xlu0 %v3077, 84
        %v3136 = vpop.permute.xlu0 %3135
        %3137 = vrot.lane.b32.xlu0 %v3078, 84
        %v3138 = vpop.permute.xlu0 %3137
        %vm3159 = vcmask 736928
        %3160 = vst.msk [vmem:[#allocation3] sm:$0xff] %vm3159, %v3100
        %vm3161 = vcmask 730784
        %3162 = vst.msk [vmem:[#allocation3 + $0x10] sm:$0x3] %vm3161, %v3102
        %3163 = vst.msk [vmem:[#allocation3 + $0x20] sm:$0xff] %vm3159, %v3104
        %3164 = vst.msk [vmem:[#allocation3 + $0x30] sm:$0x3] %vm3161, %v3106
        %3165 = vst.msk [vmem:[#allocation3 + $0x40] sm:$0xff] %vm3159, %v3108
        %3166 = vst.msk [vmem:[#allocation3 + $0x50] sm:$0x3] %vm3161, %v3110
        %3167 = vst.msk [vmem:[#allocation3 + $0x60] sm:$0xff] %vm3159, %v3112
        %3168 = vst.msk [vmem:[#allocation3 + $0x70] sm:$0x3] %vm3161, %v3114
        %3169 = vst.msk [vmem:[#allocation3 + $0x80] sm:$0xff] %vm3159, %v3116
        %3170 = vst.msk [vmem:[#allocation3 + $0x90] sm:$0x3] %vm3161, %v3118
        %3171 = vst.msk [vmem:[#allocation3 + $0xa0] sm:$0xff] %vm3159, %v3120
        %3172 = vst.msk [vmem:[#allocation3 + $0xb0] sm:$0x3] %vm3161, %v3122
        %3173 = vst.msk [vmem:[#allocation3 + $0xc0] sm:$0xff] %vm3159, %v3124
        %3174 = vst.msk [vmem:[#allocation3 + $0xd0] sm:$0x3] %vm3161, %v3126
        %3175 = vst.msk [vmem:[#allocation3 + $0xe0] sm:$0xff] %vm3159, %v3128
        %3176 = vst.msk [vmem:[#allocation3 + $0xf0] sm:$0x3] %vm3161, %v3130
        %3177 = vst.msk [vmem:[#allocation3 + $0x100] sm:$0xff] %vm3159, %v3132
        %3178 = vst.msk [vmem:[#allocation3 + $0x110] sm:$0x3] %vm3161, %v3134
        %3179 = vst.msk [vmem:[#allocation3 + $0x120] sm:$0xff] %vm3159, %v3136
        %3180 = vst.msk [vmem:[#allocation3 + $0x130] sm:$0x3] %vm3161, %v3138
        %v3181 = vld [vmem:[%s1394] sm:$0xff]
        %v3182 = vld [vmem:[%s1394 + $0x8] sm:$0x3]
        %v3183 = vld [vmem:[%s1394 + $0x10] sm:$0xff]
        %v3184 = vld [vmem:[%s1394 + $0x18] sm:$0x3]
        %v3185 = vld [vmem:[%s1394 + $0x20] sm:$0xff]
        %v3186 = vld [vmem:[%s1394 + $0x28] sm:$0x3]
        %v3187 = vld [vmem:[%s1394 + $0x30] sm:$0xff]
        %v3188 = vld [vmem:[%s1394 + $0x38] sm:$0x3]
        %v3189 = vld [vmem:[%s1394 + $0x40] sm:$0xff]
        %v3190 = vld [vmem:[%s1394 + $0x48] sm:$0x3]
        %v3191 = vld [vmem:[%s1394 + $0x50] sm:$0xff]
        %v3192 = vld [vmem:[%s1394 + $0x58] sm:$0x3]
        %v3193 = vld [vmem:[%s1394 + $0x60] sm:$0xff]
        %v3194 = vld [vmem:[%s1394 + $0x68] sm:$0x3]
        %v3195 = vld [vmem:[%s1394 + $0x70] sm:$0xff]
        %v3196 = vld [vmem:[%s1394 + $0x78] sm:$0x3]
        %v3197 = vld [vmem:[%s1394 + $0x80] sm:$0xff]
        %v3198 = vld [vmem:[%s1394 + $0x88] sm:$0x3]
        %v3199 = vld [vmem:[%s1394 + $0x90] sm:$0xff]
        %v3200 = vld [vmem:[%s1394 + $0x98] sm:$0x3]
        %3221 = vrot.lane.b32.xlu0 %v3181, 90
        %v3222 = vpop.permute.xlu0 %3221
        %3223 = vrot.lane.b32.xlu0 %v3182, 90
        %v3224 = vpop.permute.xlu0 %3223
        %3225 = vrot.lane.b32.xlu0 %v3183, 90
        %v3226 = vpop.permute.xlu0 %3225
        %3227 = vrot.lane.b32.xlu0 %v3184, 90
        %v3228 = vpop.permute.xlu0 %3227
        %3229 = vrot.lane.b32.xlu0 %v3185, 90
        %v3230 = vpop.permute.xlu0 %3229
        %3231 = vrot.lane.b32.xlu0 %v3186, 90
        %v3232 = vpop.permute.xlu0 %3231
        %3233 = vrot.lane.b32.xlu0 %v3187, 90
        %v3234 = vpop.permute.xlu0 %3233
        %3235 = vrot.lane.b32.xlu0 %v3188, 90
        %v3236 = vpop.permute.xlu0 %3235
        %3237 = vrot.lane.b32.xlu0 %v3189, 90
        %v3238 = vpop.permute.xlu0 %3237
        %3239 = vrot.lane.b32.xlu0 %v3190, 90
        %v3240 = vpop.permute.xlu0 %3239
        %3241 = vrot.lane.b32.xlu0 %v3191, 90
        %v3242 = vpop.permute.xlu0 %3241
        %3243 = vrot.lane.b32.xlu0 %v3192, 90
        %v3244 = vpop.permute.xlu0 %3243
        %3245 = vrot.lane.b32.xlu0 %v3193, 90
        %v3246 = vpop.permute.xlu0 %3245
        %3247 = vrot.lane.b32.xlu0 %v3194, 90
        %v3248 = vpop.permute.xlu0 %3247
        %3249 = vrot.lane.b32.xlu0 %v3195, 90
        %v3250 = vpop.permute.xlu0 %3249
        %3251 = vrot.lane.b32.xlu0 %v3196, 90
        %v3252 = vpop.permute.xlu0 %3251
        %3253 = vrot.lane.b32.xlu0 %v3197, 90
        %v3254 = vpop.permute.xlu0 %3253
        %3255 = vrot.lane.b32.xlu0 %v3198, 90
        %v3256 = vpop.permute.xlu0 %3255
        %3257 = vrot.lane.b32.xlu0 %v3199, 90
        %v3258 = vpop.permute.xlu0 %3257
        %3259 = vrot.lane.b32.xlu0 %v3200, 90
        %v3260 = vpop.permute.xlu0 %3259
        %vm3281 = vcmask 786128
        %3282 = vst.msk [vmem:[#allocation3] sm:$0xff] %vm3281, %v3222
        %vm3283 = vcmask 779984
        %3284 = vst.msk [vmem:[#allocation3 + $0x10] sm:$0x3] %vm3283, %v3224
        %3285 = vst.msk [vmem:[#allocation3 + $0x20] sm:$0xff] %vm3281, %v3226
        %3286 = vst.msk [vmem:[#allocation3 + $0x30] sm:$0x3] %vm3283, %v3228
        %3287 = vst.msk [vmem:[#allocation3 + $0x40] sm:$0xff] %vm3281, %v3230
        %3288 = vst.msk [vmem:[#allocation3 + $0x50] sm:$0x3] %vm3283, %v3232
        %3289 = vst.msk [vmem:[#allocation3 + $0x60] sm:$0xff] %vm3281, %v3234
        %3290 = vst.msk [vmem:[#allocation3 + $0x70] sm:$0x3] %vm3283, %v3236
        %3291 = vst.msk [vmem:[#allocation3 + $0x80] sm:$0xff] %vm3281, %v3238
        %3292 = vst.msk [vmem:[#allocation3 + $0x90] sm:$0x3] %vm3283, %v3240
        %3293 = vst.msk [vmem:[#allocation3 + $0xa0] sm:$0xff] %vm3281, %v3242
        %3294 = vst.msk [vmem:[#allocation3 + $0xb0] sm:$0x3] %vm3283, %v3244
        %3295 = vst.msk [vmem:[#allocation3 + $0xc0] sm:$0xff] %vm3281, %v3246
        %3296 = vst.msk [vmem:[#allocation3 + $0xd0] sm:$0x3] %vm3283, %v3248
        %3297 = vst.msk [vmem:[#allocation3 + $0xe0] sm:$0xff] %vm3281, %v3250
        %3298 = vst.msk [vmem:[#allocation3 + $0xf0] sm:$0x3] %vm3283, %v3252
        %3299 = vst.msk [vmem:[#allocation3 + $0x100] sm:$0xff] %vm3281, %v3254
        %3300 = vst.msk [vmem:[#allocation3 + $0x110] sm:$0x3] %vm3283, %v3256
        %3301 = vst.msk [vmem:[#allocation3 + $0x120] sm:$0xff] %vm3281, %v3258
        %3302 = vst.msk [vmem:[#allocation3 + $0x130] sm:$0x3] %vm3283, %v3260
        %v3303 = vld [vmem:[%s1394 + $0x1] sm:$0xff]
        %v3304 = vld [vmem:[%s1394 + $0x9] sm:$0x3]
        %v3305 = vld [vmem:[%s1394 + $0x11] sm:$0xff]
        %v3306 = vld [vmem:[%s1394 + $0x19] sm:$0x3]
        %v3307 = vld [vmem:[%s1394 + $0x21] sm:$0xff]
        %v3308 = vld [vmem:[%s1394 + $0x29] sm:$0x3]
        %v3309 = vld [vmem:[%s1394 + $0x31] sm:$0xff]
        %v3310 = vld [vmem:[%s1394 + $0x39] sm:$0x3]
        %v3311 = vld [vmem:[%s1394 + $0x41] sm:$0xff]
        %v3312 = vld [vmem:[%s1394 + $0x49] sm:$0x3]
        %v3313 = vld [vmem:[%s1394 + $0x51] sm:$0xff]
        %v3314 = vld [vmem:[%s1394 + $0x59] sm:$0x3]
        %v3315 = vld [vmem:[%s1394 + $0x61] sm:$0xff]
        %v3316 = vld [vmem:[%s1394 + $0x69] sm:$0x3]
        %v3317 = vld [vmem:[%s1394 + $0x71] sm:$0xff]
        %v3318 = vld [vmem:[%s1394 + $0x79] sm:$0x3]
        %v3319 = vld [vmem:[%s1394 + $0x81] sm:$0xff]
        %v3320 = vld [vmem:[%s1394 + $0x89] sm:$0x3]
        %v3321 = vld [vmem:[%s1394 + $0x91] sm:$0xff]
        %v3322 = vld [vmem:[%s1394 + $0x99] sm:$0x3]
        %3343 = vrot.lane.b32.xlu0 %v3303, 96
        %v3344 = vpop.permute.xlu0 %3343
        %3345 = vrot.lane.b32.xlu0 %v3304, 96
        %v3346 = vpop.permute.xlu0 %3345
        %3347 = vrot.lane.b32.xlu0 %v3305, 96
        %v3348 = vpop.permute.xlu0 %3347
        %3349 = vrot.lane.b32.xlu0 %v3306, 96
        %v3350 = vpop.permute.xlu0 %3349
        %3351 = vrot.lane.b32.xlu0 %v3307, 96
        %v3352 = vpop.permute.xlu0 %3351
        %3353 = vrot.lane.b32.xlu0 %v3308, 96
        %v3354 = vpop.permute.xlu0 %3353
        %3355 = vrot.lane.b32.xlu0 %v3309, 96
        %v3356 = vpop.permute.xlu0 %3355
        %3357 = vrot.lane.b32.xlu0 %v3310, 96
        %v3358 = vpop.permute.xlu0 %3357
        %3359 = vrot.lane.b32.xlu0 %v3311, 96
        %v3360 = vpop.permute.xlu0 %3359
        %3361 = vrot.lane.b32.xlu0 %v3312, 96
        %v3362 = vpop.permute.xlu0 %3361
        %3363 = vrot.lane.b32.xlu0 %v3313, 96
        %v3364 = vpop.permute.xlu0 %3363
        %3365 = vrot.lane.b32.xlu0 %v3314, 96
        %v3366 = vpop.permute.xlu0 %3365
        %3367 = vrot.lane.b32.xlu0 %v3315, 96
        %v3368 = vpop.permute.xlu0 %3367
        %3369 = vrot.lane.b32.xlu0 %v3316, 96
        %v3370 = vpop.permute.xlu0 %3369
        %3371 = vrot.lane.b32.xlu0 %v3317, 96
        %v3372 = vpop.permute.xlu0 %3371
        %3373 = vrot.lane.b32.xlu0 %v3318, 96
        %v3374 = vpop.permute.xlu0 %3373
        %3375 = vrot.lane.b32.xlu0 %v3319, 96
        %v3376 = vpop.permute.xlu0 %3375
        %3377 = vrot.lane.b32.xlu0 %v3320, 96
        %v3378 = vpop.permute.xlu0 %3377
        %3379 = vrot.lane.b32.xlu0 %v3321, 96
        %v3380 = vpop.permute.xlu0 %3379
        %3381 = vrot.lane.b32.xlu0 %v3322, 96
        %v3382 = vpop.permute.xlu0 %3381
        %vm3403 = vcmask 835328
        %3404 = vst.msk [vmem:[#allocation3] sm:$0xff] %vm3403, %v3344
        %vm3405 = vcmask 829184
        %3406 = vst.msk [vmem:[#allocation3 + $0x10] sm:$0x3] %vm3405, %v3346
        %3407 = vst.msk [vmem:[#allocation3 + $0x20] sm:$0xff] %vm3403, %v3348
        %3408 = vst.msk [vmem:[#allocation3 + $0x30] sm:$0x3] %vm3405, %v3350
        %3409 = vst.msk [vmem:[#allocation3 + $0x40] sm:$0xff] %vm3403, %v3352
        %3410 = vst.msk [vmem:[#allocation3 + $0x50] sm:$0x3] %vm3405, %v3354
        %3411 = vst.msk [vmem:[#allocation3 + $0x60] sm:$0xff] %vm3403, %v3356
        %3412 = vst.msk [vmem:[#allocation3 + $0x70] sm:$0x3] %vm3405, %v3358
        %3413 = vst.msk [vmem:[#allocation3 + $0x80] sm:$0xff] %vm3403, %v3360
        %3414 = vst.msk [vmem:[#allocation3 + $0x90] sm:$0x3] %vm3405, %v3362
        %3415 = vst.msk [vmem:[#allocation3 + $0xa0] sm:$0xff] %vm3403, %v3364
        %3416 = vst.msk [vmem:[#allocation3 + $0xb0] sm:$0x3] %vm3405, %v3366
        %3417 = vst.msk [vmem:[#allocation3 + $0xc0] sm:$0xff] %vm3403, %v3368
        %3418 = vst.msk [vmem:[#allocation3 + $0xd0] sm:$0x3] %vm3405, %v3370
        %3419 = vst.msk [vmem:[#allocation3 + $0xe0] sm:$0xff] %vm3403, %v3372
        %3420 = vst.msk [vmem:[#allocation3 + $0xf0] sm:$0x3] %vm3405, %v3374
        %3421 = vst.msk [vmem:[#allocation3 + $0x100] sm:$0xff] %vm3403, %v3376
        %3422 = vst.msk [vmem:[#allocation3 + $0x110] sm:$0x3] %vm3405, %v3378
        %3423 = vst.msk [vmem:[#allocation3 + $0x120] sm:$0xff] %vm3403, %v3380
        %3424 = vst.msk [vmem:[#allocation3 + $0x130] sm:$0x3] %vm3405, %v3382
        %v3425 = vld [vmem:[%s1394 + $0x2] sm:$0xff]
        %v3426 = vld [vmem:[%s1394 + $0xa] sm:$0x3]
        %v3427 = vld [vmem:[%s1394 + $0x12] sm:$0xff]
        %v3428 = vld [vmem:[%s1394 + $0x1a] sm:$0x3]
        %v3429 = vld [vmem:[%s1394 + $0x22] sm:$0xff]
        %v3430 = vld [vmem:[%s1394 + $0x2a] sm:$0x3]
        %v3431 = vld [vmem:[%s1394 + $0x32] sm:$0xff]
        %v3432 = vld [vmem:[%s1394 + $0x3a] sm:$0x3]
        %v3433 = vld [vmem:[%s1394 + $0x42] sm:$0xff]
        %v3434 = vld [vmem:[%s1394 + $0x4a] sm:$0x3]
        %v3435 = vld [vmem:[%s1394 + $0x52] sm:$0xff]
        %v3436 = vld [vmem:[%s1394 + $0x5a] sm:$0x3]
        %v3437 = vld [vmem:[%s1394 + $0x62] sm:$0xff]
        %v3438 = vld [vmem:[%s1394 + $0x6a] sm:$0x3]
        %v3439 = vld [vmem:[%s1394 + $0x72] sm:$0xff]
        %v3440 = vld [vmem:[%s1394 + $0x7a] sm:$0x3]
        %v3441 = vld [vmem:[%s1394 + $0x82] sm:$0xff]
        %v3442 = vld [vmem:[%s1394 + $0x8a] sm:$0x3]
        %v3443 = vld [vmem:[%s1394 + $0x92] sm:$0xff]
        %v3444 = vld [vmem:[%s1394 + $0x9a] sm:$0x3]
        %3465 = vrot.lane.b32.xlu0 %v3425, 102
        %v3466 = vpop.permute.xlu0 %3465
        %3467 = vrot.lane.b32.xlu0 %v3426, 102
        %v3468 = vpop.permute.xlu0 %3467
        %3469 = vrot.lane.b32.xlu0 %v3427, 102
        %v3470 = vpop.permute.xlu0 %3469
        %3471 = vrot.lane.b32.xlu0 %v3428, 102
        %v3472 = vpop.permute.xlu0 %3471
        %3473 = vrot.lane.b32.xlu0 %v3429, 102
        %v3474 = vpop.permute.xlu0 %3473
        %3475 = vrot.lane.b32.xlu0 %v3430, 102
        %v3476 = vpop.permute.xlu0 %3475
        %3477 = vrot.lane.b32.xlu0 %v3431, 102
        %v3478 = vpop.permute.xlu0 %3477
        %3479 = vrot.lane.b32.xlu0 %v3432, 102
        %v3480 = vpop.permute.xlu0 %3479
        %3481 = vrot.lane.b32.xlu0 %v3433, 102
        %v3482 = vpop.permute.xlu0 %3481
        %3483 = vrot.lane.b32.xlu0 %v3434, 102
        %v3484 = vpop.permute.xlu0 %3483
        %3485 = vrot.lane.b32.xlu0 %v3435, 102
        %v3486 = vpop.permute.xlu0 %3485
        %3487 = vrot.lane.b32.xlu0 %v3436, 102
        %v3488 = vpop.permute.xlu0 %3487
        %3489 = vrot.lane.b32.xlu0 %v3437, 102
        %v3490 = vpop.permute.xlu0 %3489
        %3491 = vrot.lane.b32.xlu0 %v3438, 102
        %v3492 = vpop.permute.xlu0 %3491
        %3493 = vrot.lane.b32.xlu0 %v3439, 102
        %v3494 = vpop.permute.xlu0 %3493
        %3495 = vrot.lane.b32.xlu0 %v3440, 102
        %v3496 = vpop.permute.xlu0 %3495
        %3497 = vrot.lane.b32.xlu0 %v3441, 102
        %v3498 = vpop.permute.xlu0 %3497
        %3499 = vrot.lane.b32.xlu0 %v3442, 102
        %v3500 = vpop.permute.xlu0 %3499
        %3501 = vrot.lane.b32.xlu0 %v3443, 102
        %v3502 = vpop.permute.xlu0 %3501
        %3503 = vrot.lane.b32.xlu0 %v3444, 102
        %v3504 = vpop.permute.xlu0 %3503
        %vm3525 = vcmask 884528
        %3526 = vst.msk [vmem:[#allocation3] sm:$0xff] %vm3525, %v3466
        %vm3527 = vcmask 878384
        %3528 = vst.msk [vmem:[#allocation3 + $0x10] sm:$0x3] %vm3527, %v3468
        %3529 = vst.msk [vmem:[#allocation3 + $0x20] sm:$0xff] %vm3525, %v3470
        %3530 = vst.msk [vmem:[#allocation3 + $0x30] sm:$0x3] %vm3527, %v3472
        %3531 = vst.msk [vmem:[#allocation3 + $0x40] sm:$0xff] %vm3525, %v3474
        %3532 = vst.msk [vmem:[#allocation3 + $0x50] sm:$0x3] %vm3527, %v3476
        %3533 = vst.msk [vmem:[#allocation3 + $0x60] sm:$0xff] %vm3525, %v3478
        %3534 = vst.msk [vmem:[#allocation3 + $0x70] sm:$0x3] %vm3527, %v3480
        %3535 = vst.msk [vmem:[#allocation3 + $0x80] sm:$0xff] %vm3525, %v3482
        %3536 = vst.msk [vmem:[#allocation3 + $0x90] sm:$0x3] %vm3527, %v3484
        %3537 = vst.msk [vmem:[#allocation3 + $0xa0] sm:$0xff] %vm3525, %v3486
        %3538 = vst.msk [vmem:[#allocation3 + $0xb0] sm:$0x3] %vm3527, %v3488
        %3539 = vst.msk [vmem:[#allocation3 + $0xc0] sm:$0xff] %vm3525, %v3490
        %3540 = vst.msk [vmem:[#allocation3 + $0xd0] sm:$0x3] %vm3527, %v3492
        %3541 = vst.msk [vmem:[#allocation3 + $0xe0] sm:$0xff] %vm3525, %v3494
        %3542 = vst.msk [vmem:[#allocation3 + $0xf0] sm:$0x3] %vm3527, %v3496
        %3543 = vst.msk [vmem:[#allocation3 + $0x100] sm:$0xff] %vm3525, %v3498
        %3544 = vst.msk [vmem:[#allocation3 + $0x110] sm:$0x3] %vm3527, %v3500
        %3545 = vst.msk [vmem:[#allocation3 + $0x120] sm:$0xff] %vm3525, %v3502
        %3546 = vst.msk [vmem:[#allocation3 + $0x130] sm:$0x3] %vm3527, %v3504
        %v3547 = vld [vmem:[%s1394 + $0x3] sm:$0xff]
        %v3548 = vld [vmem:[%s1394 + $0xb] sm:$0x3]
        %v3549 = vld [vmem:[%s1394 + $0x13] sm:$0xff]
        %v3550 = vld [vmem:[%s1394 + $0x1b] sm:$0x3]
        %v3551 = vld [vmem:[%s1394 + $0x23] sm:$0xff]
        %v3552 = vld [vmem:[%s1394 + $0x2b] sm:$0x3]
        %v3553 = vld [vmem:[%s1394 + $0x33] sm:$0xff]
        %v3554 = vld [vmem:[%s1394 + $0x3b] sm:$0x3]
        %v3555 = vld [vmem:[%s1394 + $0x43] sm:$0xff]
        %v3556 = vld [vmem:[%s1394 + $0x4b] sm:$0x3]
        %v3557 = vld [vmem:[%s1394 + $0x53] sm:$0xff]
        %v3558 = vld [vmem:[%s1394 + $0x5b] sm:$0x3]
        %v3559 = vld [vmem:[%s1394 + $0x63] sm:$0xff]
        %v3560 = vld [vmem:[%s1394 + $0x6b] sm:$0x3]
        %v3561 = vld [vmem:[%s1394 + $0x73] sm:$0xff]
        %v3562 = vld [vmem:[%s1394 + $0x7b] sm:$0x3]
        %v3563 = vld [vmem:[%s1394 + $0x83] sm:$0xff]
        %v3564 = vld [vmem:[%s1394 + $0x8b] sm:$0x3]
        %v3565 = vld [vmem:[%s1394 + $0x93] sm:$0xff]
        %v3566 = vld [vmem:[%s1394 + $0x9b] sm:$0x3]
        %3587 = vrot.lane.b32.xlu0 %v3547, 108
        %v3588 = vpop.permute.xlu0 %3587
        %3589 = vrot.lane.b32.xlu0 %v3548, 108
        %v3590 = vpop.permute.xlu0 %3589
        %3591 = vrot.lane.b32.xlu0 %v3549, 108
        %v3592 = vpop.permute.xlu0 %3591
        %3593 = vrot.lane.b32.xlu0 %v3550, 108
        %v3594 = vpop.permute.xlu0 %3593
        %3595 = vrot.lane.b32.xlu0 %v3551, 108
        %v3596 = vpop.permute.xlu0 %3595
        %3597 = vrot.lane.b32.xlu0 %v3552, 108
        %v3598 = vpop.permute.xlu0 %3597
        %3599 = vrot.lane.b32.xlu0 %v3553, 108
        %v3600 = vpop.permute.xlu0 %3599
        %3601 = vrot.lane.b32.xlu0 %v3554, 108
        %v3602 = vpop.permute.xlu0 %3601
        %3603 = vrot.lane.b32.xlu0 %v3555, 108
        %v3604 = vpop.permute.xlu0 %3603
        %3605 = vrot.lane.b32.xlu0 %v3556, 108
        %v3606 = vpop.permute.xlu0 %3605
        %3607 = vrot.lane.b32.xlu0 %v3557, 108
        %v3608 = vpop.permute.xlu0 %3607
        %3609 = vrot.lane.b32.xlu0 %v3558, 108
        %v3610 = vpop.permute.xlu0 %3609
        %3611 = vrot.lane.b32.xlu0 %v3559, 108
        %v3612 = vpop.permute.xlu0 %3611
        %3613 = vrot.lane.b32.xlu0 %v3560, 108
        %v3614 = vpop.permute.xlu0 %3613
        %3615 = vrot.lane.b32.xlu0 %v3561, 108
        %v3616 = vpop.permute.xlu0 %3615
        %3617 = vrot.lane.b32.xlu0 %v3562, 108
        %v3618 = vpop.permute.xlu0 %3617
        %3619 = vrot.lane.b32.xlu0 %v3563, 108
        %v3620 = vpop.permute.xlu0 %3619
        %3621 = vrot.lane.b32.xlu0 %v3564, 108
        %v3622 = vpop.permute.xlu0 %3621
        %3623 = vrot.lane.b32.xlu0 %v3565, 108
        %v3624 = vpop.permute.xlu0 %3623
        %3625 = vrot.lane.b32.xlu0 %v3566, 108
        %v3626 = vpop.permute.xlu0 %3625
        %vm3647 = vcmask 933728
        %3648 = vst.msk [vmem:[#allocation3] sm:$0xff] %vm3647, %v3588
        %vm3649 = vcmask 927584
        %3650 = vst.msk [vmem:[#allocation3 + $0x10] sm:$0x3] %vm3649, %v3590
        %3651 = vst.msk [vmem:[#allocation3 + $0x20] sm:$0xff] %vm3647, %v3592
        %3652 = vst.msk [vmem:[#allocation3 + $0x30] sm:$0x3] %vm3649, %v3594
        %3653 = vst.msk [vmem:[#allocation3 + $0x40] sm:$0xff] %vm3647, %v3596
        %3654 = vst.msk [vmem:[#allocation3 + $0x50] sm:$0x3] %vm3649, %v3598
        %3655 = vst.msk [vmem:[#allocation3 + $0x60] sm:$0xff] %vm3647, %v3600
        %3656 = vst.msk [vmem:[#allocation3 + $0x70] sm:$0x3] %vm3649, %v3602
        %3657 = vst.msk [vmem:[#allocation3 + $0x80] sm:$0xff] %vm3647, %v3604
        %3658 = vst.msk [vmem:[#allocation3 + $0x90] sm:$0x3] %vm3649, %v3606
        %3659 = vst.msk [vmem:[#allocation3 + $0xa0] sm:$0xff] %vm3647, %v3608
        %3660 = vst.msk [vmem:[#allocation3 + $0xb0] sm:$0x3] %vm3649, %v3610
        %3661 = vst.msk [vmem:[#allocation3 + $0xc0] sm:$0xff] %vm3647, %v3612
        %3662 = vst.msk [vmem:[#allocation3 + $0xd0] sm:$0x3] %vm3649, %v3614
        %3663 = vst.msk [vmem:[#allocation3 + $0xe0] sm:$0xff] %vm3647, %v3616
        %3664 = vst.msk [vmem:[#allocation3 + $0xf0] sm:$0x3] %vm3649, %v3618
        %3665 = vst.msk [vmem:[#allocation3 + $0x100] sm:$0xff] %vm3647, %v3620
        %3666 = vst.msk [vmem:[#allocation3 + $0x110] sm:$0x3] %vm3649, %v3622
        %3667 = vst.msk [vmem:[#allocation3 + $0x120] sm:$0xff] %vm3647, %v3624
        %3668 = vst.msk [vmem:[#allocation3 + $0x130] sm:$0x3] %vm3649, %v3626
        %v3669 = vld [vmem:[%s1394 + $0x4] sm:$0xff]
        %v3670 = vld [vmem:[%s1394 + $0xc] sm:$0x3]
        %v3671 = vld [vmem:[%s1394 + $0x14] sm:$0xff]
        %v3672 = vld [vmem:[%s1394 + $0x1c] sm:$0x3]
        %v3673 = vld [vmem:[%s1394 + $0x24] sm:$0xff]
        %v3674 = vld [vmem:[%s1394 + $0x2c] sm:$0x3]
        %v3675 = vld [vmem:[%s1394 + $0x34] sm:$0xff]
        %v3676 = vld [vmem:[%s1394 + $0x3c] sm:$0x3]
        %v3677 = vld [vmem:[%s1394 + $0x44] sm:$0xff]
        %v3678 = vld [vmem:[%s1394 + $0x4c] sm:$0x3]
        %v3679 = vld [vmem:[%s1394 + $0x54] sm:$0xff]
        %v3680 = vld [vmem:[%s1394 + $0x5c] sm:$0x3]
        %v3681 = vld [vmem:[%s1394 + $0x64] sm:$0xff]
        %v3682 = vld [vmem:[%s1394 + $0x6c] sm:$0x3]
        %v3683 = vld [vmem:[%s1394 + $0x74] sm:$0xff]
        %v3684 = vld [vmem:[%s1394 + $0x7c] sm:$0x3]
        %v3685 = vld [vmem:[%s1394 + $0x84] sm:$0xff]
        %v3686 = vld [vmem:[%s1394 + $0x8c] sm:$0x3]
        %v3687 = vld [vmem:[%s1394 + $0x94] sm:$0xff]
        %v3688 = vld [vmem:[%s1394 + $0x9c] sm:$0x3]
        %3709 = vrot.lane.b32.xlu0 %v3669, 114
        %v3710 = vpop.permute.xlu0 %3709
        %3711 = vrot.lane.b32.xlu0 %v3670, 114
        %v3712 = vpop.permute.xlu0 %3711
        %3713 = vrot.lane.b32.xlu0 %v3671, 114
        %v3714 = vpop.permute.xlu0 %3713
        %3715 = vrot.lane.b32.xlu0 %v3672, 114
        %v3716 = vpop.permute.xlu0 %3715
        %3717 = vrot.lane.b32.xlu0 %v3673, 114
        %v3718 = vpop.permute.xlu0 %3717
        %3719 = vrot.lane.b32.xlu0 %v3674, 114
        %v3720 = vpop.permute.xlu0 %3719
        %3721 = vrot.lane.b32.xlu0 %v3675, 114
        %v3722 = vpop.permute.xlu0 %3721
        %3723 = vrot.lane.b32.xlu0 %v3676, 114
        %v3724 = vpop.permute.xlu0 %3723
        %3725 = vrot.lane.b32.xlu0 %v3677, 114
        %v3726 = vpop.permute.xlu0 %3725
        %3727 = vrot.lane.b32.xlu0 %v3678, 114
        %v3728 = vpop.permute.xlu0 %3727
        %3729 = vrot.lane.b32.xlu0 %v3679, 114
        %v3730 = vpop.permute.xlu0 %3729
        %3731 = vrot.lane.b32.xlu0 %v3680, 114
        %v3732 = vpop.permute.xlu0 %3731
        %3733 = vrot.lane.b32.xlu0 %v3681, 114
        %v3734 = vpop.permute.xlu0 %3733
        %3735 = vrot.lane.b32.xlu0 %v3682, 114
        %v3736 = vpop.permute.xlu0 %3735
        %3737 = vrot.lane.b32.xlu0 %v3683, 114
        %v3738 = vpop.permute.xlu0 %3737
        %3739 = vrot.lane.b32.xlu0 %v3684, 114
        %v3740 = vpop.permute.xlu0 %3739
        %3741 = vrot.lane.b32.xlu0 %v3685, 114
        %v3742 = vpop.permute.xlu0 %3741
        %3743 = vrot.lane.b32.xlu0 %v3686, 114
        %v3744 = vpop.permute.xlu0 %3743
        %3745 = vrot.lane.b32.xlu0 %v3687, 114
        %v3746 = vpop.permute.xlu0 %3745
        %3747 = vrot.lane.b32.xlu0 %v3688, 114
        %v3748 = vpop.permute.xlu0 %3747
        %vm3769 = vcmask 982928
        %3770 = vst.msk [vmem:[#allocation3] sm:$0xff] %vm3769, %v3710
        %vm3771 = vcmask 976784
        %3772 = vst.msk [vmem:[#allocation3 + $0x10] sm:$0x3] %vm3771, %v3712
        %3773 = vst.msk [vmem:[#allocation3 + $0x20] sm:$0xff] %vm3769, %v3714
        %3774 = vst.msk [vmem:[#allocation3 + $0x30] sm:$0x3] %vm3771, %v3716
        %3775 = vst.msk [vmem:[#allocation3 + $0x40] sm:$0xff] %vm3769, %v3718
        %3776 = vst.msk [vmem:[#allocation3 + $0x50] sm:$0x3] %vm3771, %v3720
        %3777 = vst.msk [vmem:[#allocation3 + $0x60] sm:$0xff] %vm3769, %v3722
        %3778 = vst.msk [vmem:[#allocation3 + $0x70] sm:$0x3] %vm3771, %v3724
        %3779 = vst.msk [vmem:[#allocation3 + $0x80] sm:$0xff] %vm3769, %v3726
        %3780 = vst.msk [vmem:[#allocation3 + $0x90] sm:$0x3] %vm3771, %v3728
        %3781 = vst.msk [vmem:[#allocation3 + $0xa0] sm:$0xff] %vm3769, %v3730
        %3782 = vst.msk [vmem:[#allocation3 + $0xb0] sm:$0x3] %vm3771, %v3732
        %3783 = vst.msk [vmem:[#allocation3 + $0xc0] sm:$0xff] %vm3769, %v3734
        %3784 = vst.msk [vmem:[#allocation3 + $0xd0] sm:$0x3] %vm3771, %v3736
        %3785 = vst.msk [vmem:[#allocation3 + $0xe0] sm:$0xff] %vm3769, %v3738
        %3786 = vst.msk [vmem:[#allocation3 + $0xf0] sm:$0x3] %vm3771, %v3740
        %3787 = vst.msk [vmem:[#allocation3 + $0x100] sm:$0xff] %vm3769, %v3742
        %3788 = vst.msk [vmem:[#allocation3 + $0x110] sm:$0x3] %vm3771, %v3744
        %3789 = vst.msk [vmem:[#allocation3 + $0x120] sm:$0xff] %vm3769, %v3746
        %3790 = vst.msk [vmem:[#allocation3 + $0x130] sm:$0x3] %vm3771, %v3748
        %v3791 = vld [vmem:[%s1398] sm:$0xff]
        %v3792 = vld [vmem:[%s1398 + $0x8] sm:$0x3]
        %v3793 = vld [vmem:[%s1398 + $0x10] sm:$0xff]
        %v3794 = vld [vmem:[%s1398 + $0x18] sm:$0x3]
        %v3795 = vld [vmem:[%s1398 + $0x20] sm:$0xff]
        %v3796 = vld [vmem:[%s1398 + $0x28] sm:$0x3]
        %v3797 = vld [vmem:[%s1398 + $0x30] sm:$0xff]
        %v3798 = vld [vmem:[%s1398 + $0x38] sm:$0x3]
        %v3799 = vld [vmem:[%s1398 + $0x40] sm:$0xff]
        %v3800 = vld [vmem:[%s1398 + $0x48] sm:$0x3]
        %v3801 = vld [vmem:[%s1398 + $0x50] sm:$0xff]
        %v3802 = vld [vmem:[%s1398 + $0x58] sm:$0x3]
        %v3803 = vld [vmem:[%s1398 + $0x60] sm:$0xff]
        %v3804 = vld [vmem:[%s1398 + $0x68] sm:$0x3]
        %v3805 = vld [vmem:[%s1398 + $0x70] sm:$0xff]
        %v3806 = vld [vmem:[%s1398 + $0x78] sm:$0x3]
        %v3807 = vld [vmem:[%s1398 + $0x80] sm:$0xff]
        %v3808 = vld [vmem:[%s1398 + $0x88] sm:$0x3]
        %v3809 = vld [vmem:[%s1398 + $0x90] sm:$0xff]
        %v3810 = vld [vmem:[%s1398 + $0x98] sm:$0x3]
        %3831 = vrot.lane.b32.xlu0 %v3791, 120
        %v3832 = vpop.permute.xlu0 %3831
        %3833 = vrot.lane.b32.xlu0 %v3792, 120
        %v3834 = vpop.permute.xlu0 %3833
        %3835 = vrot.lane.b32.xlu0 %v3793, 120
        %v3836 = vpop.permute.xlu0 %3835
        %3837 = vrot.lane.b32.xlu0 %v3794, 120
        %v3838 = vpop.permute.xlu0 %3837
        %3839 = vrot.lane.b32.xlu0 %v3795, 120
        %v3840 = vpop.permute.xlu0 %3839
        %3841 = vrot.lane.b32.xlu0 %v3796, 120
        %v3842 = vpop.permute.xlu0 %3841
        %3843 = vrot.lane.b32.xlu0 %v3797, 120
        %v3844 = vpop.permute.xlu0 %3843
        %3845 = vrot.lane.b32.xlu0 %v3798, 120
        %v3846 = vpop.permute.xlu0 %3845
        %3847 = vrot.lane.b32.xlu0 %v3799, 120
        %v3848 = vpop.permute.xlu0 %3847
        %3849 = vrot.lane.b32.xlu0 %v3800, 120
        %v3850 = vpop.permute.xlu0 %3849
        %3851 = vrot.lane.b32.xlu0 %v3801, 120
        %v3852 = vpop.permute.xlu0 %3851
        %3853 = vrot.lane.b32.xlu0 %v3802, 120
        %v3854 = vpop.permute.xlu0 %3853
        %3855 = vrot.lane.b32.xlu0 %v3803, 120
        %v3856 = vpop.permute.xlu0 %3855
        %3857 = vrot.lane.b32.xlu0 %v3804, 120
        %v3858 = vpop.permute.xlu0 %3857
        %3859 = vrot.lane.b32.xlu0 %v3805, 120
        %v3860 = vpop.permute.xlu0 %3859
        %3861 = vrot.lane.b32.xlu0 %v3806, 120
        %v3862 = vpop.permute.xlu0 %3861
        %3863 = vrot.lane.b32.xlu0 %v3807, 120
        %v3864 = vpop.permute.xlu0 %3863
        %3865 = vrot.lane.b32.xlu0 %v3808, 120
        %v3866 = vpop.permute.xlu0 %3865
        %3867 = vrot.lane.b32.xlu0 %v3809, 120
        %v3868 = vpop.permute.xlu0 %3867
        %3869 = vrot.lane.b32.xlu0 %v3810, 120
        %v3870 = vpop.permute.xlu0 %3869
        %vm3891 = vcmask 1032128
        %3892 = vst.msk [vmem:[#allocation3] sm:$0xff] %vm3891, %v3832
        %vm3893 = vcmask 1025984
        %3894 = vst.msk [vmem:[#allocation3 + $0x10] sm:$0x3] %vm3893, %v3834
        %3895 = vst.msk [vmem:[#allocation3 + $0x20] sm:$0xff] %vm3891, %v3836
        %3896 = vst.msk [vmem:[#allocation3 + $0x30] sm:$0x3] %vm3893, %v3838
        %3897 = vst.msk [vmem:[#allocation3 + $0x40] sm:$0xff] %vm3891, %v3840
        %3898 = vst.msk [vmem:[#allocation3 + $0x50] sm:$0x3] %vm3893, %v3842
        %3899 = vst.msk [vmem:[#allocation3 + $0x60] sm:$0xff] %vm3891, %v3844
        %3900 = vst.msk [vmem:[#allocation3 + $0x70] sm:$0x3] %vm3893, %v3846
        %3901 = vst.msk [vmem:[#allocation3 + $0x80] sm:$0xff] %vm3891, %v3848
        %3902 = vst.msk [vmem:[#allocation3 + $0x90] sm:$0x3] %vm3893, %v3850
        %3903 = vst.msk [vmem:[#allocation3 + $0xa0] sm:$0xff] %vm3891, %v3852
        %3904 = vst.msk [vmem:[#allocation3 + $0xb0] sm:$0x3] %vm3893, %v3854
        %3905 = vst.msk [vmem:[#allocation3 + $0xc0] sm:$0xff] %vm3891, %v3856
        %3906 = vst.msk [vmem:[#allocation3 + $0xd0] sm:$0x3] %vm3893, %v3858
        %3907 = vst.msk [vmem:[#allocation3 + $0xe0] sm:$0xff] %vm3891, %v3860
        %3908 = vst.msk [vmem:[#allocation3 + $0xf0] sm:$0x3] %vm3893, %v3862
        %3909 = vst.msk [vmem:[#allocation3 + $0x100] sm:$0xff] %vm3891, %v3864
        %3910 = vst.msk [vmem:[#allocation3 + $0x110] sm:$0x3] %vm3893, %v3866
        %3911 = vst.msk [vmem:[#allocation3 + $0x120] sm:$0xff] %vm3891, %v3868
        %3912 = vst.msk [vmem:[#allocation3 + $0x130] sm:$0x3] %vm3893, %v3870
        %v3913 = vld [vmem:[%s1398 + $0x1] sm:$0xff]
        %v3914 = vld [vmem:[%s1398 + $0x9] sm:$0x3]
        %v3915 = vld [vmem:[%s1398 + $0x11] sm:$0xff]
        %v3916 = vld [vmem:[%s1398 + $0x19] sm:$0x3]
        %v3917 = vld [vmem:[%s1398 + $0x21] sm:$0xff]
        %v3918 = vld [vmem:[%s1398 + $0x29] sm:$0x3]
        %v3919 = vld [vmem:[%s1398 + $0x31] sm:$0xff]
        %v3920 = vld [vmem:[%s1398 + $0x39] sm:$0x3]
        %v3921 = vld [vmem:[%s1398 + $0x41] sm:$0xff]
        %v3922 = vld [vmem:[%s1398 + $0x49] sm:$0x3]
        %v3923 = vld [vmem:[%s1398 + $0x51] sm:$0xff]
        %v3924 = vld [vmem:[%s1398 + $0x59] sm:$0x3]
        %v3925 = vld [vmem:[%s1398 + $0x61] sm:$0xff]
        %v3926 = vld [vmem:[%s1398 + $0x69] sm:$0x3]
        %v3927 = vld [vmem:[%s1398 + $0x71] sm:$0xff]
        %v3928 = vld [vmem:[%s1398 + $0x79] sm:$0x3]
        %v3929 = vld [vmem:[%s1398 + $0x81] sm:$0xff]
        %v3930 = vld [vmem:[%s1398 + $0x89] sm:$0x3]
        %v3931 = vld [vmem:[%s1398 + $0x91] sm:$0xff]
        %v3932 = vld [vmem:[%s1398 + $0x99] sm:$0x3]
        %3953 = vrot.lane.b32.xlu0 %v3913, 126
        %v3954 = vpop.permute.xlu0 %3953
        %3955 = vrot.lane.b32.xlu0 %v3914, 126
        %v3956 = vpop.permute.xlu0 %3955
        %3957 = vrot.lane.b32.xlu0 %v3915, 126
        %v3958 = vpop.permute.xlu0 %3957
        %3959 = vrot.lane.b32.xlu0 %v3916, 126
        %v3960 = vpop.permute.xlu0 %3959
        %3961 = vrot.lane.b32.xlu0 %v3917, 126
        %v3962 = vpop.permute.xlu0 %3961
        %3963 = vrot.lane.b32.xlu0 %v3918, 126
        %v3964 = vpop.permute.xlu0 %3963
        %3965 = vrot.lane.b32.xlu0 %v3919, 126
        %v3966 = vpop.permute.xlu0 %3965
        %3967 = vrot.lane.b32.xlu0 %v3920, 126
        %v3968 = vpop.permute.xlu0 %3967
        %3969 = vrot.lane.b32.xlu0 %v3921, 126
        %v3970 = vpop.permute.xlu0 %3969
        %3971 = vrot.lane.b32.xlu0 %v3922, 126
        %v3972 = vpop.permute.xlu0 %3971
        %3973 = vrot.lane.b32.xlu0 %v3923, 126
        %v3974 = vpop.permute.xlu0 %3973
        %3975 = vrot.lane.b32.xlu0 %v3924, 126
        %v3976 = vpop.permute.xlu0 %3975
        %3977 = vrot.lane.b32.xlu0 %v3925, 126
        %v3978 = vpop.permute.xlu0 %3977
        %3979 = vrot.lane.b32.xlu0 %v3926, 126
        %v3980 = vpop.permute.xlu0 %3979
        %3981 = vrot.lane.b32.xlu0 %v3927, 126
        %v3982 = vpop.permute.xlu0 %3981
        %3983 = vrot.lane.b32.xlu0 %v3928, 126
        %v3984 = vpop.permute.xlu0 %3983
        %3985 = vrot.lane.b32.xlu0 %v3929, 126
        %v3986 = vpop.permute.xlu0 %3985
        %3987 = vrot.lane.b32.xlu0 %v3930, 126
        %v3988 = vpop.permute.xlu0 %3987
        %3989 = vrot.lane.b32.xlu0 %v3931, 126
        %v3990 = vpop.permute.xlu0 %3989
        %3991 = vrot.lane.b32.xlu0 %v3932, 126
        %v3992 = vpop.permute.xlu0 %3991
        %vm4013 = vcmask 1048560
        %4014 = vst.msk [vmem:[#allocation3] sm:$0xff] %vm4013, %v3954
        %vm4015 = vcmask 31744
        %4016 = vst.msk [vmem:[#allocation3 + $0x8] sm:$0xff] %vm4015, %v3954
        %vm4017 = vcmask 1042416
        %4018 = vst.msk [vmem:[#allocation3 + $0x10] sm:$0x3] %vm4017, %v3956
        %vm4019 = vcmask 25600
        %4020 = vst.msk [vmem:[#allocation3 + $0x18] sm:$0x3] %vm4019, %v3956
        %4021 = vst.msk [vmem:[#allocation3 + $0x20] sm:$0xff] %vm4013, %v3958
        %4022 = vst.msk [vmem:[#allocation3 + $0x28] sm:$0xff] %vm4015, %v3958
        %4023 = vst.msk [vmem:[#allocation3 + $0x30] sm:$0x3] %vm4017, %v3960
        %4024 = vst.msk [vmem:[#allocation3 + $0x38] sm:$0x3] %vm4019, %v3960
        %4025 = vst.msk [vmem:[#allocation3 + $0x40] sm:$0xff] %vm4013, %v3962
        %4026 = vst.msk [vmem:[#allocation3 + $0x48] sm:$0xff] %vm4015, %v3962
        %4027 = vst.msk [vmem:[#allocation3 + $0x50] sm:$0x3] %vm4017, %v3964
        %4028 = vst.msk [vmem:[#allocation3 + $0x58] sm:$0x3] %vm4019, %v3964
        %4029 = vst.msk [vmem:[#allocation3 + $0x60] sm:$0xff] %vm4013, %v3966
        %4030 = vst.msk [vmem:[#allocation3 + $0x68] sm:$0xff] %vm4015, %v3966
        %4031 = vst.msk [vmem:[#allocation3 + $0x70] sm:$0x3] %vm4017, %v3968
        %4032 = vst.msk [vmem:[#allocation3 + $0x78] sm:$0x3] %vm4019, %v3968
        %4033 = vst.msk [vmem:[#allocation3 + $0x80] sm:$0xff] %vm4013, %v3970
        %4034 = vst.msk [vmem:[#allocation3 + $0x88] sm:$0xff] %vm4015, %v3970
        %4035 = vst.msk [vmem:[#allocation3 + $0x90] sm:$0x3] %vm4017, %v3972
        %4036 = vst.msk [vmem:[#allocation3 + $0x98] sm:$0x3] %vm4019, %v3972
        %4037 = vst.msk [vmem:[#allocation3 + $0xa0] sm:$0xff] %vm4013, %v3974
        %4038 = vst.msk [vmem:[#allocation3 + $0xa8] sm:$0xff] %vm4015, %v3974
        %4039 = vst.msk [vmem:[#allocation3 + $0xb0] sm:$0x3] %vm4017, %v3976
        %4040 = vst.msk [vmem:[#allocation3 + $0xb8] sm:$0x3] %vm4019, %v3976
        %4041 = vst.msk [vmem:[#allocation3 + $0xc0] sm:$0xff] %vm4013, %v3978
        %4042 = vst.msk [vmem:[#allocation3 + $0xc8] sm:$0xff] %vm4015, %v3978
        %4043 = vst.msk [vmem:[#allocation3 + $0xd0] sm:$0x3] %vm4017, %v3980
        %4044 = vst.msk [vmem:[#allocation3 + $0xd8] sm:$0x3] %vm4019, %v3980
        %4045 = vst.msk [vmem:[#allocation3 + $0xe0] sm:$0xff] %vm4013, %v3982
        %4046 = vst.msk [vmem:[#allocation3 + $0xe8] sm:$0xff] %vm4015, %v3982
        %4047 = vst.msk [vmem:[#allocation3 + $0xf0] sm:$0x3] %vm4017, %v3984
        %4048 = vst.msk [vmem:[#allocation3 + $0xf8] sm:$0x3] %vm4019, %v3984
        %4049 = vst.msk [vmem:[#allocation3 + $0x100] sm:$0xff] %vm4013, %v3986
        %4050 = vst.msk [vmem:[#allocation3 + $0x108] sm:$0xff] %vm4015, %v3986
        %4051 = vst.msk [vmem:[#allocation3 + $0x110] sm:$0x3] %vm4017, %v3988
        %4052 = vst.msk [vmem:[#allocation3 + $0x118] sm:$0x3] %vm4019, %v3988
        %4053 = vst.msk [vmem:[#allocation3 + $0x120] sm:$0xff] %vm4013, %v3990
        %4054 = vst.msk [vmem:[#allocation3 + $0x128] sm:$0xff] %vm4015, %v3990
        %4055 = vst.msk [vmem:[#allocation3 + $0x130] sm:$0x3] %vm4017, %v3992
        %4056 = vst.msk [vmem:[#allocation3 + $0x138] sm:$0x3] %vm4019, %v3992
        %v4057 = vld [vmem:[%s1398 + $0x2] sm:$0xff]
        %v4058 = vld [vmem:[%s1398 + $0xa] sm:$0x3]
        %v4059 = vld [vmem:[%s1398 + $0x12] sm:$0xff]
        %v4060 = vld [vmem:[%s1398 + $0x1a] sm:$0x3]
        %v4061 = vld [vmem:[%s1398 + $0x22] sm:$0xff]
        %v4062 = vld [vmem:[%s1398 + $0x2a] sm:$0x3]
        %v4063 = vld [vmem:[%s1398 + $0x32] sm:$0xff]
        %v4064 = vld [vmem:[%s1398 + $0x3a] sm:$0x3]
        %v4065 = vld [vmem:[%s1398 + $0x42] sm:$0xff]
        %v4066 = vld [vmem:[%s1398 + $0x4a] sm:$0x3]
        %v4067 = vld [vmem:[%s1398 + $0x52] sm:$0xff]
        %v4068 = vld [vmem:[%s1398 + $0x5a] sm:$0x3]
        %v4069 = vld [vmem:[%s1398 + $0x62] sm:$0xff]
        %v4070 = vld [vmem:[%s1398 + $0x6a] sm:$0x3]
        %v4071 = vld [vmem:[%s1398 + $0x72] sm:$0xff]
        %v4072 = vld [vmem:[%s1398 + $0x7a] sm:$0x3]
        %v4073 = vld [vmem:[%s1398 + $0x82] sm:$0xff]
        %v4074 = vld [vmem:[%s1398 + $0x8a] sm:$0x3]
        %v4075 = vld [vmem:[%s1398 + $0x92] sm:$0xff]
        %v4076 = vld [vmem:[%s1398 + $0x9a] sm:$0x3]
        %4097 = vrot.lane.b32.xlu0 %v4057, 4
        %v4098 = vpop.permute.xlu0 %4097
        %4099 = vrot.lane.b32.xlu0 %v4058, 4
        %v4100 = vpop.permute.xlu0 %4099
        %4101 = vrot.lane.b32.xlu0 %v4059, 4
        %v4102 = vpop.permute.xlu0 %4101
        %4103 = vrot.lane.b32.xlu0 %v4060, 4
        %v4104 = vpop.permute.xlu0 %4103
        %4105 = vrot.lane.b32.xlu0 %v4061, 4
        %v4106 = vpop.permute.xlu0 %4105
        %4107 = vrot.lane.b32.xlu0 %v4062, 4
        %v4108 = vpop.permute.xlu0 %4107
        %4109 = vrot.lane.b32.xlu0 %v4063, 4
        %v4110 = vpop.permute.xlu0 %4109
        %4111 = vrot.lane.b32.xlu0 %v4064, 4
        %v4112 = vpop.permute.xlu0 %4111
        %4113 = vrot.lane.b32.xlu0 %v4065, 4
        %v4114 = vpop.permute.xlu0 %4113
        %4115 = vrot.lane.b32.xlu0 %v4066, 4
        %v4116 = vpop.permute.xlu0 %4115
        %4117 = vrot.lane.b32.xlu0 %v4067, 4
        %v4118 = vpop.permute.xlu0 %4117
        %4119 = vrot.lane.b32.xlu0 %v4068, 4
        %v4120 = vpop.permute.xlu0 %4119
        %4121 = vrot.lane.b32.xlu0 %v4069, 4
        %v4122 = vpop.permute.xlu0 %4121
        %4123 = vrot.lane.b32.xlu0 %v4070, 4
        %v4124 = vpop.permute.xlu0 %4123
        %4125 = vrot.lane.b32.xlu0 %v4071, 4
        %v4126 = vpop.permute.xlu0 %4125
        %4127 = vrot.lane.b32.xlu0 %v4072, 4
        %v4128 = vpop.permute.xlu0 %4127
        %4129 = vrot.lane.b32.xlu0 %v4073, 4
        %v4130 = vpop.permute.xlu0 %4129
        %4131 = vrot.lane.b32.xlu0 %v4074, 4
        %v4132 = vpop.permute.xlu0 %4131
        %4133 = vrot.lane.b32.xlu0 %v4075, 4
        %v4134 = vpop.permute.xlu0 %4133
        %4135 = vrot.lane.b32.xlu0 %v4076, 4
        %v4136 = vpop.permute.xlu0 %4135
        %vm4157 = vcmask 80928
        %4158 = vst.msk [vmem:[#allocation3 + $0x8] sm:$0xff] %vm4157, %v4098
        %vm4159 = vcmask 74784
        %4160 = vst.msk [vmem:[#allocation3 + $0x18] sm:$0x3] %vm4159, %v4100
        %4161 = vst.msk [vmem:[#allocation3 + $0x28] sm:$0xff] %vm4157, %v4102
        %4162 = vst.msk [vmem:[#allocation3 + $0x38] sm:$0x3] %vm4159, %v4104
        %4163 = vst.msk [vmem:[#allocation3 + $0x48] sm:$0xff] %vm4157, %v4106
        %4164 = vst.msk [vmem:[#allocation3 + $0x58] sm:$0x3] %vm4159, %v4108
        %4165 = vst.msk [vmem:[#allocation3 + $0x68] sm:$0xff] %vm4157, %v4110
        %4166 = vst.msk [vmem:[#allocation3 + $0x78] sm:$0x3] %vm4159, %v4112
        %4167 = vst.msk [vmem:[#allocation3 + $0x88] sm:$0xff] %vm4157, %v4114
        %4168 = vst.msk [vmem:[#allocation3 + $0x98] sm:$0x3] %vm4159, %v4116
        %4169 = vst.msk [vmem:[#allocation3 + $0xa8] sm:$0xff] %vm4157, %v4118
        %4170 = vst.msk [vmem:[#allocation3 + $0xb8] sm:$0x3] %vm4159, %v4120
        %4171 = vst.msk [vmem:[#allocation3 + $0xc8] sm:$0xff] %vm4157, %v4122
        %4172 = vst.msk [vmem:[#allocation3 + $0xd8] sm:$0x3] %vm4159, %v4124
        %4173 = vst.msk [vmem:[#allocation3 + $0xe8] sm:$0xff] %vm4157, %v4126
        %4174 = vst.msk [vmem:[#allocation3 + $0xf8] sm:$0x3] %vm4159, %v4128
        %4175 = vst.msk [vmem:[#allocation3 + $0x108] sm:$0xff] %vm4157, %v4130
        %4176 = vst.msk [vmem:[#allocation3 + $0x118] sm:$0x3] %vm4159, %v4132
        %4177 = vst.msk [vmem:[#allocation3 + $0x128] sm:$0xff] %vm4157, %v4134
        %4178 = vst.msk [vmem:[#allocation3 + $0x138] sm:$0x3] %vm4159, %v4136
        %v4179 = vld [vmem:[%s1398 + $0x3] sm:$0xff]
        %v4180 = vld [vmem:[%s1398 + $0xb] sm:$0x3]
        %v4181 = vld [vmem:[%s1398 + $0x13] sm:$0xff]
        %v4182 = vld [vmem:[%s1398 + $0x1b] sm:$0x3]
        %v4183 = vld [vmem:[%s1398 + $0x23] sm:$0xff]
        %v4184 = vld [vmem:[%s1398 + $0x2b] sm:$0x3]
        %v4185 = vld [vmem:[%s1398 + $0x33] sm:$0xff]
        %v4186 = vld [vmem:[%s1398 + $0x3b] sm:$0x3]
        %v4187 = vld [vmem:[%s1398 + $0x43] sm:$0xff]
        %v4188 = vld [vmem:[%s1398 + $0x4b] sm:$0x3]
        %v4189 = vld [vmem:[%s1398 + $0x53] sm:$0xff]
        %v4190 = vld [vmem:[%s1398 + $0x5b] sm:$0x3]
        %v4191 = vld [vmem:[%s1398 + $0x63] sm:$0xff]
        %v4192 = vld [vmem:[%s1398 + $0x6b] sm:$0x3]
        %v4193 = vld [vmem:[%s1398 + $0x73] sm:$0xff]
        %v4194 = vld [vmem:[%s1398 + $0x7b] sm:$0x3]
        %v4195 = vld [vmem:[%s1398 + $0x83] sm:$0xff]
        %v4196 = vld [vmem:[%s1398 + $0x8b] sm:$0x3]
        %v4197 = vld [vmem:[%s1398 + $0x93] sm:$0xff]
        %v4198 = vld [vmem:[%s1398 + $0x9b] sm:$0x3]
        %4219 = vrot.lane.b32.xlu0 %v4179, 10
        %v4220 = vpop.permute.xlu0 %4219
        %4221 = vrot.lane.b32.xlu0 %v4180, 10
        %v4222 = vpop.permute.xlu0 %4221
        %4223 = vrot.lane.b32.xlu0 %v4181, 10
        %v4224 = vpop.permute.xlu0 %4223
        %4225 = vrot.lane.b32.xlu0 %v4182, 10
        %v4226 = vpop.permute.xlu0 %4225
        %4227 = vrot.lane.b32.xlu0 %v4183, 10
        %v4228 = vpop.permute.xlu0 %4227
        %4229 = vrot.lane.b32.xlu0 %v4184, 10
        %v4230 = vpop.permute.xlu0 %4229
        %4231 = vrot.lane.b32.xlu0 %v4185, 10
        %v4232 = vpop.permute.xlu0 %4231
        %4233 = vrot.lane.b32.xlu0 %v4186, 10
        %v4234 = vpop.permute.xlu0 %4233
        %4235 = vrot.lane.b32.xlu0 %v4187, 10
        %v4236 = vpop.permute.xlu0 %4235
        %4237 = vrot.lane.b32.xlu0 %v4188, 10
        %v4238 = vpop.permute.xlu0 %4237
        %4239 = vrot.lane.b32.xlu0 %v4189, 10
        %v4240 = vpop.permute.xlu0 %4239
        %4241 = vrot.lane.b32.xlu0 %v4190, 10
        %v4242 = vpop.permute.xlu0 %4241
        %4243 = vrot.lane.b32.xlu0 %v4191, 10
        %v4244 = vpop.permute.xlu0 %4243
        %4245 = vrot.lane.b32.xlu0 %v4192, 10
        %v4246 = vpop.permute.xlu0 %4245
        %4247 = vrot.lane.b32.xlu0 %v4193, 10
        %v4248 = vpop.permute.xlu0 %4247
        %4249 = vrot.lane.b32.xlu0 %v4194, 10
        %v4250 = vpop.permute.xlu0 %4249
        %4251 = vrot.lane.b32.xlu0 %v4195, 10
        %v4252 = vpop.permute.xlu0 %4251
        %4253 = vrot.lane.b32.xlu0 %v4196, 10
        %v4254 = vpop.permute.xlu0 %4253
        %4255 = vrot.lane.b32.xlu0 %v4197, 10
        %v4256 = vpop.permute.xlu0 %4255
        %4257 = vrot.lane.b32.xlu0 %v4198, 10
        %v4258 = vpop.permute.xlu0 %4257
        %vm4279 = vcmask 130128
        %4280 = vst.msk [vmem:[#allocation3 + $0x8] sm:$0xff] %vm4279, %v4220
        %vm4281 = vcmask 123984
        %4282 = vst.msk [vmem:[#allocation3 + $0x18] sm:$0x3] %vm4281, %v4222
        %4283 = vst.msk [vmem:[#allocation3 + $0x28] sm:$0xff] %vm4279, %v4224
        %4284 = vst.msk [vmem:[#allocation3 + $0x38] sm:$0x3] %vm4281, %v4226
        %4285 = vst.msk [vmem:[#allocation3 + $0x48] sm:$0xff] %vm4279, %v4228
        %4286 = vst.msk [vmem:[#allocation3 + $0x58] sm:$0x3] %vm4281, %v4230
        %4287 = vst.msk [vmem:[#allocation3 + $0x68] sm:$0xff] %vm4279, %v4232
        %4288 = vst.msk [vmem:[#allocation3 + $0x78] sm:$0x3] %vm4281, %v4234
        %4289 = vst.msk [vmem:[#allocation3 + $0x88] sm:$0xff] %vm4279, %v4236
        %4290 = vst.msk [vmem:[#allocation3 + $0x98] sm:$0x3] %vm4281, %v4238
        %4291 = vst.msk [vmem:[#allocation3 + $0xa8] sm:$0xff] %vm4279, %v4240
        %4292 = vst.msk [vmem:[#allocation3 + $0xb8] sm:$0x3] %vm4281, %v4242
        %4293 = vst.msk [vmem:[#allocation3 + $0xc8] sm:$0xff] %vm4279, %v4244
        %4294 = vst.msk [vmem:[#allocation3 + $0xd8] sm:$0x3] %vm4281, %v4246
        %4295 = vst.msk [vmem:[#allocation3 + $0xe8] sm:$0xff] %vm4279, %v4248
        %4296 = vst.msk [vmem:[#allocation3 + $0xf8] sm:$0x3] %vm4281, %v4250
        %4297 = vst.msk [vmem:[#allocation3 + $0x108] sm:$0xff] %vm4279, %v4252
        %4298 = vst.msk [vmem:[#allocation3 + $0x118] sm:$0x3] %vm4281, %v4254
        %4299 = vst.msk [vmem:[#allocation3 + $0x128] sm:$0xff] %vm4279, %v4256
        %4300 = vst.msk [vmem:[#allocation3 + $0x138] sm:$0x3] %vm4281, %v4258
        %v4301 = vld [vmem:[%s1398 + $0x4] sm:$0xff]
        %v4302 = vld [vmem:[%s1398 + $0xc] sm:$0x3]
        %v4303 = vld [vmem:[%s1398 + $0x14] sm:$0xff]
        %v4304 = vld [vmem:[%s1398 + $0x1c] sm:$0x3]
        %v4305 = vld [vmem:[%s1398 + $0x24] sm:$0xff]
        %v4306 = vld [vmem:[%s1398 + $0x2c] sm:$0x3]
        %v4307 = vld [vmem:[%s1398 + $0x34] sm:$0xff]
        %v4308 = vld [vmem:[%s1398 + $0x3c] sm:$0x3]
        %v4309 = vld [vmem:[%s1398 + $0x44] sm:$0xff]
        %v4310 = vld [vmem:[%s1398 + $0x4c] sm:$0x3]
        %v4311 = vld [vmem:[%s1398 + $0x54] sm:$0xff]
        %v4312 = vld [vmem:[%s1398 + $0x5c] sm:$0x3]
        %v4313 = vld [vmem:[%s1398 + $0x64] sm:$0xff]
        %v4314 = vld [vmem:[%s1398 + $0x6c] sm:$0x3]
        %v4315 = vld [vmem:[%s1398 + $0x74] sm:$0xff]
        %v4316 = vld [vmem:[%s1398 + $0x7c] sm:$0x3]
        %v4317 = vld [vmem:[%s1398 + $0x84] sm:$0xff]
        %v4318 = vld [vmem:[%s1398 + $0x8c] sm:$0x3]
        %v4319 = vld [vmem:[%s1398 + $0x94] sm:$0xff]
        %v4320 = vld [vmem:[%s1398 + $0x9c] sm:$0x3]
        %4341 = vrot.lane.b32.xlu0 %v4301, 16
        %v4342 = vpop.permute.xlu0 %4341
        %4343 = vrot.lane.b32.xlu0 %v4302, 16
        %v4344 = vpop.permute.xlu0 %4343
        %4345 = vrot.lane.b32.xlu0 %v4303, 16
        %v4346 = vpop.permute.xlu0 %4345
        %4347 = vrot.lane.b32.xlu0 %v4304, 16
        %v4348 = vpop.permute.xlu0 %4347
        %4349 = vrot.lane.b32.xlu0 %v4305, 16
        %v4350 = vpop.permute.xlu0 %4349
        %4351 = vrot.lane.b32.xlu0 %v4306, 16
        %v4352 = vpop.permute.xlu0 %4351
        %4353 = vrot.lane.b32.xlu0 %v4307, 16
        %v4354 = vpop.permute.xlu0 %4353
        %4355 = vrot.lane.b32.xlu0 %v4308, 16
        %v4356 = vpop.permute.xlu0 %4355
        %4357 = vrot.lane.b32.xlu0 %v4309, 16
        %v4358 = vpop.permute.xlu0 %4357
        %4359 = vrot.lane.b32.xlu0 %v4310, 16
        %v4360 = vpop.permute.xlu0 %4359
        %4361 = vrot.lane.b32.xlu0 %v4311, 16
        %v4362 = vpop.permute.xlu0 %4361
        %4363 = vrot.lane.b32.xlu0 %v4312, 16
        %v4364 = vpop.permute.xlu0 %4363
        %4365 = vrot.lane.b32.xlu0 %v4313, 16
        %v4366 = vpop.permute.xlu0 %4365
        %4367 = vrot.lane.b32.xlu0 %v4314, 16
        %v4368 = vpop.permute.xlu0 %4367
        %4369 = vrot.lane.b32.xlu0 %v4315, 16
        %v4370 = vpop.permute.xlu0 %4369
        %4371 = vrot.lane.b32.xlu0 %v4316, 16
        %v4372 = vpop.permute.xlu0 %4371
        %4373 = vrot.lane.b32.xlu0 %v4317, 16
        %v4374 = vpop.permute.xlu0 %4373
        %4375 = vrot.lane.b32.xlu0 %v4318, 16
        %v4376 = vpop.permute.xlu0 %4375
        %4377 = vrot.lane.b32.xlu0 %v4319, 16
        %v4378 = vpop.permute.xlu0 %4377
        %4379 = vrot.lane.b32.xlu0 %v4320, 16
        %v4380 = vpop.permute.xlu0 %4379
        %vm4401 = vcmask 179328
        %4402 = vst.msk [vmem:[#allocation3 + $0x8] sm:$0xff] %vm4401, %v4342
        %vm4403 = vcmask 173184
        %4404 = vst.msk [vmem:[#allocation3 + $0x18] sm:$0x3] %vm4403, %v4344
        %4405 = vst.msk [vmem:[#allocation3 + $0x28] sm:$0xff] %vm4401, %v4346
        %4406 = vst.msk [vmem:[#allocation3 + $0x38] sm:$0x3] %vm4403, %v4348
        %4407 = vst.msk [vmem:[#allocation3 + $0x48] sm:$0xff] %vm4401, %v4350
        %4408 = vst.msk [vmem:[#allocation3 + $0x58] sm:$0x3] %vm4403, %v4352
        %4409 = vst.msk [vmem:[#allocation3 + $0x68] sm:$0xff] %vm4401, %v4354
        %4410 = vst.msk [vmem:[#allocation3 + $0x78] sm:$0x3] %vm4403, %v4356
        %4411 = vst.msk [vmem:[#allocation3 + $0x88] sm:$0xff] %vm4401, %v4358
        %4412 = vst.msk [vmem:[#allocation3 + $0x98] sm:$0x3] %vm4403, %v4360
        %4413 = vst.msk [vmem:[#allocation3 + $0xa8] sm:$0xff] %vm4401, %v4362
        %4414 = vst.msk [vmem:[#allocation3 + $0xb8] sm:$0x3] %vm4403, %v4364
        %4415 = vst.msk [vmem:[#allocation3 + $0xc8] sm:$0xff] %vm4401, %v4366
        %4416 = vst.msk [vmem:[#allocation3 + $0xd8] sm:$0x3] %vm4403, %v4368
        %4417 = vst.msk [vmem:[#allocation3 + $0xe8] sm:$0xff] %vm4401, %v4370
        %4418 = vst.msk [vmem:[#allocation3 + $0xf8] sm:$0x3] %vm4403, %v4372
        %4419 = vst.msk [vmem:[#allocation3 + $0x108] sm:$0xff] %vm4401, %v4374
        %4420 = vst.msk [vmem:[#allocation3 + $0x118] sm:$0x3] %vm4403, %v4376
        %4421 = vst.msk [vmem:[#allocation3 + $0x128] sm:$0xff] %vm4401, %v4378
        %4422 = vst.msk [vmem:[#allocation3 + $0x138] sm:$0x3] %vm4403, %v4380
        %v4423 = vld [vmem:[%s3] sm:$0xff]
        %v4424 = vld [vmem:[%s3 + $0x8] sm:$0xff]
        %v4425 = vld [vmem:[%s3 + $0x10] sm:$0xff]
        %v4426 = vld [vmem:[%s3 + $0x18] sm:$0xff]
        %v4427 = vld [vmem:[%s3 + $0x20] sm:$0xff]
        %v4428 = vld [vmem:[%s3 + $0x28] sm:$0xff]
        %v4429 = vld [vmem:[%s3 + $0x30] sm:$0xff]
        %v4430 = vld [vmem:[%s3 + $0x38] sm:$0xff]
        %v4431 = vld [vmem:[%s3 + $0x40] sm:$0xff]
        %v4432 = vld [vmem:[%s3 + $0x48] sm:$0xff]
        %v4433 = vld [vmem:[%s3 + $0x50] sm:$0xff]
        %v4434 = vld [vmem:[%s3 + $0x58] sm:$0xff]
        %v4435 = vld [vmem:[%s3 + $0x60] sm:$0xff]
        %v4436 = vld [vmem:[%s3 + $0x68] sm:$0xff]
        %v4437 = vld [vmem:[%s3 + $0x70] sm:$0xff]
        %v4438 = vld [vmem:[%s3 + $0x78] sm:$0xff]
        %v4439 = vld [vmem:[%s3 + $0x80] sm:$0xff]
        %v4440 = vld [vmem:[%s3 + $0x88] sm:$0xff]
        %v4441 = vld [vmem:[%s3 + $0x90] sm:$0x3f]
        %v4442 = vld [vmem:[%s4] sm:$0x1]
        %v4443 = vld [vmem:[#allocation3] sm:$0xff]
        %v4444 = vld [vmem:[#allocation3 + $0x8] sm:$0xff]
        %v4445 = vld [vmem:[#allocation3 + $0x10] sm:$0x3]
        %v4446 = vld [vmem:[#allocation3 + $0x18] sm:$0x3]
        %v4448 = vperm.slane %v4442, 0
        %vm4450 = vcmask 179200
        %v4452 = vsel %vm4450, %v4444, 0
        %v4455 = vsel %vm4450, %v4446, 0
        %vm4457 = vcmask 1045504
        %v4459 = vsel %vm4457, %v4441, 0
        %4461 = vmatpush.msra.mxu0 %v4438
        %4462 = vmatpush.msra.mxu0 %v4437
        %4463 = vmatpush.msra.mxu0 %v4436
        %4464 = vmatpush.msra.mxu0 %v4435
        %4465 = vmatpush.msra.mxu0 %v4434
        %4466 = vmatpush.msra.mxu0 %v4433
        %4467 = vmatpush.msra.mxu0 %v4432
        %4468 = vmatpush.msra.mxu0 %v4431
        %4469 = vmatpush.msra.mxu0 %v4430
        %4470 = vmatpush.msra.mxu0 %v4429
        %4471 = vmatpush.msra.mxu0 %v4428
        %4472 = vmatpush.msra.mxu0 %v4427
        %4473 = vmatpush.msra.mxu0 %v4426
        %4474 = vmatpush.msra.mxu0 %v4425
        %4475 = vmatpush.msra.mxu0 %v4424
        %4476 = vmatpush.msra.mxu0 %v4423
        %4477 = vmatmul.f32.gmra.mxu0 %v4443
        %v4478 = vpop.f32.mrf.mxu0
        %v4479 = vadd.f32 %v4448, %v4478
        %4480 = vmatmul.f32.gmra.mxu0 %v4445
        %v4481 = vpop.f32.mrf.mxu0
        %v4482 = vadd.f32 %v4448, %v4481
        %4483 = vdwg.mxu0
        %4484 = vmatpush.msra.mxu0 0.0
        %4485 = vmatpush.msra.mxu0 0.0
        %4486 = vmatpush.msra.mxu0 0.0
        %4487 = vmatpush.msra.mxu0 0.0
        %4488 = vmatpush.msra.mxu0 0.0
        %4489 = vmatpush.msra.mxu0 0.0
        %4490 = vmatpush.msra.mxu0 0.0
        %4491 = vmatpush.msra.mxu0 0.0
        %4492 = vmatpush.msra.mxu0 0.0
        %4493 = vmatpush.msra.mxu0 0.0
        %4494 = vmatpush.msra.mxu0 0.0
        %4495 = vmatpush.msra.mxu0 0.0
        %4496 = vmatpush.msra.mxu0 0.0
        %4497 = vmatpush.msra.mxu0 %v4459
        %4498 = vmatpush.msra.mxu0 %v4440
        %4499 = vmatpush.msra.mxu0 %v4439
        %4500 = vmatmul.f32.gmra.mxu0 %v4452
        %v4501 = vpop.f32.mrf.mxu0
        %v4502 = vadd.f32 %v4479, %v4501
        %4503 = vmatmul.f32.gmra.mxu0 %v4455
        %v4504 = vpop.f32.mrf.mxu0
        %v4505 = vadd.f32 %v4482, %v4504
        %4506 = vdwg.mxu0
        %v4507 = vmax.f32 %v4502, 0.0
        %v4508 = vmax.f32 %v4505, 0.0
        %s4509 = scalar_lea.vmem [#allocation3], 32
        %v4510 = vld [vmem:[%s4509] sm:$0xff]
        %v4511 = vld [vmem:[%s4509 + $0x8] sm:$0xff]
        %v4512 = vld [vmem:[%s4509 + $0x10] sm:$0x3]
        %v4513 = vld [vmem:[%s4509 + $0x18] sm:$0x3]
        %v4515 = vsel %vm4450, %v4511, 0
        %v4518 = vsel %vm4450, %v4513, 0
        %4520 = vmatpush.msra.mxu0 %v4438
        %4521 = vmatpush.msra.mxu0 %v4437
        %4522 = vmatpush.msra.mxu0 %v4436
        %4523 = vmatpush.msra.mxu0 %v4435
        %4524 = vmatpush.msra.mxu0 %v4434
        %4525 = vmatpush.msra.mxu0 %v4433
        %4526 = vmatpush.msra.mxu0 %v4432
        %4527 = vmatpush.msra.mxu0 %v4431
        %4528 = vmatpush.msra.mxu0 %v4430
        %4529 = vmatpush.msra.mxu0 %v4429
        %4530 = vmatpush.msra.mxu0 %v4428
        %4531 = vmatpush.msra.mxu0 %v4427
        %4532 = vmatpush.msra.mxu0 %v4426
        %4533 = vmatpush.msra.mxu0 %v4425
        %4534 = vmatpush.msra.mxu0 %v4424
        %4535 = vmatpush.msra.mxu0 %v4423
        %4536 = vmatmul.f32.gmra.mxu0 %v4510
        %v4537 = vpop.f32.mrf.mxu0
        %v4538 = vadd.f32 %v4448, %v4537
        %4539 = vmatmul.f32.gmra.mxu0 %v4512
        %v4540 = vpop.f32.mrf.mxu0
        %v4541 = vadd.f32 %v4448, %v4540
        %4542 = vdwg.mxu0
        %4543 = vmatpush.msra.mxu0 0.0
        %4544 = vmatpush.msra.mxu0 0.0
        %4545 = vmatpush.msra.mxu0 0.0
        %4546 = vmatpush.msra.mxu0 0.0
        %4547 = vmatpush.msra.mxu0 0.0
        %4548 = vmatpush.msra.mxu0 0.0
        %4549 = vmatpush.msra.mxu0 0.0
        %4550 = vmatpush.msra.mxu0 0.0
        %4551 = vmatpush.msra.mxu0 0.0
        %4552 = vmatpush.msra.mxu0 0.0
        %4553 = vmatpush.msra.mxu0 0.0
        %4554 = vmatpush.msra.mxu0 0.0
        %4555 = vmatpush.msra.mxu0 0.0
        %4556 = vmatpush.msra.mxu0 %v4459
        %4557 = vmatpush.msra.mxu0 %v4440
        %4558 = vmatpush.msra.mxu0 %v4439
        %4559 = vmatmul.f32.gmra.mxu0 %v4515
        %v4560 = vpop.f32.mrf.mxu0
        %v4561 = vadd.f32 %v4538, %v4560
        %4562 = vmatmul.f32.gmra.mxu0 %v4518
        %v4563 = vpop.f32.mrf.mxu0
        %v4564 = vadd.f32 %v4541, %v4563
        %4565 = vdwg.mxu0
        %v4566 = vmax.f32 %v4561, 0.0
        %v4567 = vmax.f32 %v4564, 0.0
        %s4568 = scalar_lea.vmem [#allocation3], 64
        %v4569 = vld [vmem:[%s4568] sm:$0xff]
        %v4570 = vld [vmem:[%s4568 + $0x8] sm:$0xff]
        %v4571 = vld [vmem:[%s4568 + $0x10] sm:$0x3]
        %v4572 = vld [vmem:[%s4568 + $0x18] sm:$0x3]
        %v4574 = vsel %vm4450, %v4570, 0
        %v4577 = vsel %vm4450, %v4572, 0
        %4579 = vmatpush.msra.mxu0 %v4438
        %4580 = vmatpush.msra.mxu0 %v4437
        %4581 = vmatpush.msra.mxu0 %v4436
        %4582 = vmatpush.msra.mxu0 %v4435
        %4583 = vmatpush.msra.mxu0 %v4434
        %4584 = vmatpush.msra.mxu0 %v4433
        %4585 = vmatpush.msra.mxu0 %v4432
        %4586 = vmatpush.msra.mxu0 %v4431
        %4587 = vmatpush.msra.mxu0 %v4430
        %4588 = vmatpush.msra.mxu0 %v4429
        %4589 = vmatpush.msra.mxu0 %v4428
        %4590 = vmatpush.msra.mxu0 %v4427
        %4591 = vmatpush.msra.mxu0 %v4426
        %4592 = vmatpush.msra.mxu0 %v4425
        %4593 = vmatpush.msra.mxu0 %v4424
        %4594 = vmatpush.msra.mxu0 %v4423
        %4595 = vmatmul.f32.gmra.mxu0 %v4569
        %v4596 = vpop.f32.mrf.mxu0
        %v4597 = vadd.f32 %v4448, %v4596
        %4598 = vmatmul.f32.gmra.mxu0 %v4571
        %v4599 = vpop.f32.mrf.mxu0
        %v4600 = vadd.f32 %v4448, %v4599
        %4601 = vdwg.mxu0
        %4602 = vmatpush.msra.mxu0 0.0
        %4603 = vmatpush.msra.mxu0 0.0
        %4604 = vmatpush.msra.mxu0 0.0
        %4605 = vmatpush.msra.mxu0 0.0
        %4606 = vmatpush.msra.mxu0 0.0
        %4607 = vmatpush.msra.mxu0 0.0
        %4608 = vmatpush.msra.mxu0 0.0
        %4609 = vmatpush.msra.mxu0 0.0
        %4610 = vmatpush.msra.mxu0 0.0
        %4611 = vmatpush.msra.mxu0 0.0
        %4612 = vmatpush.msra.mxu0 0.0
        %4613 = vmatpush.msra.mxu0 0.0
        %4614 = vmatpush.msra.mxu0 0.0
        %4615 = vmatpush.msra.mxu0 %v4459
        %4616 = vmatpush.msra.mxu0 %v4440
        %4617 = vmatpush.msra.mxu0 %v4439
        %4618 = vmatmul.f32.gmra.mxu0 %v4574
        %v4619 = vpop.f32.mrf.mxu0
        %v4620 = vadd.f32 %v4597, %v4619
        %4621 = vmatmul.f32.gmra.mxu0 %v4577
        %v4622 = vpop.f32.mrf.mxu0
        %v4623 = vadd.f32 %v4600, %v4622
        %4624 = vdwg.mxu0
        %v4625 = vmax.f32 %v4620, 0.0
        %v4626 = vmax.f32 %v4623, 0.0
        %s4627 = scalar_lea.vmem [#allocation3], 96
        %v4628 = vld [vmem:[%s4627] sm:$0xff]
        %v4629 = vld [vmem:[%s4627 + $0x8] sm:$0xff]
        %v4630 = vld [vmem:[%s4627 + $0x10] sm:$0x3]
        %v4631 = vld [vmem:[%s4627 + $0x18] sm:$0x3]
        %v4633 = vsel %vm4450, %v4629, 0
        %v4636 = vsel %vm4450, %v4631, 0
        %4638 = vmatpush.msra.mxu0 %v4438
        %4639 = vmatpush.msra.mxu0 %v4437
        %4640 = vmatpush.msra.mxu0 %v4436
        %4641 = vmatpush.msra.mxu0 %v4435
        %4642 = vmatpush.msra.mxu0 %v4434
        %4643 = vmatpush.msra.mxu0 %v4433
        %4644 = vmatpush.msra.mxu0 %v4432
        %4645 = vmatpush.msra.mxu0 %v4431
        %4646 = vmatpush.msra.mxu0 %v4430
        %4647 = vmatpush.msra.mxu0 %v4429
        %4648 = vmatpush.msra.mxu0 %v4428
        %4649 = vmatpush.msra.mxu0 %v4427
        %4650 = vmatpush.msra.mxu0 %v4426
        %4651 = vmatpush.msra.mxu0 %v4425
        %4652 = vmatpush.msra.mxu0 %v4424
        %4653 = vmatpush.msra.mxu0 %v4423
        %4654 = vmatmul.f32.gmra.mxu0 %v4628
        %v4655 = vpop.f32.mrf.mxu0
        %v4656 = vadd.f32 %v4448, %v4655
        %4657 = vmatmul.f32.gmra.mxu0 %v4630
        %v4658 = vpop.f32.mrf.mxu0
        %v4659 = vadd.f32 %v4448, %v4658
        %4660 = vdwg.mxu0
        %4661 = vmatpush.msra.mxu0 0.0
        %4662 = vmatpush.msra.mxu0 0.0
        %4663 = vmatpush.msra.mxu0 0.0
        %4664 = vmatpush.msra.mxu0 0.0
        %4665 = vmatpush.msra.mxu0 0.0
        %4666 = vmatpush.msra.mxu0 0.0
        %4667 = vmatpush.msra.mxu0 0.0
        %4668 = vmatpush.msra.mxu0 0.0
        %4669 = vmatpush.msra.mxu0 0.0
        %4670 = vmatpush.msra.mxu0 0.0
        %4671 = vmatpush.msra.mxu0 0.0
        %4672 = vmatpush.msra.mxu0 0.0
        %4673 = vmatpush.msra.mxu0 0.0
        %4674 = vmatpush.msra.mxu0 %v4459
        %4675 = vmatpush.msra.mxu0 %v4440
        %4676 = vmatpush.msra.mxu0 %v4439
        %4677 = vmatmul.f32.gmra.mxu0 %v4633
        %v4678 = vpop.f32.mrf.mxu0
        %v4679 = vadd.f32 %v4656, %v4678
        %4680 = vmatmul.f32.gmra.mxu0 %v4636
        %v4681 = vpop.f32.mrf.mxu0
        %v4682 = vadd.f32 %v4659, %v4681
        %4683 = vdwg.mxu0
        %v4684 = vmax.f32 %v4679, 0.0
        %v4685 = vmax.f32 %v4682, 0.0
        %s4686 = scalar_lea.vmem [#allocation3], 128
        %v4687 = vld [vmem:[%s4686] sm:$0xff]
        %v4688 = vld [vmem:[%s4686 + $0x8] sm:$0xff]
        %v4689 = vld [vmem:[%s4686 + $0x10] sm:$0x3]
        %v4690 = vld [vmem:[%s4686 + $0x18] sm:$0x3]
        %v4692 = vsel %vm4450, %v4688, 0
        %v4695 = vsel %vm4450, %v4690, 0
        %4697 = vmatpush.msra.mxu0 %v4438
        %4698 = vmatpush.msra.mxu0 %v4437
        %4699 = vmatpush.msra.mxu0 %v4436
        %4700 = vmatpush.msra.mxu0 %v4435
        %4701 = vmatpush.msra.mxu0 %v4434
        %4702 = vmatpush.msra.mxu0 %v4433
        %4703 = vmatpush.msra.mxu0 %v4432
        %4704 = vmatpush.msra.mxu0 %v4431
        %4705 = vmatpush.msra.mxu0 %v4430
        %4706 = vmatpush.msra.mxu0 %v4429
        %4707 = vmatpush.msra.mxu0 %v4428
        %4708 = vmatpush.msra.mxu0 %v4427
        %4709 = vmatpush.msra.mxu0 %v4426
        %4710 = vmatpush.msra.mxu0 %v4425
        %4711 = vmatpush.msra.mxu0 %v4424
        %4712 = vmatpush.msra.mxu0 %v4423
        %4713 = vmatmul.f32.gmra.mxu0 %v4687
        %v4714 = vpop.f32.mrf.mxu0
        %v4715 = vadd.f32 %v4448, %v4714
        %4716 = vmatmul.f32.gmra.mxu0 %v4689
        %v4717 = vpop.f32.mrf.mxu0
        %v4718 = vadd.f32 %v4448, %v4717
        %4719 = vdwg.mxu0
        %4720 = vmatpush.msra.mxu0 0.0
        %4721 = vmatpush.msra.mxu0 0.0
        %4722 = vmatpush.msra.mxu0 0.0
        %4723 = vmatpush.msra.mxu0 0.0
        %4724 = vmatpush.msra.mxu0 0.0
        %4725 = vmatpush.msra.mxu0 0.0
        %4726 = vmatpush.msra.mxu0 0.0
        %4727 = vmatpush.msra.mxu0 0.0
        %4728 = vmatpush.msra.mxu0 0.0
        %4729 = vmatpush.msra.mxu0 0.0
        %4730 = vmatpush.msra.mxu0 0.0
        %4731 = vmatpush.msra.mxu0 0.0
        %4732 = vmatpush.msra.mxu0 0.0
        %4733 = vmatpush.msra.mxu0 %v4459
        %4734 = vmatpush.msra.mxu0 %v4440
        %4735 = vmatpush.msra.mxu0 %v4439
        %4736 = vmatmul.f32.gmra.mxu0 %v4692
        %v4737 = vpop.f32.mrf.mxu0
        %v4738 = vadd.f32 %v4715, %v4737
        %4739 = vmatmul.f32.gmra.mxu0 %v4695
        %v4740 = vpop.f32.mrf.mxu0
        %v4741 = vadd.f32 %v4718, %v4740
        %4742 = vdwg.mxu0
        %v4743 = vmax.f32 %v4738, 0.0
        %v4744 = vmax.f32 %v4741, 0.0
        %s4745 = scalar_lea.vmem [#allocation3], 160
        %v4746 = vld [vmem:[%s4745] sm:$0xff]
        %v4747 = vld [vmem:[%s4745 + $0x8] sm:$0xff]
        %v4748 = vld [vmem:[%s4745 + $0x10] sm:$0x3]
        %v4749 = vld [vmem:[%s4745 + $0x18] sm:$0x3]
        %v4751 = vsel %vm4450, %v4747, 0
        %v4754 = vsel %vm4450, %v4749, 0
        %4756 = vmatpush.msra.mxu0 %v4438
        %4757 = vmatpush.msra.mxu0 %v4437
        %4758 = vmatpush.msra.mxu0 %v4436
        %4759 = vmatpush.msra.mxu0 %v4435
        %4760 = vmatpush.msra.mxu0 %v4434
        %4761 = vmatpush.msra.mxu0 %v4433
        %4762 = vmatpush.msra.mxu0 %v4432
        %4763 = vmatpush.msra.mxu0 %v4431
        %4764 = vmatpush.msra.mxu0 %v4430
        %4765 = vmatpush.msra.mxu0 %v4429
        %4766 = vmatpush.msra.mxu0 %v4428
        %4767 = vmatpush.msra.mxu0 %v4427
        %4768 = vmatpush.msra.mxu0 %v4426
        %4769 = vmatpush.msra.mxu0 %v4425
        %4770 = vmatpush.msra.mxu0 %v4424
        %4771 = vmatpush.msra.mxu0 %v4423
        %4772 = vmatmul.f32.gmra.mxu0 %v4746
        %v4773 = vpop.f32.mrf.mxu0
        %v4774 = vadd.f32 %v4448, %v4773
        %4775 = vmatmul.f32.gmra.mxu0 %v4748
        %v4776 = vpop.f32.mrf.mxu0
        %v4777 = vadd.f32 %v4448, %v4776
        %4778 = vdwg.mxu0
        %4779 = vmatpush.msra.mxu0 0.0
        %4780 = vmatpush.msra.mxu0 0.0
        %4781 = vmatpush.msra.mxu0 0.0
        %4782 = vmatpush.msra.mxu0 0.0
        %4783 = vmatpush.msra.mxu0 0.0
        %4784 = vmatpush.msra.mxu0 0.0
        %4785 = vmatpush.msra.mxu0 0.0
        %4786 = vmatpush.msra.mxu0 0.0
        %4787 = vmatpush.msra.mxu0 0.0
        %4788 = vmatpush.msra.mxu0 0.0
        %4789 = vmatpush.msra.mxu0 0.0
        %4790 = vmatpush.msra.mxu0 0.0
        %4791 = vmatpush.msra.mxu0 0.0
        %4792 = vmatpush.msra.mxu0 %v4459
        %4793 = vmatpush.msra.mxu0 %v4440
        %4794 = vmatpush.msra.mxu0 %v4439
        %4795 = vmatmul.f32.gmra.mxu0 %v4751
        %v4796 = vpop.f32.mrf.mxu0
        %v4797 = vadd.f32 %v4774, %v4796
        %4798 = vmatmul.f32.gmra.mxu0 %v4754
        %v4799 = vpop.f32.mrf.mxu0
        %v4800 = vadd.f32 %v4777, %v4799
        %4801 = vdwg.mxu0
        %v4802 = vmax.f32 %v4797, 0.0
        %v4803 = vmax.f32 %v4800, 0.0
        %s4804 = scalar_lea.vmem [#allocation3], 192
        %v4805 = vld [vmem:[%s4804] sm:$0xff]
        %v4806 = vld [vmem:[%s4804 + $0x8] sm:$0xff]
        %v4807 = vld [vmem:[%s4804 + $0x10] sm:$0x3]
        %v4808 = vld [vmem:[%s4804 + $0x18] sm:$0x3]
        %v4810 = vsel %vm4450, %v4806, 0
        %v4813 = vsel %vm4450, %v4808, 0
        %4815 = vmatpush.msra.mxu0 %v4438
        %4816 = vmatpush.msra.mxu0 %v4437
        %4817 = vmatpush.msra.mxu0 %v4436
        %4818 = vmatpush.msra.mxu0 %v4435
        %4819 = vmatpush.msra.mxu0 %v4434
        %4820 = vmatpush.msra.mxu0 %v4433
        %4821 = vmatpush.msra.mxu0 %v4432
        %4822 = vmatpush.msra.mxu0 %v4431
        %4823 = vmatpush.msra.mxu0 %v4430
        %4824 = vmatpush.msra.mxu0 %v4429
        %4825 = vmatpush.msra.mxu0 %v4428
        %4826 = vmatpush.msra.mxu0 %v4427
        %4827 = vmatpush.msra.mxu0 %v4426
        %4828 = vmatpush.msra.mxu0 %v4425
        %4829 = vmatpush.msra.mxu0 %v4424
        %4830 = vmatpush.msra.mxu0 %v4423
        %4831 = vmatmul.f32.gmra.mxu0 %v4805
        %v4832 = vpop.f32.mrf.mxu0
        %v4833 = vadd.f32 %v4448, %v4832
        %4834 = vmatmul.f32.gmra.mxu0 %v4807
        %v4835 = vpop.f32.mrf.mxu0
        %v4836 = vadd.f32 %v4448, %v4835
        %4837 = vdwg.mxu0
        %4838 = vmatpush.msra.mxu0 0.0
        %4839 = vmatpush.msra.mxu0 0.0
        %4840 = vmatpush.msra.mxu0 0.0
        %4841 = vmatpush.msra.mxu0 0.0
        %4842 = vmatpush.msra.mxu0 0.0
        %4843 = vmatpush.msra.mxu0 0.0
        %4844 = vmatpush.msra.mxu0 0.0
        %4845 = vmatpush.msra.mxu0 0.0
        %4846 = vmatpush.msra.mxu0 0.0
        %4847 = vmatpush.msra.mxu0 0.0
        %4848 = vmatpush.msra.mxu0 0.0
        %4849 = vmatpush.msra.mxu0 0.0
        %4850 = vmatpush.msra.mxu0 0.0
        %4851 = vmatpush.msra.mxu0 %v4459
        %4852 = vmatpush.msra.mxu0 %v4440
        %4853 = vmatpush.msra.mxu0 %v4439
        %4854 = vmatmul.f32.gmra.mxu0 %v4810
        %v4855 = vpop.f32.mrf.mxu0
        %v4856 = vadd.f32 %v4833, %v4855
        %4857 = vmatmul.f32.gmra.mxu0 %v4813
        %v4858 = vpop.f32.mrf.mxu0
        %v4859 = vadd.f32 %v4836, %v4858
        %4860 = vdwg.mxu0
        %v4861 = vmax.f32 %v4856, 0.0
        %v4862 = vmax.f32 %v4859, 0.0
        %s4863 = scalar_lea.vmem [#allocation3], 224
        %v4864 = vld [vmem:[%s4863] sm:$0xff]
        %v4865 = vld [vmem:[%s4863 + $0x8] sm:$0xff]
        %v4866 = vld [vmem:[%s4863 + $0x10] sm:$0x3]
        %v4867 = vld [vmem:[%s4863 + $0x18] sm:$0x3]
        %v4869 = vsel %vm4450, %v4865, 0
        %v4872 = vsel %vm4450, %v4867, 0
        %4874 = vmatpush.msra.mxu0 %v4438
        %4875 = vmatpush.msra.mxu0 %v4437
        %4876 = vmatpush.msra.mxu0 %v4436
        %4877 = vmatpush.msra.mxu0 %v4435
        %4878 = vmatpush.msra.mxu0 %v4434
        %4879 = vmatpush.msra.mxu0 %v4433
        %4880 = vmatpush.msra.mxu0 %v4432
        %4881 = vmatpush.msra.mxu0 %v4431
        %4882 = vmatpush.msra.mxu0 %v4430
        %4883 = vmatpush.msra.mxu0 %v4429
        %4884 = vmatpush.msra.mxu0 %v4428
        %4885 = vmatpush.msra.mxu0 %v4427
        %4886 = vmatpush.msra.mxu0 %v4426
        %4887 = vmatpush.msra.mxu0 %v4425
        %4888 = vmatpush.msra.mxu0 %v4424
        %4889 = vmatpush.msra.mxu0 %v4423
        %4890 = vmatmul.f32.gmra.mxu0 %v4864
        %v4891 = vpop.f32.mrf.mxu0
        %v4892 = vadd.f32 %v4448, %v4891
        %4893 = vmatmul.f32.gmra.mxu0 %v4866
        %v4894 = vpop.f32.mrf.mxu0
        %v4895 = vadd.f32 %v4448, %v4894
        %4896 = vdwg.mxu0
        %4897 = vmatpush.msra.mxu0 0.0
        %4898 = vmatpush.msra.mxu0 0.0
        %4899 = vmatpush.msra.mxu0 0.0
        %4900 = vmatpush.msra.mxu0 0.0
        %4901 = vmatpush.msra.mxu0 0.0
        %4902 = vmatpush.msra.mxu0 0.0
        %4903 = vmatpush.msra.mxu0 0.0
        %4904 = vmatpush.msra.mxu0 0.0
        %4905 = vmatpush.msra.mxu0 0.0
        %4906 = vmatpush.msra.mxu0 0.0
        %4907 = vmatpush.msra.mxu0 0.0
        %4908 = vmatpush.msra.mxu0 0.0
        %4909 = vmatpush.msra.mxu0 0.0
        %4910 = vmatpush.msra.mxu0 %v4459
        %4911 = vmatpush.msra.mxu0 %v4440
        %4912 = vmatpush.msra.mxu0 %v4439
        %4913 = vmatmul.f32.gmra.mxu0 %v4869
        %v4914 = vpop.f32.mrf.mxu0
        %v4915 = vadd.f32 %v4892, %v4914
        %4916 = vmatmul.f32.gmra.mxu0 %v4872
        %v4917 = vpop.f32.mrf.mxu0
        %v4918 = vadd.f32 %v4895, %v4917
        %4919 = vdwg.mxu0
        %v4920 = vmax.f32 %v4915, 0.0
        %v4921 = vmax.f32 %v4918, 0.0
        %s4922 = scalar_lea.vmem [#allocation3], 256
        %v4923 = vld [vmem:[%s4922] sm:$0xff]
        %v4924 = vld [vmem:[%s4922 + $0x8] sm:$0xff]
        %v4925 = vld [vmem:[%s4922 + $0x10] sm:$0x3]
        %v4926 = vld [vmem:[%s4922 + $0x18] sm:$0x3]
        %v4928 = vsel %vm4450, %v4924, 0
        %v4931 = vsel %vm4450, %v4926, 0
        %4933 = vmatpush.msra.mxu0 %v4438
        %4934 = vmatpush.msra.mxu0 %v4437
        %4935 = vmatpush.msra.mxu0 %v4436
        %4936 = vmatpush.msra.mxu0 %v4435
        %4937 = vmatpush.msra.mxu0 %v4434
        %4938 = vmatpush.msra.mxu0 %v4433
        %4939 = vmatpush.msra.mxu0 %v4432
        %4940 = vmatpush.msra.mxu0 %v4431
        %4941 = vmatpush.msra.mxu0 %v4430
        %4942 = vmatpush.msra.mxu0 %v4429
        %4943 = vmatpush.msra.mxu0 %v4428
        %4944 = vmatpush.msra.mxu0 %v4427
        %4945 = vmatpush.msra.mxu0 %v4426
        %4946 = vmatpush.msra.mxu0 %v4425
        %4947 = vmatpush.msra.mxu0 %v4424
        %4948 = vmatpush.msra.mxu0 %v4423
        %4949 = vmatmul.f32.gmra.mxu0 %v4923
        %v4950 = vpop.f32.mrf.mxu0
        %v4951 = vadd.f32 %v4448, %v4950
        %4952 = vmatmul.f32.gmra.mxu0 %v4925
        %v4953 = vpop.f32.mrf.mxu0
        %v4954 = vadd.f32 %v4448, %v4953
        %4955 = vdwg.mxu0
        %4956 = vmatpush.msra.mxu0 0.0
        %4957 = vmatpush.msra.mxu0 0.0
        %4958 = vmatpush.msra.mxu0 0.0
        %4959 = vmatpush.msra.mxu0 0.0
        %4960 = vmatpush.msra.mxu0 0.0
        %4961 = vmatpush.msra.mxu0 0.0
        %4962 = vmatpush.msra.mxu0 0.0
        %4963 = vmatpush.msra.mxu0 0.0
        %4964 = vmatpush.msra.mxu0 0.0
        %4965 = vmatpush.msra.mxu0 0.0
        %4966 = vmatpush.msra.mxu0 0.0
        %4967 = vmatpush.msra.mxu0 0.0
        %4968 = vmatpush.msra.mxu0 0.0
        %4969 = vmatpush.msra.mxu0 %v4459
        %4970 = vmatpush.msra.mxu0 %v4440
        %4971 = vmatpush.msra.mxu0 %v4439
        %4972 = vmatmul.f32.gmra.mxu0 %v4928
        %v4973 = vpop.f32.mrf.mxu0
        %v4974 = vadd.f32 %v4951, %v4973
        %4975 = vmatmul.f32.gmra.mxu0 %v4931
        %v4976 = vpop.f32.mrf.mxu0
        %v4977 = vadd.f32 %v4954, %v4976
        %4978 = vdwg.mxu0
        %v4979 = vmax.f32 %v4974, 0.0
        %v4980 = vmax.f32 %v4977, 0.0
        %s4981 = scalar_lea.vmem [#allocation3], 288
        %v4982 = vld [vmem:[%s4981] sm:$0xff]
        %v4983 = vld [vmem:[%s4981 + $0x8] sm:$0xff]
        %v4984 = vld [vmem:[%s4981 + $0x10] sm:$0x3]
        %v4985 = vld [vmem:[%s4981 + $0x18] sm:$0x3]
        %v4987 = vsel %vm4450, %v4983, 0
        %v4990 = vsel %vm4450, %v4985, 0
        %4992 = vmatpush.msra.mxu0 %v4438
        %4993 = vmatpush.msra.mxu0 %v4437
        %4994 = vmatpush.msra.mxu0 %v4436
        %4995 = vmatpush.msra.mxu0 %v4435
        %4996 = vmatpush.msra.mxu0 %v4434
        %4997 = vmatpush.msra.mxu0 %v4433
        %4998 = vmatpush.msra.mxu0 %v4432
        %4999 = vmatpush.msra.mxu0 %v4431
        %5000 = vmatpush.msra.mxu0 %v4430
        %5001 = vmatpush.msra.mxu0 %v4429
        %5002 = vmatpush.msra.mxu0 %v4428
        %5003 = vmatpush.msra.mxu0 %v4427
        %5004 = vmatpush.msra.mxu0 %v4426
        %5005 = vmatpush.msra.mxu0 %v4425
        %5006 = vmatpush.msra.mxu0 %v4424
        %5007 = vmatpush.msra.mxu0 %v4423
        %5008 = vmatmul.f32.gmra.mxu0 %v4982
        %v5009 = vpop.f32.mrf.mxu0
        %v5010 = vadd.f32 %v4448, %v5009
        %5011 = vmatmul.f32.gmra.mxu0 %v4984
        %v5012 = vpop.f32.mrf.mxu0
        %v5013 = vadd.f32 %v4448, %v5012
        %5014 = vdwg.mxu0
        %5015 = vmatpush.msra.mxu0 0.0
        %5016 = vmatpush.msra.mxu0 0.0
        %5017 = vmatpush.msra.mxu0 0.0
        %5018 = vmatpush.msra.mxu0 0.0
        %5019 = vmatpush.msra.mxu0 0.0
        %5020 = vmatpush.msra.mxu0 0.0
        %5021 = vmatpush.msra.mxu0 0.0
        %5022 = vmatpush.msra.mxu0 0.0
        %5023 = vmatpush.msra.mxu0 0.0
        %5024 = vmatpush.msra.mxu0 0.0
        %5025 = vmatpush.msra.mxu0 0.0
        %5026 = vmatpush.msra.mxu0 0.0
        %5027 = vmatpush.msra.mxu0 0.0
        %5028 = vmatpush.msra.mxu0 %v4459
        %5029 = vmatpush.msra.mxu0 %v4440
        %5030 = vmatpush.msra.mxu0 %v4439
        %5031 = vmatmul.f32.gmra.mxu0 %v4987
        %v5032 = vpop.f32.mrf.mxu0
        %v5033 = vadd.f32 %v5010, %v5032
        %5034 = vmatmul.f32.gmra.mxu0 %v4990
        %v5035 = vpop.f32.mrf.mxu0
        %v5036 = vadd.f32 %v5013, %v5035
        %5037 = vdwg.mxu0
        %v5038 = vmax.f32 %v5033, 0.0
        %v5039 = vmax.f32 %v5036, 0.0
        %v5041 = vrot.slane %v4507, 1
        %v5043 = vmax.f32 %v4507, %v5041
        %v5045 = vrot.slane %v4566, 1
        %v5047 = vmax.f32 %v4566, %v5045
        %v5048 = vmax.f32 %v5043, %v5047
        %v5049 = vlaneseq
        %vm5050 = vcmp.ge.s32.totalorder %v5049, 0
        %vm5051 = vcmp.lt.s32.totalorder %v5049, 16
        %vm5052 = vmand %vm5050, %vm5051
        %5053 = vst.msk [vmem:[#allocation4] sm:$0x1] %vm5052, %v5048
        %5055 = vst [vmem:[#allocation1] sm:$0xff] %v5048
        %s5056 = scalar_lea.vmem [#allocation1], 2
        %v5057 = vld [vmem:[%s5056] ss:$9 sm:$0xff]
        %5058 = vrot.lane.b32.xlu0 %v5057, 16
        %v5059 = vpop.permute.xlu0 %5058
        %vm5061 = vcmp.ge.s32.totalorder %v5049, 16
        %vm5062 = vcmp.lt.s32.totalorder %v5049, 32
        %vm5063 = vmand %vm5061, %vm5062
        %5064 = vst.msk [vmem:[#allocation4] sm:$0x1] %vm5063, %v5059
        %5065 = vst [vmem:[#allocation1] sm:$0xff] %v5048
        %s5066 = scalar_lea.vmem [#allocation1], 4
        %v5067 = vld [vmem:[%s5066] ss:$9 sm:$0xff]
        %5068 = vrot.lane.b32.xlu0 %v5067, 32
        %v5069 = vpop.permute.xlu0 %5068
        %vm5071 = vcmp.ge.s32.totalorder %v5049, 32
        %vm5072 = vcmp.lt.s32.totalorder %v5049, 48
        %vm5073 = vmand %vm5071, %vm5072
        %5074 = vst.msk [vmem:[#allocation4] sm:$0x1] %vm5073, %v5069
        %5075 = vst [vmem:[#allocation1] sm:$0xff] %v5048
        %s5076 = scalar_lea.vmem [#allocation1], 6
        %v5077 = vld [vmem:[%s5076] ss:$9 sm:$0xff]
        %5078 = vrot.lane.b32.xlu0 %v5077, 48
        %v5079 = vpop.permute.xlu0 %5078
        %vm5081 = vcmp.ge.s32.totalorder %v5049, 48
        %vm5082 = vcmp.lt.s32.totalorder %v5049, 64
        %vm5083 = vmand %vm5081, %vm5082
        %5084 = vst.msk [vmem:[#allocation4] sm:$0x1] %vm5083, %v5079
        %v5086 = vrot.slane %v4508, 1
        %v5088 = vmax.f32 %v4508, %v5086
        %v5090 = vrot.slane %v4567, 1
        %v5092 = vmax.f32 %v4567, %v5090
        %v5093 = vmax.f32 %v5088, %v5092
        %5095 = vrot.lane.b32.xlu0 %v5093, 64
        %v5096 = vpop.permute.xlu0 %5095
        %vm5098 = vcmp.ge.s32.totalorder %v5049, 64
        %vm5099 = vcmp.lt.s32.totalorder %v5049, 80
        %vm5100 = vmand %vm5098, %vm5099
        %5101 = vst.msk [vmem:[#allocation4] sm:$0x1] %vm5100, %v5096
        %v5103 = vrot.slane %v4625, 1
        %v5105 = vmax.f32 %v4625, %v5103
        %v5107 = vrot.slane %v4684, 1
        %v5109 = vmax.f32 %v4684, %v5107
        %v5110 = vmax.f32 %v5105, %v5109
        %5112 = vrot.lane.b32.xlu0 %v5110, 80
        %v5113 = vpop.permute.xlu0 %5112
        %vm5115 = vcmp.ge.s32.totalorder %v5049, 80
        %vm5116 = vcmp.lt.s32.totalorder %v5049, 96
        %vm5117 = vmand %vm5115, %vm5116
        %5118 = vst.msk [vmem:[#allocation4] sm:$0x1] %vm5117, %v5113
        %5119 = vst [vmem:[#allocation1] sm:$0xff] %v5110
        %s5120 = scalar_lea.vmem [#allocation1], 2
        %v5121 = vld [vmem:[%s5120] ss:$9 sm:$0xff]
        %5122 = vrot.lane.b32.xlu0 %v5121, 96
        %v5123 = vpop.permute.xlu0 %5122
        %vm5125 = vcmp.ge.s32.totalorder %v5049, 96
        %vm5126 = vcmp.lt.s32.totalorder %v5049, 112
        %vm5127 = vmand %vm5125, %vm5126
        %5128 = vst.msk [vmem:[#allocation4] sm:$0x1] %vm5127, %v5123
        %5129 = vst [vmem:[#allocation1] sm:$0xff] %v5110
        %s5130 = scalar_lea.vmem [#allocation1], 4
        %v5131 = vld [vmem:[%s5130] ss:$9 sm:$0xff]
        %5132 = vrot.lane.b32.xlu0 %v5131, 112
        %v5133 = vpop.permute.xlu0 %5132
        %vm5135 = vcmp.ge.s32.totalorder %v5049, 112
        %vm5136 = vcmp.lt.s32.totalorder %v5049, 128
        %vm5137 = vmand %vm5135, %vm5136
        %5138 = vst.msk [vmem:[#allocation4] sm:$0x1] %vm5137, %v5133
        %5139 = vst [vmem:[#allocation1] sm:$0xff] %v5110
        %s5140 = scalar_lea.vmem [#allocation1], 6
        %v5141 = vld [vmem:[%s5140] ss:$9 sm:$0xff]
        %5143 = vst.msk [vmem:[#allocation4 + $0x1] sm:$0x1] %vm5052, %v5141
        %v5145 = vrot.slane %v4626, 1
        %v5147 = vmax.f32 %v4626, %v5145
        %v5149 = vrot.slane %v4685, 1
        %v5151 = vmax.f32 %v4685, %v5149
        %v5152 = vmax.f32 %v5147, %v5151
        %5154 = vrot.lane.b32.xlu0 %v5152, 16
        %v5155 = vpop.permute.xlu0 %5154
        %5157 = vst.msk [vmem:[#allocation4 + $0x1] sm:$0x1] %vm5063, %v5155
        %v5159 = vrot.slane %v4743, 1
        %v5161 = vmax.f32 %v4743, %v5159
        %v5163 = vrot.slane %v4802, 1
        %v5165 = vmax.f32 %v4802, %v5163
        %v5166 = vmax.f32 %v5161, %v5165
        %5168 = vrot.lane.b32.xlu0 %v5166, 32
        %v5169 = vpop.permute.xlu0 %5168
        %5171 = vst.msk [vmem:[#allocation4 + $0x1] sm:$0x1] %vm5073, %v5169
        %5172 = vst [vmem:[#allocation1] sm:$0xff] %v5166
        %s5173 = scalar_lea.vmem [#allocation1], 2
        %v5174 = vld [vmem:[%s5173] ss:$9 sm:$0xff]
        %5175 = vrot.lane.b32.xlu0 %v5174, 48
        %v5176 = vpop.permute.xlu0 %5175
        %5178 = vst.msk [vmem:[#allocation4 + $0x1] sm:$0x1] %vm5083, %v5176
        %5179 = vst [vmem:[#allocation1] sm:$0xff] %v5166
        %s5180 = scalar_lea.vmem [#allocation1], 4
        %v5181 = vld [vmem:[%s5180] ss:$9 sm:$0xff]
        %5182 = vrot.lane.b32.xlu0 %v5181, 64
        %v5183 = vpop.permute.xlu0 %5182
        %5185 = vst.msk [vmem:[#allocation4 + $0x1] sm:$0x1] %vm5100, %v5183
        %5186 = vst [vmem:[#allocation1] sm:$0xff] %v5166
        %s5187 = scalar_lea.vmem [#allocation1], 6
        %v5188 = vld [vmem:[%s5187] ss:$9 sm:$0xff]
        %5189 = vrot.lane.b32.xlu0 %v5188, 80
        %v5190 = vpop.permute.xlu0 %5189
        %5192 = vst.msk [vmem:[#allocation4 + $0x1] sm:$0x1] %vm5117, %v5190
        %v5194 = vrot.slane %v4744, 1
        %v5196 = vmax.f32 %v4744, %v5194
        %v5198 = vrot.slane %v4803, 1
        %v5200 = vmax.f32 %v4803, %v5198
        %v5201 = vmax.f32 %v5196, %v5200
        %5203 = vrot.lane.b32.xlu0 %v5201, 96
        %v5204 = vpop.permute.xlu0 %5203
        %5206 = vst.msk [vmem:[#allocation4 + $0x1] sm:$0x1] %vm5127, %v5204
        %v5208 = vrot.slane %v4861, 1
        %v5210 = vmax.f32 %v4861, %v5208
        %v5212 = vrot.slane %v4920, 1
        %v5214 = vmax.f32 %v4920, %v5212
        %v5215 = vmax.f32 %v5210, %v5214
        %5217 = vrot.lane.b32.xlu0 %v5215, 112
        %v5218 = vpop.permute.xlu0 %5217
        %5220 = vst.msk [vmem:[#allocation4 + $0x1] sm:$0x1] %vm5137, %v5218
        %5221 = vst [vmem:[#allocation1] sm:$0xff] %v5215
        %s5222 = scalar_lea.vmem [#allocation1], 2
        %v5223 = vld [vmem:[%s5222] ss:$9 sm:$0xff]
        %5225 = vst.msk [vmem:[#allocation4 + $0x2] sm:$0x1] %vm5052, %v5223
        %5226 = vst [vmem:[#allocation1] sm:$0xff] %v5215
        %s5227 = scalar_lea.vmem [#allocation1], 4
        %v5228 = vld [vmem:[%s5227] ss:$9 sm:$0xff]
        %5229 = vrot.lane.b32.xlu0 %v5228, 16
        %v5230 = vpop.permute.xlu0 %5229
        %5232 = vst.msk [vmem:[#allocation4 + $0x2] sm:$0x1] %vm5063, %v5230
        %5233 = vst [vmem:[#allocation1] sm:$0xff] %v5215
        %s5234 = scalar_lea.vmem [#allocation1], 6
        %v5235 = vld [vmem:[%s5234] ss:$9 sm:$0xff]
        %5236 = vrot.lane.b32.xlu0 %v5235, 32
        %v5237 = vpop.permute.xlu0 %5236
        %5239 = vst.msk [vmem:[#allocation4 + $0x2] sm:$0x1] %vm5073, %v5237
        %v5241 = vrot.slane %v4862, 1
        %v5243 = vmax.f32 %v4862, %v5241
        %v5245 = vrot.slane %v4921, 1
        %v5247 = vmax.f32 %v4921, %v5245
        %v5248 = vmax.f32 %v5243, %v5247
        %5250 = vrot.lane.b32.xlu0 %v5248, 48
        %v5251 = vpop.permute.xlu0 %5250
        %5253 = vst.msk [vmem:[#allocation4 + $0x2] sm:$0x1] %vm5083, %v5251
        %v5255 = vrot.slane %v4979, 1
        %v5257 = vmax.f32 %v4979, %v5255
        %v5259 = vrot.slane %v5038, 1
        %v5261 = vmax.f32 %v5038, %v5259
        %v5262 = vmax.f32 %v5257, %v5261
        %5264 = vrot.lane.b32.xlu0 %v5262, 64
        %v5265 = vpop.permute.xlu0 %5264
        %5267 = vst.msk [vmem:[#allocation4 + $0x2] sm:$0x1] %vm5100, %v5265
        %5268 = vst [vmem:[#allocation1] sm:$0xff] %v5262
        %s5269 = scalar_lea.vmem [#allocation1], 2
        %v5270 = vld [vmem:[%s5269] ss:$9 sm:$0xff]
        %5271 = vrot.lane.b32.xlu0 %v5270, 80
        %v5272 = vpop.permute.xlu0 %5271
        %5274 = vst.msk [vmem:[#allocation4 + $0x2] sm:$0x1] %vm5117, %v5272
        %5275 = vst [vmem:[#allocation1] sm:$0xff] %v5262
        %s5276 = scalar_lea.vmem [#allocation1], 4
        %v5277 = vld [vmem:[%s5276] ss:$9 sm:$0xff]
        %5278 = vrot.lane.b32.xlu0 %v5277, 96
        %v5279 = vpop.permute.xlu0 %5278
        %5281 = vst.msk [vmem:[#allocation4 + $0x2] sm:$0x1] %vm5127, %v5279
        %5282 = vst [vmem:[#allocation1] sm:$0xff] %v5262
        %s5283 = scalar_lea.vmem [#allocation1], 6
        %v5284 = vld [vmem:[%s5283] ss:$9 sm:$0xff]
        %5285 = vrot.lane.b32.xlu0 %v5284, 112
        %v5286 = vpop.permute.xlu0 %5285
        %5288 = vst.msk [vmem:[#allocation4 + $0x2] sm:$0x1] %vm5137, %v5286
        %v5290 = vrot.slane %v4980, 1
        %v5292 = vmax.f32 %v4980, %v5290
        %v5294 = vrot.slane %v5039, 1
        %v5296 = vmax.f32 %v5039, %v5294
        %v5297 = vmax.f32 %v5292, %v5296
        %5298 = vst.msk [vmem:[#allocation4 + $0x3] sm:$0x1] %vm5052, %v5297
        %v5299 = vld [vmem:[#allocation4] sm:$0xf]
        %v5300 = vld [vmem:[%s5] sm:$0xff]
        %v5301 = vld [vmem:[%s5 + $0x8] sm:$0xff]
        %v5302 = vld [vmem:[%s5 + $0x10] sm:$0xff]
        %v5303 = vld [vmem:[%s5 + $0x18] sm:$0xff]
        %v5304 = vld [vmem:[%s5 + $0x20] sm:$0xff]
        %v5305 = vld [vmem:[%s5 + $0x28] sm:$0xff]
        %v5306 = vld [vmem:[%s5 + $0x30] sm:$0xff]
        %v5307 = vld [vmem:[%s5 + $0x38] sm:$0xff]
        %v5308 = vld [vmem:[%s5 + $0x40] sm:$0xff]
        %v5309 = vld [vmem:[%s5 + $0x48] sm:$0xff]
        %v5310 = vld [vmem:[%s5 + $0x50] sm:$0xff]
        %v5311 = vld [vmem:[%s5 + $0x58] sm:$0xff]
        %v5312 = vld [vmem:[%s5 + $0x60] sm:$0xff]
        %v5313 = vld [vmem:[%s5 + $0x68] sm:$0xff]
        %v5314 = vld [vmem:[%s5 + $0x70] sm:$0xff]
        %v5315 = vld [vmem:[%s5 + $0x78] sm:$0xff]
        %v5316 = vld [vmem:[%s5 + $0x80] sm:$0xff]
        %v5317 = vld [vmem:[%s5 + $0x88] sm:$0xff]
        %v5318 = vld [vmem:[%s5 + $0x90] sm:$0xff]
        %v5319 = vld [vmem:[%s5 + $0x98] sm:$0xff]
        %v5320 = vld [vmem:[%s5 + $0xa0] sm:$0xff]
        %v5321 = vld [vmem:[%s5 + $0xa8] sm:$0xff]
        %v5322 = vld [vmem:[%s5 + $0xb0] sm:$0xff]
        %v5323 = vld [vmem:[%s5 + $0xb8] sm:$0xff]
        %v5324 = vld [vmem:[%s5 + $0xc0] sm:$0xff]
        %v5325 = vld [vmem:[%s5 + $0xc8] sm:$0xff]
        %v5326 = vld [vmem:[%s5 + $0xd0] sm:$0xff]
        %v5327 = vld [vmem:[%s5 + $0xd8] sm:$0xff]
        %v5328 = vld [vmem:[%s5 + $0xe0] sm:$0xff]
        %v5329 = vld [vmem:[%s5 + $0xe8] sm:$0xff]
        %v5330 = vld [vmem:[%s5 + $0xf0] sm:$0xff]
        %v5331 = vld [vmem:[%s5 + $0xf8] sm:$0xff]
        %v5332 = vld [vmem:[%s5 + $0x100] sm:$0xff]
        %v5333 = vld [vmem:[%s5 + $0x108] sm:$0xff]
        %v5334 = vld [vmem:[%s5 + $0x110] sm:$0xff]
        %v5335 = vld [vmem:[%s5 + $0x118] sm:$0xff]
        %v5336 = vld [vmem:[%s5 + $0x120] sm:$0xff]
        %v5337 = vld [vmem:[%s5 + $0x128] sm:$0xff]
        %v5338 = vld [vmem:[%s5 + $0x130] sm:$0xff]
        %v5339 = vld [vmem:[%s5 + $0x138] sm:$0xff]
        %v5340 = vld [vmem:[%s5 + $0x140] sm:$0xff]
        %v5341 = vld [vmem:[%s5 + $0x148] sm:$0xff]
        %v5342 = vld [vmem:[%s5 + $0x150] sm:$0xff]
        %v5343 = vld [vmem:[%s5 + $0x158] sm:$0xff]
        %v5344 = vld [vmem:[%s5 + $0x160] sm:$0xff]
        %v5345 = vld [vmem:[%s5 + $0x168] sm:$0xff]
        %v5346 = vld [vmem:[%s5 + $0x170] sm:$0xff]
        %v5347 = vld [vmem:[%s5 + $0x178] sm:$0xff]
        %v5348 = vld [vmem:[%s5 + $0x180] sm:$0xff]
        %v5349 = vld [vmem:[%s5 + $0x188] sm:$0xff]
        %v5350 = vld [vmem:[%s6] sm:$0x1]
        %v5352 = vperm.slane %v5299, 0
        %v5353 = vperm.slane %v5299, 1
        %v5354 = vperm.slane %v5299, 2
        %v5355 = vperm.slane %v5299, 3
        %vm5359 = vcmask 130048
        %v5360 = vsel %vm5359, %v5355, 0
        %5362 = vmatpush.msra.mxu0 %v5315
        %5363 = vmatpush.msra.mxu0 %v5314
        %5364 = vmatpush.msra.mxu0 %v5313
        %5365 = vmatpush.msra.mxu0 %v5312
        %5366 = vmatpush.msra.mxu0 %v5311
        %5367 = vmatpush.msra.mxu0 %v5310
        %5368 = vmatpush.msra.mxu0 %v5309
        %5369 = vmatpush.msra.mxu0 %v5308
        %5370 = vmatpush.msra.mxu0 %v5307
        %5371 = vmatpush.msra.mxu0 %v5306
        %5372 = vmatpush.msra.mxu0 %v5305
        %5373 = vmatpush.msra.mxu0 %v5304
        %5374 = vmatpush.msra.mxu0 %v5303
        %5375 = vmatpush.msra.mxu0 %v5302
        %5376 = vmatpush.msra.mxu0 %v5301
        %5377 = vmatpush.msra.mxu0 %v5300
        %5378 = vmatmul.f32.gmra.mxu0 %v5352
        %v5379 = vpop.f32.mrf.mxu0
        %v5380 = vadd.f32 %v5350, %v5379
        %5381 = vdwg.mxu0
        %5382 = vmatpush.msra.mxu0 %v5331
        %5383 = vmatpush.msra.mxu0 %v5330
        %5384 = vmatpush.msra.mxu0 %v5329
        %5385 = vmatpush.msra.mxu0 %v5328
        %5386 = vmatpush.msra.mxu0 %v5327
        %5387 = vmatpush.msra.mxu0 %v5326
        %5388 = vmatpush.msra.mxu0 %v5325
        %5389 = vmatpush.msra.mxu0 %v5324
        %5390 = vmatpush.msra.mxu0 %v5323
        %5391 = vmatpush.msra.mxu0 %v5322
        %5392 = vmatpush.msra.mxu0 %v5321
        %5393 = vmatpush.msra.mxu0 %v5320
        %5394 = vmatpush.msra.mxu0 %v5319
        %5395 = vmatpush.msra.mxu0 %v5318
        %5396 = vmatpush.msra.mxu0 %v5317
        %5397 = vmatpush.msra.mxu0 %v5316
        %5398 = vmatmul.f32.gmra.mxu0 %v5353
        %v5399 = vpop.f32.mrf.mxu0
        %v5400 = vadd.f32 %v5380, %v5399
        %5401 = vdwg.mxu0
        %5402 = vmatpush.msra.mxu0 %v5347
        %5403 = vmatpush.msra.mxu0 %v5346
        %5404 = vmatpush.msra.mxu0 %v5345
        %5405 = vmatpush.msra.mxu0 %v5344
        %5406 = vmatpush.msra.mxu0 %v5343
        %5407 = vmatpush.msra.mxu0 %v5342
        %5408 = vmatpush.msra.mxu0 %v5341
        %5409 = vmatpush.msra.mxu0 %v5340
        %5410 = vmatpush.msra.mxu0 %v5339
        %5411 = vmatpush.msra.mxu0 %v5338
        %5412 = vmatpush.msra.mxu0 %v5337
        %5413 = vmatpush.msra.mxu0 %v5336
        %5414 = vmatpush.msra.mxu0 %v5335
        %5415 = vmatpush.msra.mxu0 %v5334
        %5416 = vmatpush.msra.mxu0 %v5333
        %5417 = vmatpush.msra.mxu0 %v5332
        %5418 = vmatmul.f32.gmra.mxu0 %v5354
        %v5419 = vpop.f32.mrf.mxu0
        %v5420 = vadd.f32 %v5400, %v5419
        %5421 = vdwg.mxu0
        %5422 = vmatpush.msra.mxu0 0.0
        %5423 = vmatpush.msra.mxu0 0.0
        %5424 = vmatpush.msra.mxu0 0.0
        %5425 = vmatpush.msra.mxu0 0.0
        %5426 = vmatpush.msra.mxu0 0.0
        %5427 = vmatpush.msra.mxu0 0.0
        %5428 = vmatpush.msra.mxu0 0.0
        %5429 = vmatpush.msra.mxu0 0.0
        %5430 = vmatpush.msra.mxu0 0.0
        %5431 = vmatpush.msra.mxu0 0.0
        %5432 = vmatpush.msra.mxu0 0.0
        %5433 = vmatpush.msra.mxu0 0.0
        %5434 = vmatpush.msra.mxu0 0.0
        %5435 = vmatpush.msra.mxu0 0.0
        %5436 = vmatpush.msra.mxu0 %v5349
        %5437 = vmatpush.msra.mxu0 %v5348
        %5438 = vmatmul.f32.gmra.mxu0 %v5360
        %v5439 = vpop.f32.mrf.mxu0
        %v5440 = vadd.f32 %v5420, %v5439
        %5441 = vdwg.mxu0
        %v5442 = vmax.f32 %v5440, 0.0
        %v5443 = vld [vmem:[%s7] sm:$0xff]
        %v5444 = vld [vmem:[%s7 + $0x8] sm:$0xff]
        %v5445 = vld [vmem:[%s7 + $0x10] sm:$0xff]
        %v5446 = vld [vmem:[%s7 + $0x18] sm:$0xff]
        %v5447 = vld [vmem:[%s7 + $0x20] sm:$0xff]
        %v5448 = vld [vmem:[%s7 + $0x28] sm:$0xff]
        %v5449 = vld [vmem:[%s7 + $0x30] sm:$0xff]
        %v5450 = vld [vmem:[%s7 + $0x38] sm:$0xff]
        %v5451 = vld [vmem:[%s7 + $0x40] sm:$0xff]
        %v5452 = vld [vmem:[%s7 + $0x48] sm:$0xff]
        %v5453 = vld [vmem:[%s7 + $0x50] sm:$0xff]
        %v5454 = vld [vmem:[%s7 + $0x58] sm:$0xff]
        %v5455 = vld [vmem:[%s7 + $0x60] sm:$0xff]
        %v5456 = vld [vmem:[%s7 + $0x68] sm:$0xff]
        %v5457 = vld [vmem:[%s7 + $0x70] sm:$0xff]
        %v5458 = vld [vmem:[%s8] sm:$0x1]
        %vm5459 = vcmask 982016
        %v5461 = vsel %vm5459, %v5442, 0
        %5463 = vmatpush.msra.mxu0 0.0
        %5464 = vmatpush.msra.mxu0 %v5457
        %5465 = vmatpush.msra.mxu0 %v5456
        %5466 = vmatpush.msra.mxu0 %v5455
        %5467 = vmatpush.msra.mxu0 %v5454
        %5468 = vmatpush.msra.mxu0 %v5453
        %5469 = vmatpush.msra.mxu0 %v5452
        %5470 = vmatpush.msra.mxu0 %v5451
        %5471 = vmatpush.msra.mxu0 %v5450
        %5472 = vmatpush.msra.mxu0 %v5449
        %5473 = vmatpush.msra.mxu0 %v5448
        %5474 = vmatpush.msra.mxu0 %v5447
        %5475 = vmatpush.msra.mxu0 %v5446
        %5476 = vmatpush.msra.mxu0 %v5445
        %5477 = vmatpush.msra.mxu0 %v5444
        %5478 = vmatpush.msra.mxu0 %v5443
        %5479 = vmatmul.f32.gmra.mxu0 %v5461
        %v5480 = vpop.f32.mrf.mxu0
        %v5481 = vadd.f32 %v5458, %v5480
        %5482 = vdwg.mxu0
        %v5483 = vmax.f32 %v5481, 0.0
        %v5484 = vld [vmem:[%s9] sm:$0xff]
        %v5485 = vld [vmem:[%s9 + $0x8] sm:$0xff]
        %v5486 = vld [vmem:[%s9 + $0x10] sm:$0xff]
        %v5487 = vld [vmem:[%s9 + $0x18] sm:$0xff]
        %v5488 = vld [vmem:[%s9 + $0x20] sm:$0xff]
        %v5489 = vld [vmem:[%s9 + $0x28] sm:$0xff]
        %v5490 = vld [vmem:[%s9 + $0x30] sm:$0xff]
        %v5491 = vld [vmem:[%s9 + $0x38] sm:$0xff]
        %v5492 = vld [vmem:[%s9 + $0x40] sm:$0xff]
        %v5493 = vld [vmem:[%s9 + $0x48] sm:$0xff]
        %v5494 = vld [vmem:[%s9 + $0x50] sm:$0xf]
        %v5495 = vld [vmem:[%s10] sm:$0x1]
        %vm5496 = vcmask 687104
        %v5498 = vsel %vm5496, %v5483, 0
        %v5501 = vsel %vm1278, %v5494, 0
        %5503 = vmatpush.msra.mxu0 0.0
        %5504 = vmatpush.msra.mxu0 0.0
        %5505 = vmatpush.msra.mxu0 0.0
        %5506 = vmatpush.msra.mxu0 0.0
        %5507 = vmatpush.msra.mxu0 0.0
        %5508 = vmatpush.msra.mxu0 %v5501
        %5509 = vmatpush.msra.mxu0 %v5493
        %5510 = vmatpush.msra.mxu0 %v5492
        %5511 = vmatpush.msra.mxu0 %v5491
        %5512 = vmatpush.msra.mxu0 %v5490
        %5513 = vmatpush.msra.mxu0 %v5489
        %5514 = vmatpush.msra.mxu0 %v5488
        %5515 = vmatpush.msra.mxu0 %v5487
        %5516 = vmatpush.msra.mxu0 %v5486
        %5517 = vmatpush.msra.mxu0 %v5485
        %5518 = vmatpush.msra.mxu0 %v5484
        %5519 = vmatmul.f32.gmra.mxu0 %v5498
        %v5520 = vpop.f32.mrf.mxu0
        %v5521 = vadd.f32 %v5495, %v5520
        %5522 = vdwg.mxu0
        %vm5523 = vcmask 73728
        %5524 = vst.msk [vmem:[%s378] sm:$0x1] %vm5523, %v5521
        %s5525 = sand.u32 %s269, 1
        %s5526 = scalar_lea.sflag [#allocation6], %s5525
        %s5527 = sand.u32 %s269, 1
        %s5528 = scalar_lea.vmem [#allocation5], %s5527
        // Predicated region
        $region65: #{lenet_forward.1} parent=63 // pred_check
          %p5529 = pneg %p279
        $region66: #{lenet_forward.1} parent=63 // pred_check_branch
          %5531 = sbr.rel (%p5529) target = $region68
        $region67: #{lenet_forward.1} parent=63 // pred_region
          %5533 = vsyncadd %s5526, 0
          %s5534 = scalar_lea.hbm %s11, %s25
          %s5536 = sshll.u32 %s5528, 4
          %s5537 = int_to_ptr.vmem [resolvable:$true] %s5536
          %s5538 = sshll.u32 %s5534, 4
          %s5539 = int_to_ptr.hbm [resolvable:$true] %s5538
          %5541 = dma.vmem_to_hbm [thread:$0]  %s5537, 16, %s5539, %s5526
        $region68: #{lenet_forward.1} parent=63 // pred_fallthru
          _
      $region64: #{lenet_forward.1} parent=5 // pred_fallthru
        _
      %p5542 = scmp.le.s32.totalorder 2, %s20
      // Predicated region
      $region69: #{lenet_forward.1} parent=5 // pred_check
        %p5543 = pneg %p5542
      $region70: #{lenet_forward.1} parent=5 // pred_check_branch
        %5545 = sbr.rel (%p5543) target = $region72
      $region71: #{lenet_forward.1} parent=5 // pred_region
        %s5546 = ssub.s32 %s20, 2
        // Predicated region
        $region73: #{lenet_forward.1} parent=71 // pred_check
          %p5547 = pneg %p285
        $region74: #{lenet_forward.1} parent=71 // pred_check_branch
          %5549 = sbr.rel (%p5547) target = $region76
        $region75: #{lenet_forward.1} parent=71 // pred_region
          %s5550 = sand.u32 %s270, 1
          %s5551 = scalar_lea.sflag [#allocation6], %s5550
          %s5552 = sand.u32 %s270, 1
          %s5553 = scalar_lea.vmem [#allocation5], %s5552
          %5555 = dma.done %s5551, 16
        $region76: #{lenet_forward.1} parent=71 // pred_fallthru
          _
      $region72: #{lenet_forward.1} parent=5 // pred_fallthru
        _
    $region6: #{lenet_forward.1} parent=1 // loop_footer
      %s24 = sadd.s32 1, %s20
    $region7: #{lenet_forward.1} parent=1 // loop_footer_branch
      %19 = sbr.rel target = $region3
    $region8: #{lenet_forward.1} parent=1 // loop_exit
      _
    %5556 = vsyncpa [#allocation6], 1
    %s5557 = scalar_lea.sflag [#allocation6], 1
    %5558 = vsyncpa %s5557, 1

</llo_original>
